<compile_context>
chip_gen: v6e
topology: v6e:2x2x1
jax: 0.10.0
libtpu: 0.0.40
codegen_flags: <defaults>
</compile_context>

<pallas_src>
import jax
import jax.numpy as jnp
from jax.experimental import pallas as pl
from jax.experimental.pallas import tpu as pltpu


def _round_up(x, m):
    return (x + m - 1) // m * m


# ----------------------------------------------------------------------------
# Fused kernel: length-masked bidirectional GRU + attention pooling for one
# batch tile of sequences (everything stays resident in VMEM).
#
#   x_ref     : (Bt, T, E)    batch-major inputs
#   len_ref   : (Bt, 1)       int32 valid lengths (>= 1)
#   wih_*     : (E, 3Hp)      input->gates   (gate order r, z, n; per gate
#   whh_*     : (Hp, 3Hp)     hidden->gates   zero-padded from H to Hp lanes)
#   bih_*/bhh_*: (1, 3Hp)
#   watt      : (2Hp, Ap), batt: (1, Ap), vatt: (1, Ap) attention params
#   emb_ref   : (Bt, 2Hp)     pooled embedding (real lanes: [0:H] and [Hp:Hp+H])
#   alpha_ref : (Bt, T)       attention weights (0 at padded time steps)
#   h_seq     : (T, Bt, 2Hp)  VMEM scratch holding the BiGRU outputs
# ----------------------------------------------------------------------------
def _bigru_attn_kernel(x_ref, len_ref,
                       wih_f_ref, wih_b_ref, whh_f_ref, whh_b_ref,
                       bih_f_ref, bih_b_ref, bhh_f_ref, bhh_b_ref,
                       watt_ref, batt_ref, vatt_ref,
                       emb_ref, alpha_ref,
                       h_seq):
    Bt, T, E = x_ref.shape
    Hp = whh_f_ref.shape[0]                  # padded per-direction hidden size
    lengths = len_ref[...]                   # (Bt, 1) int32

    # Hoist all weight / bias loads out of the (unrolled) loops.
    wih_f = wih_f_ref[...]
    wih_b = wih_b_ref[...]
    whh_f = whh_f_ref[...]
    whh_b = whh_b_ref[...]
    bih_f = bih_f_ref[...]
    bih_b = bih_b_ref[...]
    bhh_f = bhh_f_ref[...]
    bhh_b = bhh_b_ref[...]

    def gru_cell(gi, h, whh, bhh):
        # gi already holds x @ W_ih + b_ih (no dependence on h).
        gh = jnp.dot(h, whh, preferred_element_type=jnp.float32) + bhh
        r = jax.nn.sigmoid(gi[:, 0:Hp] + gh[:, 0:Hp])
        z = jax.nn.sigmoid(gi[:, Hp:2 * Hp] + gh[:, Hp:2 * Hp])
        n = jnp.tanh(gi[:, 2 * Hp:3 * Hp] + r * gh[:, 2 * Hp:3 * Hp])
        return (1.0 - z) * n + z * h

    hf = jnp.zeros((Bt, Hp), jnp.float32)
    hb = jnp.zeros((Bt, Hp), jnp.float32)

    # Fused forward / backward recurrence, fully unrolled (T is static & small).
    # TODO(synk): for very long padded sequences (T >> 32) switch this static
    #             unroll to a lax.fori_loop with dynamic time indexing.
    for i in range(T):
        tf = i
        tb = T - 1 - i
        # Input projections (only depend on x -> off the serial h-chain).
        gi_f = jnp.dot(x_ref[:, tf, :], wih_f,
                       preferred_element_type=jnp.float32) + bih_f
        gi_b = jnp.dot(x_ref[:, tb, :], wih_b,
                       preferred_element_type=jnp.float32) + bih_b
        hf_new = gru_cell(gi_f, hf, whh_f, bhh_f)
        hb_new = gru_cell(gi_b, hb, whh_b, bhh_b)
        mf = tf < lengths                    # (Bt, 1) bool
        mb = tb < lengths
        # Freeze the state past the valid length (packed-sequence semantics:
        # the backward pass starts from h = 0 at t = len - 1).
        hf = jnp.where(mf, hf_new, hf)
        hb = jnp.where(mb, hb_new, hb)
        # GRU outputs: 0 at padded time steps (matches pad_packed_sequence).
        h_seq[tf, :, 0:Hp] = jnp.where(mf, hf_new, 0.0)
        h_seq[tb, :, Hp:2 * Hp] = jnp.where(mb, hb_new, 0.0)

    # ---- attention pooling: Linear -> tanh -> context vector -> masked
    # softmax over time -> weighted sum (the reference's global max-shift is a
    # no-op for the softmax). ------------------------------------------------
    w_att = watt_ref[...]                    # (2Hp, Ap)
    b_att = batt_ref[...]                    # (1, Ap)
    v_att = vatt_ref[...]                    # (1, Ap) context vector as a row
    neg_big = jnp.float32(-1e30)             # finite sentinel (avoids -inf math)

    scores = []
    for t in range(T):
        h_t = h_seq[t]                                           # (Bt, 2Hp)
        u_t = jnp.tanh(jnp.dot(h_t, w_att,
                               preferred_element_type=jnp.float32) + b_att)
        # context-vector dot as a VPU multiply + lane reduction (no N=1 matmul)
        s_t = jnp.sum(u_t * v_att, axis=-1, keepdims=True)       # (Bt, 1)
        scores.append(jnp.where(t < lengths, s_t, neg_big))

    m = scores[0]
    for t in range(1, T):
        m = jnp.maximum(m, scores[t])
    exps = [jnp.where(t < lengths, jnp.exp(scores[t] - m), 0.0) for t in range(T)]
    denom = exps[0]
    for t in range(1, T):
        denom = denom + exps[t]
    inv = 1.0 / denom                                            # (Bt, 1)

    emb = jnp.zeros((Bt, 2 * Hp), jnp.float32)
    for t in range(T):
        a_t = exps[t] * inv                                      # (Bt, 1)
        alpha_ref[:, t:t + 1] = a_t
        emb = emb + a_t * h_seq[t]
    emb_ref[...] = emb                                           # lane-dense (2Hp)


# ----------------------------------------------------------------------------
# Wrapper: pads the batch / hidden / attention dims to TPU-friendly sizes and
# launches the fused kernel with a batch-parallel grid.
# ----------------------------------------------------------------------------
def bigru_attention_layer(x, lengths, gru_p, att_w, att_b, att_v):
    """x: (B, T, E) float, lengths: (B,) int.  Returns (emb (B, 2H), alphas (B, T))."""
    B, T, E = x.shape
    H = gru_p["whh_f"].shape[0]
    A = att_w.shape[1]

    Hp = _round_up(H, 64)          # 2*Hp is a multiple of 128 -> lane-dense output
    Ap = _round_up(A, 128)
    # Batch tile: 128 rows by default (per-tile VMEM footprint stays well under
    # the 64 MiB v7x budget at typical HAN sizes; tiny batches get one block).
    Bt = 128 if B >= 128 else _round_up(B, 8)
    Bp = _round_up(B, Bt)

    # ---- pad operands to the kernel layout (zero padding is inert) ----------
    x_p = jnp.pad(x.astype(jnp.float32), ((0, Bp - B), (0, 0), (0, 0)))
    len_clamped = jnp.maximum(lengths.astype(jnp.int32), 1)
    len_p = jnp.pad(len_clamped, (0, Bp - B), constant_values=1).reshape(Bp, 1)

    def pad_gate_cols(w):
        # (R, 3H) -> (R, 3Hp): zero-pad each r/z/n gate block to Hp lanes.
        gs = [jnp.pad(w[:, g * H:(g + 1) * H], ((0, 0), (0, Hp - H)))
              for g in range(3)]
        return jnp.concatenate(gs, axis=1)

    wih_f = pad_gate_cols(gru_p["wih_f"])
    wih_b = pad_gate_cols(gru_p["wih_b"])
    whh_f = jnp.pad(pad_gate_cols(gru_p["whh_f"]), ((0, Hp - H), (0, 0)))
    whh_b = jnp.pad(pad_gate_cols(gru_p["whh_b"]), ((0, Hp - H), (0, 0)))
    bih_f = pad_gate_cols(gru_p["bih_f"])
    bih_b = pad_gate_cols(gru_p["bih_b"])
    bhh_f = pad_gate_cols(gru_p["bhh_f"])
    bhh_b = pad_gate_cols(gru_p["bhh_b"])

    # Attention weight rows [0:H] act on the forward half, [Hp:Hp+H] on the
    # backward half of the padded (2Hp) hidden layout.
    watt = jnp.concatenate(
        [jnp.pad(att_w[0:H, :], ((0, Hp - H), (0, Ap - A))),
         jnp.pad(att_w[H:2 * H, :], ((0, Hp - H), (0, Ap - A)))], axis=0)
    batt = jnp.pad(att_b, ((0, 0), (0, Ap - A)))
    vatt = jnp.pad(att_v.reshape(1, A), ((0, 0), (0, Ap - A)))

    full = lambda i: (0, 0)        # weights: same (resident) block every step
    emb_p, alpha_p = pl.pallas_call(
        _bigru_attn_kernel,
        out_shape=(jax.ShapeDtypeStruct((Bp, 2 * Hp), jnp.float32),
                   jax.ShapeDtypeStruct((Bp, T), jnp.float32)),
        grid_spec=pltpu.PrefetchScalarGridSpec(
            num_scalar_prefetch=0,
            grid=(Bp // Bt,),
            in_specs=[
                pl.BlockSpec((Bt, T, E), lambda i: (i, 0, 0)),
                pl.BlockSpec((Bt, 1), lambda i: (i, 0)),
                pl.BlockSpec((E, 3 * Hp), full),
                pl.BlockSpec((E, 3 * Hp), full),
                pl.BlockSpec((Hp, 3 * Hp), full),
                pl.BlockSpec((Hp, 3 * Hp), full),
                pl.BlockSpec((1, 3 * Hp), full),
                pl.BlockSpec((1, 3 * Hp), full),
                pl.BlockSpec((1, 3 * Hp), full),
                pl.BlockSpec((1, 3 * Hp), full),
                pl.BlockSpec((2 * Hp, Ap), full),
                pl.BlockSpec((1, Ap), full),
                pl.BlockSpec((1, Ap), full),
            ],
            out_specs=(pl.BlockSpec((Bt, 2 * Hp), lambda i: (i, 0)),
                       pl.BlockSpec((Bt, T), lambda i: (i, 0))),
            scratch_shapes=[pltpu.VMEM((T, Bt, 2 * Hp), jnp.float32)],
        ),
        compiler_params=pltpu.CompilerParams(
            dimension_semantics=("parallel",),
            vmem_limit_bytes=64 * 1024 * 1024,
        ),
    )(x_p, len_p, wih_f, wih_b, whh_f, whh_b,
      bih_f, bih_b, bhh_f, bhh_b, watt, batt, vatt)

    # Extract the real (un-padded) hidden lanes: [fwd 0:H | bwd Hp:Hp+H].
    emb = jnp.concatenate([emb_p[:B, 0:H], emb_p[:B, Hp:Hp + H]], axis=1)
    return emb, alpha_p[:B]


# ----------------------------------------------------------------------------
# Parameter construction (deterministic, matches the nn.Module __init__ shapes)
# ----------------------------------------------------------------------------
def _uniform(key, shape, scale):
    return jax.random.uniform(key, shape, jnp.float32, -scale, scale)


def make_gru_params(key, input_size, hidden_size):
    ks = jax.random.split(key, 8)
    sc = 1.0 / jnp.sqrt(hidden_size)
    return {
        "wih_f": _uniform(ks[0], (input_size, 3 * hidden_size), sc),
        "whh_f": _uniform(ks[1], (hidden_size, 3 * hidden_size), sc),
        "bih_f": _uniform(ks[2], (1, 3 * hidden_size), sc),
        "bhh_f": _uniform(ks[3], (1, 3 * hidden_size), sc),
        "wih_b": _uniform(ks[4], (input_size, 3 * hidden_size), sc),
        "whh_b": _uniform(ks[5], (hidden_size, 3 * hidden_size), sc),
        "bih_b": _uniform(ks[6], (1, 3 * hidden_size), sc),
        "bhh_b": _uniform(ks[7], (1, 3 * hidden_size), sc),
    }


def make_params(key, vocab_size, emb_size, word_rnn_size, sentence_rnn_size,
                word_att_size, sentence_att_size):
    ks = jax.random.split(key, 10)
    return {
        "embedding": _uniform(ks[0], (vocab_size, emb_size), 0.1),
        "word_gru": make_gru_params(ks[1], emb_size, word_rnn_size),
        "word_att_w": _uniform(ks[2], (2 * word_rnn_size, word_att_size),
                               1.0 / jnp.sqrt(2 * word_rnn_size)),
        "word_att_b": _uniform(ks[3], (1, word_att_size),
                               1.0 / jnp.sqrt(2 * word_rnn_size)),
        "word_ctx_v": _uniform(ks[4], (word_att_size, 1),
                               1.0 / jnp.sqrt(word_att_size)),
        "sent_gru": make_gru_params(ks[5], 2 * word_rnn_size, sentence_rnn_size),
        "sent_att_w": _uniform(ks[6], (2 * sentence_rnn_size, sentence_att_size),
                               1.0 / jnp.sqrt(2 * sentence_rnn_size)),
        "sent_att_b": _uniform(ks[7], (1, sentence_att_size),
                               1.0 / jnp.sqrt(2 * sentence_rnn_size)),
        "sent_ctx_v": _uniform(ks[8], (sentence_att_size, 1),
                               1.0 / jnp.sqrt(sentence_att_size)),
    }


# ----------------------------------------------------------------------------
# Full SentenceAttention forward (embedding gather in XLA, the two fused
# GRU+attention kernels do the heavy lifting).
# ----------------------------------------------------------------------------
# TODO(synk): multi-layer GRUs (word_rnn_layers / sentence_rnn_layers > 1) and
#             train-mode dropout are not implemented; single layer, eval mode.
@jax.jit
def sentence_attention_forward(params, documents, sentences_per_document,
                               words_per_sentence):
    # documents: (N, S, W) int32 token ids
    # sentences_per_document: (N,) int32 ; words_per_sentence: (N, S) int32
    N, S, W = documents.shape

    # --- word level -----------------------------------------------------------
    emb = params["embedding"][documents]                 # (N, S, W, E) gather (glue)
    x_words = emb.reshape(N * S, W, -1).astype(jnp.float32)
    # Sentences that are pure padding have length 0 -> clamp to 1; their rows
    # are masked out at the sentence level, so outputs match the reference.
    wlen = words_per_sentence.reshape(N * S)

    sent_emb, word_alphas = bigru_attention_layer(
        x_words, wlen, params["word_gru"],
        params["word_att_w"], params["word_att_b"], params["word_ctx_v"])

    # --- sentence level -------------------------------------------------------
    sent_x = sent_emb.reshape(N, S, -1)
    slen = sentences_per_document.reshape(N)

    docs, sentence_alphas = bigru_attention_layer(
        sent_x, slen, params["sent_gru"],
        params["sent_att_w"], params["sent_att_b"], params["sent_ctx_v"])

    # Re-pad word_alphas over the sentence axis (0 rows for padding sentences),
    # matching pad_packed_sequence in the reference.
    word_alphas = word_alphas.reshape(N, S, W)
    sent_mask = (jnp.arange(S)[None, :] < sentences_per_document[:, None])
    word_alphas = word_alphas * sent_mask[:, :, None].astype(jnp.float32)

    return docs, word_alphas, sentence_alphas


# ----------------------------------------------------------------------------
if __name__ == "__main__":
    # small deterministic config
    vocab_size = 50
    emb_size = 32
    word_rnn_size = 32
    sentence_rnn_size = 32
    word_att_size = 32
    sentence_att_size = 32
    n_docs, sent_pad, word_pad = 2, 4, 8

    key = jax.random.PRNGKey(0)
    k_param, k_doc = jax.random.split(key)

    params = make_params(k_param, vocab_size, emb_size, word_rnn_size,
                         sentence_rnn_size, word_att_size, sentence_att_size)

    documents = jax.random.randint(k_doc, (n_docs, sent_pad, word_pad),
                                   0, vocab_size, dtype=jnp.int32)
    sentences_per_document = jnp.array([4, 3], dtype=jnp.int32)
    words_per_sentence = jnp.array([[8, 5, 3, 2],
                                    [6, 8, 4, 0]], dtype=jnp.int32)

    docs, word_alphas, sentence_alphas = sentence_attention_forward(
        params, documents, sentences_per_document, words_per_sentence)
    jax.block_until_ready((docs, word_alphas, sentence_alphas))

    # light sanity checks
    assert docs.shape == (n_docs, 2 * sentence_rnn_size)
    assert word_alphas.shape == (n_docs, sent_pad, word_pad)
    assert sentence_alphas.shape == (n_docs, sent_pad)
    assert bool(jnp.all(jnp.isfinite(docs)))
    assert bool(jnp.allclose(jnp.sum(sentence_alphas, axis=1), 1.0, atol=1e-5))
    assert bool(jnp.allclose(jnp.sum(word_alphas[0, 0]), 1.0, atol=1e-5))
    assert bool(jnp.allclose(jnp.sum(word_alphas[1, 3]), 0.0, atol=1e-6))  # padded sentence

    print("KERNEL_OK")
</pallas_src>

<mosaic_0001>
module attributes {stable_mosaic.version = 11 : i64} {
  func.func @_bigru_attn_kernel(%arg0: i32, %arg1: memref<8x4x64xf32, #tpu.memory_space<vmem>>, %arg2: memref<8x1xi32, #tpu.memory_space<vmem>>, %arg3: memref<64x192xf32, #tpu.memory_space<vmem>>, %arg4: memref<64x192xf32, #tpu.memory_space<vmem>>, %arg5: memref<64x192xf32, #tpu.memory_space<vmem>>, %arg6: memref<64x192xf32, #tpu.memory_space<vmem>>, %arg7: memref<1x192xf32, #tpu.memory_space<vmem>>, %arg8: memref<1x192xf32, #tpu.memory_space<vmem>>, %arg9: memref<1x192xf32, #tpu.memory_space<vmem>>, %arg10: memref<1x192xf32, #tpu.memory_space<vmem>>, %arg11: memref<128x128xf32, #tpu.memory_space<vmem>>, %arg12: memref<1x128xf32, #tpu.memory_space<vmem>>, %arg13: memref<1x128xf32, #tpu.memory_space<vmem>>, %arg14: memref<8x128xf32, #tpu.memory_space<vmem>>, %arg15: memref<8x4xf32, #tpu.memory_space<vmem>>, %arg16: memref<4x8x128xf32, #tpu.memory_space<vmem>>) attributes {dimension_semantics = [#tpu.dimension_semantics<parallel>], iteration_bounds = array<i64: 1>, scalar_prefetch = 0 : i64, scratch_operands = 1 : i64, tpu.core_type = #tpu.core_type<tc>, window_params = [{transform_indices = @transform_0, window_bounds = array<i64: 8, 4, 64>}, {transform_indices = @transform_1, window_bounds = array<i64: 8, 1>}, {pipeline_mode = #tpu.pipeline_mode<synchronous>, transform_indices = @transform_2, window_bounds = array<i64: 64, 192>}, {pipeline_mode = #tpu.pipeline_mode<synchronous>, transform_indices = @transform_3, window_bounds = array<i64: 64, 192>}, {pipeline_mode = #tpu.pipeline_mode<synchronous>, transform_indices = @transform_4, window_bounds = array<i64: 64, 192>}, {pipeline_mode = #tpu.pipeline_mode<synchronous>, transform_indices = @transform_5, window_bounds = array<i64: 64, 192>}, {pipeline_mode = #tpu.pipeline_mode<synchronous>, transform_indices = @transform_6, window_bounds = array<i64: 1, 192>}, {pipeline_mode = #tpu.pipeline_mode<synchronous>, transform_indices = @transform_7, window_bounds = array<i64: 1, 192>}, {pipeline_mode = #tpu.pipeline_mode<synchronous>, transform_indices = @transform_8, window_bounds = array<i64: 1, 192>}, {pipeline_mode = #tpu.pipeline_mode<synchronous>, transform_indices = @transform_9, window_bounds = array<i64: 1, 192>}, {pipeline_mode = #tpu.pipeline_mode<synchronous>, transform_indices = @transform_10, window_bounds = array<i64: 128, 128>}, {pipeline_mode = #tpu.pipeline_mode<synchronous>, transform_indices = @transform_11, window_bounds = array<i64: 1, 128>}, {pipeline_mode = #tpu.pipeline_mode<synchronous>, transform_indices = @transform_12, window_bounds = array<i64: 1, 128>}, {transform_indices = @transform_13, window_bounds = array<i64: 8, 128>}, {transform_indices = @transform_14, window_bounds = array<i64: 8, 4>}]} {
    %c0 = arith.constant 0 : index
    %c0_0 = arith.constant 0 : index
    %0 = vector.load %arg2[%c0, %c0_0] : memref<8x1xi32, #tpu.memory_space<vmem>>, vector<8x1xi32>
    %c0_1 = arith.constant 0 : index
    %c0_2 = arith.constant 0 : index
    %1 = vector.load %arg3[%c0_1, %c0_2] : memref<64x192xf32, #tpu.memory_space<vmem>>, vector<64x192xf32>
    %c0_3 = arith.constant 0 : index
    %c0_4 = arith.constant 0 : index
    %2 = vector.load %arg4[%c0_3, %c0_4] : memref<64x192xf32, #tpu.memory_space<vmem>>, vector<64x192xf32>
    %c0_5 = arith.constant 0 : index
    %c0_6 = arith.constant 0 : index
    %3 = vector.load %arg5[%c0_5, %c0_6] : memref<64x192xf32, #tpu.memory_space<vmem>>, vector<64x192xf32>
    %c0_7 = arith.constant 0 : index
    %c0_8 = arith.constant 0 : index
    %4 = vector.load %arg6[%c0_7, %c0_8] : memref<64x192xf32, #tpu.memory_space<vmem>>, vector<64x192xf32>
    %c0_9 = arith.constant 0 : index
    %c0_10 = arith.constant 0 : index
    %5 = vector.load %arg7[%c0_9, %c0_10] : memref<1x192xf32, #tpu.memory_space<vmem>>, vector<1x192xf32>
    %c0_11 = arith.constant 0 : index
    %c0_12 = arith.constant 0 : index
    %6 = vector.load %arg8[%c0_11, %c0_12] : memref<1x192xf32, #tpu.memory_space<vmem>>, vector<1x192xf32>
    %c0_13 = arith.constant 0 : index
    %c0_14 = arith.constant 0 : index
    %7 = vector.load %arg9[%c0_13, %c0_14] : memref<1x192xf32, #tpu.memory_space<vmem>>, vector<1x192xf32>
    %c0_15 = arith.constant 0 : index
    %c0_16 = arith.constant 0 : index
    %8 = vector.load %arg10[%c0_15, %c0_16] : memref<1x192xf32, #tpu.memory_space<vmem>>, vector<1x192xf32>
    %cst = arith.constant 0.000000e+00 : f32
    %9 = vector.broadcast %cst : f32 to vector<8x64xf32>
    %cst_17 = arith.constant 0.000000e+00 : f32
    %10 = vector.broadcast %cst_17 : f32 to vector<8x64xf32>
    %c0_18 = arith.constant 0 : index
    %c0_19 = arith.constant 0 : index
    %c0_20 = arith.constant 0 : index
    %11 = vector.load %arg1[%c0_18, %c0_19, %c0_20] : memref<8x4x64xf32, #tpu.memory_space<vmem>>, vector<8x1x64xf32>
    %12 = vector.shape_cast %11 : vector<8x1x64xf32> to vector<8x64xf32>
    %cst_21 = arith.constant dense<0.000000e+00> : vector<8x192xf32>
    %13 = tpu.matmul %12, %1, %cst_21 {dimension_numbers = #tpu.dot_dimension_numbers<[1], [0], [0], [1], [0, 0, 1, 1], [], []>} : vector<8x64xf32>, vector<64x192xf32>, vector<8x192xf32> -> vector<8x192xf32>
    %14 = vector.broadcast %5 : vector<1x192xf32> to vector<8x192xf32>
    %15 = arith.addf %13, %14 : vector<8x192xf32>
    %c0_22 = arith.constant 0 : index
    %c3 = arith.constant 3 : index
    %c0_23 = arith.constant 0 : index
    %16 = vector.load %arg1[%c0_22, %c3, %c0_23] : memref<8x4x64xf32, #tpu.memory_space<vmem>>, vector<8x1x64xf32>
    %17 = vector.shape_cast %16 : vector<8x1x64xf32> to vector<8x64xf32>
    %cst_24 = arith.constant dense<0.000000e+00> : vector<8x192xf32>
    %18 = tpu.matmul %17, %2, %cst_24 {dimension_numbers = #tpu.dot_dimension_numbers<[1], [0], [0], [1], [0, 0, 1, 1], [], []>} : vector<8x64xf32>, vector<64x192xf32>, vector<8x192xf32> -> vector<8x192xf32>
    %19 = vector.broadcast %6 : vector<1x192xf32> to vector<8x192xf32>
    %20 = arith.addf %18, %19 : vector<8x192xf32>
    %cst_25 = arith.constant dense<0.000000e+00> : vector<8x192xf32>
    %21 = tpu.matmul %9, %3, %cst_25 {dimension_numbers = #tpu.dot_dimension_numbers<[1], [0], [0], [1], [0, 0, 1, 1], [], []>} : vector<8x64xf32>, vector<64x192xf32>, vector<8x192xf32> -> vector<8x192xf32>
    %22 = vector.broadcast %7 : vector<1x192xf32> to vector<8x192xf32>
    %23 = arith.addf %21, %22 : vector<8x192xf32>
    %24 = vector.extract_strided_slice %15 {offsets = [0, 0], sizes = [8, 64], strides = [1, 1]} : vector<8x192xf32> to vector<8x64xf32>
    %25 = vector.extract_strided_slice %23 {offsets = [0, 0], sizes = [8, 64], strides = [1, 1]} : vector<8x192xf32> to vector<8x64xf32>
    %26 = arith.addf %24, %25 : vector<8x64xf32>
    %27 = arith.negf %26 : vector<8x64xf32>
    %28 = math.exp %27 : vector<8x64xf32>
    %cst_26 = arith.constant 1.000000e+00 : f32
    %29 = vector.broadcast %cst_26 : f32 to vector<8x64xf32>
    %30 = arith.addf %29, %28 : vector<8x64xf32>
    %31 = arith.divf %29, %30 : vector<8x64xf32>
    %32 = vector.extract_strided_slice %15 {offsets = [0, 64], sizes = [8, 64], strides = [1, 1]} : vector<8x192xf32> to vector<8x64xf32>
    %33 = vector.extract_strided_slice %23 {offsets = [0, 64], sizes = [8, 64], strides = [1, 1]} : vector<8x192xf32> to vector<8x64xf32>
    %34 = arith.addf %32, %33 : vector<8x64xf32>
    %35 = arith.negf %34 : vector<8x64xf32>
    %36 = math.exp %35 : vector<8x64xf32>
    %cst_27 = arith.constant 1.000000e+00 : f32
    %37 = vector.broadcast %cst_27 : f32 to vector<8x64xf32>
    %38 = arith.addf %37, %36 : vector<8x64xf32>
    %39 = arith.divf %37, %38 : vector<8x64xf32>
    %40 = vector.extract_strided_slice %15 {offsets = [0, 128], sizes = [8, 64], strides = [1, 1]} : vector<8x192xf32> to vector<8x64xf32>
    %41 = vector.extract_strided_slice %23 {offsets = [0, 128], sizes = [8, 64], strides = [1, 1]} : vector<8x192xf32> to vector<8x64xf32>
    %42 = arith.mulf %31, %41 : vector<8x64xf32>
    %43 = arith.addf %40, %42 : vector<8x64xf32>
    %44 = math.tanh %43 : vector<8x64xf32>
    %cst_28 = arith.constant 1.000000e+00 : f32
    %45 = vector.broadcast %cst_28 : f32 to vector<8x64xf32>
    %46 = arith.subf %45, %39 : vector<8x64xf32>
    %47 = arith.mulf %46, %44 : vector<8x64xf32>
    %48 = arith.mulf %39, %9 : vector<8x64xf32>
    %49 = arith.addf %47, %48 : vector<8x64xf32>
    %cst_29 = arith.constant dense<0.000000e+00> : vector<8x192xf32>
    %50 = tpu.matmul %10, %4, %cst_29 {dimension_numbers = #tpu.dot_dimension_numbers<[1], [0], [0], [1], [0, 0, 1, 1], [], []>} : vector<8x64xf32>, vector<64x192xf32>, vector<8x192xf32> -> vector<8x192xf32>
    %51 = vector.broadcast %8 : vector<1x192xf32> to vector<8x192xf32>
    %52 = arith.addf %50, %51 : vector<8x192xf32>
    %53 = vector.extract_strided_slice %20 {offsets = [0, 0], sizes = [8, 64], strides = [1, 1]} : vector<8x192xf32> to vector<8x64xf32>
    %54 = vector.extract_strided_slice %52 {offsets = [0, 0], sizes = [8, 64], strides = [1, 1]} : vector<8x192xf32> to vector<8x64xf32>
    %55 = arith.addf %53, %54 : vector<8x64xf32>
    %56 = arith.negf %55 : vector<8x64xf32>
    %57 = math.exp %56 : vector<8x64xf32>
    %cst_30 = arith.constant 1.000000e+00 : f32
    %58 = vector.broadcast %cst_30 : f32 to vector<8x64xf32>
    %59 = arith.addf %58, %57 : vector<8x64xf32>
    %60 = arith.divf %58, %59 : vector<8x64xf32>
    %61 = vector.extract_strided_slice %20 {offsets = [0, 64], sizes = [8, 64], strides = [1, 1]} : vector<8x192xf32> to vector<8x64xf32>
    %62 = vector.extract_strided_slice %52 {offsets = [0, 64], sizes = [8, 64], strides = [1, 1]} : vector<8x192xf32> to vector<8x64xf32>
    %63 = arith.addf %61, %62 : vector<8x64xf32>
    %64 = arith.negf %63 : vector<8x64xf32>
    %65 = math.exp %64 : vector<8x64xf32>
    %cst_31 = arith.constant 1.000000e+00 : f32
    %66 = vector.broadcast %cst_31 : f32 to vector<8x64xf32>
    %67 = arith.addf %66, %65 : vector<8x64xf32>
    %68 = arith.divf %66, %67 : vector<8x64xf32>
    %69 = vector.extract_strided_slice %20 {offsets = [0, 128], sizes = [8, 64], strides = [1, 1]} : vector<8x192xf32> to vector<8x64xf32>
    %70 = vector.extract_strided_slice %52 {offsets = [0, 128], sizes = [8, 64], strides = [1, 1]} : vector<8x192xf32> to vector<8x64xf32>
    %71 = arith.mulf %60, %70 : vector<8x64xf32>
    %72 = arith.addf %69, %71 : vector<8x64xf32>
    %73 = math.tanh %72 : vector<8x64xf32>
    %cst_32 = arith.constant 1.000000e+00 : f32
    %74 = vector.broadcast %cst_32 : f32 to vector<8x64xf32>
    %75 = arith.subf %74, %68 : vector<8x64xf32>
    %76 = arith.mulf %75, %73 : vector<8x64xf32>
    %77 = arith.mulf %68, %10 : vector<8x64xf32>
    %78 = arith.addf %76, %77 : vector<8x64xf32>
    %c0_i32 = arith.constant 0 : i32
    %79 = vector.broadcast %c0_i32 : i32 to vector<8x1xi32>
    %80 = arith.cmpi sgt, %0, %79 : vector<8x1xi32>
    %c3_i32 = arith.constant 3 : i32
    %81 = vector.broadcast %c3_i32 : i32 to vector<8x1xi32>
    %82 = arith.cmpi sgt, %0, %81 : vector<8x1xi32>
    %83 = vector.shape_cast %80 : vector<8x1xi1> to vector<8x1xi1>
    %84 = vector.broadcast %83 : vector<8x1xi1> to vector<8x64xi1>
    %85 = arith.select %84, %49, %9 : vector<8x64xi1>, vector<8x64xf32>
    %86 = vector.shape_cast %82 : vector<8x1xi1> to vector<8x1xi1>
    %87 = vector.broadcast %86 : vector<8x1xi1> to vector<8x64xi1>
    %88 = arith.select %87, %78, %10 : vector<8x64xi1>, vector<8x64xf32>
    %cst_33 = arith.constant 0.000000e+00 : f32
    %89 = vector.shape_cast %80 : vector<8x1xi1> to vector<8x1xi1>
    %90 = vector.broadcast %89 : vector<8x1xi1> to vector<8x64xi1>
    %91 = vector.broadcast %cst_33 : f32 to vector<8x64xf32>
    %92 = arith.select %90, %49, %91 : vector<8x64xi1>, vector<8x64xf32>
    %c0_34 = arith.constant 0 : index
    %c0_35 = arith.constant 0 : index
    %c0_36 = arith.constant 0 : index
    %93 = vector.load %arg16[%c0_34, %c0_35, %c0_36] : memref<4x8x128xf32, #tpu.memory_space<vmem>>, vector<1x8x64xf32>
    %94 = vector.shape_cast %93 : vector<1x8x64xf32> to vector<8x64xf32>
    %95 = vector.shape_cast %92 : vector<8x64xf32> to vector<1x8x64xf32>
    tpu.vector_store %arg16[%c0_34, %c0_35, %c0_36], %95 {strides = array<i32>} : memref<4x8x128xf32, #tpu.memory_space<vmem>>, vector<1x8x64xf32>,
    %cst_37 = arith.constant 0.000000e+00 : f32
    %96 = vector.shape_cast %82 : vector<8x1xi1> to vector<8x1xi1>
    %97 = vector.broadcast %96 : vector<8x1xi1> to vector<8x64xi1>
    %98 = vector.broadcast %cst_37 : f32 to vector<8x64xf32>
    %99 = arith.select %97, %78, %98 : vector<8x64xi1>, vector<8x64xf32>
    %c3_38 = arith.constant 3 : index
    %c0_39 = arith.constant 0 : index
    %c64 = arith.constant 64 : index
    %100 = vector.load %arg16[%c3_38, %c0_39, %c64] : memref<4x8x128xf32, #tpu.memory_space<vmem>>, vector<1x8x64xf32>
    %101 = vector.shape_cast %100 : vector<1x8x64xf32> to vector<8x64xf32>
    %102 = vector.shape_cast %99 : vector<8x64xf32> to vector<1x8x64xf32>
    tpu.vector_store %arg16[%c3_38, %c0_39, %c64], %102 {strides = array<i32>} : memref<4x8x128xf32, #tpu.memory_space<vmem>>, vector<1x8x64xf32>,
    %c0_40 = arith.constant 0 : index
    %c1 = arith.constant 1 : index
    %c0_41 = arith.constant 0 : index
    %103 = vector.load %arg1[%c0_40, %c1, %c0_41] : memref<8x4x64xf32, #tpu.memory_space<vmem>>, vector<8x1x64xf32>
    %104 = vector.shape_cast %103 : vector<8x1x64xf32> to vector<8x64xf32>
    %cst_42 = arith.constant dense<0.000000e+00> : vector<8x192xf32>
    %105 = tpu.matmul %104, %1, %cst_42 {dimension_numbers = #tpu.dot_dimension_numbers<[1], [0], [0], [1], [0, 0, 1, 1], [], []>} : vector<8x64xf32>, vector<64x192xf32>, vector<8x192xf32> -> vector<8x192xf32>
    %106 = vector.broadcast %5 : vector<1x192xf32> to vector<8x192xf32>
    %107 = arith.addf %105, %106 : vector<8x192xf32>
    %c0_43 = arith.constant 0 : index
    %c2 = arith.constant 2 : index
    %c0_44 = arith.constant 0 : index
    %108 = vector.load %arg1[%c0_43, %c2, %c0_44] : memref<8x4x64xf32, #tpu.memory_space<vmem>>, vector<8x1x64xf32>
    %109 = vector.shape_cast %108 : vector<8x1x64xf32> to vector<8x64xf32>
    %cst_45 = arith.constant dense<0.000000e+00> : vector<8x192xf32>
    %110 = tpu.matmul %109, %2, %cst_45 {dimension_numbers = #tpu.dot_dimension_numbers<[1], [0], [0], [1], [0, 0, 1, 1], [], []>} : vector<8x64xf32>, vector<64x192xf32>, vector<8x192xf32> -> vector<8x192xf32>
    %111 = vector.broadcast %6 : vector<1x192xf32> to vector<8x192xf32>
    %112 = arith.addf %110, %111 : vector<8x192xf32>
    %cst_46 = arith.constant dense<0.000000e+00> : vector<8x192xf32>
    %113 = tpu.matmul %85, %3, %cst_46 {dimension_numbers = #tpu.dot_dimension_numbers<[1], [0], [0], [1], [0, 0, 1, 1], [], []>} : vector<8x64xf32>, vector<64x192xf32>, vector<8x192xf32> -> vector<8x192xf32>
    %114 = vector.broadcast %7 : vector<1x192xf32> to vector<8x192xf32>
    %115 = arith.addf %113, %114 : vector<8x192xf32>
    %116 = vector.extract_strided_slice %107 {offsets = [0, 0], sizes = [8, 64], strides = [1, 1]} : vector<8x192xf32> to vector<8x64xf32>
    %117 = vector.extract_strided_slice %115 {offsets = [0, 0], sizes = [8, 64], strides = [1, 1]} : vector<8x192xf32> to vector<8x64xf32>
    %118 = arith.addf %116, %117 : vector<8x64xf32>
    %119 = arith.negf %118 : vector<8x64xf32>
    %120 = math.exp %119 : vector<8x64xf32>
    %cst_47 = arith.constant 1.000000e+00 : f32
    %121 = vector.broadcast %cst_47 : f32 to vector<8x64xf32>
    %122 = arith.addf %121, %120 : vector<8x64xf32>
    %123 = arith.divf %121, %122 : vector<8x64xf32>
    %124 = vector.extract_strided_slice %107 {offsets = [0, 64], sizes = [8, 64], strides = [1, 1]} : vector<8x192xf32> to vector<8x64xf32>
    %125 = vector.extract_strided_slice %115 {offsets = [0, 64], sizes = [8, 64], strides = [1, 1]} : vector<8x192xf32> to vector<8x64xf32>
    %126 = arith.addf %124, %125 : vector<8x64xf32>
    %127 = arith.negf %126 : vector<8x64xf32>
    %128 = math.exp %127 : vector<8x64xf32>
    %cst_48 = arith.constant 1.000000e+00 : f32
    %129 = vector.broadcast %cst_48 : f32 to vector<8x64xf32>
    %130 = arith.addf %129, %128 : vector<8x64xf32>
    %131 = arith.divf %129, %130 : vector<8x64xf32>
    %132 = vector.extract_strided_slice %107 {offsets = [0, 128], sizes = [8, 64], strides = [1, 1]} : vector<8x192xf32> to vector<8x64xf32>
    %133 = vector.extract_strided_slice %115 {offsets = [0, 128], sizes = [8, 64], strides = [1, 1]} : vector<8x192xf32> to vector<8x64xf32>
    %134 = arith.mulf %123, %133 : vector<8x64xf32>
    %135 = arith.addf %132, %134 : vector<8x64xf32>
    %136 = math.tanh %135 : vector<8x64xf32>
    %cst_49 = arith.constant 1.000000e+00 : f32
    %137 = vector.broadcast %cst_49 : f32 to vector<8x64xf32>
    %138 = arith.subf %137, %131 : vector<8x64xf32>
    %139 = arith.mulf %138, %136 : vector<8x64xf32>
    %140 = arith.mulf %131, %85 : vector<8x64xf32>
    %141 = arith.addf %139, %140 : vector<8x64xf32>
    %cst_50 = arith.constant dense<0.000000e+00> : vector<8x192xf32>
    %142 = tpu.matmul %88, %4, %cst_50 {dimension_numbers = #tpu.dot_dimension_numbers<[1], [0], [0], [1], [0, 0, 1, 1], [], []>} : vector<8x64xf32>, vector<64x192xf32>, vector<8x192xf32> -> vector<8x192xf32>
    %143 = vector.broadcast %8 : vector<1x192xf32> to vector<8x192xf32>
    %144 = arith.addf %142, %143 : vector<8x192xf32>
    %145 = vector.extract_strided_slice %112 {offsets = [0, 0], sizes = [8, 64], strides = [1, 1]} : vector<8x192xf32> to vector<8x64xf32>
    %146 = vector.extract_strided_slice %144 {offsets = [0, 0], sizes = [8, 64], strides = [1, 1]} : vector<8x192xf32> to vector<8x64xf32>
    %147 = arith.addf %145, %146 : vector<8x64xf32>
    %148 = arith.negf %147 : vector<8x64xf32>
    %149 = math.exp %148 : vector<8x64xf32>
    %cst_51 = arith.constant 1.000000e+00 : f32
    %150 = vector.broadcast %cst_51 : f32 to vector<8x64xf32>
    %151 = arith.addf %150, %149 : vector<8x64xf32>
    %152 = arith.divf %150, %151 : vector<8x64xf32>
    %153 = vector.extract_strided_slice %112 {offsets = [0, 64], sizes = [8, 64], strides = [1, 1]} : vector<8x192xf32> to vector<8x64xf32>
    %154 = vector.extract_strided_slice %144 {offsets = [0, 64], sizes = [8, 64], strides = [1, 1]} : vector<8x192xf32> to vector<8x64xf32>
    %155 = arith.addf %153, %154 : vector<8x64xf32>
    %156 = arith.negf %155 : vector<8x64xf32>
    %157 = math.exp %156 : vector<8x64xf32>
    %cst_52 = arith.constant 1.000000e+00 : f32
    %158 = vector.broadcast %cst_52 : f32 to vector<8x64xf32>
    %159 = arith.addf %158, %157 : vector<8x64xf32>
    %160 = arith.divf %158, %159 : vector<8x64xf32>
    %161 = vector.extract_strided_slice %112 {offsets = [0, 128], sizes = [8, 64], strides = [1, 1]} : vector<8x192xf32> to vector<8x64xf32>
    %162 = vector.extract_strided_slice %144 {offsets = [0, 128], sizes = [8, 64], strides = [1, 1]} : vector<8x192xf32> to vector<8x64xf32>
    %163 = arith.mulf %152, %162 : vector<8x64xf32>
    %164 = arith.addf %161, %163 : vector<8x64xf32>
    %165 = math.tanh %164 : vector<8x64xf32>
    %cst_53 = arith.constant 1.000000e+00 : f32
    %166 = vector.broadcast %cst_53 : f32 to vector<8x64xf32>
    %167 = arith.subf %166, %160 : vector<8x64xf32>
    %168 = arith.mulf %167, %165 : vector<8x64xf32>
    %169 = arith.mulf %160, %88 : vector<8x64xf32>
    %170 = arith.addf %168, %169 : vector<8x64xf32>
    %c1_i32 = arith.constant 1 : i32
    %171 = vector.broadcast %c1_i32 : i32 to vector<8x1xi32>
    %172 = arith.cmpi sgt, %0, %171 : vector<8x1xi32>
    %c2_i32 = arith.constant 2 : i32
    %173 = vector.broadcast %c2_i32 : i32 to vector<8x1xi32>
    %174 = arith.cmpi sgt, %0, %173 : vector<8x1xi32>
    %175 = vector.shape_cast %172 : vector<8x1xi1> to vector<8x1xi1>
    %176 = vector.broadcast %175 : vector<8x1xi1> to vector<8x64xi1>
    %177 = arith.select %176, %141, %85 : vector<8x64xi1>, vector<8x64xf32>
    %178 = vector.shape_cast %174 : vector<8x1xi1> to vector<8x1xi1>
    %179 = vector.broadcast %178 : vector<8x1xi1> to vector<8x64xi1>
    %180 = arith.select %179, %170, %88 : vector<8x64xi1>, vector<8x64xf32>
    %cst_54 = arith.constant 0.000000e+00 : f32
    %181 = vector.shape_cast %172 : vector<8x1xi1> to vector<8x1xi1>
    %182 = vector.broadcast %181 : vector<8x1xi1> to vector<8x64xi1>
    %183 = vector.broadcast %cst_54 : f32 to vector<8x64xf32>
    %184 = arith.select %182, %141, %183 : vector<8x64xi1>, vector<8x64xf32>
    %c1_55 = arith.constant 1 : index
    %c0_56 = arith.constant 0 : index
    %c0_57 = arith.constant 0 : index
    %185 = vector.load %arg16[%c1_55, %c0_56, %c0_57] : memref<4x8x128xf32, #tpu.memory_space<vmem>>, vector<1x8x64xf32>
    %186 = vector.shape_cast %185 : vector<1x8x64xf32> to vector<8x64xf32>
    %187 = vector.shape_cast %184 : vector<8x64xf32> to vector<1x8x64xf32>
    tpu.vector_store %arg16[%c1_55, %c0_56, %c0_57], %187 {strides = array<i32>} : memref<4x8x128xf32, #tpu.memory_space<vmem>>, vector<1x8x64xf32>,
    %cst_58 = arith.constant 0.000000e+00 : f32
    %188 = vector.shape_cast %174 : vector<8x1xi1> to vector<8x1xi1>
    %189 = vector.broadcast %188 : vector<8x1xi1> to vector<8x64xi1>
    %190 = vector.broadcast %cst_58 : f32 to vector<8x64xf32>
    %191 = arith.select %189, %170, %190 : vector<8x64xi1>, vector<8x64xf32>
    %c2_59 = arith.constant 2 : index
    %c0_60 = arith.constant 0 : index
    %c64_61 = arith.constant 64 : index
    %192 = vector.load %arg16[%c2_59, %c0_60, %c64_61] : memref<4x8x128xf32, #tpu.memory_space<vmem>>, vector<1x8x64xf32>
    %193 = vector.shape_cast %192 : vector<1x8x64xf32> to vector<8x64xf32>
    %194 = vector.shape_cast %191 : vector<8x64xf32> to vector<1x8x64xf32>
    tpu.vector_store %arg16[%c2_59, %c0_60, %c64_61], %194 {strides = array<i32>} : memref<4x8x128xf32, #tpu.memory_space<vmem>>, vector<1x8x64xf32>,
    %c0_62 = arith.constant 0 : index
    %c2_63 = arith.constant 2 : index
    %c0_64 = arith.constant 0 : index
    %195 = vector.load %arg1[%c0_62, %c2_63, %c0_64] : memref<8x4x64xf32, #tpu.memory_space<vmem>>, vector<8x1x64xf32>
    %196 = vector.shape_cast %195 : vector<8x1x64xf32> to vector<8x64xf32>
    %cst_65 = arith.constant dense<0.000000e+00> : vector<8x192xf32>
    %197 = tpu.matmul %196, %1, %cst_65 {dimension_numbers = #tpu.dot_dimension_numbers<[1], [0], [0], [1], [0, 0, 1, 1], [], []>} : vector<8x64xf32>, vector<64x192xf32>, vector<8x192xf32> -> vector<8x192xf32>
    %198 = vector.broadcast %5 : vector<1x192xf32> to vector<8x192xf32>
    %199 = arith.addf %197, %198 : vector<8x192xf32>
    %c0_66 = arith.constant 0 : index
    %c1_67 = arith.constant 1 : index
    %c0_68 = arith.constant 0 : index
    %200 = vector.load %arg1[%c0_66, %c1_67, %c0_68] : memref<8x4x64xf32, #tpu.memory_space<vmem>>, vector<8x1x64xf32>
    %201 = vector.shape_cast %200 : vector<8x1x64xf32> to vector<8x64xf32>
    %cst_69 = arith.constant dense<0.000000e+00> : vector<8x192xf32>
    %202 = tpu.matmul %201, %2, %cst_69 {dimension_numbers = #tpu.dot_dimension_numbers<[1], [0], [0], [1], [0, 0, 1, 1], [], []>} : vector<8x64xf32>, vector<64x192xf32>, vector<8x192xf32> -> vector<8x192xf32>
    %203 = vector.broadcast %6 : vector<1x192xf32> to vector<8x192xf32>
    %204 = arith.addf %202, %203 : vector<8x192xf32>
    %cst_70 = arith.constant dense<0.000000e+00> : vector<8x192xf32>
    %205 = tpu.matmul %177, %3, %cst_70 {dimension_numbers = #tpu.dot_dimension_numbers<[1], [0], [0], [1], [0, 0, 1, 1], [], []>} : vector<8x64xf32>, vector<64x192xf32>, vector<8x192xf32> -> vector<8x192xf32>
    %206 = vector.broadcast %7 : vector<1x192xf32> to vector<8x192xf32>
    %207 = arith.addf %205, %206 : vector<8x192xf32>
    %208 = vector.extract_strided_slice %199 {offsets = [0, 0], sizes = [8, 64], strides = [1, 1]} : vector<8x192xf32> to vector<8x64xf32>
    %209 = vector.extract_strided_slice %207 {offsets = [0, 0], sizes = [8, 64], strides = [1, 1]} : vector<8x192xf32> to vector<8x64xf32>
    %210 = arith.addf %208, %209 : vector<8x64xf32>
    %211 = arith.negf %210 : vector<8x64xf32>
    %212 = math.exp %211 : vector<8x64xf32>
    %cst_71 = arith.constant 1.000000e+00 : f32
    %213 = vector.broadcast %cst_71 : f32 to vector<8x64xf32>
    %214 = arith.addf %213, %212 : vector<8x64xf32>
    %215 = arith.divf %213, %214 : vector<8x64xf32>
    %216 = vector.extract_strided_slice %199 {offsets = [0, 64], sizes = [8, 64], strides = [1, 1]} : vector<8x192xf32> to vector<8x64xf32>
    %217 = vector.extract_strided_slice %207 {offsets = [0, 64], sizes = [8, 64], strides = [1, 1]} : vector<8x192xf32> to vector<8x64xf32>
    %218 = arith.addf %216, %217 : vector<8x64xf32>
    %219 = arith.negf %218 : vector<8x64xf32>
    %220 = math.exp %219 : vector<8x64xf32>
    %cst_72 = arith.constant 1.000000e+00 : f32
    %221 = vector.broadcast %cst_72 : f32 to vector<8x64xf32>
    %222 = arith.addf %221, %220 : vector<8x64xf32>
    %223 = arith.divf %221, %222 : vector<8x64xf32>
    %224 = vector.extract_strided_slice %199 {offsets = [0, 128], sizes = [8, 64], strides = [1, 1]} : vector<8x192xf32> to vector<8x64xf32>
    %225 = vector.extract_strided_slice %207 {offsets = [0, 128], sizes = [8, 64], strides = [1, 1]} : vector<8x192xf32> to vector<8x64xf32>
    %226 = arith.mulf %215, %225 : vector<8x64xf32>
    %227 = arith.addf %224, %226 : vector<8x64xf32>
    %228 = math.tanh %227 : vector<8x64xf32>
    %cst_73 = arith.constant 1.000000e+00 : f32
    %229 = vector.broadcast %cst_73 : f32 to vector<8x64xf32>
    %230 = arith.subf %229, %223 : vector<8x64xf32>
    %231 = arith.mulf %230, %228 : vector<8x64xf32>
    %232 = arith.mulf %223, %177 : vector<8x64xf32>
    %233 = arith.addf %231, %232 : vector<8x64xf32>
    %cst_74 = arith.constant dense<0.000000e+00> : vector<8x192xf32>
    %234 = tpu.matmul %180, %4, %cst_74 {dimension_numbers = #tpu.dot_dimension_numbers<[1], [0], [0], [1], [0, 0, 1, 1], [], []>} : vector<8x64xf32>, vector<64x192xf32>, vector<8x192xf32> -> vector<8x192xf32>
    %235 = vector.broadcast %8 : vector<1x192xf32> to vector<8x192xf32>
    %236 = arith.addf %234, %235 : vector<8x192xf32>
    %237 = vector.extract_strided_slice %204 {offsets = [0, 0], sizes = [8, 64], strides = [1, 1]} : vector<8x192xf32> to vector<8x64xf32>
    %238 = vector.extract_strided_slice %236 {offsets = [0, 0], sizes = [8, 64], strides = [1, 1]} : vector<8x192xf32> to vector<8x64xf32>
    %239 = arith.addf %237, %238 : vector<8x64xf32>
    %240 = arith.negf %239 : vector<8x64xf32>
    %241 = math.exp %240 : vector<8x64xf32>
    %cst_75 = arith.constant 1.000000e+00 : f32
    %242 = vector.broadcast %cst_75 : f32 to vector<8x64xf32>
    %243 = arith.addf %242, %241 : vector<8x64xf32>
    %244 = arith.divf %242, %243 : vector<8x64xf32>
    %245 = vector.extract_strided_slice %204 {offsets = [0, 64], sizes = [8, 64], strides = [1, 1]} : vector<8x192xf32> to vector<8x64xf32>
    %246 = vector.extract_strided_slice %236 {offsets = [0, 64], sizes = [8, 64], strides = [1, 1]} : vector<8x192xf32> to vector<8x64xf32>
    %247 = arith.addf %245, %246 : vector<8x64xf32>
    %248 = arith.negf %247 : vector<8x64xf32>
    %249 = math.exp %248 : vector<8x64xf32>
    %cst_76 = arith.constant 1.000000e+00 : f32
    %250 = vector.broadcast %cst_76 : f32 to vector<8x64xf32>
    %251 = arith.addf %250, %249 : vector<8x64xf32>
    %252 = arith.divf %250, %251 : vector<8x64xf32>
    %253 = vector.extract_strided_slice %204 {offsets = [0, 128], sizes = [8, 64], strides = [1, 1]} : vector<8x192xf32> to vector<8x64xf32>
    %254 = vector.extract_strided_slice %236 {offsets = [0, 128], sizes = [8, 64], strides = [1, 1]} : vector<8x192xf32> to vector<8x64xf32>
    %255 = arith.mulf %244, %254 : vector<8x64xf32>
    %256 = arith.addf %253, %255 : vector<8x64xf32>
    %257 = math.tanh %256 : vector<8x64xf32>
    %cst_77 = arith.constant 1.000000e+00 : f32
    %258 = vector.broadcast %cst_77 : f32 to vector<8x64xf32>
    %259 = arith.subf %258, %252 : vector<8x64xf32>
    %260 = arith.mulf %259, %257 : vector<8x64xf32>
    %261 = arith.mulf %252, %180 : vector<8x64xf32>
    %262 = arith.addf %260, %261 : vector<8x64xf32>
    %c2_i32_78 = arith.constant 2 : i32
    %263 = vector.broadcast %c2_i32_78 : i32 to vector<8x1xi32>
    %264 = arith.cmpi sgt, %0, %263 : vector<8x1xi32>
    %c1_i32_79 = arith.constant 1 : i32
    %265 = vector.broadcast %c1_i32_79 : i32 to vector<8x1xi32>
    %266 = arith.cmpi sgt, %0, %265 : vector<8x1xi32>
    %267 = vector.shape_cast %264 : vector<8x1xi1> to vector<8x1xi1>
    %268 = vector.broadcast %267 : vector<8x1xi1> to vector<8x64xi1>
    %269 = arith.select %268, %233, %177 : vector<8x64xi1>, vector<8x64xf32>
    %270 = vector.shape_cast %266 : vector<8x1xi1> to vector<8x1xi1>
    %271 = vector.broadcast %270 : vector<8x1xi1> to vector<8x64xi1>
    %272 = arith.select %271, %262, %180 : vector<8x64xi1>, vector<8x64xf32>
    %cst_80 = arith.constant 0.000000e+00 : f32
    %273 = vector.shape_cast %264 : vector<8x1xi1> to vector<8x1xi1>
    %274 = vector.broadcast %273 : vector<8x1xi1> to vector<8x64xi1>
    %275 = vector.broadcast %cst_80 : f32 to vector<8x64xf32>
    %276 = arith.select %274, %233, %275 : vector<8x64xi1>, vector<8x64xf32>
    %c2_81 = arith.constant 2 : index
    %c0_82 = arith.constant 0 : index
    %c0_83 = arith.constant 0 : index
    %277 = vector.load %arg16[%c2_81, %c0_82, %c0_83] : memref<4x8x128xf32, #tpu.memory_space<vmem>>, vector<1x8x64xf32>
    %278 = vector.shape_cast %277 : vector<1x8x64xf32> to vector<8x64xf32>
    %279 = vector.shape_cast %276 : vector<8x64xf32> to vector<1x8x64xf32>
    tpu.vector_store %arg16[%c2_81, %c0_82, %c0_83], %279 {strides = array<i32>} : memref<4x8x128xf32, #tpu.memory_space<vmem>>, vector<1x8x64xf32>,
    %cst_84 = arith.constant 0.000000e+00 : f32
    %280 = vector.shape_cast %266 : vector<8x1xi1> to vector<8x1xi1>
    %281 = vector.broadcast %280 : vector<8x1xi1> to vector<8x64xi1>
    %282 = vector.broadcast %cst_84 : f32 to vector<8x64xf32>
    %283 = arith.select %281, %262, %282 : vector<8x64xi1>, vector<8x64xf32>
    %c1_85 = arith.constant 1 : index
    %c0_86 = arith.constant 0 : index
    %c64_87 = arith.constant 64 : index
    %284 = vector.load %arg16[%c1_85, %c0_86, %c64_87] : memref<4x8x128xf32, #tpu.memory_space<vmem>>, vector<1x8x64xf32>
    %285 = vector.shape_cast %284 : vector<1x8x64xf32> to vector<8x64xf32>
    %286 = vector.shape_cast %283 : vector<8x64xf32> to vector<1x8x64xf32>
    tpu.vector_store %arg16[%c1_85, %c0_86, %c64_87], %286 {strides = array<i32>} : memref<4x8x128xf32, #tpu.memory_space<vmem>>, vector<1x8x64xf32>,
    %c0_88 = arith.constant 0 : index
    %c3_89 = arith.constant 3 : index
    %c0_90 = arith.constant 0 : index
    %287 = vector.load %arg1[%c0_88, %c3_89, %c0_90] : memref<8x4x64xf32, #tpu.memory_space<vmem>>, vector<8x1x64xf32>
    %288 = vector.shape_cast %287 : vector<8x1x64xf32> to vector<8x64xf32>
    %cst_91 = arith.constant dense<0.000000e+00> : vector<8x192xf32>
    %289 = tpu.matmul %288, %1, %cst_91 {dimension_numbers = #tpu.dot_dimension_numbers<[1], [0], [0], [1], [0, 0, 1, 1], [], []>} : vector<8x64xf32>, vector<64x192xf32>, vector<8x192xf32> -> vector<8x192xf32>
    %290 = vector.broadcast %5 : vector<1x192xf32> to vector<8x192xf32>
    %291 = arith.addf %289, %290 : vector<8x192xf32>
    %c0_92 = arith.constant 0 : index
    %c0_93 = arith.constant 0 : index
    %c0_94 = arith.constant 0 : index
    %292 = vector.load %arg1[%c0_92, %c0_93, %c0_94] : memref<8x4x64xf32, #tpu.memory_space<vmem>>, vector<8x1x64xf32>
    %293 = vector.shape_cast %292 : vector<8x1x64xf32> to vector<8x64xf32>
    %cst_95 = arith.constant dense<0.000000e+00> : vector<8x192xf32>
    %294 = tpu.matmul %293, %2, %cst_95 {dimension_numbers = #tpu.dot_dimension_numbers<[1], [0], [0], [1], [0, 0, 1, 1], [], []>} : vector<8x64xf32>, vector<64x192xf32>, vector<8x192xf32> -> vector<8x192xf32>
    %295 = vector.broadcast %6 : vector<1x192xf32> to vector<8x192xf32>
    %296 = arith.addf %294, %295 : vector<8x192xf32>
    %cst_96 = arith.constant dense<0.000000e+00> : vector<8x192xf32>
    %297 = tpu.matmul %269, %3, %cst_96 {dimension_numbers = #tpu.dot_dimension_numbers<[1], [0], [0], [1], [0, 0, 1, 1], [], []>} : vector<8x64xf32>, vector<64x192xf32>, vector<8x192xf32> -> vector<8x192xf32>
    %298 = vector.broadcast %7 : vector<1x192xf32> to vector<8x192xf32>
    %299 = arith.addf %297, %298 : vector<8x192xf32>
    %300 = vector.extract_strided_slice %291 {offsets = [0, 0], sizes = [8, 64], strides = [1, 1]} : vector<8x192xf32> to vector<8x64xf32>
    %301 = vector.extract_strided_slice %299 {offsets = [0, 0], sizes = [8, 64], strides = [1, 1]} : vector<8x192xf32> to vector<8x64xf32>
    %302 = arith.addf %300, %301 : vector<8x64xf32>
    %303 = arith.negf %302 : vector<8x64xf32>
    %304 = math.exp %303 : vector<8x64xf32>
    %cst_97 = arith.constant 1.000000e+00 : f32
    %305 = vector.broadcast %cst_97 : f32 to vector<8x64xf32>
    %306 = arith.addf %305, %304 : vector<8x64xf32>
    %307 = arith.divf %305, %306 : vector<8x64xf32>
    %308 = vector.extract_strided_slice %291 {offsets = [0, 64], sizes = [8, 64], strides = [1, 1]} : vector<8x192xf32> to vector<8x64xf32>
    %309 = vector.extract_strided_slice %299 {offsets = [0, 64], sizes = [8, 64], strides = [1, 1]} : vector<8x192xf32> to vector<8x64xf32>
    %310 = arith.addf %308, %309 : vector<8x64xf32>
    %311 = arith.negf %310 : vector<8x64xf32>
    %312 = math.exp %311 : vector<8x64xf32>
    %cst_98 = arith.constant 1.000000e+00 : f32
    %313 = vector.broadcast %cst_98 : f32 to vector<8x64xf32>
    %314 = arith.addf %313, %312 : vector<8x64xf32>
    %315 = arith.divf %313, %314 : vector<8x64xf32>
    %316 = vector.extract_strided_slice %291 {offsets = [0, 128], sizes = [8, 64], strides = [1, 1]} : vector<8x192xf32> to vector<8x64xf32>
    %317 = vector.extract_strided_slice %299 {offsets = [0, 128], sizes = [8, 64], strides = [1, 1]} : vector<8x192xf32> to vector<8x64xf32>
    %318 = arith.mulf %307, %317 : vector<8x64xf32>
    %319 = arith.addf %316, %318 : vector<8x64xf32>
    %320 = math.tanh %319 : vector<8x64xf32>
    %cst_99 = arith.constant 1.000000e+00 : f32
    %321 = vector.broadcast %cst_99 : f32 to vector<8x64xf32>
    %322 = arith.subf %321, %315 : vector<8x64xf32>
    %323 = arith.mulf %322, %320 : vector<8x64xf32>
    %324 = arith.mulf %315, %269 : vector<8x64xf32>
    %325 = arith.addf %323, %324 : vector<8x64xf32>
    %cst_100 = arith.constant dense<0.000000e+00> : vector<8x192xf32>
    %326 = tpu.matmul %272, %4, %cst_100 {dimension_numbers = #tpu.dot_dimension_numbers<[1], [0], [0], [1], [0, 0, 1, 1], [], []>} : vector<8x64xf32>, vector<64x192xf32>, vector<8x192xf32> -> vector<8x192xf32>
    %327 = vector.broadcast %8 : vector<1x192xf32> to vector<8x192xf32>
    %328 = arith.addf %326, %327 : vector<8x192xf32>
    %329 = vector.extract_strided_slice %296 {offsets = [0, 0], sizes = [8, 64], strides = [1, 1]} : vector<8x192xf32> to vector<8x64xf32>
    %330 = vector.extract_strided_slice %328 {offsets = [0, 0], sizes = [8, 64], strides = [1, 1]} : vector<8x192xf32> to vector<8x64xf32>
    %331 = arith.addf %329, %330 : vector<8x64xf32>
    %332 = arith.negf %331 : vector<8x64xf32>
    %333 = math.exp %332 : vector<8x64xf32>
    %cst_101 = arith.constant 1.000000e+00 : f32
    %334 = vector.broadcast %cst_101 : f32 to vector<8x64xf32>
    %335 = arith.addf %334, %333 : vector<8x64xf32>
    %336 = arith.divf %334, %335 : vector<8x64xf32>
    %337 = vector.extract_strided_slice %296 {offsets = [0, 64], sizes = [8, 64], strides = [1, 1]} : vector<8x192xf32> to vector<8x64xf32>
    %338 = vector.extract_strided_slice %328 {offsets = [0, 64], sizes = [8, 64], strides = [1, 1]} : vector<8x192xf32> to vector<8x64xf32>
    %339 = arith.addf %337, %338 : vector<8x64xf32>
    %340 = arith.negf %339 : vector<8x64xf32>
    %341 = math.exp %340 : vector<8x64xf32>
    %cst_102 = arith.constant 1.000000e+00 : f32
    %342 = vector.broadcast %cst_102 : f32 to vector<8x64xf32>
    %343 = arith.addf %342, %341 : vector<8x64xf32>
    %344 = arith.divf %342, %343 : vector<8x64xf32>
    %345 = vector.extract_strided_slice %296 {offsets = [0, 128], sizes = [8, 64], strides = [1, 1]} : vector<8x192xf32> to vector<8x64xf32>
    %346 = vector.extract_strided_slice %328 {offsets = [0, 128], sizes = [8, 64], strides = [1, 1]} : vector<8x192xf32> to vector<8x64xf32>
    %347 = arith.mulf %336, %346 : vector<8x64xf32>
    %348 = arith.addf %345, %347 : vector<8x64xf32>
    %349 = math.tanh %348 : vector<8x64xf32>
    %cst_103 = arith.constant 1.000000e+00 : f32
    %350 = vector.broadcast %cst_103 : f32 to vector<8x64xf32>
    %351 = arith.subf %350, %344 : vector<8x64xf32>
    %352 = arith.mulf %351, %349 : vector<8x64xf32>
    %353 = arith.mulf %344, %272 : vector<8x64xf32>
    %354 = arith.addf %352, %353 : vector<8x64xf32>
    %c3_i32_104 = arith.constant 3 : i32
    %355 = vector.broadcast %c3_i32_104 : i32 to vector<8x1xi32>
    %356 = arith.cmpi sgt, %0, %355 : vector<8x1xi32>
    %c0_i32_105 = arith.constant 0 : i32
    %357 = vector.broadcast %c0_i32_105 : i32 to vector<8x1xi32>
    %358 = arith.cmpi sgt, %0, %357 : vector<8x1xi32>
    %cst_106 = arith.constant 0.000000e+00 : f32
    %359 = vector.shape_cast %356 : vector<8x1xi1> to vector<8x1xi1>
    %360 = vector.broadcast %359 : vector<8x1xi1> to vector<8x64xi1>
    %361 = vector.broadcast %cst_106 : f32 to vector<8x64xf32>
    %362 = arith.select %360, %325, %361 : vector<8x64xi1>, vector<8x64xf32>
    %c3_107 = arith.constant 3 : index
    %c0_108 = arith.constant 0 : index
    %c0_109 = arith.constant 0 : index
    %363 = vector.load %arg16[%c3_107, %c0_108, %c0_109] : memref<4x8x128xf32, #tpu.memory_space<vmem>>, vector<1x8x64xf32>
    %364 = vector.shape_cast %363 : vector<1x8x64xf32> to vector<8x64xf32>
    %365 = vector.shape_cast %362 : vector<8x64xf32> to vector<1x8x64xf32>
    tpu.vector_store %arg16[%c3_107, %c0_108, %c0_109], %365 {strides = array<i32>} : memref<4x8x128xf32, #tpu.memory_space<vmem>>, vector<1x8x64xf32>,
    %cst_110 = arith.constant 0.000000e+00 : f32
    %366 = vector.shape_cast %358 : vector<8x1xi1> to vector<8x1xi1>
    %367 = vector.broadcast %366 : vector<8x1xi1> to vector<8x64xi1>
    %368 = vector.broadcast %cst_110 : f32 to vector<8x64xf32>
    %369 = arith.select %367, %354, %368 : vector<8x64xi1>, vector<8x64xf32>
    %c0_111 = arith.constant 0 : index
    %c0_112 = arith.constant 0 : index
    %c64_113 = arith.constant 64 : index
    %370 = vector.load %arg16[%c0_111, %c0_112, %c64_113] : memref<4x8x128xf32, #tpu.memory_space<vmem>>, vector<1x8x64xf32>
    %371 = vector.shape_cast %370 : vector<1x8x64xf32> to vector<8x64xf32>
    %372 = vector.shape_cast %369 : vector<8x64xf32> to vector<1x8x64xf32>
    tpu.vector_store %arg16[%c0_111, %c0_112, %c64_113], %372 {strides = array<i32>} : memref<4x8x128xf32, #tpu.memory_space<vmem>>, vector<1x8x64xf32>,
    %c0_114 = arith.constant 0 : index
    %c0_115 = arith.constant 0 : index
    %373 = vector.load %arg11[%c0_114, %c0_115] : memref<128x128xf32, #tpu.memory_space<vmem>>, vector<128x128xf32>
    %c0_116 = arith.constant 0 : index
    %c0_117 = arith.constant 0 : index
    %374 = vector.load %arg12[%c0_116, %c0_117] : memref<1x128xf32, #tpu.memory_space<vmem>>, vector<1x128xf32>
    %c0_118 = arith.constant 0 : index
    %c0_119 = arith.constant 0 : index
    %375 = vector.load %arg13[%c0_118, %c0_119] : memref<1x128xf32, #tpu.memory_space<vmem>>, vector<1x128xf32>
    %c0_120 = arith.constant 0 : index
    %c0_121 = arith.constant 0 : index
    %c0_122 = arith.constant 0 : index
    %376 = vector.load %arg16[%c0_120, %c0_121, %c0_122] : memref<4x8x128xf32, #tpu.memory_space<vmem>>, vector<1x8x128xf32>
    %377 = vector.shape_cast %376 : vector<1x8x128xf32> to vector<8x128xf32>
    %cst_123 = arith.constant dense<0.000000e+00> : vector<8x128xf32>
    %378 = tpu.matmul %377, %373, %cst_123 {dimension_numbers = #tpu.dot_dimension_numbers<[1], [0], [0], [1], [0, 0, 1, 1], [], []>} : vector<8x128xf32>, vector<128x128xf32>, vector<8x128xf32> -> vector<8x128xf32>
    %379 = vector.broadcast %374 : vector<1x128xf32> to vector<8x128xf32>
    %380 = arith.addf %378, %379 : vector<8x128xf32>
    %381 = math.tanh %380 : vector<8x128xf32>
    %382 = vector.broadcast %375 : vector<1x128xf32> to vector<8x128xf32>
    %383 = arith.mulf %381, %382 : vector<8x128xf32>
    %cst_124 = arith.constant dense<0.000000e+00> : vector<8xf32>
    %384 = vector.multi_reduction <add>, %383, %cst_124 [1] : vector<8x128xf32> to vector<8xf32>
    %385 = vector.shape_cast %384 : vector<8xf32> to vector<8x1xf32>
    %c0_i32_125 = arith.constant 0 : i32
    %386 = vector.broadcast %c0_i32_125 : i32 to vector<8x1xi32>
    %387 = arith.cmpi sgt, %0, %386 : vector<8x1xi32>
    %cst_126 = arith.constant -1.000000e+30 : f32
    %388 = vector.broadcast %cst_126 : f32 to vector<8x1xf32>
    %389 = arith.select %387, %385, %388 : vector<8x1xi1>, vector<8x1xf32>
    %c1_127 = arith.constant 1 : index
    %c0_128 = arith.constant 0 : index
    %c0_129 = arith.constant 0 : index
    %390 = vector.load %arg16[%c1_127, %c0_128, %c0_129] : memref<4x8x128xf32, #tpu.memory_space<vmem>>, vector<1x8x128xf32>
    %391 = vector.shape_cast %390 : vector<1x8x128xf32> to vector<8x128xf32>
    %cst_130 = arith.constant dense<0.000000e+00> : vector<8x128xf32>
    %392 = tpu.matmul %391, %373, %cst_130 {dimension_numbers = #tpu.dot_dimension_numbers<[1], [0], [0], [1], [0, 0, 1, 1], [], []>} : vector<8x128xf32>, vector<128x128xf32>, vector<8x128xf32> -> vector<8x128xf32>
    %393 = vector.broadcast %374 : vector<1x128xf32> to vector<8x128xf32>
    %394 = arith.addf %392, %393 : vector<8x128xf32>
    %395 = math.tanh %394 : vector<8x128xf32>
    %396 = vector.broadcast %375 : vector<1x128xf32> to vector<8x128xf32>
    %397 = arith.mulf %395, %396 : vector<8x128xf32>
    %cst_131 = arith.constant dense<0.000000e+00> : vector<8xf32>
    %398 = vector.multi_reduction <add>, %397, %cst_131 [1] : vector<8x128xf32> to vector<8xf32>
    %399 = vector.shape_cast %398 : vector<8xf32> to vector<8x1xf32>
    %c1_i32_132 = arith.constant 1 : i32
    %400 = vector.broadcast %c1_i32_132 : i32 to vector<8x1xi32>
    %401 = arith.cmpi sgt, %0, %400 : vector<8x1xi32>
    %cst_133 = arith.constant -1.000000e+30 : f32
    %402 = vector.broadcast %cst_133 : f32 to vector<8x1xf32>
    %403 = arith.select %401, %399, %402 : vector<8x1xi1>, vector<8x1xf32>
    %c2_134 = arith.constant 2 : index
    %c0_135 = arith.constant 0 : index
    %c0_136 = arith.constant 0 : index
    %404 = vector.load %arg16[%c2_134, %c0_135, %c0_136] : memref<4x8x128xf32, #tpu.memory_space<vmem>>, vector<1x8x128xf32>
    %405 = vector.shape_cast %404 : vector<1x8x128xf32> to vector<8x128xf32>
    %cst_137 = arith.constant dense<0.000000e+00> : vector<8x128xf32>
    %406 = tpu.matmul %405, %373, %cst_137 {dimension_numbers = #tpu.dot_dimension_numbers<[1], [0], [0], [1], [0, 0, 1, 1], [], []>} : vector<8x128xf32>, vector<128x128xf32>, vector<8x128xf32> -> vector<8x128xf32>
    %407 = vector.broadcast %374 : vector<1x128xf32> to vector<8x128xf32>
    %408 = arith.addf %406, %407 : vector<8x128xf32>
    %409 = math.tanh %408 : vector<8x128xf32>
    %410 = vector.broadcast %375 : vector<1x128xf32> to vector<8x128xf32>
    %411 = arith.mulf %409, %410 : vector<8x128xf32>
    %cst_138 = arith.constant dense<0.000000e+00> : vector<8xf32>
    %412 = vector.multi_reduction <add>, %411, %cst_138 [1] : vector<8x128xf32> to vector<8xf32>
    %413 = vector.shape_cast %412 : vector<8xf32> to vector<8x1xf32>
    %c2_i32_139 = arith.constant 2 : i32
    %414 = vector.broadcast %c2_i32_139 : i32 to vector<8x1xi32>
    %415 = arith.cmpi sgt, %0, %414 : vector<8x1xi32>
    %cst_140 = arith.constant -1.000000e+30 : f32
    %416 = vector.broadcast %cst_140 : f32 to vector<8x1xf32>
    %417 = arith.select %415, %413, %416 : vector<8x1xi1>, vector<8x1xf32>
    %c3_141 = arith.constant 3 : index
    %c0_142 = arith.constant 0 : index
    %c0_143 = arith.constant 0 : index
    %418 = vector.load %arg16[%c3_141, %c0_142, %c0_143] : memref<4x8x128xf32, #tpu.memory_space<vmem>>, vector<1x8x128xf32>
    %419 = vector.shape_cast %418 : vector<1x8x128xf32> to vector<8x128xf32>
    %cst_144 = arith.constant dense<0.000000e+00> : vector<8x128xf32>
    %420 = tpu.matmul %419, %373, %cst_144 {dimension_numbers = #tpu.dot_dimension_numbers<[1], [0], [0], [1], [0, 0, 1, 1], [], []>} : vector<8x128xf32>, vector<128x128xf32>, vector<8x128xf32> -> vector<8x128xf32>
    %421 = vector.broadcast %374 : vector<1x128xf32> to vector<8x128xf32>
    %422 = arith.addf %420, %421 : vector<8x128xf32>
    %423 = math.tanh %422 : vector<8x128xf32>
    %424 = vector.broadcast %375 : vector<1x128xf32> to vector<8x128xf32>
    %425 = arith.mulf %423, %424 : vector<8x128xf32>
    %cst_145 = arith.constant dense<0.000000e+00> : vector<8xf32>
    %426 = vector.multi_reduction <add>, %425, %cst_145 [1] : vector<8x128xf32> to vector<8xf32>
    %427 = vector.shape_cast %426 : vector<8xf32> to vector<8x1xf32>
    %c3_i32_146 = arith.constant 3 : i32
    %428 = vector.broadcast %c3_i32_146 : i32 to vector<8x1xi32>
    %429 = arith.cmpi sgt, %0, %428 : vector<8x1xi32>
    %cst_147 = arith.constant -1.000000e+30 : f32
    %430 = vector.broadcast %cst_147 : f32 to vector<8x1xf32>
    %431 = arith.select %429, %427, %430 : vector<8x1xi1>, vector<8x1xf32>
    %432 = arith.maximumf %389, %403 : vector<8x1xf32>
    %433 = arith.maximumf %432, %417 : vector<8x1xf32>
    %434 = arith.maximumf %433, %431 : vector<8x1xf32>
    %c0_i32_148 = arith.constant 0 : i32
    %435 = vector.broadcast %c0_i32_148 : i32 to vector<8x1xi32>
    %436 = arith.cmpi sgt, %0, %435 : vector<8x1xi32>
    %437 = arith.subf %389, %434 : vector<8x1xf32>
    %438 = math.exp %437 : vector<8x1xf32>
    %cst_149 = arith.constant 0.000000e+00 : f32
    %439 = vector.broadcast %cst_149 : f32 to vector<8x1xf32>
    %440 = arith.select %436, %438, %439 : vector<8x1xi1>, vector<8x1xf32>
    %c1_i32_150 = arith.constant 1 : i32
    %441 = vector.broadcast %c1_i32_150 : i32 to vector<8x1xi32>
    %442 = arith.cmpi sgt, %0, %441 : vector<8x1xi32>
    %443 = arith.subf %403, %434 : vector<8x1xf32>
    %444 = math.exp %443 : vector<8x1xf32>
    %cst_151 = arith.constant 0.000000e+00 : f32
    %445 = vector.broadcast %cst_151 : f32 to vector<8x1xf32>
    %446 = arith.select %442, %444, %445 : vector<8x1xi1>, vector<8x1xf32>
    %c2_i32_152 = arith.constant 2 : i32
    %447 = vector.broadcast %c2_i32_152 : i32 to vector<8x1xi32>
    %448 = arith.cmpi sgt, %0, %447 : vector<8x1xi32>
    %449 = arith.subf %417, %434 : vector<8x1xf32>
    %450 = math.exp %449 : vector<8x1xf32>
    %cst_153 = arith.constant 0.000000e+00 : f32
    %451 = vector.broadcast %cst_153 : f32 to vector<8x1xf32>
    %452 = arith.select %448, %450, %451 : vector<8x1xi1>, vector<8x1xf32>
    %c3_i32_154 = arith.constant 3 : i32
    %453 = vector.broadcast %c3_i32_154 : i32 to vector<8x1xi32>
    %454 = arith.cmpi sgt, %0, %453 : vector<8x1xi32>
    %455 = arith.subf %431, %434 : vector<8x1xf32>
    %456 = math.exp %455 : vector<8x1xf32>
    %cst_155 = arith.constant 0.000000e+00 : f32
    %457 = vector.broadcast %cst_155 : f32 to vector<8x1xf32>
    %458 = arith.select %454, %456, %457 : vector<8x1xi1>, vector<8x1xf32>
    %459 = arith.addf %440, %446 : vector<8x1xf32>
    %460 = arith.addf %459, %452 : vector<8x1xf32>
    %461 = arith.addf %460, %458 : vector<8x1xf32>
    %cst_156 = arith.constant 1.000000e+00 : f32
    %462 = vector.broadcast %cst_156 : f32 to vector<8x1xf32>
    %463 = arith.divf %462, %461 : vector<8x1xf32>
    %cst_157 = arith.constant 0.000000e+00 : f32
    %464 = vector.broadcast %cst_157 : f32 to vector<8x128xf32>
    %465 = arith.mulf %440, %463 : vector<8x1xf32>
    %c0_158 = arith.constant 0 : index
    %c0_159 = arith.constant 0 : index
    %466 = vector.load %arg15[%c0_158, %c0_159] : memref<8x4xf32, #tpu.memory_space<vmem>>, vector<8x1xf32>
    tpu.vector_store %arg15[%c0_158, %c0_159], %465 {strides = array<i32>} : memref<8x4xf32, #tpu.memory_space<vmem>>, vector<8x1xf32>,
    %c0_160 = arith.constant 0 : index
    %c0_161 = arith.constant 0 : index
    %c0_162 = arith.constant 0 : index
    %467 = vector.load %arg16[%c0_160, %c0_161, %c0_162] : memref<4x8x128xf32, #tpu.memory_space<vmem>>, vector<1x8x128xf32>
    %468 = vector.shape_cast %467 : vector<1x8x128xf32> to vector<8x128xf32>
    %469 = vector.broadcast %465 : vector<8x1xf32> to vector<8x128xf32>
    %470 = arith.mulf %469, %468 : vector<8x128xf32>
    %471 = arith.addf %464, %470 : vector<8x128xf32>
    %472 = arith.mulf %446, %463 : vector<8x1xf32>
    %c0_163 = arith.constant 0 : index
    %c1_164 = arith.constant 1 : index
    %473 = vector.load %arg15[%c0_163, %c1_164] : memref<8x4xf32, #tpu.memory_space<vmem>>, vector<8x1xf32>
    tpu.vector_store %arg15[%c0_163, %c1_164], %472 {strides = array<i32>} : memref<8x4xf32, #tpu.memory_space<vmem>>, vector<8x1xf32>,
    %c1_165 = arith.constant 1 : index
    %c0_166 = arith.constant 0 : index
    %c0_167 = arith.constant 0 : index
    %474 = vector.load %arg16[%c1_165, %c0_166, %c0_167] : memref<4x8x128xf32, #tpu.memory_space<vmem>>, vector<1x8x128xf32>
    %475 = vector.shape_cast %474 : vector<1x8x128xf32> to vector<8x128xf32>
    %476 = vector.broadcast %472 : vector<8x1xf32> to vector<8x128xf32>
    %477 = arith.mulf %476, %475 : vector<8x128xf32>
    %478 = arith.addf %471, %477 : vector<8x128xf32>
    %479 = arith.mulf %452, %463 : vector<8x1xf32>
    %c0_168 = arith.constant 0 : index
    %c2_169 = arith.constant 2 : index
    %480 = vector.load %arg15[%c0_168, %c2_169] : memref<8x4xf32, #tpu.memory_space<vmem>>, vector<8x1xf32>
    tpu.vector_store %arg15[%c0_168, %c2_169], %479 {strides = array<i32>} : memref<8x4xf32, #tpu.memory_space<vmem>>, vector<8x1xf32>,
    %c2_170 = arith.constant 2 : index
    %c0_171 = arith.constant 0 : index
    %c0_172 = arith.constant 0 : index
    %481 = vector.load %arg16[%c2_170, %c0_171, %c0_172] : memref<4x8x128xf32, #tpu.memory_space<vmem>>, vector<1x8x128xf32>
    %482 = vector.shape_cast %481 : vector<1x8x128xf32> to vector<8x128xf32>
    %483 = vector.broadcast %479 : vector<8x1xf32> to vector<8x128xf32>
    %484 = arith.mulf %483, %482 : vector<8x128xf32>
    %485 = arith.addf %478, %484 : vector<8x128xf32>
    %486 = arith.mulf %458, %463 : vector<8x1xf32>
    %c0_173 = arith.constant 0 : index
    %c3_174 = arith.constant 3 : index
    %487 = vector.load %arg15[%c0_173, %c3_174] : memref<8x4xf32, #tpu.memory_space<vmem>>, vector<8x1xf32>
    tpu.vector_store %arg15[%c0_173, %c3_174], %486 {strides = array<i32>} : memref<8x4xf32, #tpu.memory_space<vmem>>, vector<8x1xf32>,
    %c3_175 = arith.constant 3 : index
    %c0_176 = arith.constant 0 : index
    %c0_177 = arith.constant 0 : index
    %488 = vector.load %arg16[%c3_175, %c0_176, %c0_177] : memref<4x8x128xf32, #tpu.memory_space<vmem>>, vector<1x8x128xf32>
    %489 = vector.shape_cast %488 : vector<1x8x128xf32> to vector<8x128xf32>
    %490 = vector.broadcast %486 : vector<8x1xf32> to vector<8x128xf32>
    %491 = arith.mulf %490, %489 : vector<8x128xf32>
    %492 = arith.addf %485, %491 : vector<8x128xf32>
    %c0_178 = arith.constant 0 : index
    %c0_179 = arith.constant 0 : index
    %493 = vector.load %arg14[%c0_178, %c0_179] : memref<8x128xf32, #tpu.memory_space<vmem>>, vector<8x128xf32>
    tpu.vector_store %arg14[%c0_178, %c0_179], %492 {strides = array<i32>} : memref<8x128xf32, #tpu.memory_space<vmem>>, vector<8x128xf32>,
    return
  }
  func.func @transform_0(%arg0: i32) -> (i32, i32, i32) {
    %c0_i32 = arith.constant 0 : i32
    %c0_i32_0 = arith.constant 0 : i32
    %c0_i32_1 = arith.constant 0 : i32
    return %arg0, %c0_i32, %c0_i32_0 : i32, i32, i32
  }
  func.func @transform_1(%arg0: i32) -> (i32, i32) {
    %c0_i32 = arith.constant 0 : i32
    %c0_i32_0 = arith.constant 0 : i32
    return %arg0, %c0_i32 : i32, i32
  }
  func.func @transform_2(%arg0: i32) -> (i32, i32) {
    %c0_i32 = arith.constant 0 : i32
    %c0_i32_0 = arith.constant 0 : i32
    %c0_i32_1 = arith.constant 0 : i32
    return %c0_i32, %c0_i32_0 : i32, i32
  }
  func.func @transform_3(%arg0: i32) -> (i32, i32) {
    %c0_i32 = arith.constant 0 : i32
    %c0_i32_0 = arith.constant 0 : i32
    %c0_i32_1 = arith.constant 0 : i32
    return %c0_i32, %c0_i32_0 : i32, i32
  }
  func.func @transform_4(%arg0: i32) -> (i32, i32) {
    %c0_i32 = arith.constant 0 : i32
    %c0_i32_0 = arith.constant 0 : i32
    %c0_i32_1 = arith.constant 0 : i32
    return %c0_i32, %c0_i32_0 : i32, i32
  }
  func.func @transform_5(%arg0: i32) -> (i32, i32) {
    %c0_i32 = arith.constant 0 : i32
    %c0_i32_0 = arith.constant 0 : i32
    %c0_i32_1 = arith.constant 0 : i32
    return %c0_i32, %c0_i32_0 : i32, i32
  }
  func.func @transform_6(%arg0: i32) -> (i32, i32) {
    %c0_i32 = arith.constant 0 : i32
    %c0_i32_0 = arith.constant 0 : i32
    %c0_i32_1 = arith.constant 0 : i32
    return %c0_i32, %c0_i32_0 : i32, i32
  }
  func.func @transform_7(%arg0: i32) -> (i32, i32) {
    %c0_i32 = arith.constant 0 : i32
    %c0_i32_0 = arith.constant 0 : i32
    %c0_i32_1 = arith.constant 0 : i32
    return %c0_i32, %c0_i32_0 : i32, i32
  }
  func.func @transform_8(%arg0: i32) -> (i32, i32) {
    %c0_i32 = arith.constant 0 : i32
    %c0_i32_0 = arith.constant 0 : i32
    %c0_i32_1 = arith.constant 0 : i32
    return %c0_i32, %c0_i32_0 : i32, i32
  }
  func.func @transform_9(%arg0: i32) -> (i32, i32) {
    %c0_i32 = arith.constant 0 : i32
    %c0_i32_0 = arith.constant 0 : i32
    %c0_i32_1 = arith.constant 0 : i32
    return %c0_i32, %c0_i32_0 : i32, i32
  }
  func.func @transform_10(%arg0: i32) -> (i32, i32) {
    %c0_i32 = arith.constant 0 : i32
    %c0_i32_0 = arith.constant 0 : i32
    %c0_i32_1 = arith.constant 0 : i32
    return %c0_i32, %c0_i32_0 : i32, i32
  }
  func.func @transform_11(%arg0: i32) -> (i32, i32) {
    %c0_i32 = arith.constant 0 : i32
    %c0_i32_0 = arith.constant 0 : i32
    %c0_i32_1 = arith.constant 0 : i32
    return %c0_i32, %c0_i32_0 : i32, i32
  }
  func.func @transform_12(%arg0: i32) -> (i32, i32) {
    %c0_i32 = arith.constant 0 : i32
    %c0_i32_0 = arith.constant 0 : i32
    %c0_i32_1 = arith.constant 0 : i32
    return %c0_i32, %c0_i32_0 : i32, i32
  }
  func.func @transform_13(%arg0: i32) -> (i32, i32) {
    %c0_i32 = arith.constant 0 : i32
    %c0_i32_0 = arith.constant 0 : i32
    return %arg0, %c0_i32 : i32, i32
  }
  func.func @transform_14(%arg0: i32) -> (i32, i32) {
    %c0_i32 = arith.constant 0 : i32
    %c0_i32_0 = arith.constant 0 : i32
    return %arg0, %c0_i32 : i32, i32
  }
}

module attributes {stable_mosaic.version = 11 : i64} {
  func.func @_bigru_attn_kernel(%arg0: i32, %arg1: memref<8x8x32xf32, #tpu.memory_space<vmem>>, %arg2: memref<8x1xi32, #tpu.memory_space<vmem>>, %arg3: memref<32x192xf32, #tpu.memory_space<vmem>>, %arg4: memref<32x192xf32, #tpu.memory_space<vmem>>, %arg5: memref<64x192xf32, #tpu.memory_space<vmem>>, %arg6: memref<64x192xf32, #tpu.memory_space<vmem>>, %arg7: memref<1x192xf32, #tpu.memory_space<vmem>>, %arg8: memref<1x192xf32, #tpu.memory_space<vmem>>, %arg9: memref<1x192xf32, #tpu.memory_space<vmem>>, %arg10: memref<1x192xf32, #tpu.memory_space<vmem>>, %arg11: memref<128x128xf32, #tpu.memory_space<vmem>>, %arg12: memref<1x128xf32, #tpu.memory_space<vmem>>, %arg13: memref<1x128xf32, #tpu.memory_space<vmem>>, %arg14: memref<8x128xf32, #tpu.memory_space<vmem>>, %arg15: memref<8x8xf32, #tpu.memory_space<vmem>>, %arg16: memref<8x8x128xf32, #tpu.memory_space<vmem>>) attributes {dimension_semantics = [#tpu.dimension_semantics<parallel>], iteration_bounds = array<i64: 1>, scalar_prefetch = 0 : i64, scratch_operands = 1 : i64, tpu.core_type = #tpu.core_type<tc>, window_params = [{transform_indices = @transform_0, window_bounds = array<i64: 8, 8, 32>}, {transform_indices = @transform_1, window_bounds = array<i64: 8, 1>}, {pipeline_mode = #tpu.pipeline_mode<synchronous>, transform_indices = @transform_2, window_bounds = array<i64: 32, 192>}, {pipeline_mode = #tpu.pipeline_mode<synchronous>, transform_indices = @transform_3, window_bounds = array<i64: 32, 192>}, {pipeline_mode = #tpu.pipeline_mode<synchronous>, transform_indices = @transform_4, window_bounds = array<i64: 64, 192>}, {pipeline_mode = #tpu.pipeline_mode<synchronous>, transform_indices = @transform_5, window_bounds = array<i64: 64, 192>}, {pipeline_mode = #tpu.pipeline_mode<synchronous>, transform_indices = @transform_6, window_bounds = array<i64: 1, 192>}, {pipeline_mode = #tpu.pipeline_mode<synchronous>, transform_indices = @transform_7, window_bounds = array<i64: 1, 192>}, {pipeline_mode = #tpu.pipeline_mode<synchronous>, transform_indices = @transform_8, window_bounds = array<i64: 1, 192>}, {pipeline_mode = #tpu.pipeline_mode<synchronous>, transform_indices = @transform_9, window_bounds = array<i64: 1, 192>}, {pipeline_mode = #tpu.pipeline_mode<synchronous>, transform_indices = @transform_10, window_bounds = array<i64: 128, 128>}, {pipeline_mode = #tpu.pipeline_mode<synchronous>, transform_indices = @transform_11, window_bounds = array<i64: 1, 128>}, {pipeline_mode = #tpu.pipeline_mode<synchronous>, transform_indices = @transform_12, window_bounds = array<i64: 1, 128>}, {transform_indices = @transform_13, window_bounds = array<i64: 8, 128>}, {transform_indices = @transform_14, window_bounds = array<i64: 8, 8>}]} {
    %c0 = arith.constant 0 : index
    %c0_0 = arith.constant 0 : index
    %0 = vector.load %arg2[%c0, %c0_0] : memref<8x1xi32, #tpu.memory_space<vmem>>, vector<8x1xi32>
    %c0_1 = arith.constant 0 : index
    %c0_2 = arith.constant 0 : index
    %1 = vector.load %arg3[%c0_1, %c0_2] : memref<32x192xf32, #tpu.memory_space<vmem>>, vector<32x192xf32>
    %c0_3 = arith.constant 0 : index
    %c0_4 = arith.constant 0 : index
    %2 = vector.load %arg4[%c0_3, %c0_4] : memref<32x192xf32, #tpu.memory_space<vmem>>, vector<32x192xf32>
    %c0_5 = arith.constant 0 : index
    %c0_6 = arith.constant 0 : index
    %3 = vector.load %arg5[%c0_5, %c0_6] : memref<64x192xf32, #tpu.memory_space<vmem>>, vector<64x192xf32>
    %c0_7 = arith.constant 0 : index
    %c0_8 = arith.constant 0 : index
    %4 = vector.load %arg6[%c0_7, %c0_8] : memref<64x192xf32, #tpu.memory_space<vmem>>, vector<64x192xf32>
    %c0_9 = arith.constant 0 : index
    %c0_10 = arith.constant 0 : index
    %5 = vector.load %arg7[%c0_9, %c0_10] : memref<1x192xf32, #tpu.memory_space<vmem>>, vector<1x192xf32>
    %c0_11 = arith.constant 0 : index
    %c0_12 = arith.constant 0 : index
    %6 = vector.load %arg8[%c0_11, %c0_12] : memref<1x192xf32, #tpu.memory_space<vmem>>, vector<1x192xf32>
    %c0_13 = arith.constant 0 : index
    %c0_14 = arith.constant 0 : index
    %7 = vector.load %arg9[%c0_13, %c0_14] : memref<1x192xf32, #tpu.memory_space<vmem>>, vector<1x192xf32>
    %c0_15 = arith.constant 0 : index
    %c0_16 = arith.constant 0 : index
    %8 = vector.load %arg10[%c0_15, %c0_16] : memref<1x192xf32, #tpu.memory_space<vmem>>, vector<1x192xf32>
    %cst = arith.constant 0.000000e+00 : f32
    %9 = vector.broadcast %cst : f32 to vector<8x64xf32>
    %cst_17 = arith.constant 0.000000e+00 : f32
    %10 = vector.broadcast %cst_17 : f32 to vector<8x64xf32>
    %c0_18 = arith.constant 0 : index
    %c0_19 = arith.constant 0 : index
    %c0_20 = arith.constant 0 : index
    %11 = vector.load %arg1[%c0_18, %c0_19, %c0_20] : memref<8x8x32xf32, #tpu.memory_space<vmem>>, vector<8x1x32xf32>
    %12 = vector.shape_cast %11 : vector<8x1x32xf32> to vector<8x32xf32>
    %cst_21 = arith.constant dense<0.000000e+00> : vector<8x192xf32>
    %13 = tpu.matmul %12, %1, %cst_21 {dimension_numbers = #tpu.dot_dimension_numbers<[1], [0], [0], [1], [0, 0, 1, 1], [], []>} : vector<8x32xf32>, vector<32x192xf32>, vector<8x192xf32> -> vector<8x192xf32>
    %14 = vector.broadcast %5 : vector<1x192xf32> to vector<8x192xf32>
    %15 = arith.addf %13, %14 : vector<8x192xf32>
    %c0_22 = arith.constant 0 : index
    %c7 = arith.constant 7 : index
    %c0_23 = arith.constant 0 : index
    %16 = vector.load %arg1[%c0_22, %c7, %c0_23] : memref<8x8x32xf32, #tpu.memory_space<vmem>>, vector<8x1x32xf32>
    %17 = vector.shape_cast %16 : vector<8x1x32xf32> to vector<8x32xf32>
    %cst_24 = arith.constant dense<0.000000e+00> : vector<8x192xf32>
    %18 = tpu.matmul %17, %2, %cst_24 {dimension_numbers = #tpu.dot_dimension_numbers<[1], [0], [0], [1], [0, 0, 1, 1], [], []>} : vector<8x32xf32>, vector<32x192xf32>, vector<8x192xf32> -> vector<8x192xf32>
    %19 = vector.broadcast %6 : vector<1x192xf32> to vector<8x192xf32>
    %20 = arith.addf %18, %19 : vector<8x192xf32>
    %cst_25 = arith.constant dense<0.000000e+00> : vector<8x192xf32>
    %21 = tpu.matmul %9, %3, %cst_25 {dimension_numbers = #tpu.dot_dimension_numbers<[1], [0], [0], [1], [0, 0, 1, 1], [], []>} : vector<8x64xf32>, vector<64x192xf32>, vector<8x192xf32> -> vector<8x192xf32>
    %22 = vector.broadcast %7 : vector<1x192xf32> to vector<8x192xf32>
    %23 = arith.addf %21, %22 : vector<8x192xf32>
    %24 = vector.extract_strided_slice %15 {offsets = [0, 0], sizes = [8, 64], strides = [1, 1]} : vector<8x192xf32> to vector<8x64xf32>
    %25 = vector.extract_strided_slice %23 {offsets = [0, 0], sizes = [8, 64], strides = [1, 1]} : vector<8x192xf32> to vector<8x64xf32>
    %26 = arith.addf %24, %25 : vector<8x64xf32>
    %27 = arith.negf %26 : vector<8x64xf32>
    %28 = math.exp %27 : vector<8x64xf32>
    %cst_26 = arith.constant 1.000000e+00 : f32
    %29 = vector.broadcast %cst_26 : f32 to vector<8x64xf32>
    %30 = arith.addf %29, %28 : vector<8x64xf32>
    %31 = arith.divf %29, %30 : vector<8x64xf32>
    %32 = vector.extract_strided_slice %15 {offsets = [0, 64], sizes = [8, 64], strides = [1, 1]} : vector<8x192xf32> to vector<8x64xf32>
    %33 = vector.extract_strided_slice %23 {offsets = [0, 64], sizes = [8, 64], strides = [1, 1]} : vector<8x192xf32> to vector<8x64xf32>
    %34 = arith.addf %32, %33 : vector<8x64xf32>
    %35 = arith.negf %34 : vector<8x64xf32>
    %36 = math.exp %35 : vector<8x64xf32>
    %cst_27 = arith.constant 1.000000e+00 : f32
    %37 = vector.broadcast %cst_27 : f32 to vector<8x64xf32>
    %38 = arith.addf %37, %36 : vector<8x64xf32>
    %39 = arith.divf %37, %38 : vector<8x64xf32>
    %40 = vector.extract_strided_slice %15 {offsets = [0, 128], sizes = [8, 64], strides = [1, 1]} : vector<8x192xf32> to vector<8x64xf32>
    %41 = vector.extract_strided_slice %23 {offsets = [0, 128], sizes = [8, 64], strides = [1, 1]} : vector<8x192xf32> to vector<8x64xf32>
    %42 = arith.mulf %31, %41 : vector<8x64xf32>
    %43 = arith.addf %40, %42 : vector<8x64xf32>
    %44 = math.tanh %43 : vector<8x64xf32>
    %cst_28 = arith.constant 1.000000e+00 : f32
    %45 = vector.broadcast %cst_28 : f32 to vector<8x64xf32>
    %46 = arith.subf %45, %39 : vector<8x64xf32>
    %47 = arith.mulf %46, %44 : vector<8x64xf32>
    %48 = arith.mulf %39, %9 : vector<8x64xf32>
    %49 = arith.addf %47, %48 : vector<8x64xf32>
    %cst_29 = arith.constant dense<0.000000e+00> : vector<8x192xf32>
    %50 = tpu.matmul %10, %4, %cst_29 {dimension_numbers = #tpu.dot_dimension_numbers<[1], [0], [0], [1], [0, 0, 1, 1], [], []>} : vector<8x64xf32>, vector<64x192xf32>, vector<8x192xf32> -> vector<8x192xf32>
    %51 = vector.broadcast %8 : vector<1x192xf32> to vector<8x192xf32>
    %52 = arith.addf %50, %51 : vector<8x192xf32>
    %53 = vector.extract_strided_slice %20 {offsets = [0, 0], sizes = [8, 64], strides = [1, 1]} : vector<8x192xf32> to vector<8x64xf32>
    %54 = vector.extract_strided_slice %52 {offsets = [0, 0], sizes = [8, 64], strides = [1, 1]} : vector<8x192xf32> to vector<8x64xf32>
    %55 = arith.addf %53, %54 : vector<8x64xf32>
    %56 = arith.negf %55 : vector<8x64xf32>
    %57 = math.exp %56 : vector<8x64xf32>
    %cst_30 = arith.constant 1.000000e+00 : f32
    %58 = vector.broadcast %cst_30 : f32 to vector<8x64xf32>
    %59 = arith.addf %58, %57 : vector<8x64xf32>
    %60 = arith.divf %58, %59 : vector<8x64xf32>
    %61 = vector.extract_strided_slice %20 {offsets = [0, 64], sizes = [8, 64], strides = [1, 1]} : vector<8x192xf32> to vector<8x64xf32>
    %62 = vector.extract_strided_slice %52 {offsets = [0, 64], sizes = [8, 64], strides = [1, 1]} : vector<8x192xf32> to vector<8x64xf32>
    %63 = arith.addf %61, %62 : vector<8x64xf32>
    %64 = arith.negf %63 : vector<8x64xf32>
    %65 = math.exp %64 : vector<8x64xf32>
    %cst_31 = arith.constant 1.000000e+00 : f32
    %66 = vector.broadcast %cst_31 : f32 to vector<8x64xf32>
    %67 = arith.addf %66, %65 : vector<8x64xf32>
    %68 = arith.divf %66, %67 : vector<8x64xf32>
    %69 = vector.extract_strided_slice %20 {offsets = [0, 128], sizes = [8, 64], strides = [1, 1]} : vector<8x192xf32> to vector<8x64xf32>
    %70 = vector.extract_strided_slice %52 {offsets = [0, 128], sizes = [8, 64], strides = [1, 1]} : vector<8x192xf32> to vector<8x64xf32>
    %71 = arith.mulf %60, %70 : vector<8x64xf32>
    %72 = arith.addf %69, %71 : vector<8x64xf32>
    %73 = math.tanh %72 : vector<8x64xf32>
    %cst_32 = arith.constant 1.000000e+00 : f32
    %74 = vector.broadcast %cst_32 : f32 to vector<8x64xf32>
    %75 = arith.subf %74, %68 : vector<8x64xf32>
    %76 = arith.mulf %75, %73 : vector<8x64xf32>
    %77 = arith.mulf %68, %10 : vector<8x64xf32>
    %78 = arith.addf %76, %77 : vector<8x64xf32>
    %c0_i32 = arith.constant 0 : i32
    %79 = vector.broadcast %c0_i32 : i32 to vector<8x1xi32>
    %80 = arith.cmpi sgt, %0, %79 : vector<8x1xi32>
    %c7_i32 = arith.constant 7 : i32
    %81 = vector.broadcast %c7_i32 : i32 to vector<8x1xi32>
    %82 = arith.cmpi sgt, %0, %81 : vector<8x1xi32>
    %83 = vector.shape_cast %80 : vector<8x1xi1> to vector<8x1xi1>
    %84 = vector.broadcast %83 : vector<8x1xi1> to vector<8x64xi1>
    %85 = arith.select %84, %49, %9 : vector<8x64xi1>, vector<8x64xf32>
    %86 = vector.shape_cast %82 : vector<8x1xi1> to vector<8x1xi1>
    %87 = vector.broadcast %86 : vector<8x1xi1> to vector<8x64xi1>
    %88 = arith.select %87, %78, %10 : vector<8x64xi1>, vector<8x64xf32>
    %cst_33 = arith.constant 0.000000e+00 : f32
    %89 = vector.shape_cast %80 : vector<8x1xi1> to vector<8x1xi1>
    %90 = vector.broadcast %89 : vector<8x1xi1> to vector<8x64xi1>
    %91 = vector.broadcast %cst_33 : f32 to vector<8x64xf32>
    %92 = arith.select %90, %49, %91 : vector<8x64xi1>, vector<8x64xf32>
    %c0_34 = arith.constant 0 : index
    %c0_35 = arith.constant 0 : index
    %c0_36 = arith.constant 0 : index
    %93 = vector.load %arg16[%c0_34, %c0_35, %c0_36] : memref<8x8x128xf32, #tpu.memory_space<vmem>>, vector<1x8x64xf32>
    %94 = vector.shape_cast %93 : vector<1x8x64xf32> to vector<8x64xf32>
    %95 = vector.shape_cast %92 : vector<8x64xf32> to vector<1x8x64xf32>
    tpu.vector_store %arg16[%c0_34, %c0_35, %c0_36], %95 {strides = array<i32>} : memref<8x8x128xf32, #tpu.memory_space<vmem>>, vector<1x8x64xf32>,
    %cst_37 = arith.constant 0.000000e+00 : f32
    %96 = vector.shape_cast %82 : vector<8x1xi1> to vector<8x1xi1>
    %97 = vector.broadcast %96 : vector<8x1xi1> to vector<8x64xi1>
    %98 = vector.broadcast %cst_37 : f32 to vector<8x64xf32>
    %99 = arith.select %97, %78, %98 : vector<8x64xi1>, vector<8x64xf32>
    %c7_38 = arith.constant 7 : index
    %c0_39 = arith.constant 0 : index
    %c64 = arith.constant 64 : index
    %100 = vector.load %arg16[%c7_38, %c0_39, %c64] : memref<8x8x128xf32, #tpu.memory_space<vmem>>, vector<1x8x64xf32>
    %101 = vector.shape_cast %100 : vector<1x8x64xf32> to vector<8x64xf32>
    %102 = vector.shape_cast %99 : vector<8x64xf32> to vector<1x8x64xf32>
    tpu.vector_store %arg16[%c7_38, %c0_39, %c64], %102 {strides = array<i32>} : memref<8x8x128xf32, #tpu.memory_space<vmem>>, vector<1x8x64xf32>,
    %c0_40 = arith.constant 0 : index
    %c1 = arith.constant 1 : index
    %c0_41 = arith.constant 0 : index
    %103 = vector.load %arg1[%c0_40, %c1, %c0_41] : memref<8x8x32xf32, #tpu.memory_space<vmem>>, vector<8x1x32xf32>
    %104 = vector.shape_cast %103 : vector<8x1x32xf32> to vector<8x32xf32>
    %cst_42 = arith.constant dense<0.000000e+00> : vector<8x192xf32>
    %105 = tpu.matmul %104, %1, %cst_42 {dimension_numbers = #tpu.dot_dimension_numbers<[1], [0], [0], [1], [0, 0, 1, 1], [], []>} : vector<8x32xf32>, vector<32x192xf32>, vector<8x192xf32> -> vector<8x192xf32>
    %106 = vector.broadcast %5 : vector<1x192xf32> to vector<8x192xf32>
    %107 = arith.addf %105, %106 : vector<8x192xf32>
    %c0_43 = arith.constant 0 : index
    %c6 = arith.constant 6 : index
    %c0_44 = arith.constant 0 : index
    %108 = vector.load %arg1[%c0_43, %c6, %c0_44] : memref<8x8x32xf32, #tpu.memory_space<vmem>>, vector<8x1x32xf32>
    %109 = vector.shape_cast %108 : vector<8x1x32xf32> to vector<8x32xf32>
    %cst_45 = arith.constant dense<0.000000e+00> : vector<8x192xf32>
    %110 = tpu.matmul %109, %2, %cst_45 {dimension_numbers = #tpu.dot_dimension_numbers<[1], [0], [0], [1], [0, 0, 1, 1], [], []>} : vector<8x32xf32>, vector<32x192xf32>, vector<8x192xf32> -> vector<8x192xf32>
    %111 = vector.broadcast %6 : vector<1x192xf32> to vector<8x192xf32>
    %112 = arith.addf %110, %111 : vector<8x192xf32>
    %cst_46 = arith.constant dense<0.000000e+00> : vector<8x192xf32>
    %113 = tpu.matmul %85, %3, %cst_46 {dimension_numbers = #tpu.dot_dimension_numbers<[1], [0], [0], [1], [0, 0, 1, 1], [], []>} : vector<8x64xf32>, vector<64x192xf32>, vector<8x192xf32> -> vector<8x192xf32>
    %114 = vector.broadcast %7 : vector<1x192xf32> to vector<8x192xf32>
    %115 = arith.addf %113, %114 : vector<8x192xf32>
    %116 = vector.extract_strided_slice %107 {offsets = [0, 0], sizes = [8, 64], strides = [1, 1]} : vector<8x192xf32> to vector<8x64xf32>
    %117 = vector.extract_strided_slice %115 {offsets = [0, 0], sizes = [8, 64], strides = [1, 1]} : vector<8x192xf32> to vector<8x64xf32>
    %118 = arith.addf %116, %117 : vector<8x64xf32>
    %119 = arith.negf %118 : vector<8x64xf32>
    %120 = math.exp %119 : vector<8x64xf32>
    %cst_47 = arith.constant 1.000000e+00 : f32
    %121 = vector.broadcast %cst_47 : f32 to vector<8x64xf32>
    %122 = arith.addf %121, %120 : vector<8x64xf32>
    %123 = arith.divf %121, %122 : vector<8x64xf32>
    %124 = vector.extract_strided_slice %107 {offsets = [0, 64], sizes = [8, 64], strides = [1, 1]} : vector<8x192xf32> to vector<8x64xf32>
    %125 = vector.extract_strided_slice %115 {offsets = [0, 64], sizes = [8, 64], strides = [1, 1]} : vector<8x192xf32> to vector<8x64xf32>
    %126 = arith.addf %124, %125 : vector<8x64xf32>
    %127 = arith.negf %126 : vector<8x64xf32>
    %128 = math.exp %127 : vector<8x64xf32>
    %cst_48 = arith.constant 1.000000e+00 : f32
    %129 = vector.broadcast %cst_48 : f32 to vector<8x64xf32>
    %130 = arith.addf %129, %128 : vector<8x64xf32>
    %131 = arith.divf %129, %130 : vector<8x64xf32>
    %132 = vector.extract_strided_slice %107 {offsets = [0, 128], sizes = [8, 64], strides = [1, 1]} : vector<8x192xf32> to vector<8x64xf32>
    %133 = vector.extract_strided_slice %115 {offsets = [0, 128], sizes = [8, 64], strides = [1, 1]} : vector<8x192xf32> to vector<8x64xf32>
    %134 = arith.mulf %123, %133 : vector<8x64xf32>
    %135 = arith.addf %132, %134 : vector<8x64xf32>
    %136 = math.tanh %135 : vector<8x64xf32>
    %cst_49 = arith.constant 1.000000e+00 : f32
    %137 = vector.broadcast %cst_49 : f32 to vector<8x64xf32>
    %138 = arith.subf %137, %131 : vector<8x64xf32>
    %139 = arith.mulf %138, %136 : vector<8x64xf32>
    %140 = arith.mulf %131, %85 : vector<8x64xf32>
    %141 = arith.addf %139, %140 : vector<8x64xf32>
    %cst_50 = arith.constant dense<0.000000e+00> : vector<8x192xf32>
    %142 = tpu.matmul %88, %4, %cst_50 {dimension_numbers = #tpu.dot_dimension_numbers<[1], [0], [0], [1], [0, 0, 1, 1], [], []>} : vector<8x64xf32>, vector<64x192xf32>, vector<8x192xf32> -> vector<8x192xf32>
    %143 = vector.broadcast %8 : vector<1x192xf32> to vector<8x192xf32>
    %144 = arith.addf %142, %143 : vector<8x192xf32>
    %145 = vector.extract_strided_slice %112 {offsets = [0, 0], sizes = [8, 64], strides = [1, 1]} : vector<8x192xf32> to vector<8x64xf32>
    %146 = vector.extract_strided_slice %144 {offsets = [0, 0], sizes = [8, 64], strides = [1, 1]} : vector<8x192xf32> to vector<8x64xf32>
    %147 = arith.addf %145, %146 : vector<8x64xf32>
    %148 = arith.negf %147 : vector<8x64xf32>
    %149 = math.exp %148 : vector<8x64xf32>
    %cst_51 = arith.constant 1.000000e+00 : f32
    %150 = vector.broadcast %cst_51 : f32 to vector<8x64xf32>
    %151 = arith.addf %150, %149 : vector<8x64xf32>
    %152 = arith.divf %150, %151 : vector<8x64xf32>
    %153 = vector.extract_strided_slice %112 {offsets = [0, 64], sizes = [8, 64], strides = [1, 1]} : vector<8x192xf32> to vector<8x64xf32>
    %154 = vector.extract_strided_slice %144 {offsets = [0, 64], sizes = [8, 64], strides = [1, 1]} : vector<8x192xf32> to vector<8x64xf32>
    %155 = arith.addf %153, %154 : vector<8x64xf32>
    %156 = arith.negf %155 : vector<8x64xf32>
    %157 = math.exp %156 : vector<8x64xf32>
    %cst_52 = arith.constant 1.000000e+00 : f32
    %158 = vector.broadcast %cst_52 : f32 to vector<8x64xf32>
    %159 = arith.addf %158, %157 : vector<8x64xf32>
    %160 = arith.divf %158, %159 : vector<8x64xf32>
    %161 = vector.extract_strided_slice %112 {offsets = [0, 128], sizes = [8, 64], strides = [1, 1]} : vector<8x192xf32> to vector<8x64xf32>
    %162 = vector.extract_strided_slice %144 {offsets = [0, 128], sizes = [8, 64], strides = [1, 1]} : vector<8x192xf32> to vector<8x64xf32>
    %163 = arith.mulf %152, %162 : vector<8x64xf32>
    %164 = arith.addf %161, %163 : vector<8x64xf32>
    %165 = math.tanh %164 : vector<8x64xf32>
    %cst_53 = arith.constant 1.000000e+00 : f32
    %166 = vector.broadcast %cst_53 : f32 to vector<8x64xf32>
    %167 = arith.subf %166, %160 : vector<8x64xf32>
    %168 = arith.mulf %167, %165 : vector<8x64xf32>
    %169 = arith.mulf %160, %88 : vector<8x64xf32>
    %170 = arith.addf %168, %169 : vector<8x64xf32>
    %c1_i32 = arith.constant 1 : i32
    %171 = vector.broadcast %c1_i32 : i32 to vector<8x1xi32>
    %172 = arith.cmpi sgt, %0, %171 : vector<8x1xi32>
    %c6_i32 = arith.constant 6 : i32
    %173 = vector.broadcast %c6_i32 : i32 to vector<8x1xi32>
    %174 = arith.cmpi sgt, %0, %173 : vector<8x1xi32>
    %175 = vector.shape_cast %172 : vector<8x1xi1> to vector<8x1xi1>
    %176 = vector.broadcast %175 : vector<8x1xi1> to vector<8x64xi1>
    %177 = arith.select %176, %141, %85 : vector<8x64xi1>, vector<8x64xf32>
    %178 = vector.shape_cast %174 : vector<8x1xi1> to vector<8x1xi1>
    %179 = vector.broadcast %178 : vector<8x1xi1> to vector<8x64xi1>
    %180 = arith.select %179, %170, %88 : vector<8x64xi1>, vector<8x64xf32>
    %cst_54 = arith.constant 0.000000e+00 : f32
    %181 = vector.shape_cast %172 : vector<8x1xi1> to vector<8x1xi1>
    %182 = vector.broadcast %181 : vector<8x1xi1> to vector<8x64xi1>
    %183 = vector.broadcast %cst_54 : f32 to vector<8x64xf32>
    %184 = arith.select %182, %141, %183 : vector<8x64xi1>, vector<8x64xf32>
    %c1_55 = arith.constant 1 : index
    %c0_56 = arith.constant 0 : index
    %c0_57 = arith.constant 0 : index
    %185 = vector.load %arg16[%c1_55, %c0_56, %c0_57] : memref<8x8x128xf32, #tpu.memory_space<vmem>>, vector<1x8x64xf32>
    %186 = vector.shape_cast %185 : vector<1x8x64xf32> to vector<8x64xf32>
    %187 = vector.shape_cast %184 : vector<8x64xf32> to vector<1x8x64xf32>
    tpu.vector_store %arg16[%c1_55, %c0_56, %c0_57], %187 {strides = array<i32>} : memref<8x8x128xf32, #tpu.memory_space<vmem>>, vector<1x8x64xf32>,
    %cst_58 = arith.constant 0.000000e+00 : f32
    %188 = vector.shape_cast %174 : vector<8x1xi1> to vector<8x1xi1>
    %189 = vector.broadcast %188 : vector<8x1xi1> to vector<8x64xi1>
    %190 = vector.broadcast %cst_58 : f32 to vector<8x64xf32>
    %191 = arith.select %189, %170, %190 : vector<8x64xi1>, vector<8x64xf32>
    %c6_59 = arith.constant 6 : index
    %c0_60 = arith.constant 0 : index
    %c64_61 = arith.constant 64 : index
    %192 = vector.load %arg16[%c6_59, %c0_60, %c64_61] : memref<8x8x128xf32, #tpu.memory_space<vmem>>, vector<1x8x64xf32>
    %193 = vector.shape_cast %192 : vector<1x8x64xf32> to vector<8x64xf32>
    %194 = vector.shape_cast %191 : vector<8x64xf32> to vector<1x8x64xf32>
    tpu.vector_store %arg16[%c6_59, %c0_60, %c64_61], %194 {strides = array<i32>} : memref<8x8x128xf32, #tpu.memory_space<vmem>>, vector<1x8x64xf32>,
    %c0_62 = arith.constant 0 : index
    %c2 = arith.constant 2 : index
    %c0_63 = arith.constant 0 : index
    %195 = vector.load %arg1[%c0_62, %c2, %c0_63] : memref<8x8x32xf32, #tpu.memory_space<vmem>>, vector<8x1x32xf32>
    %196 = vector.shape_cast %195 : vector<8x1x32xf32> to vector<8x32xf32>
    %cst_64 = arith.constant dense<0.000000e+00> : vector<8x192xf32>
    %197 = tpu.matmul %196, %1, %cst_64 {dimension_numbers = #tpu.dot_dimension_numbers<[1], [0], [0], [1], [0, 0, 1, 1], [], []>} : vector<8x32xf32>, vector<32x192xf32>, vector<8x192xf32> -> vector<8x192xf32>
    %198 = vector.broadcast %5 : vector<1x192xf32> to vector<8x192xf32>
    %199 = arith.addf %197, %198 : vector<8x192xf32>
    %c0_65 = arith.constant 0 : index
    %c5 = arith.constant 5 : index
    %c0_66 = arith.constant 0 : index
    %200 = vector.load %arg1[%c0_65, %c5, %c0_66] : memref<8x8x32xf32, #tpu.memory_space<vmem>>, vector<8x1x32xf32>
    %201 = vector.shape_cast %200 : vector<8x1x32xf32> to vector<8x32xf32>
    %cst_67 = arith.constant dense<0.000000e+00> : vector<8x192xf32>
    %202 = tpu.matmul %201, %2, %cst_67 {dimension_numbers = #tpu.dot_dimension_numbers<[1], [0], [0], [1], [0, 0, 1, 1], [], []>} : vector<8x32xf32>, vector<32x192xf32>, vector<8x192xf32> -> vector<8x192xf32>
    %203 = vector.broadcast %6 : vector<1x192xf32> to vector<8x192xf32>
    %204 = arith.addf %202, %203 : vector<8x192xf32>
    %cst_68 = arith.constant dense<0.000000e+00> : vector<8x192xf32>
    %205 = tpu.matmul %177, %3, %cst_68 {dimension_numbers = #tpu.dot_dimension_numbers<[1], [0], [0], [1], [0, 0, 1, 1], [], []>} : vector<8x64xf32>, vector<64x192xf32>, vector<8x192xf32> -> vector<8x192xf32>
    %206 = vector.broadcast %7 : vector<1x192xf32> to vector<8x192xf32>
    %207 = arith.addf %205, %206 : vector<8x192xf32>
    %208 = vector.extract_strided_slice %199 {offsets = [0, 0], sizes = [8, 64], strides = [1, 1]} : vector<8x192xf32> to vector<8x64xf32>
    %209 = vector.extract_strided_slice %207 {offsets = [0, 0], sizes = [8, 64], strides = [1, 1]} : vector<8x192xf32> to vector<8x64xf32>
    %210 = arith.addf %208, %209 : vector<8x64xf32>
    %211 = arith.negf %210 : vector<8x64xf32>
    %212 = math.exp %211 : vector<8x64xf32>
    %cst_69 = arith.constant 1.000000e+00 : f32
    %213 = vector.broadcast %cst_69 : f32 to vector<8x64xf32>
    %214 = arith.addf %213, %212 : vector<8x64xf32>
    %215 = arith.divf %213, %214 : vector<8x64xf32>
    %216 = vector.extract_strided_slice %199 {offsets = [0, 64], sizes = [8, 64], strides = [1, 1]} : vector<8x192xf32> to vector<8x64xf32>
    %217 = vector.extract_strided_slice %207 {offsets = [0, 64], sizes = [8, 64], strides = [1, 1]} : vector<8x192xf32> to vector<8x64xf32>
    %218 = arith.addf %216, %217 : vector<8x64xf32>
    %219 = arith.negf %218 : vector<8x64xf32>
    %220 = math.exp %219 : vector<8x64xf32>
    %cst_70 = arith.constant 1.000000e+00 : f32
    %221 = vector.broadcast %cst_70 : f32 to vector<8x64xf32>
    %222 = arith.addf %221, %220 : vector<8x64xf32>
    %223 = arith.divf %221, %222 : vector<8x64xf32>
    %224 = vector.extract_strided_slice %199 {offsets = [0, 128], sizes = [8, 64], strides = [1, 1]} : vector<8x192xf32> to vector<8x64xf32>
    %225 = vector.extract_strided_slice %207 {offsets = [0, 128], sizes = [8, 64], strides = [1, 1]} : vector<8x192xf32> to vector<8x64xf32>
    %226 = arith.mulf %215, %225 : vector<8x64xf32>
    %227 = arith.addf %224, %226 : vector<8x64xf32>
    %228 = math.tanh %227 : vector<8x64xf32>
    %cst_71 = arith.constant 1.000000e+00 : f32
    %229 = vector.broadcast %cst_71 : f32 to vector<8x64xf32>
    %230 = arith.subf %229, %223 : vector<8x64xf32>
    %231 = arith.mulf %230, %228 : vector<8x64xf32>
    %232 = arith.mulf %223, %177 : vector<8x64xf32>
    %233 = arith.addf %231, %232 : vector<8x64xf32>
    %cst_72 = arith.constant dense<0.000000e+00> : vector<8x192xf32>
    %234 = tpu.matmul %180, %4, %cst_72 {dimension_numbers = #tpu.dot_dimension_numbers<[1], [0], [0], [1], [0, 0, 1, 1], [], []>} : vector<8x64xf32>, vector<64x192xf32>, vector<8x192xf32> -> vector<8x192xf32>
    %235 = vector.broadcast %8 : vector<1x192xf32> to vector<8x192xf32>
    %236 = arith.addf %234, %235 : vector<8x192xf32>
    %237 = vector.extract_strided_slice %204 {offsets = [0, 0], sizes = [8, 64], strides = [1, 1]} : vector<8x192xf32> to vector<8x64xf32>
    %238 = vector.extract_strided_slice %236 {offsets = [0, 0], sizes = [8, 64], strides = [1, 1]} : vector<8x192xf32> to vector<8x64xf32>
    %239 = arith.addf %237, %238 : vector<8x64xf32>
    %240 = arith.negf %239 : vector<8x64xf32>
    %241 = math.exp %240 : vector<8x64xf32>
    %cst_73 = arith.constant 1.000000e+00 : f32
    %242 = vector.broadcast %cst_73 : f32 to vector<8x64xf32>
    %243 = arith.addf %242, %241 : vector<8x64xf32>
    %244 = arith.divf %242, %243 : vector<8x64xf32>
    %245 = vector.extract_strided_slice %204 {offsets = [0, 64], sizes = [8, 64], strides = [1, 1]} : vector<8x192xf32> to vector<8x64xf32>
    %246 = vector.extract_strided_slice %236 {offsets = [0, 64], sizes = [8, 64], strides = [1, 1]} : vector<8x192xf32> to vector<8x64xf32>
    %247 = arith.addf %245, %246 : vector<8x64xf32>
    %248 = arith.negf %247 : vector<8x64xf32>
    %249 = math.exp %248 : vector<8x64xf32>
    %cst_74 = arith.constant 1.000000e+00 : f32
    %250 = vector.broadcast %cst_74 : f32 to vector<8x64xf32>
    %251 = arith.addf %250, %249 : vector<8x64xf32>
    %252 = arith.divf %250, %251 : vector<8x64xf32>
    %253 = vector.extract_strided_slice %204 {offsets = [0, 128], sizes = [8, 64], strides = [1, 1]} : vector<8x192xf32> to vector<8x64xf32>
    %254 = vector.extract_strided_slice %236 {offsets = [0, 128], sizes = [8, 64], strides = [1, 1]} : vector<8x192xf32> to vector<8x64xf32>
    %255 = arith.mulf %244, %254 : vector<8x64xf32>
    %256 = arith.addf %253, %255 : vector<8x64xf32>
    %257 = math.tanh %256 : vector<8x64xf32>
    %cst_75 = arith.constant 1.000000e+00 : f32
    %258 = vector.broadcast %cst_75 : f32 to vector<8x64xf32>
    %259 = arith.subf %258, %252 : vector<8x64xf32>
    %260 = arith.mulf %259, %257 : vector<8x64xf32>
    %261 = arith.mulf %252, %180 : vector<8x64xf32>
    %262 = arith.addf %260, %261 : vector<8x64xf32>
    %c2_i32 = arith.constant 2 : i32
    %263 = vector.broadcast %c2_i32 : i32 to vector<8x1xi32>
    %264 = arith.cmpi sgt, %0, %263 : vector<8x1xi32>
    %c5_i32 = arith.constant 5 : i32
    %265 = vector.broadcast %c5_i32 : i32 to vector<8x1xi32>
    %266 = arith.cmpi sgt, %0, %265 : vector<8x1xi32>
    %267 = vector.shape_cast %264 : vector<8x1xi1> to vector<8x1xi1>
    %268 = vector.broadcast %267 : vector<8x1xi1> to vector<8x64xi1>
    %269 = arith.select %268, %233, %177 : vector<8x64xi1>, vector<8x64xf32>
    %270 = vector.shape_cast %266 : vector<8x1xi1> to vector<8x1xi1>
    %271 = vector.broadcast %270 : vector<8x1xi1> to vector<8x64xi1>
    %272 = arith.select %271, %262, %180 : vector<8x64xi1>, vector<8x64xf32>
    %cst_76 = arith.constant 0.000000e+00 : f32
    %273 = vector.shape_cast %264 : vector<8x1xi1> to vector<8x1xi1>
    %274 = vector.broadcast %273 : vector<8x1xi1> to vector<8x64xi1>
    %275 = vector.broadcast %cst_76 : f32 to vector<8x64xf32>
    %276 = arith.select %274, %233, %275 : vector<8x64xi1>, vector<8x64xf32>
    %c2_77 = arith.constant 2 : index
    %c0_78 = arith.constant 0 : index
    %c0_79 = arith.constant 0 : index
    %277 = vector.load %arg16[%c2_77, %c0_78, %c0_79] : memref<8x8x128xf32, #tpu.memory_space<vmem>>, vector<1x8x64xf32>
    %278 = vector.shape_cast %277 : vector<1x8x64xf32> to vector<8x64xf32>
    %279 = vector.shape_cast %276 : vector<8x64xf32> to vector<1x8x64xf32>
    tpu.vector_store %arg16[%c2_77, %c0_78, %c0_79], %279 {strides = array<i32>} : memref<8x8x128xf32, #tpu.memory_space<vmem>>, vector<1x8x64xf32>,
    %cst_80 = arith.constant 0.000000e+00 : f32
    %280 = vector.shape_cast %266 : vector<8x1xi1> to vector<8x1xi1>
    %281 = vector.broadcast %280 : vector<8x1xi1> to vector<8x64xi1>
    %282 = vector.broadcast %cst_80 : f32 to vector<8x64xf32>
    %283 = arith.select %281, %262, %282 : vector<8x64xi1>, vector<8x64xf32>
    %c5_81 = arith.constant 5 : index
    %c0_82 = arith.constant 0 : index
    %c64_83 = arith.constant 64 : index
    %284 = vector.load %arg16[%c5_81, %c0_82, %c64_83] : memref<8x8x128xf32, #tpu.memory_space<vmem>>, vector<1x8x64xf32>
    %285 = vector.shape_cast %284 : vector<1x8x64xf32> to vector<8x64xf32>
    %286 = vector.shape_cast %283 : vector<8x64xf32> to vector<1x8x64xf32>
    tpu.vector_store %arg16[%c5_81, %c0_82, %c64_83], %286 {strides = array<i32>} : memref<8x8x128xf32, #tpu.memory_space<vmem>>, vector<1x8x64xf32>,
    %c0_84 = arith.constant 0 : index
    %c3 = arith.constant 3 : index
    %c0_85 = arith.constant 0 : index
    %287 = vector.load %arg1[%c0_84, %c3, %c0_85] : memref<8x8x32xf32, #tpu.memory_space<vmem>>, vector<8x1x32xf32>
    %288 = vector.shape_cast %287 : vector<8x1x32xf32> to vector<8x32xf32>
    %cst_86 = arith.constant dense<0.000000e+00> : vector<8x192xf32>
    %289 = tpu.matmul %288, %1, %cst_86 {dimension_numbers = #tpu.dot_dimension_numbers<[1], [0], [0], [1], [0, 0, 1, 1], [], []>} : vector<8x32xf32>, vector<32x192xf32>, vector<8x192xf32> -> vector<8x192xf32>
    %290 = vector.broadcast %5 : vector<1x192xf32> to vector<8x192xf32>
    %291 = arith.addf %289, %290 : vector<8x192xf32>
    %c0_87 = arith.constant 0 : index
    %c4 = arith.constant 4 : index
    %c0_88 = arith.constant 0 : index
    %292 = vector.load %arg1[%c0_87, %c4, %c0_88] : memref<8x8x32xf32, #tpu.memory_space<vmem>>, vector<8x1x32xf32>
    %293 = vector.shape_cast %292 : vector<8x1x32xf32> to vector<8x32xf32>
    %cst_89 = arith.constant dense<0.000000e+00> : vector<8x192xf32>
    %294 = tpu.matmul %293, %2, %cst_89 {dimension_numbers = #tpu.dot_dimension_numbers<[1], [0], [0], [1], [0, 0, 1, 1], [], []>} : vector<8x32xf32>, vector<32x192xf32>, vector<8x192xf32> -> vector<8x192xf32>
    %295 = vector.broadcast %6 : vector<1x192xf32> to vector<8x192xf32>
    %296 = arith.addf %294, %295 : vector<8x192xf32>
    %cst_90 = arith.constant dense<0.000000e+00> : vector<8x192xf32>
    %297 = tpu.matmul %269, %3, %cst_90 {dimension_numbers = #tpu.dot_dimension_numbers<[1], [0], [0], [1], [0, 0, 1, 1], [], []>} : vector<8x64xf32>, vector<64x192xf32>, vector<8x192xf32> -> vector<8x192xf32>
    %298 = vector.broadcast %7 : vector<1x192xf32> to vector<8x192xf32>
    %299 = arith.addf %297, %298 : vector<8x192xf32>
    %300 = vector.extract_strided_slice %291 {offsets = [0, 0], sizes = [8, 64], strides = [1, 1]} : vector<8x192xf32> to vector<8x64xf32>
    %301 = vector.extract_strided_slice %299 {offsets = [0, 0], sizes = [8, 64], strides = [1, 1]} : vector<8x192xf32> to vector<8x64xf32>
    %302 = arith.addf %300, %301 : vector<8x64xf32>
    %303 = arith.negf %302 : vector<8x64xf32>
    %304 = math.exp %303 : vector<8x64xf32>
    %cst_91 = arith.constant 1.000000e+00 : f32
    %305 = vector.broadcast %cst_91 : f32 to vector<8x64xf32>
    %306 = arith.addf %305, %304 : vector<8x64xf32>
    %307 = arith.divf %305, %306 : vector<8x64xf32>
    %308 = vector.extract_strided_slice %291 {offsets = [0, 64], sizes = [8, 64], strides = [1, 1]} : vector<8x192xf32> to vector<8x64xf32>
    %309 = vector.extract_strided_slice %299 {offsets = [0, 64], sizes = [8, 64], strides = [1, 1]} : vector<8x192xf32> to vector<8x64xf32>
    %310 = arith.addf %308, %309 : vector<8x64xf32>
    %311 = arith.negf %310 : vector<8x64xf32>
    %312 = math.exp %311 : vector<8x64xf32>
    %cst_92 = arith.constant 1.000000e+00 : f32
    %313 = vector.broadcast %cst_92 : f32 to vector<8x64xf32>
    %314 = arith.addf %313, %312 : vector<8x64xf32>
    %315 = arith.divf %313, %314 : vector<8x64xf32>
    %316 = vector.extract_strided_slice %291 {offsets = [0, 128], sizes = [8, 64], strides = [1, 1]} : vector<8x192xf32> to vector<8x64xf32>
    %317 = vector.extract_strided_slice %299 {offsets = [0, 128], sizes = [8, 64], strides = [1, 1]} : vector<8x192xf32> to vector<8x64xf32>
    %318 = arith.mulf %307, %317 : vector<8x64xf32>
    %319 = arith.addf %316, %318 : vector<8x64xf32>
    %320 = math.tanh %319 : vector<8x64xf32>
    %cst_93 = arith.constant 1.000000e+00 : f32
    %321 = vector.broadcast %cst_93 : f32 to vector<8x64xf32>
    %322 = arith.subf %321, %315 : vector<8x64xf32>
    %323 = arith.mulf %322, %320 : vector<8x64xf32>
    %324 = arith.mulf %315, %269 : vector<8x64xf32>
    %325 = arith.addf %323, %324 : vector<8x64xf32>
    %cst_94 = arith.constant dense<0.000000e+00> : vector<8x192xf32>
    %326 = tpu.matmul %272, %4, %cst_94 {dimension_numbers = #tpu.dot_dimension_numbers<[1], [0], [0], [1], [0, 0, 1, 1], [], []>} : vector<8x64xf32>, vector<64x192xf32>, vector<8x192xf32> -> vector<8x192xf32>
    %327 = vector.broadcast %8 : vector<1x192xf32> to vector<8x192xf32>
    %328 = arith.addf %326, %327 : vector<8x192xf32>
    %329 = vector.extract_strided_slice %296 {offsets = [0, 0], sizes = [8, 64], strides = [1, 1]} : vector<8x192xf32> to vector<8x64xf32>
    %330 = vector.extract_strided_slice %328 {offsets = [0, 0], sizes = [8, 64], strides = [1, 1]} : vector<8x192xf32> to vector<8x64xf32>
    %331 = arith.addf %329, %330 : vector<8x64xf32>
    %332 = arith.negf %331 : vector<8x64xf32>
    %333 = math.exp %332 : vector<8x64xf32>
    %cst_95 = arith.constant 1.000000e+00 : f32
    %334 = vector.broadcast %cst_95 : f32 to vector<8x64xf32>
    %335 = arith.addf %334, %333 : vector<8x64xf32>
    %336 = arith.divf %334, %335 : vector<8x64xf32>
    %337 = vector.extract_strided_slice %296 {offsets = [0, 64], sizes = [8, 64], strides = [1, 1]} : vector<8x192xf32> to vector<8x64xf32>
    %338 = vector.extract_strided_slice %328 {offsets = [0, 64], sizes = [8, 64], strides = [1, 1]} : vector<8x192xf32> to vector<8x64xf32>
    %339 = arith.addf %337, %338 : vector<8x64xf32>
    %340 = arith.negf %339 : vector<8x64xf32>
    %341 = math.exp %340 : vector<8x64xf32>
    %cst_96 = arith.constant 1.000000e+00 : f32
    %342 = vector.broadcast %cst_96 : f32 to vector<8x64xf32>
    %343 = arith.addf %342, %341 : vector<8x64xf32>
    %344 = arith.divf %342, %343 : vector<8x64xf32>
    %345 = vector.extract_strided_slice %296 {offsets = [0, 128], sizes = [8, 64], strides = [1, 1]} : vector<8x192xf32> to vector<8x64xf32>
    %346 = vector.extract_strided_slice %328 {offsets = [0, 128], sizes = [8, 64], strides = [1, 1]} : vector<8x192xf32> to vector<8x64xf32>
    %347 = arith.mulf %336, %346 : vector<8x64xf32>
    %348 = arith.addf %345, %347 : vector<8x64xf32>
    %349 = math.tanh %348 : vector<8x64xf32>
    %cst_97 = arith.constant 1.000000e+00 : f32
    %350 = vector.broadcast %cst_97 : f32 to vector<8x64xf32>
    %351 = arith.subf %350, %344 : vector<8x64xf32>
    %352 = arith.mulf %351, %349 : vector<8x64xf32>
    %353 = arith.mulf %344, %272 : vector<8x64xf32>
    %354 = arith.addf %352, %353 : vector<8x64xf32>
    %c3_i32 = arith.constant 3 : i32
    %355 = vector.broadcast %c3_i32 : i32 to vector<8x1xi32>
    %356 = arith.cmpi sgt, %0, %355 : vector<8x1xi32>
    %c4_i32 = arith.constant 4 : i32
    %357 = vector.broadcast %c4_i32 : i32 to vector<8x1xi32>
    %358 = arith.cmpi sgt, %0, %357 : vector<8x1xi32>
    %359 = vector.shape_cast %356 : vector<8x1xi1> to vector<8x1xi1>
    %360 = vector.broadcast %359 : vector<8x1xi1> to vector<8x64xi1>
    %361 = arith.select %360, %325, %269 : vector<8x64xi1>, vector<8x64xf32>
    %362 = vector.shape_cast %358 : vector<8x1xi1> to vector<8x1xi1>
    %363 = vector.broadcast %362 : vector<8x1xi1> to vector<8x64xi1>
    %364 = arith.select %363, %354, %272 : vector<8x64xi1>, vector<8x64xf32>
    %cst_98 = arith.constant 0.000000e+00 : f32
    %365 = vector.shape_cast %356 : vector<8x1xi1> to vector<8x1xi1>
    %366 = vector.broadcast %365 : vector<8x1xi1> to vector<8x64xi1>
    %367 = vector.broadcast %cst_98 : f32 to vector<8x64xf32>
    %368 = arith.select %366, %325, %367 : vector<8x64xi1>, vector<8x64xf32>
    %c3_99 = arith.constant 3 : index
    %c0_100 = arith.constant 0 : index
    %c0_101 = arith.constant 0 : index
    %369 = vector.load %arg16[%c3_99, %c0_100, %c0_101] : memref<8x8x128xf32, #tpu.memory_space<vmem>>, vector<1x8x64xf32>
    %370 = vector.shape_cast %369 : vector<1x8x64xf32> to vector<8x64xf32>
    %371 = vector.shape_cast %368 : vector<8x64xf32> to vector<1x8x64xf32>
    tpu.vector_store %arg16[%c3_99, %c0_100, %c0_101], %371 {strides = array<i32>} : memref<8x8x128xf32, #tpu.memory_space<vmem>>, vector<1x8x64xf32>,
    %cst_102 = arith.constant 0.000000e+00 : f32
    %372 = vector.shape_cast %358 : vector<8x1xi1> to vector<8x1xi1>
    %373 = vector.broadcast %372 : vector<8x1xi1> to vector<8x64xi1>
    %374 = vector.broadcast %cst_102 : f32 to vector<8x64xf32>
    %375 = arith.select %373, %354, %374 : vector<8x64xi1>, vector<8x64xf32>
    %c4_103 = arith.constant 4 : index
    %c0_104 = arith.constant 0 : index
    %c64_105 = arith.constant 64 : index
    %376 = vector.load %arg16[%c4_103, %c0_104, %c64_105] : memref<8x8x128xf32, #tpu.memory_space<vmem>>, vector<1x8x64xf32>
    %377 = vector.shape_cast %376 : vector<1x8x64xf32> to vector<8x64xf32>
    %378 = vector.shape_cast %375 : vector<8x64xf32> to vector<1x8x64xf32>
    tpu.vector_store %arg16[%c4_103, %c0_104, %c64_105], %378 {strides = array<i32>} : memref<8x8x128xf32, #tpu.memory_space<vmem>>, vector<1x8x64xf32>,
    %c0_106 = arith.constant 0 : index
    %c4_107 = arith.constant 4 : index
    %c0_108 = arith.constant 0 : index
    %379 = vector.load %arg1[%c0_106, %c4_107, %c0_108] : memref<8x8x32xf32, #tpu.memory_space<vmem>>, vector<8x1x32xf32>
    %380 = vector.shape_cast %379 : vector<8x1x32xf32> to vector<8x32xf32>
    %cst_109 = arith.constant dense<0.000000e+00> : vector<8x192xf32>
    %381 = tpu.matmul %380, %1, %cst_109 {dimension_numbers = #tpu.dot_dimension_numbers<[1], [0], [0], [1], [0, 0, 1, 1], [], []>} : vector<8x32xf32>, vector<32x192xf32>, vector<8x192xf32> -> vector<8x192xf32>
    %382 = vector.broadcast %5 : vector<1x192xf32> to vector<8x192xf32>
    %383 = arith.addf %381, %382 : vector<8x192xf32>
    %c0_110 = arith.constant 0 : index
    %c3_111 = arith.constant 3 : index
    %c0_112 = arith.constant 0 : index
    %384 = vector.load %arg1[%c0_110, %c3_111, %c0_112] : memref<8x8x32xf32, #tpu.memory_space<vmem>>, vector<8x1x32xf32>
    %385 = vector.shape_cast %384 : vector<8x1x32xf32> to vector<8x32xf32>
    %cst_113 = arith.constant dense<0.000000e+00> : vector<8x192xf32>
    %386 = tpu.matmul %385, %2, %cst_113 {dimension_numbers = #tpu.dot_dimension_numbers<[1], [0], [0], [1], [0, 0, 1, 1], [], []>} : vector<8x32xf32>, vector<32x192xf32>, vector<8x192xf32> -> vector<8x192xf32>
    %387 = vector.broadcast %6 : vector<1x192xf32> to vector<8x192xf32>
    %388 = arith.addf %386, %387 : vector<8x192xf32>
    %cst_114 = arith.constant dense<0.000000e+00> : vector<8x192xf32>
    %389 = tpu.matmul %361, %3, %cst_114 {dimension_numbers = #tpu.dot_dimension_numbers<[1], [0], [0], [1], [0, 0, 1, 1], [], []>} : vector<8x64xf32>, vector<64x192xf32>, vector<8x192xf32> -> vector<8x192xf32>
    %390 = vector.broadcast %7 : vector<1x192xf32> to vector<8x192xf32>
    %391 = arith.addf %389, %390 : vector<8x192xf32>
    %392 = vector.extract_strided_slice %383 {offsets = [0, 0], sizes = [8, 64], strides = [1, 1]} : vector<8x192xf32> to vector<8x64xf32>
    %393 = vector.extract_strided_slice %391 {offsets = [0, 0], sizes = [8, 64], strides = [1, 1]} : vector<8x192xf32> to vector<8x64xf32>
    %394 = arith.addf %392, %393 : vector<8x64xf32>
    %395 = arith.negf %394 : vector<8x64xf32>
    %396 = math.exp %395 : vector<8x64xf32>
    %cst_115 = arith.constant 1.000000e+00 : f32
    %397 = vector.broadcast %cst_115 : f32 to vector<8x64xf32>
    %398 = arith.addf %397, %396 : vector<8x64xf32>
    %399 = arith.divf %397, %398 : vector<8x64xf32>
    %400 = vector.extract_strided_slice %383 {offsets = [0, 64], sizes = [8, 64], strides = [1, 1]} : vector<8x192xf32> to vector<8x64xf32>
    %401 = vector.extract_strided_slice %391 {offsets = [0, 64], sizes = [8, 64], strides = [1, 1]} : vector<8x192xf32> to vector<8x64xf32>
    %402 = arith.addf %400, %401 : vector<8x64xf32>
    %403 = arith.negf %402 : vector<8x64xf32>
    %404 = math.exp %403 : vector<8x64xf32>
    %cst_116 = arith.constant 1.000000e+00 : f32
    %405 = vector.broadcast %cst_116 : f32 to vector<8x64xf32>
    %406 = arith.addf %405, %404 : vector<8x64xf32>
    %407 = arith.divf %405, %406 : vector<8x64xf32>
    %408 = vector.extract_strided_slice %383 {offsets = [0, 128], sizes = [8, 64], strides = [1, 1]} : vector<8x192xf32> to vector<8x64xf32>
    %409 = vector.extract_strided_slice %391 {offsets = [0, 128], sizes = [8, 64], strides = [1, 1]} : vector<8x192xf32> to vector<8x64xf32>
    %410 = arith.mulf %399, %409 : vector<8x64xf32>
    %411 = arith.addf %408, %410 : vector<8x64xf32>
    %412 = math.tanh %411 : vector<8x64xf32>
    %cst_117 = arith.constant 1.000000e+00 : f32
    %413 = vector.broadcast %cst_117 : f32 to vector<8x64xf32>
    %414 = arith.subf %413, %407 : vector<8x64xf32>
    %415 = arith.mulf %414, %412 : vector<8x64xf32>
    %416 = arith.mulf %407, %361 : vector<8x64xf32>
    %417 = arith.addf %415, %416 : vector<8x64xf32>
    %cst_118 = arith.constant dense<0.000000e+00> : vector<8x192xf32>
    %418 = tpu.matmul %364, %4, %cst_118 {dimension_numbers = #tpu.dot_dimension_numbers<[1], [0], [0], [1], [0, 0, 1, 1], [], []>} : vector<8x64xf32>, vector<64x192xf32>, vector<8x192xf32> -> vector<8x192xf32>
    %419 = vector.broadcast %8 : vector<1x192xf32> to vector<8x192xf32>
    %420 = arith.addf %418, %419 : vector<8x192xf32>
    %421 = vector.extract_strided_slice %388 {offsets = [0, 0], sizes = [8, 64], strides = [1, 1]} : vector<8x192xf32> to vector<8x64xf32>
    %422 = vector.extract_strided_slice %420 {offsets = [0, 0], sizes = [8, 64], strides = [1, 1]} : vector<8x192xf32> to vector<8x64xf32>
    %423 = arith.addf %421, %422 : vector<8x64xf32>
    %424 = arith.negf %423 : vector<8x64xf32>
    %425 = math.exp %424 : vector<8x64xf32>
    %cst_119 = arith.constant 1.000000e+00 : f32
    %426 = vector.broadcast %cst_119 : f32 to vector<8x64xf32>
    %427 = arith.addf %426, %425 : vector<8x64xf32>
    %428 = arith.divf %426, %427 : vector<8x64xf32>
    %429 = vector.extract_strided_slice %388 {offsets = [0, 64], sizes = [8, 64], strides = [1, 1]} : vector<8x192xf32> to vector<8x64xf32>
    %430 = vector.extract_strided_slice %420 {offsets = [0, 64], sizes = [8, 64], strides = [1, 1]} : vector<8x192xf32> to vector<8x64xf32>
    %431 = arith.addf %429, %430 : vector<8x64xf32>
    %432 = arith.negf %431 : vector<8x64xf32>
    %433 = math.exp %432 : vector<8x64xf32>
    %cst_120 = arith.constant 1.000000e+00 : f32
    %434 = vector.broadcast %cst_120 : f32 to vector<8x64xf32>
    %435 = arith.addf %434, %433 : vector<8x64xf32>
    %436 = arith.divf %434, %435 : vector<8x64xf32>
    %437 = vector.extract_strided_slice %388 {offsets = [0, 128], sizes = [8, 64], strides = [1, 1]} : vector<8x192xf32> to vector<8x64xf32>
    %438 = vector.extract_strided_slice %420 {offsets = [0, 128], sizes = [8, 64], strides = [1, 1]} : vector<8x192xf32> to vector<8x64xf32>
    %439 = arith.mulf %428, %438 : vector<8x64xf32>
    %440 = arith.addf %437, %439 : vector<8x64xf32>
    %441 = math.tanh %440 : vector<8x64xf32>
    %cst_121 = arith.constant 1.000000e+00 : f32
    %442 = vector.broadcast %cst_121 : f32 to vector<8x64xf32>
    %443 = arith.subf %442, %436 : vector<8x64xf32>
    %444 = arith.mulf %443, %441 : vector<8x64xf32>
    %445 = arith.mulf %436, %364 : vector<8x64xf32>
    %446 = arith.addf %444, %445 : vector<8x64xf32>
    %c4_i32_122 = arith.constant 4 : i32
    %447 = vector.broadcast %c4_i32_122 : i32 to vector<8x1xi32>
    %448 = arith.cmpi sgt, %0, %447 : vector<8x1xi32>
    %c3_i32_123 = arith.constant 3 : i32
    %449 = vector.broadcast %c3_i32_123 : i32 to vector<8x1xi32>
    %450 = arith.cmpi sgt, %0, %449 : vector<8x1xi32>
    %451 = vector.shape_cast %448 : vector<8x1xi1> to vector<8x1xi1>
    %452 = vector.broadcast %451 : vector<8x1xi1> to vector<8x64xi1>
    %453 = arith.select %452, %417, %361 : vector<8x64xi1>, vector<8x64xf32>
    %454 = vector.shape_cast %450 : vector<8x1xi1> to vector<8x1xi1>
    %455 = vector.broadcast %454 : vector<8x1xi1> to vector<8x64xi1>
    %456 = arith.select %455, %446, %364 : vector<8x64xi1>, vector<8x64xf32>
    %cst_124 = arith.constant 0.000000e+00 : f32
    %457 = vector.shape_cast %448 : vector<8x1xi1> to vector<8x1xi1>
    %458 = vector.broadcast %457 : vector<8x1xi1> to vector<8x64xi1>
    %459 = vector.broadcast %cst_124 : f32 to vector<8x64xf32>
    %460 = arith.select %458, %417, %459 : vector<8x64xi1>, vector<8x64xf32>
    %c4_125 = arith.constant 4 : index
    %c0_126 = arith.constant 0 : index
    %c0_127 = arith.constant 0 : index
    %461 = vector.load %arg16[%c4_125, %c0_126, %c0_127] : memref<8x8x128xf32, #tpu.memory_space<vmem>>, vector<1x8x64xf32>
    %462 = vector.shape_cast %461 : vector<1x8x64xf32> to vector<8x64xf32>
    %463 = vector.shape_cast %460 : vector<8x64xf32> to vector<1x8x64xf32>
    tpu.vector_store %arg16[%c4_125, %c0_126, %c0_127], %463 {strides = array<i32>} : memref<8x8x128xf32, #tpu.memory_space<vmem>>, vector<1x8x64xf32>,
    %cst_128 = arith.constant 0.000000e+00 : f32
    %464 = vector.shape_cast %450 : vector<8x1xi1> to vector<8x1xi1>
    %465 = vector.broadcast %464 : vector<8x1xi1> to vector<8x64xi1>
    %466 = vector.broadcast %cst_128 : f32 to vector<8x64xf32>
    %467 = arith.select %465, %446, %466 : vector<8x64xi1>, vector<8x64xf32>
    %c3_129 = arith.constant 3 : index
    %c0_130 = arith.constant 0 : index
    %c64_131 = arith.constant 64 : index
    %468 = vector.load %arg16[%c3_129, %c0_130, %c64_131] : memref<8x8x128xf32, #tpu.memory_space<vmem>>, vector<1x8x64xf32>
    %469 = vector.shape_cast %468 : vector<1x8x64xf32> to vector<8x64xf32>
    %470 = vector.shape_cast %467 : vector<8x64xf32> to vector<1x8x64xf32>
    tpu.vector_store %arg16[%c3_129, %c0_130, %c64_131], %470 {strides = array<i32>} : memref<8x8x128xf32, #tpu.memory_space<vmem>>, vector<1x8x64xf32>,
    %c0_132 = arith.constant 0 : index
    %c5_133 = arith.constant 5 : index
    %c0_134 = arith.constant 0 : index
    %471 = vector.load %arg1[%c0_132, %c5_133, %c0_134] : memref<8x8x32xf32, #tpu.memory_space<vmem>>, vector<8x1x32xf32>
    %472 = vector.shape_cast %471 : vector<8x1x32xf32> to vector<8x32xf32>
    %cst_135 = arith.constant dense<0.000000e+00> : vector<8x192xf32>
    %473 = tpu.matmul %472, %1, %cst_135 {dimension_numbers = #tpu.dot_dimension_numbers<[1], [0], [0], [1], [0, 0, 1, 1], [], []>} : vector<8x32xf32>, vector<32x192xf32>, vector<8x192xf32> -> vector<8x192xf32>
    %474 = vector.broadcast %5 : vector<1x192xf32> to vector<8x192xf32>
    %475 = arith.addf %473, %474 : vector<8x192xf32>
    %c0_136 = arith.constant 0 : index
    %c2_137 = arith.constant 2 : index
    %c0_138 = arith.constant 0 : index
    %476 = vector.load %arg1[%c0_136, %c2_137, %c0_138] : memref<8x8x32xf32, #tpu.memory_space<vmem>>, vector<8x1x32xf32>
    %477 = vector.shape_cast %476 : vector<8x1x32xf32> to vector<8x32xf32>
    %cst_139 = arith.constant dense<0.000000e+00> : vector<8x192xf32>
    %478 = tpu.matmul %477, %2, %cst_139 {dimension_numbers = #tpu.dot_dimension_numbers<[1], [0], [0], [1], [0, 0, 1, 1], [], []>} : vector<8x32xf32>, vector<32x192xf32>, vector<8x192xf32> -> vector<8x192xf32>
    %479 = vector.broadcast %6 : vector<1x192xf32> to vector<8x192xf32>
    %480 = arith.addf %478, %479 : vector<8x192xf32>
    %cst_140 = arith.constant dense<0.000000e+00> : vector<8x192xf32>
    %481 = tpu.matmul %453, %3, %cst_140 {dimension_numbers = #tpu.dot_dimension_numbers<[1], [0], [0], [1], [0, 0, 1, 1], [], []>} : vector<8x64xf32>, vector<64x192xf32>, vector<8x192xf32> -> vector<8x192xf32>
    %482 = vector.broadcast %7 : vector<1x192xf32> to vector<8x192xf32>
    %483 = arith.addf %481, %482 : vector<8x192xf32>
    %484 = vector.extract_strided_slice %475 {offsets = [0, 0], sizes = [8, 64], strides = [1, 1]} : vector<8x192xf32> to vector<8x64xf32>
    %485 = vector.extract_strided_slice %483 {offsets = [0, 0], sizes = [8, 64], strides = [1, 1]} : vector<8x192xf32> to vector<8x64xf32>
    %486 = arith.addf %484, %485 : vector<8x64xf32>
    %487 = arith.negf %486 : vector<8x64xf32>
    %488 = math.exp %487 : vector<8x64xf32>
    %cst_141 = arith.constant 1.000000e+00 : f32
    %489 = vector.broadcast %cst_141 : f32 to vector<8x64xf32>
    %490 = arith.addf %489, %488 : vector<8x64xf32>
    %491 = arith.divf %489, %490 : vector<8x64xf32>
    %492 = vector.extract_strided_slice %475 {offsets = [0, 64], sizes = [8, 64], strides = [1, 1]} : vector<8x192xf32> to vector<8x64xf32>
    %493 = vector.extract_strided_slice %483 {offsets = [0, 64], sizes = [8, 64], strides = [1, 1]} : vector<8x192xf32> to vector<8x64xf32>
    %494 = arith.addf %492, %493 : vector<8x64xf32>
    %495 = arith.negf %494 : vector<8x64xf32>
    %496 = math.exp %495 : vector<8x64xf32>
    %cst_142 = arith.constant 1.000000e+00 : f32
    %497 = vector.broadcast %cst_142 : f32 to vector<8x64xf32>
    %498 = arith.addf %497, %496 : vector<8x64xf32>
    %499 = arith.divf %497, %498 : vector<8x64xf32>
    %500 = vector.extract_strided_slice %475 {offsets = [0, 128], sizes = [8, 64], strides = [1, 1]} : vector<8x192xf32> to vector<8x64xf32>
    %501 = vector.extract_strided_slice %483 {offsets = [0, 128], sizes = [8, 64], strides = [1, 1]} : vector<8x192xf32> to vector<8x64xf32>
    %502 = arith.mulf %491, %501 : vector<8x64xf32>
    %503 = arith.addf %500, %502 : vector<8x64xf32>
    %504 = math.tanh %503 : vector<8x64xf32>
    %cst_143 = arith.constant 1.000000e+00 : f32
    %505 = vector.broadcast %cst_143 : f32 to vector<8x64xf32>
    %506 = arith.subf %505, %499 : vector<8x64xf32>
    %507 = arith.mulf %506, %504 : vector<8x64xf32>
    %508 = arith.mulf %499, %453 : vector<8x64xf32>
    %509 = arith.addf %507, %508 : vector<8x64xf32>
    %cst_144 = arith.constant dense<0.000000e+00> : vector<8x192xf32>
    %510 = tpu.matmul %456, %4, %cst_144 {dimension_numbers = #tpu.dot_dimension_numbers<[1], [0], [0], [1], [0, 0, 1, 1], [], []>} : vector<8x64xf32>, vector<64x192xf32>, vector<8x192xf32> -> vector<8x192xf32>
    %511 = vector.broadcast %8 : vector<1x192xf32> to vector<8x192xf32>
    %512 = arith.addf %510, %511 : vector<8x192xf32>
    %513 = vector.extract_strided_slice %480 {offsets = [0, 0], sizes = [8, 64], strides = [1, 1]} : vector<8x192xf32> to vector<8x64xf32>
    %514 = vector.extract_strided_slice %512 {offsets = [0, 0], sizes = [8, 64], strides = [1, 1]} : vector<8x192xf32> to vector<8x64xf32>
    %515 = arith.addf %513, %514 : vector<8x64xf32>
    %516 = arith.negf %515 : vector<8x64xf32>
    %517 = math.exp %516 : vector<8x64xf32>
    %cst_145 = arith.constant 1.000000e+00 : f32
    %518 = vector.broadcast %cst_145 : f32 to vector<8x64xf32>
    %519 = arith.addf %518, %517 : vector<8x64xf32>
    %520 = arith.divf %518, %519 : vector<8x64xf32>
    %521 = vector.extract_strided_slice %480 {offsets = [0, 64], sizes = [8, 64], strides = [1, 1]} : vector<8x192xf32> to vector<8x64xf32>
    %522 = vector.extract_strided_slice %512 {offsets = [0, 64], sizes = [8, 64], strides = [1, 1]} : vector<8x192xf32> to vector<8x64xf32>
    %523 = arith.addf %521, %522 : vector<8x64xf32>
    %524 = arith.negf %523 : vector<8x64xf32>
    %525 = math.exp %524 : vector<8x64xf32>
    %cst_146 = arith.constant 1.000000e+00 : f32
    %526 = vector.broadcast %cst_146 : f32 to vector<8x64xf32>
    %527 = arith.addf %526, %525 : vector<8x64xf32>
    %528 = arith.divf %526, %527 : vector<8x64xf32>
    %529 = vector.extract_strided_slice %480 {offsets = [0, 128], sizes = [8, 64], strides = [1, 1]} : vector<8x192xf32> to vector<8x64xf32>
    %530 = vector.extract_strided_slice %512 {offsets = [0, 128], sizes = [8, 64], strides = [1, 1]} : vector<8x192xf32> to vector<8x64xf32>
    %531 = arith.mulf %520, %530 : vector<8x64xf32>
    %532 = arith.addf %529, %531 : vector<8x64xf32>
    %533 = math.tanh %532 : vector<8x64xf32>
    %cst_147 = arith.constant 1.000000e+00 : f32
    %534 = vector.broadcast %cst_147 : f32 to vector<8x64xf32>
    %535 = arith.subf %534, %528 : vector<8x64xf32>
    %536 = arith.mulf %535, %533 : vector<8x64xf32>
    %537 = arith.mulf %528, %456 : vector<8x64xf32>
    %538 = arith.addf %536, %537 : vector<8x64xf32>
    %c5_i32_148 = arith.constant 5 : i32
    %539 = vector.broadcast %c5_i32_148 : i32 to vector<8x1xi32>
    %540 = arith.cmpi sgt, %0, %539 : vector<8x1xi32>
    %c2_i32_149 = arith.constant 2 : i32
    %541 = vector.broadcast %c2_i32_149 : i32 to vector<8x1xi32>
    %542 = arith.cmpi sgt, %0, %541 : vector<8x1xi32>
    %543 = vector.shape_cast %540 : vector<8x1xi1> to vector<8x1xi1>
    %544 = vector.broadcast %543 : vector<8x1xi1> to vector<8x64xi1>
    %545 = arith.select %544, %509, %453 : vector<8x64xi1>, vector<8x64xf32>
    %546 = vector.shape_cast %542 : vector<8x1xi1> to vector<8x1xi1>
    %547 = vector.broadcast %546 : vector<8x1xi1> to vector<8x64xi1>
    %548 = arith.select %547, %538, %456 : vector<8x64xi1>, vector<8x64xf32>
    %cst_150 = arith.constant 0.000000e+00 : f32
    %549 = vector.shape_cast %540 : vector<8x1xi1> to vector<8x1xi1>
    %550 = vector.broadcast %549 : vector<8x1xi1> to vector<8x64xi1>
    %551 = vector.broadcast %cst_150 : f32 to vector<8x64xf32>
    %552 = arith.select %550, %509, %551 : vector<8x64xi1>, vector<8x64xf32>
    %c5_151 = arith.constant 5 : index
    %c0_152 = arith.constant 0 : index
    %c0_153 = arith.constant 0 : index
    %553 = vector.load %arg16[%c5_151, %c0_152, %c0_153] : memref<8x8x128xf32, #tpu.memory_space<vmem>>, vector<1x8x64xf32>
    %554 = vector.shape_cast %553 : vector<1x8x64xf32> to vector<8x64xf32>
    %555 = vector.shape_cast %552 : vector<8x64xf32> to vector<1x8x64xf32>
    tpu.vector_store %arg16[%c5_151, %c0_152, %c0_153], %555 {strides = array<i32>} : memref<8x8x128xf32, #tpu.memory_space<vmem>>, vector<1x8x64xf32>,
    %cst_154 = arith.constant 0.000000e+00 : f32
    %556 = vector.shape_cast %542 : vector<8x1xi1> to vector<8x1xi1>
    %557 = vector.broadcast %556 : vector<8x1xi1> to vector<8x64xi1>
    %558 = vector.broadcast %cst_154 : f32 to vector<8x64xf32>
    %559 = arith.select %557, %538, %558 : vector<8x64xi1>, vector<8x64xf32>
    %c2_155 = arith.constant 2 : index
    %c0_156 = arith.constant 0 : index
    %c64_157 = arith.constant 64 : index
    %560 = vector.load %arg16[%c2_155, %c0_156, %c64_157] : memref<8x8x128xf32, #tpu.memory_space<vmem>>, vector<1x8x64xf32>
    %561 = vector.shape_cast %560 : vector<1x8x64xf32> to vector<8x64xf32>
    %562 = vector.shape_cast %559 : vector<8x64xf32> to vector<1x8x64xf32>
    tpu.vector_store %arg16[%c2_155, %c0_156, %c64_157], %562 {strides = array<i32>} : memref<8x8x128xf32, #tpu.memory_space<vmem>>, vector<1x8x64xf32>,
    %c0_158 = arith.constant 0 : index
    %c6_159 = arith.constant 6 : index
    %c0_160 = arith.constant 0 : index
    %563 = vector.load %arg1[%c0_158, %c6_159, %c0_160] : memref<8x8x32xf32, #tpu.memory_space<vmem>>, vector<8x1x32xf32>
    %564 = vector.shape_cast %563 : vector<8x1x32xf32> to vector<8x32xf32>
    %cst_161 = arith.constant dense<0.000000e+00> : vector<8x192xf32>
    %565 = tpu.matmul %564, %1, %cst_161 {dimension_numbers = #tpu.dot_dimension_numbers<[1], [0], [0], [1], [0, 0, 1, 1], [], []>} : vector<8x32xf32>, vector<32x192xf32>, vector<8x192xf32> -> vector<8x192xf32>
    %566 = vector.broadcast %5 : vector<1x192xf32> to vector<8x192xf32>
    %567 = arith.addf %565, %566 : vector<8x192xf32>
    %c0_162 = arith.constant 0 : index
    %c1_163 = arith.constant 1 : index
    %c0_164 = arith.constant 0 : index
    %568 = vector.load %arg1[%c0_162, %c1_163, %c0_164] : memref<8x8x32xf32, #tpu.memory_space<vmem>>, vector<8x1x32xf32>
    %569 = vector.shape_cast %568 : vector<8x1x32xf32> to vector<8x32xf32>
    %cst_165 = arith.constant dense<0.000000e+00> : vector<8x192xf32>
    %570 = tpu.matmul %569, %2, %cst_165 {dimension_numbers = #tpu.dot_dimension_numbers<[1], [0], [0], [1], [0, 0, 1, 1], [], []>} : vector<8x32xf32>, vector<32x192xf32>, vector<8x192xf32> -> vector<8x192xf32>
    %571 = vector.broadcast %6 : vector<1x192xf32> to vector<8x192xf32>
    %572 = arith.addf %570, %571 : vector<8x192xf32>
    %cst_166 = arith.constant dense<0.000000e+00> : vector<8x192xf32>
    %573 = tpu.matmul %545, %3, %cst_166 {dimension_numbers = #tpu.dot_dimension_numbers<[1], [0], [0], [1], [0, 0, 1, 1], [], []>} : vector<8x64xf32>, vector<64x192xf32>, vector<8x192xf32> -> vector<8x192xf32>
    %574 = vector.broadcast %7 : vector<1x192xf32> to vector<8x192xf32>
    %575 = arith.addf %573, %574 : vector<8x192xf32>
    %576 = vector.extract_strided_slice %567 {offsets = [0, 0], sizes = [8, 64], strides = [1, 1]} : vector<8x192xf32> to vector<8x64xf32>
    %577 = vector.extract_strided_slice %575 {offsets = [0, 0], sizes = [8, 64], strides = [1, 1]} : vector<8x192xf32> to vector<8x64xf32>
    %578 = arith.addf %576, %577 : vector<8x64xf32>
    %579 = arith.negf %578 : vector<8x64xf32>
    %580 = math.exp %579 : vector<8x64xf32>
    %cst_167 = arith.constant 1.000000e+00 : f32
    %581 = vector.broadcast %cst_167 : f32 to vector<8x64xf32>
    %582 = arith.addf %581, %580 : vector<8x64xf32>
    %583 = arith.divf %581, %582 : vector<8x64xf32>
    %584 = vector.extract_strided_slice %567 {offsets = [0, 64], sizes = [8, 64], strides = [1, 1]} : vector<8x192xf32> to vector<8x64xf32>
    %585 = vector.extract_strided_slice %575 {offsets = [0, 64], sizes = [8, 64], strides = [1, 1]} : vector<8x192xf32> to vector<8x64xf32>
    %586 = arith.addf %584, %585 : vector<8x64xf32>
    %587 = arith.negf %586 : vector<8x64xf32>
    %588 = math.exp %587 : vector<8x64xf32>
    %cst_168 = arith.constant 1.000000e+00 : f32
    %589 = vector.broadcast %cst_168 : f32 to vector<8x64xf32>
    %590 = arith.addf %589, %588 : vector<8x64xf32>
    %591 = arith.divf %589, %590 : vector<8x64xf32>
    %592 = vector.extract_strided_slice %567 {offsets = [0, 128], sizes = [8, 64], strides = [1, 1]} : vector<8x192xf32> to vector<8x64xf32>
    %593 = vector.extract_strided_slice %575 {offsets = [0, 128], sizes = [8, 64], strides = [1, 1]} : vector<8x192xf32> to vector<8x64xf32>
    %594 = arith.mulf %583, %593 : vector<8x64xf32>
    %595 = arith.addf %592, %594 : vector<8x64xf32>
    %596 = math.tanh %595 : vector<8x64xf32>
    %cst_169 = arith.constant 1.000000e+00 : f32
    %597 = vector.broadcast %cst_169 : f32 to vector<8x64xf32>
    %598 = arith.subf %597, %591 : vector<8x64xf32>
    %599 = arith.mulf %598, %596 : vector<8x64xf32>
    %600 = arith.mulf %591, %545 : vector<8x64xf32>
    %601 = arith.addf %599, %600 : vector<8x64xf32>
    %cst_170 = arith.constant dense<0.000000e+00> : vector<8x192xf32>
    %602 = tpu.matmul %548, %4, %cst_170 {dimension_numbers = #tpu.dot_dimension_numbers<[1], [0], [0], [1], [0, 0, 1, 1], [], []>} : vector<8x64xf32>, vector<64x192xf32>, vector<8x192xf32> -> vector<8x192xf32>
    %603 = vector.broadcast %8 : vector<1x192xf32> to vector<8x192xf32>
    %604 = arith.addf %602, %603 : vector<8x192xf32>
    %605 = vector.extract_strided_slice %572 {offsets = [0, 0], sizes = [8, 64], strides = [1, 1]} : vector<8x192xf32> to vector<8x64xf32>
    %606 = vector.extract_strided_slice %604 {offsets = [0, 0], sizes = [8, 64], strides = [1, 1]} : vector<8x192xf32> to vector<8x64xf32>
    %607 = arith.addf %605, %606 : vector<8x64xf32>
    %608 = arith.negf %607 : vector<8x64xf32>
    %609 = math.exp %608 : vector<8x64xf32>
    %cst_171 = arith.constant 1.000000e+00 : f32
    %610 = vector.broadcast %cst_171 : f32 to vector<8x64xf32>
    %611 = arith.addf %610, %609 : vector<8x64xf32>
    %612 = arith.divf %610, %611 : vector<8x64xf32>
    %613 = vector.extract_strided_slice %572 {offsets = [0, 64], sizes = [8, 64], strides = [1, 1]} : vector<8x192xf32> to vector<8x64xf32>
    %614 = vector.extract_strided_slice %604 {offsets = [0, 64], sizes = [8, 64], strides = [1, 1]} : vector<8x192xf32> to vector<8x64xf32>
    %615 = arith.addf %613, %614 : vector<8x64xf32>
    %616 = arith.negf %615 : vector<8x64xf32>
    %617 = math.exp %616 : vector<8x64xf32>
    %cst_172 = arith.constant 1.000000e+00 : f32
    %618 = vector.broadcast %cst_172 : f32 to vector<8x64xf32>
    %619 = arith.addf %618, %617 : vector<8x64xf32>
    %620 = arith.divf %618, %619 : vector<8x64xf32>
    %621 = vector.extract_strided_slice %572 {offsets = [0, 128], sizes = [8, 64], strides = [1, 1]} : vector<8x192xf32> to vector<8x64xf32>
    %622 = vector.extract_strided_slice %604 {offsets = [0, 128], sizes = [8, 64], strides = [1, 1]} : vector<8x192xf32> to vector<8x64xf32>
    %623 = arith.mulf %612, %622 : vector<8x64xf32>
    %624 = arith.addf %621, %623 : vector<8x64xf32>
    %625 = math.tanh %624 : vector<8x64xf32>
    %cst_173 = arith.constant 1.000000e+00 : f32
    %626 = vector.broadcast %cst_173 : f32 to vector<8x64xf32>
    %627 = arith.subf %626, %620 : vector<8x64xf32>
    %628 = arith.mulf %627, %625 : vector<8x64xf32>
    %629 = arith.mulf %620, %548 : vector<8x64xf32>
    %630 = arith.addf %628, %629 : vector<8x64xf32>
    %c6_i32_174 = arith.constant 6 : i32
    %631 = vector.broadcast %c6_i32_174 : i32 to vector<8x1xi32>
    %632 = arith.cmpi sgt, %0, %631 : vector<8x1xi32>
    %c1_i32_175 = arith.constant 1 : i32
    %633 = vector.broadcast %c1_i32_175 : i32 to vector<8x1xi32>
    %634 = arith.cmpi sgt, %0, %633 : vector<8x1xi32>
    %635 = vector.shape_cast %632 : vector<8x1xi1> to vector<8x1xi1>
    %636 = vector.broadcast %635 : vector<8x1xi1> to vector<8x64xi1>
    %637 = arith.select %636, %601, %545 : vector<8x64xi1>, vector<8x64xf32>
    %638 = vector.shape_cast %634 : vector<8x1xi1> to vector<8x1xi1>
    %639 = vector.broadcast %638 : vector<8x1xi1> to vector<8x64xi1>
    %640 = arith.select %639, %630, %548 : vector<8x64xi1>, vector<8x64xf32>
    %cst_176 = arith.constant 0.000000e+00 : f32
    %641 = vector.shape_cast %632 : vector<8x1xi1> to vector<8x1xi1>
    %642 = vector.broadcast %641 : vector<8x1xi1> to vector<8x64xi1>
    %643 = vector.broadcast %cst_176 : f32 to vector<8x64xf32>
    %644 = arith.select %642, %601, %643 : vector<8x64xi1>, vector<8x64xf32>
    %c6_177 = arith.constant 6 : index
    %c0_178 = arith.constant 0 : index
    %c0_179 = arith.constant 0 : index
    %645 = vector.load %arg16[%c6_177, %c0_178, %c0_179] : memref<8x8x128xf32, #tpu.memory_space<vmem>>, vector<1x8x64xf32>
    %646 = vector.shape_cast %645 : vector<1x8x64xf32> to vector<8x64xf32>
    %647 = vector.shape_cast %644 : vector<8x64xf32> to vector<1x8x64xf32>
    tpu.vector_store %arg16[%c6_177, %c0_178, %c0_179], %647 {strides = array<i32>} : memref<8x8x128xf32, #tpu.memory_space<vmem>>, vector<1x8x64xf32>,
    %cst_180 = arith.constant 0.000000e+00 : f32
    %648 = vector.shape_cast %634 : vector<8x1xi1> to vector<8x1xi1>
    %649 = vector.broadcast %648 : vector<8x1xi1> to vector<8x64xi1>
    %650 = vector.broadcast %cst_180 : f32 to vector<8x64xf32>
    %651 = arith.select %649, %630, %650 : vector<8x64xi1>, vector<8x64xf32>
    %c1_181 = arith.constant 1 : index
    %c0_182 = arith.constant 0 : index
    %c64_183 = arith.constant 64 : index
    %652 = vector.load %arg16[%c1_181, %c0_182, %c64_183] : memref<8x8x128xf32, #tpu.memory_space<vmem>>, vector<1x8x64xf32>
    %653 = vector.shape_cast %652 : vector<1x8x64xf32> to vector<8x64xf32>
    %654 = vector.shape_cast %651 : vector<8x64xf32> to vector<1x8x64xf32>
    tpu.vector_store %arg16[%c1_181, %c0_182, %c64_183], %654 {strides = array<i32>} : memref<8x8x128xf32, #tpu.memory_space<vmem>>, vector<1x8x64xf32>,
    %c0_184 = arith.constant 0 : index
    %c7_185 = arith.constant 7 : index
    %c0_186 = arith.constant 0 : index
    %655 = vector.load %arg1[%c0_184, %c7_185, %c0_186] : memref<8x8x32xf32, #tpu.memory_space<vmem>>, vector<8x1x32xf32>
    %656 = vector.shape_cast %655 : vector<8x1x32xf32> to vector<8x32xf32>
    %cst_187 = arith.constant dense<0.000000e+00> : vector<8x192xf32>
    %657 = tpu.matmul %656, %1, %cst_187 {dimension_numbers = #tpu.dot_dimension_numbers<[1], [0], [0], [1], [0, 0, 1, 1], [], []>} : vector<8x32xf32>, vector<32x192xf32>, vector<8x192xf32> -> vector<8x192xf32>
    %658 = vector.broadcast %5 : vector<1x192xf32> to vector<8x192xf32>
    %659 = arith.addf %657, %658 : vector<8x192xf32>
    %c0_188 = arith.constant 0 : index
    %c0_189 = arith.constant 0 : index
    %c0_190 = arith.constant 0 : index
    %660 = vector.load %arg1[%c0_188, %c0_189, %c0_190] : memref<8x8x32xf32, #tpu.memory_space<vmem>>, vector<8x1x32xf32>
    %661 = vector.shape_cast %660 : vector<8x1x32xf32> to vector<8x32xf32>
    %cst_191 = arith.constant dense<0.000000e+00> : vector<8x192xf32>
    %662 = tpu.matmul %661, %2, %cst_191 {dimension_numbers = #tpu.dot_dimension_numbers<[1], [0], [0], [1], [0, 0, 1, 1], [], []>} : vector<8x32xf32>, vector<32x192xf32>, vector<8x192xf32> -> vector<8x192xf32>
    %663 = vector.broadcast %6 : vector<1x192xf32> to vector<8x192xf32>
    %664 = arith.addf %662, %663 : vector<8x192xf32>
    %cst_192 = arith.constant dense<0.000000e+00> : vector<8x192xf32>
    %665 = tpu.matmul %637, %3, %cst_192 {dimension_numbers = #tpu.dot_dimension_numbers<[1], [0], [0], [1], [0, 0, 1, 1], [], []>} : vector<8x64xf32>, vector<64x192xf32>, vector<8x192xf32> -> vector<8x192xf32>
    %666 = vector.broadcast %7 : vector<1x192xf32> to vector<8x192xf32>
    %667 = arith.addf %665, %666 : vector<8x192xf32>
    %668 = vector.extract_strided_slice %659 {offsets = [0, 0], sizes = [8, 64], strides = [1, 1]} : vector<8x192xf32> to vector<8x64xf32>
    %669 = vector.extract_strided_slice %667 {offsets = [0, 0], sizes = [8, 64], strides = [1, 1]} : vector<8x192xf32> to vector<8x64xf32>
    %670 = arith.addf %668, %669 : vector<8x64xf32>
    %671 = arith.negf %670 : vector<8x64xf32>
    %672 = math.exp %671 : vector<8x64xf32>
    %cst_193 = arith.constant 1.000000e+00 : f32
    %673 = vector.broadcast %cst_193 : f32 to vector<8x64xf32>
    %674 = arith.addf %673, %672 : vector<8x64xf32>
    %675 = arith.divf %673, %674 : vector<8x64xf32>
    %676 = vector.extract_strided_slice %659 {offsets = [0, 64], sizes = [8, 64], strides = [1, 1]} : vector<8x192xf32> to vector<8x64xf32>
    %677 = vector.extract_strided_slice %667 {offsets = [0, 64], sizes = [8, 64], strides = [1, 1]} : vector<8x192xf32> to vector<8x64xf32>
    %678 = arith.addf %676, %677 : vector<8x64xf32>
    %679 = arith.negf %678 : vector<8x64xf32>
    %680 = math.exp %679 : vector<8x64xf32>
    %cst_194 = arith.constant 1.000000e+00 : f32
    %681 = vector.broadcast %cst_194 : f32 to vector<8x64xf32>
    %682 = arith.addf %681, %680 : vector<8x64xf32>
    %683 = arith.divf %681, %682 : vector<8x64xf32>
    %684 = vector.extract_strided_slice %659 {offsets = [0, 128], sizes = [8, 64], strides = [1, 1]} : vector<8x192xf32> to vector<8x64xf32>
    %685 = vector.extract_strided_slice %667 {offsets = [0, 128], sizes = [8, 64], strides = [1, 1]} : vector<8x192xf32> to vector<8x64xf32>
    %686 = arith.mulf %675, %685 : vector<8x64xf32>
    %687 = arith.addf %684, %686 : vector<8x64xf32>
    %688 = math.tanh %687 : vector<8x64xf32>
    %cst_195 = arith.constant 1.000000e+00 : f32
    %689 = vector.broadcast %cst_195 : f32 to vector<8x64xf32>
    %690 = arith.subf %689, %683 : vector<8x64xf32>
    %691 = arith.mulf %690, %688 : vector<8x64xf32>
    %692 = arith.mulf %683, %637 : vector<8x64xf32>
    %693 = arith.addf %691, %692 : vector<8x64xf32>
    %cst_196 = arith.constant dense<0.000000e+00> : vector<8x192xf32>
    %694 = tpu.matmul %640, %4, %cst_196 {dimension_numbers = #tpu.dot_dimension_numbers<[1], [0], [0], [1], [0, 0, 1, 1], [], []>} : vector<8x64xf32>, vector<64x192xf32>, vector<8x192xf32> -> vector<8x192xf32>
    %695 = vector.broadcast %8 : vector<1x192xf32> to vector<8x192xf32>
    %696 = arith.addf %694, %695 : vector<8x192xf32>
    %697 = vector.extract_strided_slice %664 {offsets = [0, 0], sizes = [8, 64], strides = [1, 1]} : vector<8x192xf32> to vector<8x64xf32>
    %698 = vector.extract_strided_slice %696 {offsets = [0, 0], sizes = [8, 64], strides = [1, 1]} : vector<8x192xf32> to vector<8x64xf32>
    %699 = arith.addf %697, %698 : vector<8x64xf32>
    %700 = arith.negf %699 : vector<8x64xf32>
    %701 = math.exp %700 : vector<8x64xf32>
    %cst_197 = arith.constant 1.000000e+00 : f32
    %702 = vector.broadcast %cst_197 : f32 to vector<8x64xf32>
    %703 = arith.addf %702, %701 : vector<8x64xf32>
    %704 = arith.divf %702, %703 : vector<8x64xf32>
    %705 = vector.extract_strided_slice %664 {offsets = [0, 64], sizes = [8, 64], strides = [1, 1]} : vector<8x192xf32> to vector<8x64xf32>
    %706 = vector.extract_strided_slice %696 {offsets = [0, 64], sizes = [8, 64], strides = [1, 1]} : vector<8x192xf32> to vector<8x64xf32>
    %707 = arith.addf %705, %706 : vector<8x64xf32>
    %708 = arith.negf %707 : vector<8x64xf32>
    %709 = math.exp %708 : vector<8x64xf32>
    %cst_198 = arith.constant 1.000000e+00 : f32
    %710 = vector.broadcast %cst_198 : f32 to vector<8x64xf32>
    %711 = arith.addf %710, %709 : vector<8x64xf32>
    %712 = arith.divf %710, %711 : vector<8x64xf32>
    %713 = vector.extract_strided_slice %664 {offsets = [0, 128], sizes = [8, 64], strides = [1, 1]} : vector<8x192xf32> to vector<8x64xf32>
    %714 = vector.extract_strided_slice %696 {offsets = [0, 128], sizes = [8, 64], strides = [1, 1]} : vector<8x192xf32> to vector<8x64xf32>
    %715 = arith.mulf %704, %714 : vector<8x64xf32>
    %716 = arith.addf %713, %715 : vector<8x64xf32>
    %717 = math.tanh %716 : vector<8x64xf32>
    %cst_199 = arith.constant 1.000000e+00 : f32
    %718 = vector.broadcast %cst_199 : f32 to vector<8x64xf32>
    %719 = arith.subf %718, %712 : vector<8x64xf32>
    %720 = arith.mulf %719, %717 : vector<8x64xf32>
    %721 = arith.mulf %712, %640 : vector<8x64xf32>
    %722 = arith.addf %720, %721 : vector<8x64xf32>
    %c7_i32_200 = arith.constant 7 : i32
    %723 = vector.broadcast %c7_i32_200 : i32 to vector<8x1xi32>
    %724 = arith.cmpi sgt, %0, %723 : vector<8x1xi32>
    %c0_i32_201 = arith.constant 0 : i32
    %725 = vector.broadcast %c0_i32_201 : i32 to vector<8x1xi32>
    %726 = arith.cmpi sgt, %0, %725 : vector<8x1xi32>
    %cst_202 = arith.constant 0.000000e+00 : f32
    %727 = vector.shape_cast %724 : vector<8x1xi1> to vector<8x1xi1>
    %728 = vector.broadcast %727 : vector<8x1xi1> to vector<8x64xi1>
    %729 = vector.broadcast %cst_202 : f32 to vector<8x64xf32>
    %730 = arith.select %728, %693, %729 : vector<8x64xi1>, vector<8x64xf32>
    %c7_203 = arith.constant 7 : index
    %c0_204 = arith.constant 0 : index
    %c0_205 = arith.constant 0 : index
    %731 = vector.load %arg16[%c7_203, %c0_204, %c0_205] : memref<8x8x128xf32, #tpu.memory_space<vmem>>, vector<1x8x64xf32>
    %732 = vector.shape_cast %731 : vector<1x8x64xf32> to vector<8x64xf32>
    %733 = vector.shape_cast %730 : vector<8x64xf32> to vector<1x8x64xf32>
    tpu.vector_store %arg16[%c7_203, %c0_204, %c0_205], %733 {strides = array<i32>} : memref<8x8x128xf32, #tpu.memory_space<vmem>>, vector<1x8x64xf32>,
    %cst_206 = arith.constant 0.000000e+00 : f32
    %734 = vector.shape_cast %726 : vector<8x1xi1> to vector<8x1xi1>
    %735 = vector.broadcast %734 : vector<8x1xi1> to vector<8x64xi1>
    %736 = vector.broadcast %cst_206 : f32 to vector<8x64xf32>
    %737 = arith.select %735, %722, %736 : vector<8x64xi1>, vector<8x64xf32>
    %c0_207 = arith.constant 0 : index
    %c0_208 = arith.constant 0 : index
    %c64_209 = arith.constant 64 : index
    %738 = vector.load %arg16[%c0_207, %c0_208, %c64_209] : memref<8x8x128xf32, #tpu.memory_space<vmem>>, vector<1x8x64xf32>
    %739 = vector.shape_cast %738 : vector<1x8x64xf32> to vector<8x64xf32>
    %740 = vector.shape_cast %737 : vector<8x64xf32> to vector<1x8x64xf32>
    tpu.vector_store %arg16[%c0_207, %c0_208, %c64_209], %740 {strides = array<i32>} : memref<8x8x128xf32, #tpu.memory_space<vmem>>, vector<1x8x64xf32>,
    %c0_210 = arith.constant 0 : index
    %c0_211 = arith.constant 0 : index
    %741 = vector.load %arg11[%c0_210, %c0_211] : memref<128x128xf32, #tpu.memory_space<vmem>>, vector<128x128xf32>
    %c0_212 = arith.constant 0 : index
    %c0_213 = arith.constant 0 : index
    %742 = vector.load %arg12[%c0_212, %c0_213] : memref<1x128xf32, #tpu.memory_space<vmem>>, vector<1x128xf32>
    %c0_214 = arith.constant 0 : index
    %c0_215 = arith.constant 0 : index
    %743 = vector.load %arg13[%c0_214, %c0_215] : memref<1x128xf32, #tpu.memory_space<vmem>>, vector<1x128xf32>
    %c0_216 = arith.constant 0 : index
    %c0_217 = arith.constant 0 : index
    %c0_218 = arith.constant 0 : index
    %744 = vector.load %arg16[%c0_216, %c0_217, %c0_218] : memref<8x8x128xf32, #tpu.memory_space<vmem>>, vector<1x8x128xf32>
    %745 = vector.shape_cast %744 : vector<1x8x128xf32> to vector<8x128xf32>
    %cst_219 = arith.constant dense<0.000000e+00> : vector<8x128xf32>
    %746 = tpu.matmul %745, %741, %cst_219 {dimension_numbers = #tpu.dot_dimension_numbers<[1], [0], [0], [1], [0, 0, 1, 1], [], []>} : vector<8x128xf32>, vector<128x128xf32>, vector<8x128xf32> -> vector<8x128xf32>
    %747 = vector.broadcast %742 : vector<1x128xf32> to vector<8x128xf32>
    %748 = arith.addf %746, %747 : vector<8x128xf32>
    %749 = math.tanh %748 : vector<8x128xf32>
    %750 = vector.broadcast %743 : vector<1x128xf32> to vector<8x128xf32>
    %751 = arith.mulf %749, %750 : vector<8x128xf32>
    %cst_220 = arith.constant dense<0.000000e+00> : vector<8xf32>
    %752 = vector.multi_reduction <add>, %751, %cst_220 [1] : vector<8x128xf32> to vector<8xf32>
    %753 = vector.shape_cast %752 : vector<8xf32> to vector<8x1xf32>
    %c0_i32_221 = arith.constant 0 : i32
    %754 = vector.broadcast %c0_i32_221 : i32 to vector<8x1xi32>
    %755 = arith.cmpi sgt, %0, %754 : vector<8x1xi32>
    %cst_222 = arith.constant -1.000000e+30 : f32
    %756 = vector.broadcast %cst_222 : f32 to vector<8x1xf32>
    %757 = arith.select %755, %753, %756 : vector<8x1xi1>, vector<8x1xf32>
    %c1_223 = arith.constant 1 : index
    %c0_224 = arith.constant 0 : index
    %c0_225 = arith.constant 0 : index
    %758 = vector.load %arg16[%c1_223, %c0_224, %c0_225] : memref<8x8x128xf32, #tpu.memory_space<vmem>>, vector<1x8x128xf32>
    %759 = vector.shape_cast %758 : vector<1x8x128xf32> to vector<8x128xf32>
    %cst_226 = arith.constant dense<0.000000e+00> : vector<8x128xf32>
    %760 = tpu.matmul %759, %741, %cst_226 {dimension_numbers = #tpu.dot_dimension_numbers<[1], [0], [0], [1], [0, 0, 1, 1], [], []>} : vector<8x128xf32>, vector<128x128xf32>, vector<8x128xf32> -> vector<8x128xf32>
    %761 = vector.broadcast %742 : vector<1x128xf32> to vector<8x128xf32>
    %762 = arith.addf %760, %761 : vector<8x128xf32>
    %763 = math.tanh %762 : vector<8x128xf32>
    %764 = vector.broadcast %743 : vector<1x128xf32> to vector<8x128xf32>
    %765 = arith.mulf %763, %764 : vector<8x128xf32>
    %cst_227 = arith.constant dense<0.000000e+00> : vector<8xf32>
    %766 = vector.multi_reduction <add>, %765, %cst_227 [1] : vector<8x128xf32> to vector<8xf32>
    %767 = vector.shape_cast %766 : vector<8xf32> to vector<8x1xf32>
    %c1_i32_228 = arith.constant 1 : i32
    %768 = vector.broadcast %c1_i32_228 : i32 to vector<8x1xi32>
    %769 = arith.cmpi sgt, %0, %768 : vector<8x1xi32>
    %cst_229 = arith.constant -1.000000e+30 : f32
    %770 = vector.broadcast %cst_229 : f32 to vector<8x1xf32>
    %771 = arith.select %769, %767, %770 : vector<8x1xi1>, vector<8x1xf32>
    %c2_230 = arith.constant 2 : index
    %c0_231 = arith.constant 0 : index
    %c0_232 = arith.constant 0 : index
    %772 = vector.load %arg16[%c2_230, %c0_231, %c0_232] : memref<8x8x128xf32, #tpu.memory_space<vmem>>, vector<1x8x128xf32>
    %773 = vector.shape_cast %772 : vector<1x8x128xf32> to vector<8x128xf32>
    %cst_233 = arith.constant dense<0.000000e+00> : vector<8x128xf32>
    %774 = tpu.matmul %773, %741, %cst_233 {dimension_numbers = #tpu.dot_dimension_numbers<[1], [0], [0], [1], [0, 0, 1, 1], [], []>} : vector<8x128xf32>, vector<128x128xf32>, vector<8x128xf32> -> vector<8x128xf32>
    %775 = vector.broadcast %742 : vector<1x128xf32> to vector<8x128xf32>
    %776 = arith.addf %774, %775 : vector<8x128xf32>
    %777 = math.tanh %776 : vector<8x128xf32>
    %778 = vector.broadcast %743 : vector<1x128xf32> to vector<8x128xf32>
    %779 = arith.mulf %777, %778 : vector<8x128xf32>
    %cst_234 = arith.constant dense<0.000000e+00> : vector<8xf32>
    %780 = vector.multi_reduction <add>, %779, %cst_234 [1] : vector<8x128xf32> to vector<8xf32>
    %781 = vector.shape_cast %780 : vector<8xf32> to vector<8x1xf32>
    %c2_i32_235 = arith.constant 2 : i32
    %782 = vector.broadcast %c2_i32_235 : i32 to vector<8x1xi32>
    %783 = arith.cmpi sgt, %0, %782 : vector<8x1xi32>
    %cst_236 = arith.constant -1.000000e+30 : f32
    %784 = vector.broadcast %cst_236 : f32 to vector<8x1xf32>
    %785 = arith.select %783, %781, %784 : vector<8x1xi1>, vector<8x1xf32>
    %c3_237 = arith.constant 3 : index
    %c0_238 = arith.constant 0 : index
    %c0_239 = arith.constant 0 : index
    %786 = vector.load %arg16[%c3_237, %c0_238, %c0_239] : memref<8x8x128xf32, #tpu.memory_space<vmem>>, vector<1x8x128xf32>
    %787 = vector.shape_cast %786 : vector<1x8x128xf32> to vector<8x128xf32>
    %cst_240 = arith.constant dense<0.000000e+00> : vector<8x128xf32>
    %788 = tpu.matmul %787, %741, %cst_240 {dimension_numbers = #tpu.dot_dimension_numbers<[1], [0], [0], [1], [0, 0, 1, 1], [], []>} : vector<8x128xf32>, vector<128x128xf32>, vector<8x128xf32> -> vector<8x128xf32>
    %789 = vector.broadcast %742 : vector<1x128xf32> to vector<8x128xf32>
    %790 = arith.addf %788, %789 : vector<8x128xf32>
    %791 = math.tanh %790 : vector<8x128xf32>
    %792 = vector.broadcast %743 : vector<1x128xf32> to vector<8x128xf32>
    %793 = arith.mulf %791, %792 : vector<8x128xf32>
    %cst_241 = arith.constant dense<0.000000e+00> : vector<8xf32>
    %794 = vector.multi_reduction <add>, %793, %cst_241 [1] : vector<8x128xf32> to vector<8xf32>
    %795 = vector.shape_cast %794 : vector<8xf32> to vector<8x1xf32>
    %c3_i32_242 = arith.constant 3 : i32
    %796 = vector.broadcast %c3_i32_242 : i32 to vector<8x1xi32>
    %797 = arith.cmpi sgt, %0, %796 : vector<8x1xi32>
    %cst_243 = arith.constant -1.000000e+30 : f32
    %798 = vector.broadcast %cst_243 : f32 to vector<8x1xf32>
    %799 = arith.select %797, %795, %798 : vector<8x1xi1>, vector<8x1xf32>
    %c4_244 = arith.constant 4 : index
    %c0_245 = arith.constant 0 : index
    %c0_246 = arith.constant 0 : index
    %800 = vector.load %arg16[%c4_244, %c0_245, %c0_246] : memref<8x8x128xf32, #tpu.memory_space<vmem>>, vector<1x8x128xf32>
    %801 = vector.shape_cast %800 : vector<1x8x128xf32> to vector<8x128xf32>
    %cst_247 = arith.constant dense<0.000000e+00> : vector<8x128xf32>
    %802 = tpu.matmul %801, %741, %cst_247 {dimension_numbers = #tpu.dot_dimension_numbers<[1], [0], [0], [1], [0, 0, 1, 1], [], []>} : vector<8x128xf32>, vector<128x128xf32>, vector<8x128xf32> -> vector<8x128xf32>
    %803 = vector.broadcast %742 : vector<1x128xf32> to vector<8x128xf32>
    %804 = arith.addf %802, %803 : vector<8x128xf32>
    %805 = math.tanh %804 : vector<8x128xf32>
    %806 = vector.broadcast %743 : vector<1x128xf32> to vector<8x128xf32>
    %807 = arith.mulf %805, %806 : vector<8x128xf32>
    %cst_248 = arith.constant dense<0.000000e+00> : vector<8xf32>
    %808 = vector.multi_reduction <add>, %807, %cst_248 [1] : vector<8x128xf32> to vector<8xf32>
    %809 = vector.shape_cast %808 : vector<8xf32> to vector<8x1xf32>
    %c4_i32_249 = arith.constant 4 : i32
    %810 = vector.broadcast %c4_i32_249 : i32 to vector<8x1xi32>
    %811 = arith.cmpi sgt, %0, %810 : vector<8x1xi32>
    %cst_250 = arith.constant -1.000000e+30 : f32
    %812 = vector.broadcast %cst_250 : f32 to vector<8x1xf32>
    %813 = arith.select %811, %809, %812 : vector<8x1xi1>, vector<8x1xf32>
    %c5_251 = arith.constant 5 : index
    %c0_252 = arith.constant 0 : index
    %c0_253 = arith.constant 0 : index
    %814 = vector.load %arg16[%c5_251, %c0_252, %c0_253] : memref<8x8x128xf32, #tpu.memory_space<vmem>>, vector<1x8x128xf32>
    %815 = vector.shape_cast %814 : vector<1x8x128xf32> to vector<8x128xf32>
    %cst_254 = arith.constant dense<0.000000e+00> : vector<8x128xf32>
    %816 = tpu.matmul %815, %741, %cst_254 {dimension_numbers = #tpu.dot_dimension_numbers<[1], [0], [0], [1], [0, 0, 1, 1], [], []>} : vector<8x128xf32>, vector<128x128xf32>, vector<8x128xf32> -> vector<8x128xf32>
    %817 = vector.broadcast %742 : vector<1x128xf32> to vector<8x128xf32>
    %818 = arith.addf %816, %817 : vector<8x128xf32>
    %819 = math.tanh %818 : vector<8x128xf32>
    %820 = vector.broadcast %743 : vector<1x128xf32> to vector<8x128xf32>
    %821 = arith.mulf %819, %820 : vector<8x128xf32>
    %cst_255 = arith.constant dense<0.000000e+00> : vector<8xf32>
    %822 = vector.multi_reduction <add>, %821, %cst_255 [1] : vector<8x128xf32> to vector<8xf32>
    %823 = vector.shape_cast %822 : vector<8xf32> to vector<8x1xf32>
    %c5_i32_256 = arith.constant 5 : i32
    %824 = vector.broadcast %c5_i32_256 : i32 to vector<8x1xi32>
    %825 = arith.cmpi sgt, %0, %824 : vector<8x1xi32>
    %cst_257 = arith.constant -1.000000e+30 : f32
    %826 = vector.broadcast %cst_257 : f32 to vector<8x1xf32>
    %827 = arith.select %825, %823, %826 : vector<8x1xi1>, vector<8x1xf32>
    %c6_258 = arith.constant 6 : index
    %c0_259 = arith.constant 0 : index
    %c0_260 = arith.constant 0 : index
    %828 = vector.load %arg16[%c6_258, %c0_259, %c0_260] : memref<8x8x128xf32, #tpu.memory_space<vmem>>, vector<1x8x128xf32>
    %829 = vector.shape_cast %828 : vector<1x8x128xf32> to vector<8x128xf32>
    %cst_261 = arith.constant dense<0.000000e+00> : vector<8x128xf32>
    %830 = tpu.matmul %829, %741, %cst_261 {dimension_numbers = #tpu.dot_dimension_numbers<[1], [0], [0], [1], [0, 0, 1, 1], [], []>} : vector<8x128xf32>, vector<128x128xf32>, vector<8x128xf32> -> vector<8x128xf32>
    %831 = vector.broadcast %742 : vector<1x128xf32> to vector<8x128xf32>
    %832 = arith.addf %830, %831 : vector<8x128xf32>
    %833 = math.tanh %832 : vector<8x128xf32>
    %834 = vector.broadcast %743 : vector<1x128xf32> to vector<8x128xf32>
    %835 = arith.mulf %833, %834 : vector<8x128xf32>
    %cst_262 = arith.constant dense<0.000000e+00> : vector<8xf32>
    %836 = vector.multi_reduction <add>, %835, %cst_262 [1] : vector<8x128xf32> to vector<8xf32>
    %837 = vector.shape_cast %836 : vector<8xf32> to vector<8x1xf32>
    %c6_i32_263 = arith.constant 6 : i32
    %838 = vector.broadcast %c6_i32_263 : i32 to vector<8x1xi32>
    %839 = arith.cmpi sgt, %0, %838 : vector<8x1xi32>
    %cst_264 = arith.constant -1.000000e+30 : f32
    %840 = vector.broadcast %cst_264 : f32 to vector<8x1xf32>
    %841 = arith.select %839, %837, %840 : vector<8x1xi1>, vector<8x1xf32>
    %c7_265 = arith.constant 7 : index
    %c0_266 = arith.constant 0 : index
    %c0_267 = arith.constant 0 : index
    %842 = vector.load %arg16[%c7_265, %c0_266, %c0_267] : memref<8x8x128xf32, #tpu.memory_space<vmem>>, vector<1x8x128xf32>
    %843 = vector.shape_cast %842 : vector<1x8x128xf32> to vector<8x128xf32>
    %cst_268 = arith.constant dense<0.000000e+00> : vector<8x128xf32>
    %844 = tpu.matmul %843, %741, %cst_268 {dimension_numbers = #tpu.dot_dimension_numbers<[1], [0], [0], [1], [0, 0, 1, 1], [], []>} : vector<8x128xf32>, vector<128x128xf32>, vector<8x128xf32> -> vector<8x128xf32>
    %845 = vector.broadcast %742 : vector<1x128xf32> to vector<8x128xf32>
    %846 = arith.addf %844, %845 : vector<8x128xf32>
    %847 = math.tanh %846 : vector<8x128xf32>
    %848 = vector.broadcast %743 : vector<1x128xf32> to vector<8x128xf32>
    %849 = arith.mulf %847, %848 : vector<8x128xf32>
    %cst_269 = arith.constant dense<0.000000e+00> : vector<8xf32>
    %850 = vector.multi_reduction <add>, %849, %cst_269 [1] : vector<8x128xf32> to vector<8xf32>
    %851 = vector.shape_cast %850 : vector<8xf32> to vector<8x1xf32>
    %c7_i32_270 = arith.constant 7 : i32
    %852 = vector.broadcast %c7_i32_270 : i32 to vector<8x1xi32>
    %853 = arith.cmpi sgt, %0, %852 : vector<8x1xi32>
    %cst_271 = arith.constant -1.000000e+30 : f32
    %854 = vector.broadcast %cst_271 : f32 to vector<8x1xf32>
    %855 = arith.select %853, %851, %854 : vector<8x1xi1>, vector<8x1xf32>
    %856 = arith.maximumf %757, %771 : vector<8x1xf32>
    %857 = arith.maximumf %856, %785 : vector<8x1xf32>
    %858 = arith.maximumf %857, %799 : vector<8x1xf32>
    %859 = arith.maximumf %858, %813 : vector<8x1xf32>
    %860 = arith.maximumf %859, %827 : vector<8x1xf32>
    %861 = arith.maximumf %860, %841 : vector<8x1xf32>
    %862 = arith.maximumf %861, %855 : vector<8x1xf32>
    %c0_i32_272 = arith.constant 0 : i32
    %863 = vector.broadcast %c0_i32_272 : i32 to vector<8x1xi32>
    %864 = arith.cmpi sgt, %0, %863 : vector<8x1xi32>
    %865 = arith.subf %757, %862 : vector<8x1xf32>
    %866 = math.exp %865 : vector<8x1xf32>
    %cst_273 = arith.constant 0.000000e+00 : f32
    %867 = vector.broadcast %cst_273 : f32 to vector<8x1xf32>
    %868 = arith.select %864, %866, %867 : vector<8x1xi1>, vector<8x1xf32>
    %c1_i32_274 = arith.constant 1 : i32
    %869 = vector.broadcast %c1_i32_274 : i32 to vector<8x1xi32>
    %870 = arith.cmpi sgt, %0, %869 : vector<8x1xi32>
    %871 = arith.subf %771, %862 : vector<8x1xf32>
    %872 = math.exp %871 : vector<8x1xf32>
    %cst_275 = arith.constant 0.000000e+00 : f32
    %873 = vector.broadcast %cst_275 : f32 to vector<8x1xf32>
    %874 = arith.select %870, %872, %873 : vector<8x1xi1>, vector<8x1xf32>
    %c2_i32_276 = arith.constant 2 : i32
    %875 = vector.broadcast %c2_i32_276 : i32 to vector<8x1xi32>
    %876 = arith.cmpi sgt, %0, %875 : vector<8x1xi32>
    %877 = arith.subf %785, %862 : vector<8x1xf32>
    %878 = math.exp %877 : vector<8x1xf32>
    %cst_277 = arith.constant 0.000000e+00 : f32
    %879 = vector.broadcast %cst_277 : f32 to vector<8x1xf32>
    %880 = arith.select %876, %878, %879 : vector<8x1xi1>, vector<8x1xf32>
    %c3_i32_278 = arith.constant 3 : i32
    %881 = vector.broadcast %c3_i32_278 : i32 to vector<8x1xi32>
    %882 = arith.cmpi sgt, %0, %881 : vector<8x1xi32>
    %883 = arith.subf %799, %862 : vector<8x1xf32>
    %884 = math.exp %883 : vector<8x1xf32>
    %cst_279 = arith.constant 0.000000e+00 : f32
    %885 = vector.broadcast %cst_279 : f32 to vector<8x1xf32>
    %886 = arith.select %882, %884, %885 : vector<8x1xi1>, vector<8x1xf32>
    %c4_i32_280 = arith.constant 4 : i32
    %887 = vector.broadcast %c4_i32_280 : i32 to vector<8x1xi32>
    %888 = arith.cmpi sgt, %0, %887 : vector<8x1xi32>
    %889 = arith.subf %813, %862 : vector<8x1xf32>
    %890 = math.exp %889 : vector<8x1xf32>
    %cst_281 = arith.constant 0.000000e+00 : f32
    %891 = vector.broadcast %cst_281 : f32 to vector<8x1xf32>
    %892 = arith.select %888, %890, %891 : vector<8x1xi1>, vector<8x1xf32>
    %c5_i32_282 = arith.constant 5 : i32
    %893 = vector.broadcast %c5_i32_282 : i32 to vector<8x1xi32>
    %894 = arith.cmpi sgt, %0, %893 : vector<8x1xi32>
    %895 = arith.subf %827, %862 : vector<8x1xf32>
    %896 = math.exp %895 : vector<8x1xf32>
    %cst_283 = arith.constant 0.000000e+00 : f32
    %897 = vector.broadcast %cst_283 : f32 to vector<8x1xf32>
    %898 = arith.select %894, %896, %897 : vector<8x1xi1>, vector<8x1xf32>
    %c6_i32_284 = arith.constant 6 : i32
    %899 = vector.broadcast %c6_i32_284 : i32 to vector<8x1xi32>
    %900 = arith.cmpi sgt, %0, %899 : vector<8x1xi32>
    %901 = arith.subf %841, %862 : vector<8x1xf32>
    %902 = math.exp %901 : vector<8x1xf32>
    %cst_285 = arith.constant 0.000000e+00 : f32
    %903 = vector.broadcast %cst_285 : f32 to vector<8x1xf32>
    %904 = arith.select %900, %902, %903 : vector<8x1xi1>, vector<8x1xf32>
    %c7_i32_286 = arith.constant 7 : i32
    %905 = vector.broadcast %c7_i32_286 : i32 to vector<8x1xi32>
    %906 = arith.cmpi sgt, %0, %905 : vector<8x1xi32>
    %907 = arith.subf %855, %862 : vector<8x1xf32>
    %908 = math.exp %907 : vector<8x1xf32>
    %cst_287 = arith.constant 0.000000e+00 : f32
    %909 = vector.broadcast %cst_287 : f32 to vector<8x1xf32>
    %910 = arith.select %906, %908, %909 : vector<8x1xi1>, vector<8x1xf32>
    %911 = arith.addf %868, %874 : vector<8x1xf32>
    %912 = arith.addf %911, %880 : vector<8x1xf32>
    %913 = arith.addf %912, %886 : vector<8x1xf32>
    %914 = arith.addf %913, %892 : vector<8x1xf32>
    %915 = arith.addf %914, %898 : vector<8x1xf32>
    %916 = arith.addf %915, %904 : vector<8x1xf32>
    %917 = arith.addf %916, %910 : vector<8x1xf32>
    %cst_288 = arith.constant 1.000000e+00 : f32
    %918 = vector.broadcast %cst_288 : f32 to vector<8x1xf32>
    %919 = arith.divf %918, %917 : vector<8x1xf32>
    %cst_289 = arith.constant 0.000000e+00 : f32
    %920 = vector.broadcast %cst_289 : f32 to vector<8x128xf32>
    %921 = arith.mulf %868, %919 : vector<8x1xf32>
    %c0_290 = arith.constant 0 : index
    %c0_291 = arith.constant 0 : index
    %922 = vector.load %arg15[%c0_290, %c0_291] : memref<8x8xf32, #tpu.memory_space<vmem>>, vector<8x1xf32>
    tpu.vector_store %arg15[%c0_290, %c0_291], %921 {strides = array<i32>} : memref<8x8xf32, #tpu.memory_space<vmem>>, vector<8x1xf32>,
    %c0_292 = arith.constant 0 : index
    %c0_293 = arith.constant 0 : index
    %c0_294 = arith.constant 0 : index
    %923 = vector.load %arg16[%c0_292, %c0_293, %c0_294] : memref<8x8x128xf32, #tpu.memory_space<vmem>>, vector<1x8x128xf32>
    %924 = vector.shape_cast %923 : vector<1x8x128xf32> to vector<8x128xf32>
    %925 = vector.broadcast %921 : vector<8x1xf32> to vector<8x128xf32>
    %926 = arith.mulf %925, %924 : vector<8x128xf32>
    %927 = arith.addf %920, %926 : vector<8x128xf32>
    %928 = arith.mulf %874, %919 : vector<8x1xf32>
    %c0_295 = arith.constant 0 : index
    %c1_296 = arith.constant 1 : index
    %929 = vector.load %arg15[%c0_295, %c1_296] : memref<8x8xf32, #tpu.memory_space<vmem>>, vector<8x1xf32>
    tpu.vector_store %arg15[%c0_295, %c1_296], %928 {strides = array<i32>} : memref<8x8xf32, #tpu.memory_space<vmem>>, vector<8x1xf32>,
    %c1_297 = arith.constant 1 : index
    %c0_298 = arith.constant 0 : index
    %c0_299 = arith.constant 0 : index
    %930 = vector.load %arg16[%c1_297, %c0_298, %c0_299] : memref<8x8x128xf32, #tpu.memory_space<vmem>>, vector<1x8x128xf32>
    %931 = vector.shape_cast %930 : vector<1x8x128xf32> to vector<8x128xf32>
    %932 = vector.broadcast %928 : vector<8x1xf32> to vector<8x128xf32>
    %933 = arith.mulf %932, %931 : vector<8x128xf32>
    %934 = arith.addf %927, %933 : vector<8x128xf32>
    %935 = arith.mulf %880, %919 : vector<8x1xf32>
    %c0_300 = arith.constant 0 : index
    %c2_301 = arith.constant 2 : index
    %936 = vector.load %arg15[%c0_300, %c2_301] : memref<8x8xf32, #tpu.memory_space<vmem>>, vector<8x1xf32>
    tpu.vector_store %arg15[%c0_300, %c2_301], %935 {strides = array<i32>} : memref<8x8xf32, #tpu.memory_space<vmem>>, vector<8x1xf32>,
    %c2_302 = arith.constant 2 : index
    %c0_303 = arith.constant 0 : index
    %c0_304 = arith.constant 0 : index
    %937 = vector.load %arg16[%c2_302, %c0_303, %c0_304] : memref<8x8x128xf32, #tpu.memory_space<vmem>>, vector<1x8x128xf32>
    %938 = vector.shape_cast %937 : vector<1x8x128xf32> to vector<8x128xf32>
    %939 = vector.broadcast %935 : vector<8x1xf32> to vector<8x128xf32>
    %940 = arith.mulf %939, %938 : vector<8x128xf32>
    %941 = arith.addf %934, %940 : vector<8x128xf32>
    %942 = arith.mulf %886, %919 : vector<8x1xf32>
    %c0_305 = arith.constant 0 : index
    %c3_306 = arith.constant 3 : index
    %943 = vector.load %arg15[%c0_305, %c3_306] : memref<8x8xf32, #tpu.memory_space<vmem>>, vector<8x1xf32>
    tpu.vector_store %arg15[%c0_305, %c3_306], %942 {strides = array<i32>} : memref<8x8xf32, #tpu.memory_space<vmem>>, vector<8x1xf32>,
    %c3_307 = arith.constant 3 : index
    %c0_308 = arith.constant 0 : index
    %c0_309 = arith.constant 0 : index
    %944 = vector.load %arg16[%c3_307, %c0_308, %c0_309] : memref<8x8x128xf32, #tpu.memory_space<vmem>>, vector<1x8x128xf32>
    %945 = vector.shape_cast %944 : vector<1x8x128xf32> to vector<8x128xf32>
    %946 = vector.broadcast %942 : vector<8x1xf32> to vector<8x128xf32>
    %947 = arith.mulf %946, %945 : vector<8x128xf32>
    %948 = arith.addf %941, %947 : vector<8x128xf32>
    %949 = arith.mulf %892, %919 : vector<8x1xf32>
    %c0_310 = arith.constant 0 : index
    %c4_311 = arith.constant 4 : index
    %950 = vector.load %arg15[%c0_310, %c4_311] : memref<8x8xf32, #tpu.memory_space<vmem>>, vector<8x1xf32>
    tpu.vector_store %arg15[%c0_310, %c4_311], %949 {strides = array<i32>} : memref<8x8xf32, #tpu.memory_space<vmem>>, vector<8x1xf32>,
    %c4_312 = arith.constant 4 : index
    %c0_313 = arith.constant 0 : index
    %c0_314 = arith.constant 0 : index
    %951 = vector.load %arg16[%c4_312, %c0_313, %c0_314] : memref<8x8x128xf32, #tpu.memory_space<vmem>>, vector<1x8x128xf32>
    %952 = vector.shape_cast %951 : vector<1x8x128xf32> to vector<8x128xf32>
    %953 = vector.broadcast %949 : vector<8x1xf32> to vector<8x128xf32>
    %954 = arith.mulf %953, %952 : vector<8x128xf32>
    %955 = arith.addf %948, %954 : vector<8x128xf32>
    %956 = arith.mulf %898, %919 : vector<8x1xf32>
    %c0_315 = arith.constant 0 : index
    %c5_316 = arith.constant 5 : index
    %957 = vector.load %arg15[%c0_315, %c5_316] : memref<8x8xf32, #tpu.memory_space<vmem>>, vector<8x1xf32>
    tpu.vector_store %arg15[%c0_315, %c5_316], %956 {strides = array<i32>} : memref<8x8xf32, #tpu.memory_space<vmem>>, vector<8x1xf32>,
    %c5_317 = arith.constant 5 : index
    %c0_318 = arith.constant 0 : index
    %c0_319 = arith.constant 0 : index
    %958 = vector.load %arg16[%c5_317, %c0_318, %c0_319] : memref<8x8x128xf32, #tpu.memory_space<vmem>>, vector<1x8x128xf32>
    %959 = vector.shape_cast %958 : vector<1x8x128xf32> to vector<8x128xf32>
    %960 = vector.broadcast %956 : vector<8x1xf32> to vector<8x128xf32>
    %961 = arith.mulf %960, %959 : vector<8x128xf32>
    %962 = arith.addf %955, %961 : vector<8x128xf32>
    %963 = arith.mulf %904, %919 : vector<8x1xf32>
    %c0_320 = arith.constant 0 : index
    %c6_321 = arith.constant 6 : index
    %964 = vector.load %arg15[%c0_320, %c6_321] : memref<8x8xf32, #tpu.memory_space<vmem>>, vector<8x1xf32>
    tpu.vector_store %arg15[%c0_320, %c6_321], %963 {strides = array<i32>} : memref<8x8xf32, #tpu.memory_space<vmem>>, vector<8x1xf32>,
    %c6_322 = arith.constant 6 : index
    %c0_323 = arith.constant 0 : index
    %c0_324 = arith.constant 0 : index
    %965 = vector.load %arg16[%c6_322, %c0_323, %c0_324] : memref<8x8x128xf32, #tpu.memory_space<vmem>>, vector<1x8x128xf32>
    %966 = vector.shape_cast %965 : vector<1x8x128xf32> to vector<8x128xf32>
    %967 = vector.broadcast %963 : vector<8x1xf32> to vector<8x128xf32>
    %968 = arith.mulf %967, %966 : vector<8x128xf32>
    %969 = arith.addf %962, %968 : vector<8x128xf32>
    %970 = arith.mulf %910, %919 : vector<8x1xf32>
    %c0_325 = arith.constant 0 : index
    %c7_326 = arith.constant 7 : index
    %971 = vector.load %arg15[%c0_325, %c7_326] : memref<8x8xf32, #tpu.memory_space<vmem>>, vector<8x1xf32>
    tpu.vector_store %arg15[%c0_325, %c7_326], %970 {strides = array<i32>} : memref<8x8xf32, #tpu.memory_space<vmem>>, vector<8x1xf32>,
    %c7_327 = arith.constant 7 : index
    %c0_328 = arith.constant 0 : index
    %c0_329 = arith.constant 0 : index
    %972 = vector.load %arg16[%c7_327, %c0_328, %c0_329] : memref<8x8x128xf32, #tpu.memory_space<vmem>>, vector<1x8x128xf32>
    %973 = vector.shape_cast %972 : vector<1x8x128xf32> to vector<8x128xf32>
    %974 = vector.broadcast %970 : vector<8x1xf32> to vector<8x128xf32>
    %975 = arith.mulf %974, %973 : vector<8x128xf32>
    %976 = arith.addf %969, %975 : vector<8x128xf32>
    %c0_330 = arith.constant 0 : index
    %c0_331 = arith.constant 0 : index
    %977 = vector.load %arg14[%c0_330, %c0_331] : memref<8x128xf32, #tpu.memory_space<vmem>>, vector<8x128xf32>
    tpu.vector_store %arg14[%c0_330, %c0_331], %976 {strides = array<i32>} : memref<8x128xf32, #tpu.memory_space<vmem>>, vector<8x128xf32>,
    return
  }
  func.func @transform_0(%arg0: i32) -> (i32, i32, i32) {
    %c0_i32 = arith.constant 0 : i32
    %c0_i32_0 = arith.constant 0 : i32
    %c0_i32_1 = arith.constant 0 : i32
    return %arg0, %c0_i32, %c0_i32_0 : i32, i32, i32
  }
  func.func @transform_1(%arg0: i32) -> (i32, i32) {
    %c0_i32 = arith.constant 0 : i32
    %c0_i32_0 = arith.constant 0 : i32
    return %arg0, %c0_i32 : i32, i32
  }
  func.func @transform_2(%arg0: i32) -> (i32, i32) {
    %c0_i32 = arith.constant 0 : i32
    %c0_i32_0 = arith.constant 0 : i32
    %c0_i32_1 = arith.constant 0 : i32
    return %c0_i32, %c0_i32_0 : i32, i32
  }
  func.func @transform_3(%arg0: i32) -> (i32, i32) {
    %c0_i32 = arith.constant 0 : i32
    %c0_i32_0 = arith.constant 0 : i32
    %c0_i32_1 = arith.constant 0 : i32
    return %c0_i32, %c0_i32_0 : i32, i32
  }
  func.func @transform_4(%arg0: i32) -> (i32, i32) {
    %c0_i32 = arith.constant 0 : i32
    %c0_i32_0 = arith.constant 0 : i32
    %c0_i32_1 = arith.constant 0 : i32
    return %c0_i32, %c0_i32_0 : i32, i32
  }
  func.func @transform_5(%arg0: i32) -> (i32, i32) {
    %c0_i32 = arith.constant 0 : i32
    %c0_i32_0 = arith.constant 0 : i32
    %c0_i32_1 = arith.constant 0 : i32
    return %c0_i32, %c0_i32_0 : i32, i32
  }
  func.func @transform_6(%arg0: i32) -> (i32, i32) {
    %c0_i32 = arith.constant 0 : i32
    %c0_i32_0 = arith.constant 0 : i32
    %c0_i32_1 = arith.constant 0 : i32
    return %c0_i32, %c0_i32_0 : i32, i32
  }
  func.func @transform_7(%arg0: i32) -> (i32, i32) {
    %c0_i32 = arith.constant 0 : i32
    %c0_i32_0 = arith.constant 0 : i32
    %c0_i32_1 = arith.constant 0 : i32
    return %c0_i32, %c0_i32_0 : i32, i32
  }
  func.func @transform_8(%arg0: i32) -> (i32, i32) {
    %c0_i32 = arith.constant 0 : i32
    %c0_i32_0 = arith.constant 0 : i32
    %c0_i32_1 = arith.constant 0 : i32
    return %c0_i32, %c0_i32_0 : i32, i32
  }
  func.func @transform_9(%arg0: i32) -> (i32, i32) {
    %c0_i32 = arith.constant 0 : i32
    %c0_i32_0 = arith.constant 0 : i32
    %c0_i32_1 = arith.constant 0 : i32
    return %c0_i32, %c0_i32_0 : i32, i32
  }
  func.func @transform_10(%arg0: i32) -> (i32, i32) {
    %c0_i32 = arith.constant 0 : i32
    %c0_i32_0 = arith.constant 0 : i32
    %c0_i32_1 = arith.constant 0 : i32
    return %c0_i32, %c0_i32_0 : i32, i32
  }
  func.func @transform_11(%arg0: i32) -> (i32, i32) {
    %c0_i32 = arith.constant 0 : i32
    %c0_i32_0 = arith.constant 0 : i32
    %c0_i32_1 = arith.constant 0 : i32
    return %c0_i32, %c0_i32_0 : i32, i32
  }
  func.func @transform_12(%arg0: i32) -> (i32, i32) {
    %c0_i32 = arith.constant 0 : i32
    %c0_i32_0 = arith.constant 0 : i32
    %c0_i32_1 = arith.constant 0 : i32
    return %c0_i32, %c0_i32_0 : i32, i32
  }
  func.func @transform_13(%arg0: i32) -> (i32, i32) {
    %c0_i32 = arith.constant 0 : i32
    %c0_i32_0 = arith.constant 0 : i32
    return %arg0, %c0_i32 : i32, i32
  }
  func.func @transform_14(%arg0: i32) -> (i32, i32) {
    %c0_i32 = arith.constant 0 : i32
    %c0_i32_0 = arith.constant 0 : i32
    return %arg0, %c0_i32 : i32, i32
  }
}

</mosaic_0001>

<llo_original>
// kernel: sentence_attention_forward.3
$region0: #{sentence_attention_forward.3}
  #allocation0 [shape = 'u32[]', space=smem, size = 0x4, offset = 0x4, fixed_abs, tag = 'smem constant byte address 0x4 - core index']
  #allocation1 [shape = 'u32[144,128]{1,0:T(1,128)}', space=vmem, size = 0x12000, scoped, tag = 'internal scratch']
  #allocation2 [shape = 'f32[4,8,128]{2,1,0:T(8,128)}', space=vmem, size = 0x4000, scoped, tag = 'scratch operand']
  %s0 = inlined_call_operand.vmem [shape: f32[8,4,64], index: 0, kind: input, shape index: {}]
  %s1 = inlined_call_operand.vmem [shape: s32[8,1], index: 1, kind: input, shape index: {}]
  %s2 = inlined_call_operand.vmem [shape: f32[64,192], index: 2, kind: input, shape index: {}]
  %s3 = inlined_call_operand.vmem [shape: f32[64,192], index: 3, kind: input, shape index: {}]
  %s4 = inlined_call_operand.vmem [shape: f32[64,192], index: 4, kind: input, shape index: {}]
  %s5 = inlined_call_operand.vmem [shape: f32[64,192], index: 5, kind: input, shape index: {}]
  %s6 = inlined_call_operand.vmem [shape: f32[1,192], index: 6, kind: input, shape index: {}]
  %s7 = inlined_call_operand.vmem [shape: f32[1,192], index: 7, kind: input, shape index: {}]
  %s8 = inlined_call_operand.vmem [shape: f32[1,192], index: 8, kind: input, shape index: {}]
  %s9 = inlined_call_operand.vmem [shape: f32[1,192], index: 9, kind: input, shape index: {}]
  %s10 = inlined_call_operand.vmem [shape: f32[128,128], index: 10, kind: input, shape index: {}]
  %s11 = inlined_call_operand.vmem [shape: f32[1,128], index: 11, kind: input, shape index: {}]
  %s12 = inlined_call_operand.vmem [shape: f32[1,128], index: 12, kind: input, shape index: {}]
  %s13 = inlined_call_operand.vmem [shape: f32[8,128], index: 13, kind: output, shape index: {0}]
  %s14 = inlined_call_operand.vmem [shape: f32[8,4], index: 14, kind: output, shape index: {1}]
  %15 = xla_tuple %s13, %s14
  %s16 = sld [smem:[#allocation0]]
  $region70: #{sentence_attention_forward.3} parent=0
    _
  %s18 = ssub.s32 1, %s16
  %s19 = scalar_select 0, %s18, %s16
  // Predicated region
  $region2: #{sentence_attention_forward.3} parent=0 // pred_check
    _
  $region3: #{sentence_attention_forward.3} parent=0 // pred_check_branch
    %21 = sbr.rel (0) target = $region5
  $region4: #{sentence_attention_forward.3} parent=0 // pred_region
    _
  $region5: #{sentence_attention_forward.3} parent=0 // pred_fallthru
    _
  // Predicated region
  $region6: #{sentence_attention_forward.3} parent=0 // pred_check
    _
  $region7: #{sentence_attention_forward.3} parent=0 // pred_check_branch
    %23 = sbr.rel (0) target = $region9
  $region8: #{sentence_attention_forward.3} parent=0 // pred_region
    _
  $region9: #{sentence_attention_forward.3} parent=0 // pred_fallthru
    _
  // Predicated region
  $region10: #{sentence_attention_forward.3} parent=0 // pred_check
    _
  $region11: #{sentence_attention_forward.3} parent=0 // pred_check_branch
    %25 = sbr.rel (0) target = $region13
  $region12: #{sentence_attention_forward.3} parent=0 // pred_region
    _
  $region13: #{sentence_attention_forward.3} parent=0 // pred_fallthru
    _
  // Predicated region
  $region14: #{sentence_attention_forward.3} parent=0 // pred_check
    _
  $region15: #{sentence_attention_forward.3} parent=0 // pred_check_branch
    %27 = sbr.rel (0) target = $region17
  $region16: #{sentence_attention_forward.3} parent=0 // pred_region
    _
  $region17: #{sentence_attention_forward.3} parent=0 // pred_fallthru
    _
  // Predicated region
  $region18: #{sentence_attention_forward.3} parent=0 // pred_check
    _
  $region19: #{sentence_attention_forward.3} parent=0 // pred_check_branch
    %29 = sbr.rel (0) target = $region21
  $region20: #{sentence_attention_forward.3} parent=0 // pred_region
    _
  $region21: #{sentence_attention_forward.3} parent=0 // pred_fallthru
    _
  // Predicated region
  $region22: #{sentence_attention_forward.3} parent=0 // pred_check
    _
  $region23: #{sentence_attention_forward.3} parent=0 // pred_check_branch
    %31 = sbr.rel (0) target = $region25
  $region24: #{sentence_attention_forward.3} parent=0 // pred_region
    _
  $region25: #{sentence_attention_forward.3} parent=0 // pred_fallthru
    _
  // Predicated region
  $region26: #{sentence_attention_forward.3} parent=0 // pred_check
    _
  $region27: #{sentence_attention_forward.3} parent=0 // pred_check_branch
    %33 = sbr.rel (0) target = $region29
  $region28: #{sentence_attention_forward.3} parent=0 // pred_region
    _
  $region29: #{sentence_attention_forward.3} parent=0 // pred_fallthru
    _
  // Predicated region
  $region30: #{sentence_attention_forward.3} parent=0 // pred_check
    _
  $region31: #{sentence_attention_forward.3} parent=0 // pred_check_branch
    %35 = sbr.rel (0) target = $region33
  $region32: #{sentence_attention_forward.3} parent=0 // pred_region
    _
  $region33: #{sentence_attention_forward.3} parent=0 // pred_fallthru
    _
  // Predicated region
  $region34: #{sentence_attention_forward.3} parent=0 // pred_check
    _
  $region35: #{sentence_attention_forward.3} parent=0 // pred_check_branch
    %37 = sbr.rel (0) target = $region37
  $region36: #{sentence_attention_forward.3} parent=0 // pred_region
    _
  $region37: #{sentence_attention_forward.3} parent=0 // pred_fallthru
    _
  // Predicated region
  $region38: #{sentence_attention_forward.3} parent=0 // pred_check
    _
  $region39: #{sentence_attention_forward.3} parent=0 // pred_check_branch
    %39 = sbr.rel (0) target = $region41
  $region40: #{sentence_attention_forward.3} parent=0 // pred_region
    _
  $region41: #{sentence_attention_forward.3} parent=0 // pred_fallthru
    _
  // Predicated region
  $region42: #{sentence_attention_forward.3} parent=0 // pred_check
    _
  $region43: #{sentence_attention_forward.3} parent=0 // pred_check_branch
    %41 = sbr.rel (0) target = $region45
  $region44: #{sentence_attention_forward.3} parent=0 // pred_region
    _
  $region45: #{sentence_attention_forward.3} parent=0 // pred_fallthru
    _
  // Predicated region
  $region46: #{sentence_attention_forward.3} parent=0 // pred_check
    _
  $region47: #{sentence_attention_forward.3} parent=0 // pred_check_branch
    %43 = sbr.rel (0) target = $region49
  $region48: #{sentence_attention_forward.3} parent=0 // pred_region
    _
  $region49: #{sentence_attention_forward.3} parent=0 // pred_fallthru
    _
  // Predicated region
  $region50: #{sentence_attention_forward.3} parent=0 // pred_check
    _
  $region51: #{sentence_attention_forward.3} parent=0 // pred_check_branch
    %45 = sbr.rel (0) target = $region53
  $region52: #{sentence_attention_forward.3} parent=0 // pred_region
    _
  $region53: #{sentence_attention_forward.3} parent=0 // pred_fallthru
    _
  %v46 = vld [vmem:[%s1] sm:$0xff]
  %v47 = vld [vmem:[%s2] sm:$0xff]
  %v48 = vld [vmem:[%s2 + $0x8] sm:$0xff]
  %v49 = vld [vmem:[%s2 + $0x10] sm:$0xff]
  %v50 = vld [vmem:[%s2 + $0x18] sm:$0xff]
  %v51 = vld [vmem:[%s2 + $0x20] sm:$0xff]
  %v52 = vld [vmem:[%s2 + $0x28] sm:$0xff]
  %v53 = vld [vmem:[%s2 + $0x30] sm:$0xff]
  %v54 = vld [vmem:[%s2 + $0x38] sm:$0xff]
  %v55 = vld [vmem:[%s2 + $0x40] sm:$0xff]
  %v56 = vld [vmem:[%s2 + $0x48] sm:$0xff]
  %v57 = vld [vmem:[%s2 + $0x50] sm:$0xff]
  %v58 = vld [vmem:[%s2 + $0x58] sm:$0xff]
  %v59 = vld [vmem:[%s2 + $0x60] sm:$0xff]
  %v60 = vld [vmem:[%s2 + $0x68] sm:$0xff]
  %v61 = vld [vmem:[%s2 + $0x70] sm:$0xff]
  %v62 = vld [vmem:[%s2 + $0x78] sm:$0xff]
  %v63 = vld [vmem:[%s3] sm:$0xff]
  %v64 = vld [vmem:[%s3 + $0x8] sm:$0xff]
  %v65 = vld [vmem:[%s3 + $0x10] sm:$0xff]
  %v66 = vld [vmem:[%s3 + $0x18] sm:$0xff]
  %v67 = vld [vmem:[%s3 + $0x20] sm:$0xff]
  %v68 = vld [vmem:[%s3 + $0x28] sm:$0xff]
  %v69 = vld [vmem:[%s3 + $0x30] sm:$0xff]
  %v70 = vld [vmem:[%s3 + $0x38] sm:$0xff]
  %v71 = vld [vmem:[%s3 + $0x40] sm:$0xff]
  %v72 = vld [vmem:[%s3 + $0x48] sm:$0xff]
  %v73 = vld [vmem:[%s3 + $0x50] sm:$0xff]
  %v74 = vld [vmem:[%s3 + $0x58] sm:$0xff]
  %v75 = vld [vmem:[%s3 + $0x60] sm:$0xff]
  %v76 = vld [vmem:[%s3 + $0x68] sm:$0xff]
  %v77 = vld [vmem:[%s3 + $0x70] sm:$0xff]
  %v78 = vld [vmem:[%s3 + $0x78] sm:$0xff]
  %v79 = vld [vmem:[%s4] sm:$0xff]
  %v80 = vld [vmem:[%s4 + $0x8] sm:$0xff]
  %v81 = vld [vmem:[%s4 + $0x10] sm:$0xff]
  %v82 = vld [vmem:[%s4 + $0x18] sm:$0xff]
  %v83 = vld [vmem:[%s4 + $0x20] sm:$0xff]
  %v84 = vld [vmem:[%s4 + $0x28] sm:$0xff]
  %v85 = vld [vmem:[%s4 + $0x30] sm:$0xff]
  %v86 = vld [vmem:[%s4 + $0x38] sm:$0xff]
  %v87 = vld [vmem:[%s4 + $0x40] sm:$0xff]
  %v88 = vld [vmem:[%s4 + $0x48] sm:$0xff]
  %v89 = vld [vmem:[%s4 + $0x50] sm:$0xff]
  %v90 = vld [vmem:[%s4 + $0x58] sm:$0xff]
  %v91 = vld [vmem:[%s4 + $0x60] sm:$0xff]
  %v92 = vld [vmem:[%s4 + $0x68] sm:$0xff]
  %v93 = vld [vmem:[%s4 + $0x70] sm:$0xff]
  %v94 = vld [vmem:[%s4 + $0x78] sm:$0xff]
  %v95 = vld [vmem:[%s5] sm:$0xff]
  %v96 = vld [vmem:[%s5 + $0x8] sm:$0xff]
  %v97 = vld [vmem:[%s5 + $0x10] sm:$0xff]
  %v98 = vld [vmem:[%s5 + $0x18] sm:$0xff]
  %v99 = vld [vmem:[%s5 + $0x20] sm:$0xff]
  %v100 = vld [vmem:[%s5 + $0x28] sm:$0xff]
  %v101 = vld [vmem:[%s5 + $0x30] sm:$0xff]
  %v102 = vld [vmem:[%s5 + $0x38] sm:$0xff]
  %v103 = vld [vmem:[%s5 + $0x40] sm:$0xff]
  %v104 = vld [vmem:[%s5 + $0x48] sm:$0xff]
  %v105 = vld [vmem:[%s5 + $0x50] sm:$0xff]
  %v106 = vld [vmem:[%s5 + $0x58] sm:$0xff]
  %v107 = vld [vmem:[%s5 + $0x60] sm:$0xff]
  %v108 = vld [vmem:[%s5 + $0x68] sm:$0xff]
  %v109 = vld [vmem:[%s5 + $0x70] sm:$0xff]
  %v110 = vld [vmem:[%s5 + $0x78] sm:$0xff]
  %v111 = vld [vmem:[%s6] sm:$0x3]
  %v112 = vld [vmem:[%s7] sm:$0x3]
  %v113 = vld [vmem:[%s8] sm:$0x3]
  %v114 = vld [vmem:[%s9] sm:$0x3]
  %v115 = vld [vmem:[%s0] sm:$0x1]
  %v116 = vld [vmem:[%s0 + $0x4] sm:$0x1]
  %v117 = vld [vmem:[%s0 + $0x8] sm:$0x1]
  %v118 = vld [vmem:[%s0 + $0xc] sm:$0x1]
  %v119 = vld [vmem:[%s0 + $0x10] sm:$0x1]
  %v120 = vld [vmem:[%s0 + $0x14] sm:$0x1]
  %v121 = vld [vmem:[%s0 + $0x18] sm:$0x1]
  %v122 = vld [vmem:[%s0 + $0x1c] sm:$0x1]
  %v124 = vlaneseq
  %v125 = vshrl.u32 %v124, 7
  %v126 = vsub.s32 0, %v125
  %v127 = vrot.slane %v111, %v126
  %v128 = vlaneseq
  %v129 = vshrl.u32 %v128, 7
  %v130 = vsub.s32 1, %v129
  %v131 = vrot.slane %v111, %v130
  %v142 = vrot.slane %v116, 7
  %vm143 = vcmask 1041409
  %v144 = vsel %vm143, %v142, %v115
  %v145 = vrot.slane %v117, 6
  %vm146 = vcmask 1042434
  %v147 = vsel %vm146, %v145, %v144
  %v148 = vrot.slane %v118, 5
  %vm149 = vcmask 1043459
  %v150 = vsel %vm149, %v148, %v147
  %v151 = vrot.slane %v119, 4
  %vm152 = vcmask 1044484
  %v153 = vsel %vm152, %v151, %v150
  %v154 = vrot.slane %v120, 3
  %vm155 = vcmask 1045509
  %v156 = vsel %vm155, %v154, %v153
  %v157 = vrot.slane %v121, 2
  %vm158 = vcmask 1046534
  %v159 = vsel %vm158, %v157, %v156
  %v160 = vrot.slane %v122, 1
  %vm161 = vcmask 1047559
  %v162 = vsel %vm161, %v160, %v159
  %vm163 = vcmask 523264
  %v164 = vsel %vm163, %v162, 0
  %166 = vmatprep.subr.mxu0 0.0
  %167 = vmatpush1.msra.mxu0 0.0
  %168 = vmatprep.subr.mxu0 0.0
  %169 = vmatpush1.msra.mxu0 0.0
  %170 = vmatprep.subr.mxu0 0.0
  %171 = vmatpush1.msra.mxu0 0.0
  %172 = vmatprep.subr.mxu0 0.0
  %173 = vmatpush1.msra.mxu0 0.0
  %174 = vmatprep.subr.mxu0 0.0
  %175 = vmatpush1.msra.mxu0 0.0
  %176 = vmatprep.subr.mxu0 0.0
  %177 = vmatpush1.msra.mxu0 0.0
  %178 = vmatprep.subr.mxu0 0.0
  %179 = vmatpush1.msra.mxu0 0.0
  %180 = vmatprep.subr.mxu0 0.0
  %181 = vmatpush1.msra.mxu0 0.0
  %182 = vmatprep.subr.mxu0 %v62
  %183 = vmatpush1.msra.mxu0 %v61
  %184 = vmatprep.subr.mxu0 %v60
  %185 = vmatpush1.msra.mxu0 %v59
  %186 = vmatprep.subr.mxu0 %v58
  %187 = vmatpush1.msra.mxu0 %v57
  %188 = vmatprep.subr.mxu0 %v56
  %189 = vmatpush1.msra.mxu0 %v55
  %190 = vmatprep.subr.mxu0 %v54
  %191 = vmatpush1.msra.mxu0 %v53
  %192 = vmatprep.subr.mxu0 %v52
  %193 = vmatpush1.msra.mxu0 %v51
  %194 = vmatprep.subr.mxu0 %v50
  %195 = vmatpush1.msra.mxu0 %v49
  %196 = vmatprep.subr.mxu0 %v48
  %197 = vmatpush1.msra.mxu0 %v47
  %198 = vmatprep.subr.mxu0 0.0
  %199 = vmatpush2.msra.mxu0 0.0
  %200 = vmatprep.subr.mxu0 0.0
  %201 = vmatpush2.msra.mxu0 0.0
  %202 = vmatprep.subr.mxu0 0.0
  %203 = vmatpush2.msra.mxu0 0.0
  %204 = vmatprep.subr.mxu0 0.0
  %205 = vmatpush2.msra.mxu0 0.0
  %206 = vmatprep.subr.mxu0 0.0
  %207 = vmatpush2.msra.mxu0 0.0
  %208 = vmatprep.subr.mxu0 0.0
  %209 = vmatpush2.msra.mxu0 0.0
  %210 = vmatprep.subr.mxu0 0.0
  %211 = vmatpush2.msra.mxu0 0.0
  %212 = vmatprep.subr.mxu0 0.0
  %213 = vmatpush2.msra.mxu0 0.0
  %214 = vmatprep.subr.mxu0 0.0
  %215 = vmatpush2.msra.mxu0 0.0
  %216 = vmatprep.subr.mxu0 0.0
  %217 = vmatpush2.msra.mxu0 0.0
  %218 = vmatprep.subr.mxu0 0.0
  %219 = vmatpush2.msra.mxu0 0.0
  %220 = vmatprep.subr.mxu0 0.0
  %221 = vmatpush2.msra.mxu0 0.0
  %222 = vmatprep.subr.mxu0 0.0
  %223 = vmatpush2.msra.mxu0 0.0
  %224 = vmatprep.subr.mxu0 0.0
  %225 = vmatpush2.msra.mxu0 0.0
  %226 = vmatprep.subr.mxu0 0.0
  %227 = vmatpush2.msra.mxu0 0.0
  %228 = vmatprep.subr.mxu0 0.0
  %229 = vmatpush2.msra.mxu0 0.0
  %230 = vmatprep.mubr.f32.mxu0 0.0
  %231 = vmatmul.mubr.f32.gmra.mxu0 %v164
  %v232 = vpop.f32.mrf.mxu0
  %v233 = vadd.f32 %v127, %v232
  %v234 = vpop.f32.mrf.mxu0
  %v235 = vadd.f32 %v131, %v234
  %236 = vdwg.mxu0
  %v237 = vld [vmem:[%s0 + $0x3] sm:$0x1]
  %v238 = vld [vmem:[%s0 + $0x7] sm:$0x1]
  %v239 = vld [vmem:[%s0 + $0xb] sm:$0x1]
  %v240 = vld [vmem:[%s0 + $0xf] sm:$0x1]
  %v241 = vld [vmem:[%s0 + $0x13] sm:$0x1]
  %v242 = vld [vmem:[%s0 + $0x17] sm:$0x1]
  %v243 = vld [vmem:[%s0 + $0x1b] sm:$0x1]
  %v244 = vld [vmem:[%s0 + $0x1f] sm:$0x1]
  %v246 = vlaneseq
  %v247 = vshrl.u32 %v246, 7
  %v248 = vsub.s32 0, %v247
  %v249 = vrot.slane %v112, %v248
  %v250 = vlaneseq
  %v251 = vshrl.u32 %v250, 7
  %v252 = vsub.s32 1, %v251
  %v253 = vrot.slane %v112, %v252
  %v264 = vrot.slane %v238, 7
  %v265 = vsel %vm143, %v264, %v237
  %v266 = vrot.slane %v239, 6
  %v267 = vsel %vm146, %v266, %v265
  %v268 = vrot.slane %v240, 5
  %v269 = vsel %vm149, %v268, %v267
  %v270 = vrot.slane %v241, 4
  %v271 = vsel %vm152, %v270, %v269
  %v272 = vrot.slane %v242, 3
  %v273 = vsel %vm155, %v272, %v271
  %v274 = vrot.slane %v243, 2
  %v275 = vsel %vm158, %v274, %v273
  %v276 = vrot.slane %v244, 1
  %v277 = vsel %vm161, %v276, %v275
  %v278 = vsel %vm163, %v277, 0
  %280 = vmatprep.subr.mxu0 0.0
  %281 = vmatpush1.msra.mxu0 0.0
  %282 = vmatprep.subr.mxu0 0.0
  %283 = vmatpush1.msra.mxu0 0.0
  %284 = vmatprep.subr.mxu0 0.0
  %285 = vmatpush1.msra.mxu0 0.0
  %286 = vmatprep.subr.mxu0 0.0
  %287 = vmatpush1.msra.mxu0 0.0
  %288 = vmatprep.subr.mxu0 0.0
  %289 = vmatpush1.msra.mxu0 0.0
  %290 = vmatprep.subr.mxu0 0.0
  %291 = vmatpush1.msra.mxu0 0.0
  %292 = vmatprep.subr.mxu0 0.0
  %293 = vmatpush1.msra.mxu0 0.0
  %294 = vmatprep.subr.mxu0 0.0
  %295 = vmatpush1.msra.mxu0 0.0
  %296 = vmatprep.subr.mxu0 %v78
  %297 = vmatpush1.msra.mxu0 %v77
  %298 = vmatprep.subr.mxu0 %v76
  %299 = vmatpush1.msra.mxu0 %v75
  %300 = vmatprep.subr.mxu0 %v74
  %301 = vmatpush1.msra.mxu0 %v73
  %302 = vmatprep.subr.mxu0 %v72
  %303 = vmatpush1.msra.mxu0 %v71
  %304 = vmatprep.subr.mxu0 %v70
  %305 = vmatpush1.msra.mxu0 %v69
  %306 = vmatprep.subr.mxu0 %v68
  %307 = vmatpush1.msra.mxu0 %v67
  %308 = vmatprep.subr.mxu0 %v66
  %309 = vmatpush1.msra.mxu0 %v65
  %310 = vmatprep.subr.mxu0 %v64
  %311 = vmatpush1.msra.mxu0 %v63
  %312 = vmatprep.subr.mxu0 0.0
  %313 = vmatpush2.msra.mxu0 0.0
  %314 = vmatprep.subr.mxu0 0.0
  %315 = vmatpush2.msra.mxu0 0.0
  %316 = vmatprep.subr.mxu0 0.0
  %317 = vmatpush2.msra.mxu0 0.0
  %318 = vmatprep.subr.mxu0 0.0
  %319 = vmatpush2.msra.mxu0 0.0
  %320 = vmatprep.subr.mxu0 0.0
  %321 = vmatpush2.msra.mxu0 0.0
  %322 = vmatprep.subr.mxu0 0.0
  %323 = vmatpush2.msra.mxu0 0.0
  %324 = vmatprep.subr.mxu0 0.0
  %325 = vmatpush2.msra.mxu0 0.0
  %326 = vmatprep.subr.mxu0 0.0
  %327 = vmatpush2.msra.mxu0 0.0
  %328 = vmatprep.subr.mxu0 0.0
  %329 = vmatpush2.msra.mxu0 0.0
  %330 = vmatprep.subr.mxu0 0.0
  %331 = vmatpush2.msra.mxu0 0.0
  %332 = vmatprep.subr.mxu0 0.0
  %333 = vmatpush2.msra.mxu0 0.0
  %334 = vmatprep.subr.mxu0 0.0
  %335 = vmatpush2.msra.mxu0 0.0
  %336 = vmatprep.subr.mxu0 0.0
  %337 = vmatpush2.msra.mxu0 0.0
  %338 = vmatprep.subr.mxu0 0.0
  %339 = vmatpush2.msra.mxu0 0.0
  %340 = vmatprep.subr.mxu0 0.0
  %341 = vmatpush2.msra.mxu0 0.0
  %342 = vmatprep.subr.mxu0 0.0
  %343 = vmatpush2.msra.mxu0 0.0
  %344 = vmatprep.mubr.f32.mxu0 0.0
  %345 = vmatmul.mubr.f32.gmra.mxu0 %v278
  %v346 = vpop.f32.mrf.mxu0
  %v347 = vadd.f32 %v249, %v346
  %v348 = vpop.f32.mrf.mxu0
  %v349 = vadd.f32 %v253, %v348
  %350 = vdwg.mxu0
  %v352 = vlaneseq
  %v353 = vshrl.u32 %v352, 7
  %v354 = vsub.s32 0, %v353
  %v355 = vrot.slane %v113, %v354
  %v356 = vlaneseq
  %v357 = vshrl.u32 %v356, 7
  %v358 = vsub.s32 1, %v357
  %v359 = vrot.slane %v113, %v358
  %v363 = vsel %vm163, 0.0, 0
  %365 = vmatprep.subr.mxu0 0.0
  %366 = vmatpush1.msra.mxu0 0.0
  %367 = vmatprep.subr.mxu0 0.0
  %368 = vmatpush1.msra.mxu0 0.0
  %369 = vmatprep.subr.mxu0 0.0
  %370 = vmatpush1.msra.mxu0 0.0
  %371 = vmatprep.subr.mxu0 0.0
  %372 = vmatpush1.msra.mxu0 0.0
  %373 = vmatprep.subr.mxu0 0.0
  %374 = vmatpush1.msra.mxu0 0.0
  %375 = vmatprep.subr.mxu0 0.0
  %376 = vmatpush1.msra.mxu0 0.0
  %377 = vmatprep.subr.mxu0 0.0
  %378 = vmatpush1.msra.mxu0 0.0
  %379 = vmatprep.subr.mxu0 0.0
  %380 = vmatpush1.msra.mxu0 0.0
  %381 = vmatprep.subr.mxu0 %v94
  %382 = vmatpush1.msra.mxu0 %v93
  %383 = vmatprep.subr.mxu0 %v92
  %384 = vmatpush1.msra.mxu0 %v91
  %385 = vmatprep.subr.mxu0 %v90
  %386 = vmatpush1.msra.mxu0 %v89
  %387 = vmatprep.subr.mxu0 %v88
  %388 = vmatpush1.msra.mxu0 %v87
  %389 = vmatprep.subr.mxu0 %v86
  %390 = vmatpush1.msra.mxu0 %v85
  %391 = vmatprep.subr.mxu0 %v84
  %392 = vmatpush1.msra.mxu0 %v83
  %393 = vmatprep.subr.mxu0 %v82
  %394 = vmatpush1.msra.mxu0 %v81
  %395 = vmatprep.subr.mxu0 %v80
  %396 = vmatpush1.msra.mxu0 %v79
  %397 = vmatprep.subr.mxu0 0.0
  %398 = vmatpush2.msra.mxu0 0.0
  %399 = vmatprep.subr.mxu0 0.0
  %400 = vmatpush2.msra.mxu0 0.0
  %401 = vmatprep.subr.mxu0 0.0
  %402 = vmatpush2.msra.mxu0 0.0
  %403 = vmatprep.subr.mxu0 0.0
  %404 = vmatpush2.msra.mxu0 0.0
  %405 = vmatprep.subr.mxu0 0.0
  %406 = vmatpush2.msra.mxu0 0.0
  %407 = vmatprep.subr.mxu0 0.0
  %408 = vmatpush2.msra.mxu0 0.0
  %409 = vmatprep.subr.mxu0 0.0
  %410 = vmatpush2.msra.mxu0 0.0
  %411 = vmatprep.subr.mxu0 0.0
  %412 = vmatpush2.msra.mxu0 0.0
  %413 = vmatprep.subr.mxu0 0.0
  %414 = vmatpush2.msra.mxu0 0.0
  %415 = vmatprep.subr.mxu0 0.0
  %416 = vmatpush2.msra.mxu0 0.0
  %417 = vmatprep.subr.mxu0 0.0
  %418 = vmatpush2.msra.mxu0 0.0
  %419 = vmatprep.subr.mxu0 0.0
  %420 = vmatpush2.msra.mxu0 0.0
  %421 = vmatprep.subr.mxu0 0.0
  %422 = vmatpush2.msra.mxu0 0.0
  %423 = vmatprep.subr.mxu0 0.0
  %424 = vmatpush2.msra.mxu0 0.0
  %425 = vmatprep.subr.mxu0 0.0
  %426 = vmatpush2.msra.mxu0 0.0
  %427 = vmatprep.subr.mxu0 0.0
  %428 = vmatpush2.msra.mxu0 0.0
  %429 = vmatprep.mubr.f32.mxu0 0.0
  %430 = vmatmul.mubr.f32.gmra.mxu0 %v363
  %v431 = vpop.f32.mrf.mxu0
  %v432 = vadd.f32 %v355, %v431
  %v433 = vpop.f32.mrf.mxu0
  %v434 = vadd.f32 %v359, %v433
  %435 = vdwg.mxu0
  %v436 = vadd.f32 %v233, %v432
  %v437 = vxor.u32 %v436, 2147483648
  %v438 = vmul.f32 %v437, 1.442695
  %v439 = vpow.pop %v438
  %v440 = vadd.f32 %v439, 1.0
  %v441 = vrcp.pop %v440
  %v442 = vmul.f32 1.0, %v441
  %v443 = vmul.f32 %v442, %v434
  %v444 = vadd.f32 %v235, %v443
  %v445 = vtanh.pop %v444
  %v446 = vsub.f32 1.0, %v442
  %448 = vrot.lane.b32.xlu0 %v445, 64
  %v449 = vpop.permute.xlu0 %448
  %v451 = vmul.f32 %v446, %v449
  %v452 = vmul.f32 %v442, 0.0
  %v453 = vadd.f32 %v451, %v452
  %v455 = vlaneseq
  %v456 = vshrl.u32 %v455, 7
  %v457 = vsub.s32 0, %v456
  %v458 = vrot.slane %v114, %v457
  %v459 = vlaneseq
  %v460 = vshrl.u32 %v459, 7
  %v461 = vsub.s32 1, %v460
  %v462 = vrot.slane %v114, %v461
  %465 = vmatprep.subr.mxu0 0.0
  %466 = vmatpush1.msra.mxu0 0.0
  %467 = vmatprep.subr.mxu0 0.0
  %468 = vmatpush1.msra.mxu0 0.0
  %469 = vmatprep.subr.mxu0 0.0
  %470 = vmatpush1.msra.mxu0 0.0
  %471 = vmatprep.subr.mxu0 0.0
  %472 = vmatpush1.msra.mxu0 0.0
  %473 = vmatprep.subr.mxu0 0.0
  %474 = vmatpush1.msra.mxu0 0.0
  %475 = vmatprep.subr.mxu0 0.0
  %476 = vmatpush1.msra.mxu0 0.0
  %477 = vmatprep.subr.mxu0 0.0
  %478 = vmatpush1.msra.mxu0 0.0
  %479 = vmatprep.subr.mxu0 0.0
  %480 = vmatpush1.msra.mxu0 0.0
  %481 = vmatprep.subr.mxu0 %v110
  %482 = vmatpush1.msra.mxu0 %v109
  %483 = vmatprep.subr.mxu0 %v108
  %484 = vmatpush1.msra.mxu0 %v107
  %485 = vmatprep.subr.mxu0 %v106
  %486 = vmatpush1.msra.mxu0 %v105
  %487 = vmatprep.subr.mxu0 %v104
  %488 = vmatpush1.msra.mxu0 %v103
  %489 = vmatprep.subr.mxu0 %v102
  %490 = vmatpush1.msra.mxu0 %v101
  %491 = vmatprep.subr.mxu0 %v100
  %492 = vmatpush1.msra.mxu0 %v99
  %493 = vmatprep.subr.mxu0 %v98
  %494 = vmatpush1.msra.mxu0 %v97
  %495 = vmatprep.subr.mxu0 %v96
  %496 = vmatpush1.msra.mxu0 %v95
  %497 = vmatprep.subr.mxu0 0.0
  %498 = vmatpush2.msra.mxu0 0.0
  %499 = vmatprep.subr.mxu0 0.0
  %500 = vmatpush2.msra.mxu0 0.0
  %501 = vmatprep.subr.mxu0 0.0
  %502 = vmatpush2.msra.mxu0 0.0
  %503 = vmatprep.subr.mxu0 0.0
  %504 = vmatpush2.msra.mxu0 0.0
  %505 = vmatprep.subr.mxu0 0.0
  %506 = vmatpush2.msra.mxu0 0.0
  %507 = vmatprep.subr.mxu0 0.0
  %508 = vmatpush2.msra.mxu0 0.0
  %509 = vmatprep.subr.mxu0 0.0
  %510 = vmatpush2.msra.mxu0 0.0
  %511 = vmatprep.subr.mxu0 0.0
  %512 = vmatpush2.msra.mxu0 0.0
  %513 = vmatprep.subr.mxu0 0.0
  %514 = vmatpush2.msra.mxu0 0.0
  %515 = vmatprep.subr.mxu0 0.0
  %516 = vmatpush2.msra.mxu0 0.0
  %517 = vmatprep.subr.mxu0 0.0
  %518 = vmatpush2.msra.mxu0 0.0
  %519 = vmatprep.subr.mxu0 0.0
  %520 = vmatpush2.msra.mxu0 0.0
  %521 = vmatprep.subr.mxu0 0.0
  %522 = vmatpush2.msra.mxu0 0.0
  %523 = vmatprep.subr.mxu0 0.0
  %524 = vmatpush2.msra.mxu0 0.0
  %525 = vmatprep.subr.mxu0 0.0
  %526 = vmatpush2.msra.mxu0 0.0
  %527 = vmatprep.subr.mxu0 0.0
  %528 = vmatpush2.msra.mxu0 0.0
  %529 = vmatprep.mubr.f32.mxu0 0.0
  %530 = vmatmul.mubr.f32.gmra.mxu0 %v363
  %v531 = vpop.f32.mrf.mxu0
  %v532 = vadd.f32 %v458, %v531
  %v533 = vpop.f32.mrf.mxu0
  %v534 = vadd.f32 %v462, %v533
  %535 = vdwg.mxu0
  %v536 = vadd.f32 %v347, %v532
  %v537 = vxor.u32 %v536, 2147483648
  %v538 = vmul.f32 %v537, 1.442695
  %v539 = vpow.pop %v538
  %v540 = vadd.f32 %v539, 1.0
  %v541 = vrcp.pop %v540
  %v542 = vmul.f32 1.0, %v541
  %v543 = vmul.f32 %v542, %v534
  %v544 = vadd.f32 %v349, %v543
  %v545 = vtanh.pop %v544
  %v546 = vsub.f32 1.0, %v542
  %548 = vrot.lane.b32.xlu0 %v545, 64
  %v549 = vpop.permute.xlu0 %548
  %v551 = vmul.f32 %v546, %v549
  %v552 = vmul.f32 %v542, 0.0
  %v553 = vadd.f32 %v551, %v552
  %vm554 = vcmp.gt.s32.totalorder %v46, 0
  %vm555 = vcmp.gt.s32.totalorder %v46, 3
  %v556 = vsel %vm554, 1, 0
  %557 = vset.pattern.permute.xlu0 0
  %558 = vperm.xlu0 %557, %v556
  %v559 = vpop.permute.xlu0 %558
  %vm560 = vcmp.eq.s32.totalorder %v559, 1
  %v561 = vsel %vm560, %v453, 0.0
  %v562 = vsel %vm555, 1, 0
  %563 = vset.pattern.permute.xlu0 0
  %564 = vperm.xlu0 %563, %v562
  %v565 = vpop.permute.xlu0 %564
  %vm566 = vcmp.eq.s32.totalorder %v565, 1
  %v567 = vsel %vm566, %v553, 0.0
  %569 = vrot.lane.b32.xlu0 %v561, 64
  %v570 = vpop.permute.xlu0 %569
  %572 = vst.msk [vmem:[#allocation2] sm:$0xff] %vm163, %v570
  %s573 = scalar_lea.vmem [#allocation2], 24
  %vm574 = vcmask 1048064
  %575 = vst.msk [vmem:[%s573] sm:$0xff] %vm574, %v567
  %v576 = vld [vmem:[%s0 + $0x1] sm:$0x1]
  %v577 = vld [vmem:[%s0 + $0x5] sm:$0x1]
  %v578 = vld [vmem:[%s0 + $0x9] sm:$0x1]
  %v579 = vld [vmem:[%s0 + $0xd] sm:$0x1]
  %v580 = vld [vmem:[%s0 + $0x11] sm:$0x1]
  %v581 = vld [vmem:[%s0 + $0x15] sm:$0x1]
  %v582 = vld [vmem:[%s0 + $0x19] sm:$0x1]
  %v583 = vld [vmem:[%s0 + $0x1d] sm:$0x1]
  %v592 = vrot.slane %v577, 7
  %v593 = vsel %vm143, %v592, %v576
  %v594 = vrot.slane %v578, 6
  %v595 = vsel %vm146, %v594, %v593
  %v596 = vrot.slane %v579, 5
  %v597 = vsel %vm149, %v596, %v595
  %v598 = vrot.slane %v580, 4
  %v599 = vsel %vm152, %v598, %v597
  %v600 = vrot.slane %v581, 3
  %v601 = vsel %vm155, %v600, %v599
  %v602 = vrot.slane %v582, 2
  %v603 = vsel %vm158, %v602, %v601
  %v604 = vrot.slane %v583, 1
  %v605 = vsel %vm161, %v604, %v603
  %v606 = vsel %vm163, %v605, 0
  %608 = vmatprep.subr.mxu0 0.0
  %609 = vmatpush1.msra.mxu0 0.0
  %610 = vmatprep.subr.mxu0 0.0
  %611 = vmatpush1.msra.mxu0 0.0
  %612 = vmatprep.subr.mxu0 0.0
  %613 = vmatpush1.msra.mxu0 0.0
  %614 = vmatprep.subr.mxu0 0.0
  %615 = vmatpush1.msra.mxu0 0.0
  %616 = vmatprep.subr.mxu0 0.0
  %617 = vmatpush1.msra.mxu0 0.0
  %618 = vmatprep.subr.mxu0 0.0
  %619 = vmatpush1.msra.mxu0 0.0
  %620 = vmatprep.subr.mxu0 0.0
  %621 = vmatpush1.msra.mxu0 0.0
  %622 = vmatprep.subr.mxu0 0.0
  %623 = vmatpush1.msra.mxu0 0.0
  %624 = vmatprep.subr.mxu0 %v62
  %625 = vmatpush1.msra.mxu0 %v61
  %626 = vmatprep.subr.mxu0 %v60
  %627 = vmatpush1.msra.mxu0 %v59
  %628 = vmatprep.subr.mxu0 %v58
  %629 = vmatpush1.msra.mxu0 %v57
  %630 = vmatprep.subr.mxu0 %v56
  %631 = vmatpush1.msra.mxu0 %v55
  %632 = vmatprep.subr.mxu0 %v54
  %633 = vmatpush1.msra.mxu0 %v53
  %634 = vmatprep.subr.mxu0 %v52
  %635 = vmatpush1.msra.mxu0 %v51
  %636 = vmatprep.subr.mxu0 %v50
  %637 = vmatpush1.msra.mxu0 %v49
  %638 = vmatprep.subr.mxu0 %v48
  %639 = vmatpush1.msra.mxu0 %v47
  %640 = vmatprep.subr.mxu0 0.0
  %641 = vmatpush2.msra.mxu0 0.0
  %642 = vmatprep.subr.mxu0 0.0
  %643 = vmatpush2.msra.mxu0 0.0
  %644 = vmatprep.subr.mxu0 0.0
  %645 = vmatpush2.msra.mxu0 0.0
  %646 = vmatprep.subr.mxu0 0.0
  %647 = vmatpush2.msra.mxu0 0.0
  %648 = vmatprep.subr.mxu0 0.0
  %649 = vmatpush2.msra.mxu0 0.0
  %650 = vmatprep.subr.mxu0 0.0
  %651 = vmatpush2.msra.mxu0 0.0
  %652 = vmatprep.subr.mxu0 0.0
  %653 = vmatpush2.msra.mxu0 0.0
  %654 = vmatprep.subr.mxu0 0.0
  %655 = vmatpush2.msra.mxu0 0.0
  %656 = vmatprep.subr.mxu0 0.0
  %657 = vmatpush2.msra.mxu0 0.0
  %658 = vmatprep.subr.mxu0 0.0
  %659 = vmatpush2.msra.mxu0 0.0
  %660 = vmatprep.subr.mxu0 0.0
  %661 = vmatpush2.msra.mxu0 0.0
  %662 = vmatprep.subr.mxu0 0.0
  %663 = vmatpush2.msra.mxu0 0.0
  %664 = vmatprep.subr.mxu0 0.0
  %665 = vmatpush2.msra.mxu0 0.0
  %666 = vmatprep.subr.mxu0 0.0
  %667 = vmatpush2.msra.mxu0 0.0
  %668 = vmatprep.subr.mxu0 0.0
  %669 = vmatpush2.msra.mxu0 0.0
  %670 = vmatprep.subr.mxu0 0.0
  %671 = vmatpush2.msra.mxu0 0.0
  %672 = vmatprep.mubr.f32.mxu0 0.0
  %673 = vmatmul.mubr.f32.gmra.mxu0 %v606
  %v674 = vpop.f32.mrf.mxu0
  %v675 = vadd.f32 %v127, %v674
  %v676 = vpop.f32.mrf.mxu0
  %v677 = vadd.f32 %v131, %v676
  %678 = vdwg.mxu0
  %v679 = vld [vmem:[%s0 + $0x2] sm:$0x1]
  %v680 = vld [vmem:[%s0 + $0x6] sm:$0x1]
  %v681 = vld [vmem:[%s0 + $0xa] sm:$0x1]
  %v682 = vld [vmem:[%s0 + $0xe] sm:$0x1]
  %v683 = vld [vmem:[%s0 + $0x12] sm:$0x1]
  %v684 = vld [vmem:[%s0 + $0x16] sm:$0x1]
  %v685 = vld [vmem:[%s0 + $0x1a] sm:$0x1]
  %v686 = vld [vmem:[%s0 + $0x1e] sm:$0x1]
  %v695 = vrot.slane %v680, 7
  %v696 = vsel %vm143, %v695, %v679
  %v697 = vrot.slane %v681, 6
  %v698 = vsel %vm146, %v697, %v696
  %v699 = vrot.slane %v682, 5
  %v700 = vsel %vm149, %v699, %v698
  %v701 = vrot.slane %v683, 4
  %v702 = vsel %vm152, %v701, %v700
  %v703 = vrot.slane %v684, 3
  %v704 = vsel %vm155, %v703, %v702
  %v705 = vrot.slane %v685, 2
  %v706 = vsel %vm158, %v705, %v704
  %v707 = vrot.slane %v686, 1
  %v708 = vsel %vm161, %v707, %v706
  %v709 = vsel %vm163, %v708, 0
  %711 = vmatprep.subr.mxu0 0.0
  %712 = vmatpush1.msra.mxu0 0.0
  %713 = vmatprep.subr.mxu0 0.0
  %714 = vmatpush1.msra.mxu0 0.0
  %715 = vmatprep.subr.mxu0 0.0
  %716 = vmatpush1.msra.mxu0 0.0
  %717 = vmatprep.subr.mxu0 0.0
  %718 = vmatpush1.msra.mxu0 0.0
  %719 = vmatprep.subr.mxu0 0.0
  %720 = vmatpush1.msra.mxu0 0.0
  %721 = vmatprep.subr.mxu0 0.0
  %722 = vmatpush1.msra.mxu0 0.0
  %723 = vmatprep.subr.mxu0 0.0
  %724 = vmatpush1.msra.mxu0 0.0
  %725 = vmatprep.subr.mxu0 0.0
  %726 = vmatpush1.msra.mxu0 0.0
  %727 = vmatprep.subr.mxu0 %v78
  %728 = vmatpush1.msra.mxu0 %v77
  %729 = vmatprep.subr.mxu0 %v76
  %730 = vmatpush1.msra.mxu0 %v75
  %731 = vmatprep.subr.mxu0 %v74
  %732 = vmatpush1.msra.mxu0 %v73
  %733 = vmatprep.subr.mxu0 %v72
  %734 = vmatpush1.msra.mxu0 %v71
  %735 = vmatprep.subr.mxu0 %v70
  %736 = vmatpush1.msra.mxu0 %v69
  %737 = vmatprep.subr.mxu0 %v68
  %738 = vmatpush1.msra.mxu0 %v67
  %739 = vmatprep.subr.mxu0 %v66
  %740 = vmatpush1.msra.mxu0 %v65
  %741 = vmatprep.subr.mxu0 %v64
  %742 = vmatpush1.msra.mxu0 %v63
  %743 = vmatprep.subr.mxu0 0.0
  %744 = vmatpush2.msra.mxu0 0.0
  %745 = vmatprep.subr.mxu0 0.0
  %746 = vmatpush2.msra.mxu0 0.0
  %747 = vmatprep.subr.mxu0 0.0
  %748 = vmatpush2.msra.mxu0 0.0
  %749 = vmatprep.subr.mxu0 0.0
  %750 = vmatpush2.msra.mxu0 0.0
  %751 = vmatprep.subr.mxu0 0.0
  %752 = vmatpush2.msra.mxu0 0.0
  %753 = vmatprep.subr.mxu0 0.0
  %754 = vmatpush2.msra.mxu0 0.0
  %755 = vmatprep.subr.mxu0 0.0
  %756 = vmatpush2.msra.mxu0 0.0
  %757 = vmatprep.subr.mxu0 0.0
  %758 = vmatpush2.msra.mxu0 0.0
  %759 = vmatprep.subr.mxu0 0.0
  %760 = vmatpush2.msra.mxu0 0.0
  %761 = vmatprep.subr.mxu0 0.0
  %762 = vmatpush2.msra.mxu0 0.0
  %763 = vmatprep.subr.mxu0 0.0
  %764 = vmatpush2.msra.mxu0 0.0
  %765 = vmatprep.subr.mxu0 0.0
  %766 = vmatpush2.msra.mxu0 0.0
  %767 = vmatprep.subr.mxu0 0.0
  %768 = vmatpush2.msra.mxu0 0.0
  %769 = vmatprep.subr.mxu0 0.0
  %770 = vmatpush2.msra.mxu0 0.0
  %771 = vmatprep.subr.mxu0 0.0
  %772 = vmatpush2.msra.mxu0 0.0
  %773 = vmatprep.subr.mxu0 0.0
  %774 = vmatpush2.msra.mxu0 0.0
  %775 = vmatprep.mubr.f32.mxu0 0.0
  %776 = vmatmul.mubr.f32.gmra.mxu0 %v709
  %v777 = vpop.f32.mrf.mxu0
  %v778 = vadd.f32 %v249, %v777
  %v779 = vpop.f32.mrf.mxu0
  %v780 = vadd.f32 %v253, %v779
  %781 = vdwg.mxu0
  %v782 = vsel %vm163, %v570, 0
  %784 = vmatprep.subr.mxu0 0.0
  %785 = vmatpush1.msra.mxu0 0.0
  %786 = vmatprep.subr.mxu0 0.0
  %787 = vmatpush1.msra.mxu0 0.0
  %788 = vmatprep.subr.mxu0 0.0
  %789 = vmatpush1.msra.mxu0 0.0
  %790 = vmatprep.subr.mxu0 0.0
  %791 = vmatpush1.msra.mxu0 0.0
  %792 = vmatprep.subr.mxu0 0.0
  %793 = vmatpush1.msra.mxu0 0.0
  %794 = vmatprep.subr.mxu0 0.0
  %795 = vmatpush1.msra.mxu0 0.0
  %796 = vmatprep.subr.mxu0 0.0
  %797 = vmatpush1.msra.mxu0 0.0
  %798 = vmatprep.subr.mxu0 0.0
  %799 = vmatpush1.msra.mxu0 0.0
  %800 = vmatprep.subr.mxu0 %v94
  %801 = vmatpush1.msra.mxu0 %v93
  %802 = vmatprep.subr.mxu0 %v92
  %803 = vmatpush1.msra.mxu0 %v91
  %804 = vmatprep.subr.mxu0 %v90
  %805 = vmatpush1.msra.mxu0 %v89
  %806 = vmatprep.subr.mxu0 %v88
  %807 = vmatpush1.msra.mxu0 %v87
  %808 = vmatprep.subr.mxu0 %v86
  %809 = vmatpush1.msra.mxu0 %v85
  %810 = vmatprep.subr.mxu0 %v84
  %811 = vmatpush1.msra.mxu0 %v83
  %812 = vmatprep.subr.mxu0 %v82
  %813 = vmatpush1.msra.mxu0 %v81
  %814 = vmatprep.subr.mxu0 %v80
  %815 = vmatpush1.msra.mxu0 %v79
  %816 = vmatprep.subr.mxu0 0.0
  %817 = vmatpush2.msra.mxu0 0.0
  %818 = vmatprep.subr.mxu0 0.0
  %819 = vmatpush2.msra.mxu0 0.0
  %820 = vmatprep.subr.mxu0 0.0
  %821 = vmatpush2.msra.mxu0 0.0
  %822 = vmatprep.subr.mxu0 0.0
  %823 = vmatpush2.msra.mxu0 0.0
  %824 = vmatprep.subr.mxu0 0.0
  %825 = vmatpush2.msra.mxu0 0.0
  %826 = vmatprep.subr.mxu0 0.0
  %827 = vmatpush2.msra.mxu0 0.0
  %828 = vmatprep.subr.mxu0 0.0
  %829 = vmatpush2.msra.mxu0 0.0
  %830 = vmatprep.subr.mxu0 0.0
  %831 = vmatpush2.msra.mxu0 0.0
  %832 = vmatprep.subr.mxu0 0.0
  %833 = vmatpush2.msra.mxu0 0.0
  %834 = vmatprep.subr.mxu0 0.0
  %835 = vmatpush2.msra.mxu0 0.0
  %836 = vmatprep.subr.mxu0 0.0
  %837 = vmatpush2.msra.mxu0 0.0
  %838 = vmatprep.subr.mxu0 0.0
  %839 = vmatpush2.msra.mxu0 0.0
  %840 = vmatprep.subr.mxu0 0.0
  %841 = vmatpush2.msra.mxu0 0.0
  %842 = vmatprep.subr.mxu0 0.0
  %843 = vmatpush2.msra.mxu0 0.0
  %844 = vmatprep.subr.mxu0 0.0
  %845 = vmatpush2.msra.mxu0 0.0
  %846 = vmatprep.subr.mxu0 0.0
  %847 = vmatpush2.msra.mxu0 0.0
  %848 = vmatprep.mubr.f32.mxu0 0.0
  %849 = vmatmul.mubr.f32.gmra.mxu0 %v782
  %v850 = vpop.f32.mrf.mxu0
  %v851 = vadd.f32 %v355, %v850
  %v852 = vpop.f32.mrf.mxu0
  %v853 = vadd.f32 %v359, %v852
  %854 = vdwg.mxu0
  %v855 = vadd.f32 %v675, %v851
  %v856 = vxor.u32 %v855, 2147483648
  %v857 = vmul.f32 %v856, 1.442695
  %v858 = vpow.pop %v857
  %v859 = vadd.f32 %v858, 1.0
  %v860 = vrcp.pop %v859
  %v861 = vmul.f32 1.0, %v860
  %v862 = vmul.f32 %v861, %v853
  %v863 = vadd.f32 %v677, %v862
  %v864 = vtanh.pop %v863
  %v865 = vsub.f32 1.0, %v861
  %867 = vrot.lane.b32.xlu0 %v864, 64
  %v868 = vpop.permute.xlu0 %867
  %v870 = vmul.f32 %v865, %v868
  %v871 = vmul.f32 %v861, %v561
  %v872 = vadd.f32 %v870, %v871
  %874 = vrot.lane.b32.xlu0 %v567, 64
  %v875 = vpop.permute.xlu0 %874
  %v876 = vsel %vm163, %v875, 0
  %878 = vmatprep.subr.mxu0 0.0
  %879 = vmatpush1.msra.mxu0 0.0
  %880 = vmatprep.subr.mxu0 0.0
  %881 = vmatpush1.msra.mxu0 0.0
  %882 = vmatprep.subr.mxu0 0.0
  %883 = vmatpush1.msra.mxu0 0.0
  %884 = vmatprep.subr.mxu0 0.0
  %885 = vmatpush1.msra.mxu0 0.0
  %886 = vmatprep.subr.mxu0 0.0
  %887 = vmatpush1.msra.mxu0 0.0
  %888 = vmatprep.subr.mxu0 0.0
  %889 = vmatpush1.msra.mxu0 0.0
  %890 = vmatprep.subr.mxu0 0.0
  %891 = vmatpush1.msra.mxu0 0.0
  %892 = vmatprep.subr.mxu0 0.0
  %893 = vmatpush1.msra.mxu0 0.0
  %894 = vmatprep.subr.mxu0 %v110
  %895 = vmatpush1.msra.mxu0 %v109
  %896 = vmatprep.subr.mxu0 %v108
  %897 = vmatpush1.msra.mxu0 %v107
  %898 = vmatprep.subr.mxu0 %v106
  %899 = vmatpush1.msra.mxu0 %v105
  %900 = vmatprep.subr.mxu0 %v104
  %901 = vmatpush1.msra.mxu0 %v103
  %902 = vmatprep.subr.mxu0 %v102
  %903 = vmatpush1.msra.mxu0 %v101
  %904 = vmatprep.subr.mxu0 %v100
  %905 = vmatpush1.msra.mxu0 %v99
  %906 = vmatprep.subr.mxu0 %v98
  %907 = vmatpush1.msra.mxu0 %v97
  %908 = vmatprep.subr.mxu0 %v96
  %909 = vmatpush1.msra.mxu0 %v95
  %910 = vmatprep.subr.mxu0 0.0
  %911 = vmatpush2.msra.mxu0 0.0
  %912 = vmatprep.subr.mxu0 0.0
  %913 = vmatpush2.msra.mxu0 0.0
  %914 = vmatprep.subr.mxu0 0.0
  %915 = vmatpush2.msra.mxu0 0.0
  %916 = vmatprep.subr.mxu0 0.0
  %917 = vmatpush2.msra.mxu0 0.0
  %918 = vmatprep.subr.mxu0 0.0
  %919 = vmatpush2.msra.mxu0 0.0
  %920 = vmatprep.subr.mxu0 0.0
  %921 = vmatpush2.msra.mxu0 0.0
  %922 = vmatprep.subr.mxu0 0.0
  %923 = vmatpush2.msra.mxu0 0.0
  %924 = vmatprep.subr.mxu0 0.0
  %925 = vmatpush2.msra.mxu0 0.0
  %926 = vmatprep.subr.mxu0 0.0
  %927 = vmatpush2.msra.mxu0 0.0
  %928 = vmatprep.subr.mxu0 0.0
  %929 = vmatpush2.msra.mxu0 0.0
  %930 = vmatprep.subr.mxu0 0.0
  %931 = vmatpush2.msra.mxu0 0.0
  %932 = vmatprep.subr.mxu0 0.0
  %933 = vmatpush2.msra.mxu0 0.0
  %934 = vmatprep.subr.mxu0 0.0
  %935 = vmatpush2.msra.mxu0 0.0
  %936 = vmatprep.subr.mxu0 0.0
  %937 = vmatpush2.msra.mxu0 0.0
  %938 = vmatprep.subr.mxu0 0.0
  %939 = vmatpush2.msra.mxu0 0.0
  %940 = vmatprep.subr.mxu0 0.0
  %941 = vmatpush2.msra.mxu0 0.0
  %942 = vmatprep.mubr.f32.mxu0 0.0
  %943 = vmatmul.mubr.f32.gmra.mxu0 %v876
  %v944 = vpop.f32.mrf.mxu0
  %v945 = vadd.f32 %v458, %v944
  %v946 = vpop.f32.mrf.mxu0
  %v947 = vadd.f32 %v462, %v946
  %948 = vdwg.mxu0
  %v949 = vadd.f32 %v778, %v945
  %v950 = vxor.u32 %v949, 2147483648
  %v951 = vmul.f32 %v950, 1.442695
  %v952 = vpow.pop %v951
  %v953 = vadd.f32 %v952, 1.0
  %v954 = vrcp.pop %v953
  %v955 = vmul.f32 1.0, %v954
  %v956 = vmul.f32 %v955, %v947
  %v957 = vadd.f32 %v780, %v956
  %v958 = vtanh.pop %v957
  %v959 = vsub.f32 1.0, %v955
  %961 = vrot.lane.b32.xlu0 %v958, 64
  %v962 = vpop.permute.xlu0 %961
  %v964 = vmul.f32 %v959, %v962
  %v965 = vmul.f32 %v955, %v567
  %v966 = vadd.f32 %v964, %v965
  %vm967 = vcmp.gt.s32.totalorder %v46, 1
  %vm968 = vcmp.gt.s32.totalorder %v46, 2
  %v969 = vsel %vm967, 1, 0
  %970 = vset.pattern.permute.xlu0 0
  %971 = vperm.xlu0 %970, %v969
  %v972 = vpop.permute.xlu0 %971
  %vm973 = vcmp.eq.s32.totalorder %v972, 1
  %v974 = vsel %vm973, %v872, %v561
  %v975 = vsel %vm968, 1, 0
  %976 = vset.pattern.permute.xlu0 0
  %977 = vperm.xlu0 %976, %v975
  %v978 = vpop.permute.xlu0 %977
  %vm979 = vcmp.eq.s32.totalorder %v978, 1
  %v980 = vsel %vm979, %v966, %v567
  %v981 = vsel %vm973, %v872, 0.0
  %983 = vrot.lane.b32.xlu0 %v981, 64
  %v984 = vpop.permute.xlu0 %983
  %s986 = scalar_lea.vmem [#allocation2], 8
  %987 = vst.msk [vmem:[%s986] sm:$0xff] %vm163, %v984
  %v988 = vsel %vm979, %v966, 0.0
  %s989 = scalar_lea.vmem [#allocation2], 16
  %990 = vst.msk [vmem:[%s989] sm:$0xff] %vm574, %v988
  %v991 = vld [vmem:[%s0 + $0x2] sm:$0x1]
  %v992 = vld [vmem:[%s0 + $0x6] sm:$0x1]
  %v993 = vld [vmem:[%s0 + $0xa] sm:$0x1]
  %v994 = vld [vmem:[%s0 + $0xe] sm:$0x1]
  %v995 = vld [vmem:[%s0 + $0x12] sm:$0x1]
  %v996 = vld [vmem:[%s0 + $0x16] sm:$0x1]
  %v997 = vld [vmem:[%s0 + $0x1a] sm:$0x1]
  %v998 = vld [vmem:[%s0 + $0x1e] sm:$0x1]
  %v1007 = vrot.slane %v992, 7
  %v1008 = vsel %vm143, %v1007, %v991
  %v1009 = vrot.slane %v993, 6
  %v1010 = vsel %vm146, %v1009, %v1008
  %v1011 = vrot.slane %v994, 5
  %v1012 = vsel %vm149, %v1011, %v1010
  %v1013 = vrot.slane %v995, 4
  %v1014 = vsel %vm152, %v1013, %v1012
  %v1015 = vrot.slane %v996, 3
  %v1016 = vsel %vm155, %v1015, %v1014
  %v1017 = vrot.slane %v997, 2
  %v1018 = vsel %vm158, %v1017, %v1016
  %v1019 = vrot.slane %v998, 1
  %v1020 = vsel %vm161, %v1019, %v1018
  %v1021 = vsel %vm163, %v1020, 0
  %1023 = vmatprep.subr.mxu0 0.0
  %1024 = vmatpush1.msra.mxu0 0.0
  %1025 = vmatprep.subr.mxu0 0.0
  %1026 = vmatpush1.msra.mxu0 0.0
  %1027 = vmatprep.subr.mxu0 0.0
  %1028 = vmatpush1.msra.mxu0 0.0
  %1029 = vmatprep.subr.mxu0 0.0
  %1030 = vmatpush1.msra.mxu0 0.0
  %1031 = vmatprep.subr.mxu0 0.0
  %1032 = vmatpush1.msra.mxu0 0.0
  %1033 = vmatprep.subr.mxu0 0.0
  %1034 = vmatpush1.msra.mxu0 0.0
  %1035 = vmatprep.subr.mxu0 0.0
  %1036 = vmatpush1.msra.mxu0 0.0
  %1037 = vmatprep.subr.mxu0 0.0
  %1038 = vmatpush1.msra.mxu0 0.0
  %1039 = vmatprep.subr.mxu0 %v62
  %1040 = vmatpush1.msra.mxu0 %v61
  %1041 = vmatprep.subr.mxu0 %v60
  %1042 = vmatpush1.msra.mxu0 %v59
  %1043 = vmatprep.subr.mxu0 %v58
  %1044 = vmatpush1.msra.mxu0 %v57
  %1045 = vmatprep.subr.mxu0 %v56
  %1046 = vmatpush1.msra.mxu0 %v55
  %1047 = vmatprep.subr.mxu0 %v54
  %1048 = vmatpush1.msra.mxu0 %v53
  %1049 = vmatprep.subr.mxu0 %v52
  %1050 = vmatpush1.msra.mxu0 %v51
  %1051 = vmatprep.subr.mxu0 %v50
  %1052 = vmatpush1.msra.mxu0 %v49
  %1053 = vmatprep.subr.mxu0 %v48
  %1054 = vmatpush1.msra.mxu0 %v47
  %1055 = vmatprep.subr.mxu0 0.0
  %1056 = vmatpush2.msra.mxu0 0.0
  %1057 = vmatprep.subr.mxu0 0.0
  %1058 = vmatpush2.msra.mxu0 0.0
  %1059 = vmatprep.subr.mxu0 0.0
  %1060 = vmatpush2.msra.mxu0 0.0
  %1061 = vmatprep.subr.mxu0 0.0
  %1062 = vmatpush2.msra.mxu0 0.0
  %1063 = vmatprep.subr.mxu0 0.0
  %1064 = vmatpush2.msra.mxu0 0.0
  %1065 = vmatprep.subr.mxu0 0.0
  %1066 = vmatpush2.msra.mxu0 0.0
  %1067 = vmatprep.subr.mxu0 0.0
  %1068 = vmatpush2.msra.mxu0 0.0
  %1069 = vmatprep.subr.mxu0 0.0
  %1070 = vmatpush2.msra.mxu0 0.0
  %1071 = vmatprep.subr.mxu0 0.0
  %1072 = vmatpush2.msra.mxu0 0.0
  %1073 = vmatprep.subr.mxu0 0.0
  %1074 = vmatpush2.msra.mxu0 0.0
  %1075 = vmatprep.subr.mxu0 0.0
  %1076 = vmatpush2.msra.mxu0 0.0
  %1077 = vmatprep.subr.mxu0 0.0
  %1078 = vmatpush2.msra.mxu0 0.0
  %1079 = vmatprep.subr.mxu0 0.0
  %1080 = vmatpush2.msra.mxu0 0.0
  %1081 = vmatprep.subr.mxu0 0.0
  %1082 = vmatpush2.msra.mxu0 0.0
  %1083 = vmatprep.subr.mxu0 0.0
  %1084 = vmatpush2.msra.mxu0 0.0
  %1085 = vmatprep.subr.mxu0 0.0
  %1086 = vmatpush2.msra.mxu0 0.0
  %1087 = vmatprep.mubr.f32.mxu0 0.0
  %1088 = vmatmul.mubr.f32.gmra.mxu0 %v1021
  %v1089 = vpop.f32.mrf.mxu0
  %v1090 = vadd.f32 %v127, %v1089
  %v1091 = vpop.f32.mrf.mxu0
  %v1092 = vadd.f32 %v131, %v1091
  %1093 = vdwg.mxu0
  %v1094 = vld [vmem:[%s0 + $0x1] sm:$0x1]
  %v1095 = vld [vmem:[%s0 + $0x5] sm:$0x1]
  %v1096 = vld [vmem:[%s0 + $0x9] sm:$0x1]
  %v1097 = vld [vmem:[%s0 + $0xd] sm:$0x1]
  %v1098 = vld [vmem:[%s0 + $0x11] sm:$0x1]
  %v1099 = vld [vmem:[%s0 + $0x15] sm:$0x1]
  %v1100 = vld [vmem:[%s0 + $0x19] sm:$0x1]
  %v1101 = vld [vmem:[%s0 + $0x1d] sm:$0x1]
  %v1110 = vrot.slane %v1095, 7
  %v1111 = vsel %vm143, %v1110, %v1094
  %v1112 = vrot.slane %v1096, 6
  %v1113 = vsel %vm146, %v1112, %v1111
  %v1114 = vrot.slane %v1097, 5
  %v1115 = vsel %vm149, %v1114, %v1113
  %v1116 = vrot.slane %v1098, 4
  %v1117 = vsel %vm152, %v1116, %v1115
  %v1118 = vrot.slane %v1099, 3
  %v1119 = vsel %vm155, %v1118, %v1117
  %v1120 = vrot.slane %v1100, 2
  %v1121 = vsel %vm158, %v1120, %v1119
  %v1122 = vrot.slane %v1101, 1
  %v1123 = vsel %vm161, %v1122, %v1121
  %v1124 = vsel %vm163, %v1123, 0
  %1126 = vmatprep.subr.mxu0 0.0
  %1127 = vmatpush1.msra.mxu0 0.0
  %1128 = vmatprep.subr.mxu0 0.0
  %1129 = vmatpush1.msra.mxu0 0.0
  %1130 = vmatprep.subr.mxu0 0.0
  %1131 = vmatpush1.msra.mxu0 0.0
  %1132 = vmatprep.subr.mxu0 0.0
  %1133 = vmatpush1.msra.mxu0 0.0
  %1134 = vmatprep.subr.mxu0 0.0
  %1135 = vmatpush1.msra.mxu0 0.0
  %1136 = vmatprep.subr.mxu0 0.0
  %1137 = vmatpush1.msra.mxu0 0.0
  %1138 = vmatprep.subr.mxu0 0.0
  %1139 = vmatpush1.msra.mxu0 0.0
  %1140 = vmatprep.subr.mxu0 0.0
  %1141 = vmatpush1.msra.mxu0 0.0
  %1142 = vmatprep.subr.mxu0 %v78
  %1143 = vmatpush1.msra.mxu0 %v77
  %1144 = vmatprep.subr.mxu0 %v76
  %1145 = vmatpush1.msra.mxu0 %v75
  %1146 = vmatprep.subr.mxu0 %v74
  %1147 = vmatpush1.msra.mxu0 %v73
  %1148 = vmatprep.subr.mxu0 %v72
  %1149 = vmatpush1.msra.mxu0 %v71
  %1150 = vmatprep.subr.mxu0 %v70
  %1151 = vmatpush1.msra.mxu0 %v69
  %1152 = vmatprep.subr.mxu0 %v68
  %1153 = vmatpush1.msra.mxu0 %v67
  %1154 = vmatprep.subr.mxu0 %v66
  %1155 = vmatpush1.msra.mxu0 %v65
  %1156 = vmatprep.subr.mxu0 %v64
  %1157 = vmatpush1.msra.mxu0 %v63
  %1158 = vmatprep.subr.mxu0 0.0
  %1159 = vmatpush2.msra.mxu0 0.0
  %1160 = vmatprep.subr.mxu0 0.0
  %1161 = vmatpush2.msra.mxu0 0.0
  %1162 = vmatprep.subr.mxu0 0.0
  %1163 = vmatpush2.msra.mxu0 0.0
  %1164 = vmatprep.subr.mxu0 0.0
  %1165 = vmatpush2.msra.mxu0 0.0
  %1166 = vmatprep.subr.mxu0 0.0
  %1167 = vmatpush2.msra.mxu0 0.0
  %1168 = vmatprep.subr.mxu0 0.0
  %1169 = vmatpush2.msra.mxu0 0.0
  %1170 = vmatprep.subr.mxu0 0.0
  %1171 = vmatpush2.msra.mxu0 0.0
  %1172 = vmatprep.subr.mxu0 0.0
  %1173 = vmatpush2.msra.mxu0 0.0
  %1174 = vmatprep.subr.mxu0 0.0
  %1175 = vmatpush2.msra.mxu0 0.0
  %1176 = vmatprep.subr.mxu0 0.0
  %1177 = vmatpush2.msra.mxu0 0.0
  %1178 = vmatprep.subr.mxu0 0.0
  %1179 = vmatpush2.msra.mxu0 0.0
  %1180 = vmatprep.subr.mxu0 0.0
  %1181 = vmatpush2.msra.mxu0 0.0
  %1182 = vmatprep.subr.mxu0 0.0
  %1183 = vmatpush2.msra.mxu0 0.0
  %1184 = vmatprep.subr.mxu0 0.0
  %1185 = vmatpush2.msra.mxu0 0.0
  %1186 = vmatprep.subr.mxu0 0.0
  %1187 = vmatpush2.msra.mxu0 0.0
  %1188 = vmatprep.subr.mxu0 0.0
  %1189 = vmatpush2.msra.mxu0 0.0
  %1190 = vmatprep.mubr.f32.mxu0 0.0
  %1191 = vmatmul.mubr.f32.gmra.mxu0 %v1124
  %v1192 = vpop.f32.mrf.mxu0
  %v1193 = vadd.f32 %v249, %v1192
  %v1194 = vpop.f32.mrf.mxu0
  %v1195 = vadd.f32 %v253, %v1194
  %1196 = vdwg.mxu0
  %1198 = vrot.lane.b32.xlu0 %v974, 64
  %v1199 = vpop.permute.xlu0 %1198
  %v1200 = vsel %vm163, %v1199, 0
  %1202 = vmatprep.subr.mxu0 0.0
  %1203 = vmatpush1.msra.mxu0 0.0
  %1204 = vmatprep.subr.mxu0 0.0
  %1205 = vmatpush1.msra.mxu0 0.0
  %1206 = vmatprep.subr.mxu0 0.0
  %1207 = vmatpush1.msra.mxu0 0.0
  %1208 = vmatprep.subr.mxu0 0.0
  %1209 = vmatpush1.msra.mxu0 0.0
  %1210 = vmatprep.subr.mxu0 0.0
  %1211 = vmatpush1.msra.mxu0 0.0
  %1212 = vmatprep.subr.mxu0 0.0
  %1213 = vmatpush1.msra.mxu0 0.0
  %1214 = vmatprep.subr.mxu0 0.0
  %1215 = vmatpush1.msra.mxu0 0.0
  %1216 = vmatprep.subr.mxu0 0.0
  %1217 = vmatpush1.msra.mxu0 0.0
  %1218 = vmatprep.subr.mxu0 %v94
  %1219 = vmatpush1.msra.mxu0 %v93
  %1220 = vmatprep.subr.mxu0 %v92
  %1221 = vmatpush1.msra.mxu0 %v91
  %1222 = vmatprep.subr.mxu0 %v90
  %1223 = vmatpush1.msra.mxu0 %v89
  %1224 = vmatprep.subr.mxu0 %v88
  %1225 = vmatpush1.msra.mxu0 %v87
  %1226 = vmatprep.subr.mxu0 %v86
  %1227 = vmatpush1.msra.mxu0 %v85
  %1228 = vmatprep.subr.mxu0 %v84
  %1229 = vmatpush1.msra.mxu0 %v83
  %1230 = vmatprep.subr.mxu0 %v82
  %1231 = vmatpush1.msra.mxu0 %v81
  %1232 = vmatprep.subr.mxu0 %v80
  %1233 = vmatpush1.msra.mxu0 %v79
  %1234 = vmatprep.subr.mxu0 0.0
  %1235 = vmatpush2.msra.mxu0 0.0
  %1236 = vmatprep.subr.mxu0 0.0
  %1237 = vmatpush2.msra.mxu0 0.0
  %1238 = vmatprep.subr.mxu0 0.0
  %1239 = vmatpush2.msra.mxu0 0.0
  %1240 = vmatprep.subr.mxu0 0.0
  %1241 = vmatpush2.msra.mxu0 0.0
  %1242 = vmatprep.subr.mxu0 0.0
  %1243 = vmatpush2.msra.mxu0 0.0
  %1244 = vmatprep.subr.mxu0 0.0
  %1245 = vmatpush2.msra.mxu0 0.0
  %1246 = vmatprep.subr.mxu0 0.0
  %1247 = vmatpush2.msra.mxu0 0.0
  %1248 = vmatprep.subr.mxu0 0.0
  %1249 = vmatpush2.msra.mxu0 0.0
  %1250 = vmatprep.subr.mxu0 0.0
  %1251 = vmatpush2.msra.mxu0 0.0
  %1252 = vmatprep.subr.mxu0 0.0
  %1253 = vmatpush2.msra.mxu0 0.0
  %1254 = vmatprep.subr.mxu0 0.0
  %1255 = vmatpush2.msra.mxu0 0.0
  %1256 = vmatprep.subr.mxu0 0.0
  %1257 = vmatpush2.msra.mxu0 0.0
  %1258 = vmatprep.subr.mxu0 0.0
  %1259 = vmatpush2.msra.mxu0 0.0
  %1260 = vmatprep.subr.mxu0 0.0
  %1261 = vmatpush2.msra.mxu0 0.0
  %1262 = vmatprep.subr.mxu0 0.0
  %1263 = vmatpush2.msra.mxu0 0.0
  %1264 = vmatprep.subr.mxu0 0.0
  %1265 = vmatpush2.msra.mxu0 0.0
  %1266 = vmatprep.mubr.f32.mxu0 0.0
  %1267 = vmatmul.mubr.f32.gmra.mxu0 %v1200
  %v1268 = vpop.f32.mrf.mxu0
  %v1269 = vadd.f32 %v355, %v1268
  %v1270 = vpop.f32.mrf.mxu0
  %v1271 = vadd.f32 %v359, %v1270
  %1272 = vdwg.mxu0
  %v1273 = vadd.f32 %v1090, %v1269
  %v1274 = vxor.u32 %v1273, 2147483648
  %v1275 = vmul.f32 %v1274, 1.442695
  %v1276 = vpow.pop %v1275
  %v1277 = vadd.f32 %v1276, 1.0
  %v1278 = vrcp.pop %v1277
  %v1279 = vmul.f32 1.0, %v1278
  %v1280 = vmul.f32 %v1279, %v1271
  %v1281 = vadd.f32 %v1092, %v1280
  %v1282 = vtanh.pop %v1281
  %v1283 = vsub.f32 1.0, %v1279
  %1285 = vrot.lane.b32.xlu0 %v1282, 64
  %v1286 = vpop.permute.xlu0 %1285
  %v1288 = vmul.f32 %v1283, %v1286
  %v1289 = vmul.f32 %v1279, %v974
  %v1290 = vadd.f32 %v1288, %v1289
  %1292 = vrot.lane.b32.xlu0 %v980, 64
  %v1293 = vpop.permute.xlu0 %1292
  %v1294 = vsel %vm163, %v1293, 0
  %1296 = vmatprep.subr.mxu0 0.0
  %1297 = vmatpush1.msra.mxu0 0.0
  %1298 = vmatprep.subr.mxu0 0.0
  %1299 = vmatpush1.msra.mxu0 0.0
  %1300 = vmatprep.subr.mxu0 0.0
  %1301 = vmatpush1.msra.mxu0 0.0
  %1302 = vmatprep.subr.mxu0 0.0
  %1303 = vmatpush1.msra.mxu0 0.0
  %1304 = vmatprep.subr.mxu0 0.0
  %1305 = vmatpush1.msra.mxu0 0.0
  %1306 = vmatprep.subr.mxu0 0.0
  %1307 = vmatpush1.msra.mxu0 0.0
  %1308 = vmatprep.subr.mxu0 0.0
  %1309 = vmatpush1.msra.mxu0 0.0
  %1310 = vmatprep.subr.mxu0 0.0
  %1311 = vmatpush1.msra.mxu0 0.0
  %1312 = vmatprep.subr.mxu0 %v110
  %1313 = vmatpush1.msra.mxu0 %v109
  %1314 = vmatprep.subr.mxu0 %v108
  %1315 = vmatpush1.msra.mxu0 %v107
  %1316 = vmatprep.subr.mxu0 %v106
  %1317 = vmatpush1.msra.mxu0 %v105
  %1318 = vmatprep.subr.mxu0 %v104
  %1319 = vmatpush1.msra.mxu0 %v103
  %1320 = vmatprep.subr.mxu0 %v102
  %1321 = vmatpush1.msra.mxu0 %v101
  %1322 = vmatprep.subr.mxu0 %v100
  %1323 = vmatpush1.msra.mxu0 %v99
  %1324 = vmatprep.subr.mxu0 %v98
  %1325 = vmatpush1.msra.mxu0 %v97
  %1326 = vmatprep.subr.mxu0 %v96
  %1327 = vmatpush1.msra.mxu0 %v95
  %1328 = vmatprep.subr.mxu0 0.0
  %1329 = vmatpush2.msra.mxu0 0.0
  %1330 = vmatprep.subr.mxu0 0.0
  %1331 = vmatpush2.msra.mxu0 0.0
  %1332 = vmatprep.subr.mxu0 0.0
  %1333 = vmatpush2.msra.mxu0 0.0
  %1334 = vmatprep.subr.mxu0 0.0
  %1335 = vmatpush2.msra.mxu0 0.0
  %1336 = vmatprep.subr.mxu0 0.0
  %1337 = vmatpush2.msra.mxu0 0.0
  %1338 = vmatprep.subr.mxu0 0.0
  %1339 = vmatpush2.msra.mxu0 0.0
  %1340 = vmatprep.subr.mxu0 0.0
  %1341 = vmatpush2.msra.mxu0 0.0
  %1342 = vmatprep.subr.mxu0 0.0
  %1343 = vmatpush2.msra.mxu0 0.0
  %1344 = vmatprep.subr.mxu0 0.0
  %1345 = vmatpush2.msra.mxu0 0.0
  %1346 = vmatprep.subr.mxu0 0.0
  %1347 = vmatpush2.msra.mxu0 0.0
  %1348 = vmatprep.subr.mxu0 0.0
  %1349 = vmatpush2.msra.mxu0 0.0
  %1350 = vmatprep.subr.mxu0 0.0
  %1351 = vmatpush2.msra.mxu0 0.0
  %1352 = vmatprep.subr.mxu0 0.0
  %1353 = vmatpush2.msra.mxu0 0.0
  %1354 = vmatprep.subr.mxu0 0.0
  %1355 = vmatpush2.msra.mxu0 0.0
  %1356 = vmatprep.subr.mxu0 0.0
  %1357 = vmatpush2.msra.mxu0 0.0
  %1358 = vmatprep.subr.mxu0 0.0
  %1359 = vmatpush2.msra.mxu0 0.0
  %1360 = vmatprep.mubr.f32.mxu0 0.0
  %1361 = vmatmul.mubr.f32.gmra.mxu0 %v1294
  %v1362 = vpop.f32.mrf.mxu0
  %v1363 = vadd.f32 %v458, %v1362
  %v1364 = vpop.f32.mrf.mxu0
  %v1365 = vadd.f32 %v462, %v1364
  %1366 = vdwg.mxu0
  %v1367 = vadd.f32 %v1193, %v1363
  %v1368 = vxor.u32 %v1367, 2147483648
  %v1369 = vmul.f32 %v1368, 1.442695
  %v1370 = vpow.pop %v1369
  %v1371 = vadd.f32 %v1370, 1.0
  %v1372 = vrcp.pop %v1371
  %v1373 = vmul.f32 1.0, %v1372
  %v1374 = vmul.f32 %v1373, %v1365
  %v1375 = vadd.f32 %v1195, %v1374
  %v1376 = vtanh.pop %v1375
  %v1377 = vsub.f32 1.0, %v1373
  %1379 = vrot.lane.b32.xlu0 %v1376, 64
  %v1380 = vpop.permute.xlu0 %1379
  %v1382 = vmul.f32 %v1377, %v1380
  %v1383 = vmul.f32 %v1373, %v980
  %v1384 = vadd.f32 %v1382, %v1383
  %v1385 = vsel %vm979, %v1290, %v974
  %v1386 = vsel %vm973, %v1384, %v980
  %v1387 = vsel %vm979, %v1290, 0.0
  %1389 = vrot.lane.b32.xlu0 %v1387, 64
  %v1390 = vpop.permute.xlu0 %1389
  %1392 = vst.msk [vmem:[%s989] sm:$0xff] %vm163, %v1390
  %v1393 = vsel %vm973, %v1384, 0.0
  %1394 = vst.msk [vmem:[%s986] sm:$0xff] %vm574, %v1393
  %v1395 = vld [vmem:[%s0 + $0x3] sm:$0x1]
  %v1396 = vld [vmem:[%s0 + $0x7] sm:$0x1]
  %v1397 = vld [vmem:[%s0 + $0xb] sm:$0x1]
  %v1398 = vld [vmem:[%s0 + $0xf] sm:$0x1]
  %v1399 = vld [vmem:[%s0 + $0x13] sm:$0x1]
  %v1400 = vld [vmem:[%s0 + $0x17] sm:$0x1]
  %v1401 = vld [vmem:[%s0 + $0x1b] sm:$0x1]
  %v1402 = vld [vmem:[%s0 + $0x1f] sm:$0x1]
  %v1411 = vrot.slane %v1396, 7
  %v1412 = vsel %vm143, %v1411, %v1395
  %v1413 = vrot.slane %v1397, 6
  %v1414 = vsel %vm146, %v1413, %v1412
  %v1415 = vrot.slane %v1398, 5
  %v1416 = vsel %vm149, %v1415, %v1414
  %v1417 = vrot.slane %v1399, 4
  %v1418 = vsel %vm152, %v1417, %v1416
  %v1419 = vrot.slane %v1400, 3
  %v1420 = vsel %vm155, %v1419, %v1418
  %v1421 = vrot.slane %v1401, 2
  %v1422 = vsel %vm158, %v1421, %v1420
  %v1423 = vrot.slane %v1402, 1
  %v1424 = vsel %vm161, %v1423, %v1422
  %v1425 = vsel %vm163, %v1424, 0
  %1427 = vmatprep.subr.mxu0 0.0
  %1428 = vmatpush1.msra.mxu0 0.0
  %1429 = vmatprep.subr.mxu0 0.0
  %1430 = vmatpush1.msra.mxu0 0.0
  %1431 = vmatprep.subr.mxu0 0.0
  %1432 = vmatpush1.msra.mxu0 0.0
  %1433 = vmatprep.subr.mxu0 0.0
  %1434 = vmatpush1.msra.mxu0 0.0
  %1435 = vmatprep.subr.mxu0 0.0
  %1436 = vmatpush1.msra.mxu0 0.0
  %1437 = vmatprep.subr.mxu0 0.0
  %1438 = vmatpush1.msra.mxu0 0.0
  %1439 = vmatprep.subr.mxu0 0.0
  %1440 = vmatpush1.msra.mxu0 0.0
  %1441 = vmatprep.subr.mxu0 0.0
  %1442 = vmatpush1.msra.mxu0 0.0
  %1443 = vmatprep.subr.mxu0 %v62
  %1444 = vmatpush1.msra.mxu0 %v61
  %1445 = vmatprep.subr.mxu0 %v60
  %1446 = vmatpush1.msra.mxu0 %v59
  %1447 = vmatprep.subr.mxu0 %v58
  %1448 = vmatpush1.msra.mxu0 %v57
  %1449 = vmatprep.subr.mxu0 %v56
  %1450 = vmatpush1.msra.mxu0 %v55
  %1451 = vmatprep.subr.mxu0 %v54
  %1452 = vmatpush1.msra.mxu0 %v53
  %1453 = vmatprep.subr.mxu0 %v52
  %1454 = vmatpush1.msra.mxu0 %v51
  %1455 = vmatprep.subr.mxu0 %v50
  %1456 = vmatpush1.msra.mxu0 %v49
  %1457 = vmatprep.subr.mxu0 %v48
  %1458 = vmatpush1.msra.mxu0 %v47
  %1459 = vmatprep.subr.mxu0 0.0
  %1460 = vmatpush2.msra.mxu0 0.0
  %1461 = vmatprep.subr.mxu0 0.0
  %1462 = vmatpush2.msra.mxu0 0.0
  %1463 = vmatprep.subr.mxu0 0.0
  %1464 = vmatpush2.msra.mxu0 0.0
  %1465 = vmatprep.subr.mxu0 0.0
  %1466 = vmatpush2.msra.mxu0 0.0
  %1467 = vmatprep.subr.mxu0 0.0
  %1468 = vmatpush2.msra.mxu0 0.0
  %1469 = vmatprep.subr.mxu0 0.0
  %1470 = vmatpush2.msra.mxu0 0.0
  %1471 = vmatprep.subr.mxu0 0.0
  %1472 = vmatpush2.msra.mxu0 0.0
  %1473 = vmatprep.subr.mxu0 0.0
  %1474 = vmatpush2.msra.mxu0 0.0
  %1475 = vmatprep.subr.mxu0 0.0
  %1476 = vmatpush2.msra.mxu0 0.0
  %1477 = vmatprep.subr.mxu0 0.0
  %1478 = vmatpush2.msra.mxu0 0.0
  %1479 = vmatprep.subr.mxu0 0.0
  %1480 = vmatpush2.msra.mxu0 0.0
  %1481 = vmatprep.subr.mxu0 0.0
  %1482 = vmatpush2.msra.mxu0 0.0
  %1483 = vmatprep.subr.mxu0 0.0
  %1484 = vmatpush2.msra.mxu0 0.0
  %1485 = vmatprep.subr.mxu0 0.0
  %1486 = vmatpush2.msra.mxu0 0.0
  %1487 = vmatprep.subr.mxu0 0.0
  %1488 = vmatpush2.msra.mxu0 0.0
  %1489 = vmatprep.subr.mxu0 0.0
  %1490 = vmatpush2.msra.mxu0 0.0
  %1491 = vmatprep.mubr.f32.mxu0 0.0
  %1492 = vmatmul.mubr.f32.gmra.mxu0 %v1425
  %v1493 = vpop.f32.mrf.mxu0
  %v1494 = vadd.f32 %v127, %v1493
  %v1495 = vpop.f32.mrf.mxu0
  %v1496 = vadd.f32 %v131, %v1495
  %1497 = vdwg.mxu0
  %v1498 = vld [vmem:[%s0] sm:$0x1]
  %v1499 = vld [vmem:[%s0 + $0x4] sm:$0x1]
  %v1500 = vld [vmem:[%s0 + $0x8] sm:$0x1]
  %v1501 = vld [vmem:[%s0 + $0xc] sm:$0x1]
  %v1502 = vld [vmem:[%s0 + $0x10] sm:$0x1]
  %v1503 = vld [vmem:[%s0 + $0x14] sm:$0x1]
  %v1504 = vld [vmem:[%s0 + $0x18] sm:$0x1]
  %v1505 = vld [vmem:[%s0 + $0x1c] sm:$0x1]
  %v1514 = vrot.slane %v1499, 7
  %v1515 = vsel %vm143, %v1514, %v1498
  %v1516 = vrot.slane %v1500, 6
  %v1517 = vsel %vm146, %v1516, %v1515
  %v1518 = vrot.slane %v1501, 5
  %v1519 = vsel %vm149, %v1518, %v1517
  %v1520 = vrot.slane %v1502, 4
  %v1521 = vsel %vm152, %v1520, %v1519
  %v1522 = vrot.slane %v1503, 3
  %v1523 = vsel %vm155, %v1522, %v1521
  %v1524 = vrot.slane %v1504, 2
  %v1525 = vsel %vm158, %v1524, %v1523
  %v1526 = vrot.slane %v1505, 1
  %v1527 = vsel %vm161, %v1526, %v1525
  %v1528 = vsel %vm163, %v1527, 0
  %1530 = vmatprep.subr.mxu0 0.0
  %1531 = vmatpush1.msra.mxu0 0.0
  %1532 = vmatprep.subr.mxu0 0.0
  %1533 = vmatpush1.msra.mxu0 0.0
  %1534 = vmatprep.subr.mxu0 0.0
  %1535 = vmatpush1.msra.mxu0 0.0
  %1536 = vmatprep.subr.mxu0 0.0
  %1537 = vmatpush1.msra.mxu0 0.0
  %1538 = vmatprep.subr.mxu0 0.0
  %1539 = vmatpush1.msra.mxu0 0.0
  %1540 = vmatprep.subr.mxu0 0.0
  %1541 = vmatpush1.msra.mxu0 0.0
  %1542 = vmatprep.subr.mxu0 0.0
  %1543 = vmatpush1.msra.mxu0 0.0
  %1544 = vmatprep.subr.mxu0 0.0
  %1545 = vmatpush1.msra.mxu0 0.0
  %1546 = vmatprep.subr.mxu0 %v78
  %1547 = vmatpush1.msra.mxu0 %v77
  %1548 = vmatprep.subr.mxu0 %v76
  %1549 = vmatpush1.msra.mxu0 %v75
  %1550 = vmatprep.subr.mxu0 %v74
  %1551 = vmatpush1.msra.mxu0 %v73
  %1552 = vmatprep.subr.mxu0 %v72
  %1553 = vmatpush1.msra.mxu0 %v71
  %1554 = vmatprep.subr.mxu0 %v70
  %1555 = vmatpush1.msra.mxu0 %v69
  %1556 = vmatprep.subr.mxu0 %v68
  %1557 = vmatpush1.msra.mxu0 %v67
  %1558 = vmatprep.subr.mxu0 %v66
  %1559 = vmatpush1.msra.mxu0 %v65
  %1560 = vmatprep.subr.mxu0 %v64
  %1561 = vmatpush1.msra.mxu0 %v63
  %1562 = vmatprep.subr.mxu0 0.0
  %1563 = vmatpush2.msra.mxu0 0.0
  %1564 = vmatprep.subr.mxu0 0.0
  %1565 = vmatpush2.msra.mxu0 0.0
  %1566 = vmatprep.subr.mxu0 0.0
  %1567 = vmatpush2.msra.mxu0 0.0
  %1568 = vmatprep.subr.mxu0 0.0
  %1569 = vmatpush2.msra.mxu0 0.0
  %1570 = vmatprep.subr.mxu0 0.0
  %1571 = vmatpush2.msra.mxu0 0.0
  %1572 = vmatprep.subr.mxu0 0.0
  %1573 = vmatpush2.msra.mxu0 0.0
  %1574 = vmatprep.subr.mxu0 0.0
  %1575 = vmatpush2.msra.mxu0 0.0
  %1576 = vmatprep.subr.mxu0 0.0
  %1577 = vmatpush2.msra.mxu0 0.0
  %1578 = vmatprep.subr.mxu0 0.0
  %1579 = vmatpush2.msra.mxu0 0.0
  %1580 = vmatprep.subr.mxu0 0.0
  %1581 = vmatpush2.msra.mxu0 0.0
  %1582 = vmatprep.subr.mxu0 0.0
  %1583 = vmatpush2.msra.mxu0 0.0
  %1584 = vmatprep.subr.mxu0 0.0
  %1585 = vmatpush2.msra.mxu0 0.0
  %1586 = vmatprep.subr.mxu0 0.0
  %1587 = vmatpush2.msra.mxu0 0.0
  %1588 = vmatprep.subr.mxu0 0.0
  %1589 = vmatpush2.msra.mxu0 0.0
  %1590 = vmatprep.subr.mxu0 0.0
  %1591 = vmatpush2.msra.mxu0 0.0
  %1592 = vmatprep.subr.mxu0 0.0
  %1593 = vmatpush2.msra.mxu0 0.0
  %1594 = vmatprep.mubr.f32.mxu0 0.0
  %1595 = vmatmul.mubr.f32.gmra.mxu0 %v1528
  %v1596 = vpop.f32.mrf.mxu0
  %v1597 = vadd.f32 %v249, %v1596
  %v1598 = vpop.f32.mrf.mxu0
  %v1599 = vadd.f32 %v253, %v1598
  %1600 = vdwg.mxu0
  %1602 = vrot.lane.b32.xlu0 %v1385, 64
  %v1603 = vpop.permute.xlu0 %1602
  %v1604 = vsel %vm163, %v1603, 0
  %1606 = vmatprep.subr.mxu0 0.0
  %1607 = vmatpush1.msra.mxu0 0.0
  %1608 = vmatprep.subr.mxu0 0.0
  %1609 = vmatpush1.msra.mxu0 0.0
  %1610 = vmatprep.subr.mxu0 0.0
  %1611 = vmatpush1.msra.mxu0 0.0
  %1612 = vmatprep.subr.mxu0 0.0
  %1613 = vmatpush1.msra.mxu0 0.0
  %1614 = vmatprep.subr.mxu0 0.0
  %1615 = vmatpush1.msra.mxu0 0.0
  %1616 = vmatprep.subr.mxu0 0.0
  %1617 = vmatpush1.msra.mxu0 0.0
  %1618 = vmatprep.subr.mxu0 0.0
  %1619 = vmatpush1.msra.mxu0 0.0
  %1620 = vmatprep.subr.mxu0 0.0
  %1621 = vmatpush1.msra.mxu0 0.0
  %1622 = vmatprep.subr.mxu0 %v94
  %1623 = vmatpush1.msra.mxu0 %v93
  %1624 = vmatprep.subr.mxu0 %v92
  %1625 = vmatpush1.msra.mxu0 %v91
  %1626 = vmatprep.subr.mxu0 %v90
  %1627 = vmatpush1.msra.mxu0 %v89
  %1628 = vmatprep.subr.mxu0 %v88
  %1629 = vmatpush1.msra.mxu0 %v87
  %1630 = vmatprep.subr.mxu0 %v86
  %1631 = vmatpush1.msra.mxu0 %v85
  %1632 = vmatprep.subr.mxu0 %v84
  %1633 = vmatpush1.msra.mxu0 %v83
  %1634 = vmatprep.subr.mxu0 %v82
  %1635 = vmatpush1.msra.mxu0 %v81
  %1636 = vmatprep.subr.mxu0 %v80
  %1637 = vmatpush1.msra.mxu0 %v79
  %1638 = vmatprep.subr.mxu0 0.0
  %1639 = vmatpush2.msra.mxu0 0.0
  %1640 = vmatprep.subr.mxu0 0.0
  %1641 = vmatpush2.msra.mxu0 0.0
  %1642 = vmatprep.subr.mxu0 0.0
  %1643 = vmatpush2.msra.mxu0 0.0
  %1644 = vmatprep.subr.mxu0 0.0
  %1645 = vmatpush2.msra.mxu0 0.0
  %1646 = vmatprep.subr.mxu0 0.0
  %1647 = vmatpush2.msra.mxu0 0.0
  %1648 = vmatprep.subr.mxu0 0.0
  %1649 = vmatpush2.msra.mxu0 0.0
  %1650 = vmatprep.subr.mxu0 0.0
  %1651 = vmatpush2.msra.mxu0 0.0
  %1652 = vmatprep.subr.mxu0 0.0
  %1653 = vmatpush2.msra.mxu0 0.0
  %1654 = vmatprep.subr.mxu0 0.0
  %1655 = vmatpush2.msra.mxu0 0.0
  %1656 = vmatprep.subr.mxu0 0.0
  %1657 = vmatpush2.msra.mxu0 0.0
  %1658 = vmatprep.subr.mxu0 0.0
  %1659 = vmatpush2.msra.mxu0 0.0
  %1660 = vmatprep.subr.mxu0 0.0
  %1661 = vmatpush2.msra.mxu0 0.0
  %1662 = vmatprep.subr.mxu0 0.0
  %1663 = vmatpush2.msra.mxu0 0.0
  %1664 = vmatprep.subr.mxu0 0.0
  %1665 = vmatpush2.msra.mxu0 0.0
  %1666 = vmatprep.subr.mxu0 0.0
  %1667 = vmatpush2.msra.mxu0 0.0
  %1668 = vmatprep.subr.mxu0 0.0
  %1669 = vmatpush2.msra.mxu0 0.0
  %1670 = vmatprep.mubr.f32.mxu0 0.0
  %1671 = vmatmul.mubr.f32.gmra.mxu0 %v1604
  %v1672 = vpop.f32.mrf.mxu0
  %v1673 = vadd.f32 %v355, %v1672
  %v1674 = vpop.f32.mrf.mxu0
  %v1675 = vadd.f32 %v359, %v1674
  %1676 = vdwg.mxu0
  %v1677 = vadd.f32 %v1494, %v1673
  %v1678 = vxor.u32 %v1677, 2147483648
  %v1679 = vmul.f32 %v1678, 1.442695
  %v1680 = vpow.pop %v1679
  %v1681 = vadd.f32 %v1680, 1.0
  %v1682 = vrcp.pop %v1681
  %v1683 = vmul.f32 1.0, %v1682
  %v1684 = vmul.f32 %v1683, %v1675
  %v1685 = vadd.f32 %v1496, %v1684
  %v1686 = vtanh.pop %v1685
  %v1687 = vsub.f32 1.0, %v1683
  %1689 = vrot.lane.b32.xlu0 %v1686, 64
  %v1690 = vpop.permute.xlu0 %1689
  %v1692 = vmul.f32 %v1687, %v1690
  %v1693 = vmul.f32 %v1683, %v1385
  %v1694 = vadd.f32 %v1692, %v1693
  %1696 = vrot.lane.b32.xlu0 %v1386, 64
  %v1697 = vpop.permute.xlu0 %1696
  %v1698 = vsel %vm163, %v1697, 0
  %1700 = vmatprep.subr.mxu0 0.0
  %1701 = vmatpush1.msra.mxu0 0.0
  %1702 = vmatprep.subr.mxu0 0.0
  %1703 = vmatpush1.msra.mxu0 0.0
  %1704 = vmatprep.subr.mxu0 0.0
  %1705 = vmatpush1.msra.mxu0 0.0
  %1706 = vmatprep.subr.mxu0 0.0
  %1707 = vmatpush1.msra.mxu0 0.0
  %1708 = vmatprep.subr.mxu0 0.0
  %1709 = vmatpush1.msra.mxu0 0.0
  %1710 = vmatprep.subr.mxu0 0.0
  %1711 = vmatpush1.msra.mxu0 0.0
  %1712 = vmatprep.subr.mxu0 0.0
  %1713 = vmatpush1.msra.mxu0 0.0
  %1714 = vmatprep.subr.mxu0 0.0
  %1715 = vmatpush1.msra.mxu0 0.0
  %1716 = vmatprep.subr.mxu0 %v110
  %1717 = vmatpush1.msra.mxu0 %v109
  %1718 = vmatprep.subr.mxu0 %v108
  %1719 = vmatpush1.msra.mxu0 %v107
  %1720 = vmatprep.subr.mxu0 %v106
  %1721 = vmatpush1.msra.mxu0 %v105
  %1722 = vmatprep.subr.mxu0 %v104
  %1723 = vmatpush1.msra.mxu0 %v103
  %1724 = vmatprep.subr.mxu0 %v102
  %1725 = vmatpush1.msra.mxu0 %v101
  %1726 = vmatprep.subr.mxu0 %v100
  %1727 = vmatpush1.msra.mxu0 %v99
  %1728 = vmatprep.subr.mxu0 %v98
  %1729 = vmatpush1.msra.mxu0 %v97
  %1730 = vmatprep.subr.mxu0 %v96
  %1731 = vmatpush1.msra.mxu0 %v95
  %1732 = vmatprep.subr.mxu0 0.0
  %1733 = vmatpush2.msra.mxu0 0.0
  %1734 = vmatprep.subr.mxu0 0.0
  %1735 = vmatpush2.msra.mxu0 0.0
  %1736 = vmatprep.subr.mxu0 0.0
  %1737 = vmatpush2.msra.mxu0 0.0
  %1738 = vmatprep.subr.mxu0 0.0
  %1739 = vmatpush2.msra.mxu0 0.0
  %1740 = vmatprep.subr.mxu0 0.0
  %1741 = vmatpush2.msra.mxu0 0.0
  %1742 = vmatprep.subr.mxu0 0.0
  %1743 = vmatpush2.msra.mxu0 0.0
  %1744 = vmatprep.subr.mxu0 0.0
  %1745 = vmatpush2.msra.mxu0 0.0
  %1746 = vmatprep.subr.mxu0 0.0
  %1747 = vmatpush2.msra.mxu0 0.0
  %1748 = vmatprep.subr.mxu0 0.0
  %1749 = vmatpush2.msra.mxu0 0.0
  %1750 = vmatprep.subr.mxu0 0.0
  %1751 = vmatpush2.msra.mxu0 0.0
  %1752 = vmatprep.subr.mxu0 0.0
  %1753 = vmatpush2.msra.mxu0 0.0
  %1754 = vmatprep.subr.mxu0 0.0
  %1755 = vmatpush2.msra.mxu0 0.0
  %1756 = vmatprep.subr.mxu0 0.0
  %1757 = vmatpush2.msra.mxu0 0.0
  %1758 = vmatprep.subr.mxu0 0.0
  %1759 = vmatpush2.msra.mxu0 0.0
  %1760 = vmatprep.subr.mxu0 0.0
  %1761 = vmatpush2.msra.mxu0 0.0
  %1762 = vmatprep.subr.mxu0 0.0
  %1763 = vmatpush2.msra.mxu0 0.0
  %1764 = vmatprep.mubr.f32.mxu0 0.0
  %1765 = vmatmul.mubr.f32.gmra.mxu0 %v1698
  %v1766 = vpop.f32.mrf.mxu0
  %v1767 = vadd.f32 %v458, %v1766
  %v1768 = vpop.f32.mrf.mxu0
  %v1769 = vadd.f32 %v462, %v1768
  %1770 = vdwg.mxu0
  %v1771 = vadd.f32 %v1597, %v1767
  %v1772 = vxor.u32 %v1771, 2147483648
  %v1773 = vmul.f32 %v1772, 1.442695
  %v1774 = vpow.pop %v1773
  %v1775 = vadd.f32 %v1774, 1.0
  %v1776 = vrcp.pop %v1775
  %v1777 = vmul.f32 1.0, %v1776
  %v1778 = vmul.f32 %v1777, %v1769
  %v1779 = vadd.f32 %v1599, %v1778
  %v1780 = vtanh.pop %v1779
  %v1781 = vsub.f32 1.0, %v1777
  %1783 = vrot.lane.b32.xlu0 %v1780, 64
  %v1784 = vpop.permute.xlu0 %1783
  %v1786 = vmul.f32 %v1781, %v1784
  %v1787 = vmul.f32 %v1777, %v1386
  %v1788 = vadd.f32 %v1786, %v1787
  %v1789 = vsel %vm566, %v1694, 0.0
  %1791 = vrot.lane.b32.xlu0 %v1789, 64
  %v1792 = vpop.permute.xlu0 %1791
  %1794 = vst.msk [vmem:[%s573] sm:$0xff] %vm163, %v1792
  %v1795 = vsel %vm560, %v1788, 0.0
  %1796 = vst.msk [vmem:[#allocation2] sm:$0xff] %vm574, %v1795
  %v1797 = vld [vmem:[%s10] sm:$0xff]
  %v1798 = vld [vmem:[%s10 + $0x8] sm:$0xff]
  %v1799 = vld [vmem:[%s10 + $0x10] sm:$0xff]
  %v1800 = vld [vmem:[%s10 + $0x18] sm:$0xff]
  %v1801 = vld [vmem:[%s10 + $0x20] sm:$0xff]
  %v1802 = vld [vmem:[%s10 + $0x28] sm:$0xff]
  %v1803 = vld [vmem:[%s10 + $0x30] sm:$0xff]
  %v1804 = vld [vmem:[%s10 + $0x38] sm:$0xff]
  %v1805 = vld [vmem:[%s10 + $0x40] sm:$0xff]
  %v1806 = vld [vmem:[%s10 + $0x48] sm:$0xff]
  %v1807 = vld [vmem:[%s10 + $0x50] sm:$0xff]
  %v1808 = vld [vmem:[%s10 + $0x58] sm:$0xff]
  %v1809 = vld [vmem:[%s10 + $0x60] sm:$0xff]
  %v1810 = vld [vmem:[%s10 + $0x68] sm:$0xff]
  %v1811 = vld [vmem:[%s10 + $0x70] sm:$0xff]
  %v1812 = vld [vmem:[%s10 + $0x78] sm:$0xff]
  %v1813 = vld [vmem:[%s11] sm:$0x1]
  %v1814 = vld [vmem:[%s12] sm:$0x1]
  %v1815 = vld [vmem:[#allocation2] sm:$0xff]
  %v1817 = vlaneseq
  %v1818 = vshrl.u32 %v1817, 7
  %v1819 = vsub.s32 0, %v1818
  %v1820 = vrot.slane %v1813, %v1819
  %1822 = vmatprep.subr.mxu0 0.0
  %1823 = vmatpush1.msra.mxu0 %v1812
  %1824 = vmatprep.subr.mxu0 0.0
  %1825 = vmatpush1.msra.mxu0 %v1811
  %1826 = vmatprep.subr.mxu0 0.0
  %1827 = vmatpush1.msra.mxu0 %v1810
  %1828 = vmatprep.subr.mxu0 0.0
  %1829 = vmatpush1.msra.mxu0 %v1809
  %1830 = vmatprep.subr.mxu0 0.0
  %1831 = vmatpush1.msra.mxu0 %v1808
  %1832 = vmatprep.subr.mxu0 0.0
  %1833 = vmatpush1.msra.mxu0 %v1807
  %1834 = vmatprep.subr.mxu0 0.0
  %1835 = vmatpush1.msra.mxu0 %v1806
  %1836 = vmatprep.subr.mxu0 0.0
  %1837 = vmatpush1.msra.mxu0 %v1805
  %1838 = vmatprep.subr.mxu0 0.0
  %1839 = vmatpush1.msra.mxu0 %v1804
  %1840 = vmatprep.subr.mxu0 0.0
  %1841 = vmatpush1.msra.mxu0 %v1803
  %1842 = vmatprep.subr.mxu0 0.0
  %1843 = vmatpush1.msra.mxu0 %v1802
  %1844 = vmatprep.subr.mxu0 0.0
  %1845 = vmatpush1.msra.mxu0 %v1801
  %1846 = vmatprep.subr.mxu0 0.0
  %1847 = vmatpush1.msra.mxu0 %v1800
  %1848 = vmatprep.subr.mxu0 0.0
  %1849 = vmatpush1.msra.mxu0 %v1799
  %1850 = vmatprep.subr.mxu0 0.0
  %1851 = vmatpush1.msra.mxu0 %v1798
  %1852 = vmatprep.subr.mxu0 0.0
  %1853 = vmatpush1.msra.mxu0 %v1797
  %1854 = vmatprep.subr.mxu0 0.0
  %1855 = vmatpush2.msra.mxu0 0.0
  %1856 = vmatprep.subr.mxu0 0.0
  %1857 = vmatpush2.msra.mxu0 0.0
  %1858 = vmatprep.subr.mxu0 0.0
  %1859 = vmatpush2.msra.mxu0 0.0
  %1860 = vmatprep.subr.mxu0 0.0
  %1861 = vmatpush2.msra.mxu0 0.0
  %1862 = vmatprep.subr.mxu0 0.0
  %1863 = vmatpush2.msra.mxu0 0.0
  %1864 = vmatprep.subr.mxu0 0.0
  %1865 = vmatpush2.msra.mxu0 0.0
  %1866 = vmatprep.subr.mxu0 0.0
  %1867 = vmatpush2.msra.mxu0 0.0
  %1868 = vmatprep.subr.mxu0 0.0
  %1869 = vmatpush2.msra.mxu0 0.0
  %1870 = vmatprep.subr.mxu0 0.0
  %1871 = vmatpush2.msra.mxu0 0.0
  %1872 = vmatprep.subr.mxu0 0.0
  %1873 = vmatpush2.msra.mxu0 0.0
  %1874 = vmatprep.subr.mxu0 0.0
  %1875 = vmatpush2.msra.mxu0 0.0
  %1876 = vmatprep.subr.mxu0 0.0
  %1877 = vmatpush2.msra.mxu0 0.0
  %1878 = vmatprep.subr.mxu0 0.0
  %1879 = vmatpush2.msra.mxu0 0.0
  %1880 = vmatprep.subr.mxu0 0.0
  %1881 = vmatpush2.msra.mxu0 0.0
  %1882 = vmatprep.subr.mxu0 0.0
  %1883 = vmatpush2.msra.mxu0 0.0
  %1884 = vmatprep.subr.mxu0 0.0
  %1885 = vmatpush2.msra.mxu0 0.0
  %1886 = vmatprep.mubr.f32.mxu0 0.0
  %1887 = vmatmul.mubr.f32.gmra.mxu0 %v1815
  %v1888 = vpop.f32.mrf.mxu0
  %v1889 = vadd.f32 %v1820, %v1888
  %v1890 = vpop.f32.mrf.mxu0
  %1891 = vdwg.mxu0
  %v1892 = vtanh.pop %v1889
  %v1894 = vlaneseq
  %v1895 = vshrl.u32 %v1894, 7
  %v1896 = vsub.s32 0, %v1895
  %v1897 = vrot.slane %v1814, %v1896
  %v1899 = vmul.f32 %v1892, %v1897
  %1900 = vadd.xlane.f32.xlu0 %v1899
  %v1901 = vpop.xlane.xlu0 %1900
  %v1902 = vsel %vm554, %v1901, -1e+30
  %v1903 = vld [vmem:[%s986] sm:$0xff]
  %1904 = vmatprep.subr.mxu0 0.0
  %1905 = vmatpush1.msra.mxu0 %v1812
  %1906 = vmatprep.subr.mxu0 0.0
  %1907 = vmatpush1.msra.mxu0 %v1811
  %1908 = vmatprep.subr.mxu0 0.0
  %1909 = vmatpush1.msra.mxu0 %v1810
  %1910 = vmatprep.subr.mxu0 0.0
  %1911 = vmatpush1.msra.mxu0 %v1809
  %1912 = vmatprep.subr.mxu0 0.0
  %1913 = vmatpush1.msra.mxu0 %v1808
  %1914 = vmatprep.subr.mxu0 0.0
  %1915 = vmatpush1.msra.mxu0 %v1807
  %1916 = vmatprep.subr.mxu0 0.0
  %1917 = vmatpush1.msra.mxu0 %v1806
  %1918 = vmatprep.subr.mxu0 0.0
  %1919 = vmatpush1.msra.mxu0 %v1805
  %1920 = vmatprep.subr.mxu0 0.0
  %1921 = vmatpush1.msra.mxu0 %v1804
  %1922 = vmatprep.subr.mxu0 0.0
  %1923 = vmatpush1.msra.mxu0 %v1803
  %1924 = vmatprep.subr.mxu0 0.0
  %1925 = vmatpush1.msra.mxu0 %v1802
  %1926 = vmatprep.subr.mxu0 0.0
  %1927 = vmatpush1.msra.mxu0 %v1801
  %1928 = vmatprep.subr.mxu0 0.0
  %1929 = vmatpush1.msra.mxu0 %v1800
  %1930 = vmatprep.subr.mxu0 0.0
  %1931 = vmatpush1.msra.mxu0 %v1799
  %1932 = vmatprep.subr.mxu0 0.0
  %1933 = vmatpush1.msra.mxu0 %v1798
  %1934 = vmatprep.subr.mxu0 0.0
  %1935 = vmatpush1.msra.mxu0 %v1797
  %1936 = vmatprep.subr.mxu0 0.0
  %1937 = vmatpush2.msra.mxu0 0.0
  %1938 = vmatprep.subr.mxu0 0.0
  %1939 = vmatpush2.msra.mxu0 0.0
  %1940 = vmatprep.subr.mxu0 0.0
  %1941 = vmatpush2.msra.mxu0 0.0
  %1942 = vmatprep.subr.mxu0 0.0
  %1943 = vmatpush2.msra.mxu0 0.0
  %1944 = vmatprep.subr.mxu0 0.0
  %1945 = vmatpush2.msra.mxu0 0.0
  %1946 = vmatprep.subr.mxu0 0.0
  %1947 = vmatpush2.msra.mxu0 0.0
  %1948 = vmatprep.subr.mxu0 0.0
  %1949 = vmatpush2.msra.mxu0 0.0
  %1950 = vmatprep.subr.mxu0 0.0
  %1951 = vmatpush2.msra.mxu0 0.0
  %1952 = vmatprep.subr.mxu0 0.0
  %1953 = vmatpush2.msra.mxu0 0.0
  %1954 = vmatprep.subr.mxu0 0.0
  %1955 = vmatpush2.msra.mxu0 0.0
  %1956 = vmatprep.subr.mxu0 0.0
  %1957 = vmatpush2.msra.mxu0 0.0
  %1958 = vmatprep.subr.mxu0 0.0
  %1959 = vmatpush2.msra.mxu0 0.0
  %1960 = vmatprep.subr.mxu0 0.0
  %1961 = vmatpush2.msra.mxu0 0.0
  %1962 = vmatprep.subr.mxu0 0.0
  %1963 = vmatpush2.msra.mxu0 0.0
  %1964 = vmatprep.subr.mxu0 0.0
  %1965 = vmatpush2.msra.mxu0 0.0
  %1966 = vmatprep.subr.mxu0 0.0
  %1967 = vmatpush2.msra.mxu0 0.0
  %1968 = vmatprep.mubr.f32.mxu0 0.0
  %1969 = vmatmul.mubr.f32.gmra.mxu0 %v1903
  %v1970 = vpop.f32.mrf.mxu0
  %v1971 = vadd.f32 %v1820, %v1970
  %v1972 = vpop.f32.mrf.mxu0
  %1973 = vdwg.mxu0
  %v1974 = vtanh.pop %v1971
  %v1975 = vmul.f32 %v1974, %v1897
  %1976 = vadd.xlane.f32.xlu0 %v1975
  %v1977 = vpop.xlane.xlu0 %1976
  %v1978 = vsel %vm967, %v1977, -1e+30
  %v1979 = vld [vmem:[%s989] sm:$0xff]
  %1980 = vmatprep.subr.mxu0 0.0
  %1981 = vmatpush1.msra.mxu0 %v1812
  %1982 = vmatprep.subr.mxu0 0.0
  %1983 = vmatpush1.msra.mxu0 %v1811
  %1984 = vmatprep.subr.mxu0 0.0
  %1985 = vmatpush1.msra.mxu0 %v1810
  %1986 = vmatprep.subr.mxu0 0.0
  %1987 = vmatpush1.msra.mxu0 %v1809
  %1988 = vmatprep.subr.mxu0 0.0
  %1989 = vmatpush1.msra.mxu0 %v1808
  %1990 = vmatprep.subr.mxu0 0.0
  %1991 = vmatpush1.msra.mxu0 %v1807
  %1992 = vmatprep.subr.mxu0 0.0
  %1993 = vmatpush1.msra.mxu0 %v1806
  %1994 = vmatprep.subr.mxu0 0.0
  %1995 = vmatpush1.msra.mxu0 %v1805
  %1996 = vmatprep.subr.mxu0 0.0
  %1997 = vmatpush1.msra.mxu0 %v1804
  %1998 = vmatprep.subr.mxu0 0.0
  %1999 = vmatpush1.msra.mxu0 %v1803
  %2000 = vmatprep.subr.mxu0 0.0
  %2001 = vmatpush1.msra.mxu0 %v1802
  %2002 = vmatprep.subr.mxu0 0.0
  %2003 = vmatpush1.msra.mxu0 %v1801
  %2004 = vmatprep.subr.mxu0 0.0
  %2005 = vmatpush1.msra.mxu0 %v1800
  %2006 = vmatprep.subr.mxu0 0.0
  %2007 = vmatpush1.msra.mxu0 %v1799
  %2008 = vmatprep.subr.mxu0 0.0
  %2009 = vmatpush1.msra.mxu0 %v1798
  %2010 = vmatprep.subr.mxu0 0.0
  %2011 = vmatpush1.msra.mxu0 %v1797
  %2012 = vmatprep.subr.mxu0 0.0
  %2013 = vmatpush2.msra.mxu0 0.0
  %2014 = vmatprep.subr.mxu0 0.0
  %2015 = vmatpush2.msra.mxu0 0.0
  %2016 = vmatprep.subr.mxu0 0.0
  %2017 = vmatpush2.msra.mxu0 0.0
  %2018 = vmatprep.subr.mxu0 0.0
  %2019 = vmatpush2.msra.mxu0 0.0
  %2020 = vmatprep.subr.mxu0 0.0
  %2021 = vmatpush2.msra.mxu0 0.0
  %2022 = vmatprep.subr.mxu0 0.0
  %2023 = vmatpush2.msra.mxu0 0.0
  %2024 = vmatprep.subr.mxu0 0.0
  %2025 = vmatpush2.msra.mxu0 0.0
  %2026 = vmatprep.subr.mxu0 0.0
  %2027 = vmatpush2.msra.mxu0 0.0
  %2028 = vmatprep.subr.mxu0 0.0
  %2029 = vmatpush2.msra.mxu0 0.0
  %2030 = vmatprep.subr.mxu0 0.0
  %2031 = vmatpush2.msra.mxu0 0.0
  %2032 = vmatprep.subr.mxu0 0.0
  %2033 = vmatpush2.msra.mxu0 0.0
  %2034 = vmatprep.subr.mxu0 0.0
  %2035 = vmatpush2.msra.mxu0 0.0
  %2036 = vmatprep.subr.mxu0 0.0
  %2037 = vmatpush2.msra.mxu0 0.0
  %2038 = vmatprep.subr.mxu0 0.0
  %2039 = vmatpush2.msra.mxu0 0.0
  %2040 = vmatprep.subr.mxu0 0.0
  %2041 = vmatpush2.msra.mxu0 0.0
  %2042 = vmatprep.subr.mxu0 0.0
  %2043 = vmatpush2.msra.mxu0 0.0
  %2044 = vmatprep.mubr.f32.mxu0 0.0
  %2045 = vmatmul.mubr.f32.gmra.mxu0 %v1979
  %v2046 = vpop.f32.mrf.mxu0
  %v2047 = vadd.f32 %v1820, %v2046
  %v2048 = vpop.f32.mrf.mxu0
  %2049 = vdwg.mxu0
  %v2050 = vtanh.pop %v2047
  %v2051 = vmul.f32 %v2050, %v1897
  %2052 = vadd.xlane.f32.xlu0 %v2051
  %v2053 = vpop.xlane.xlu0 %2052
  %v2054 = vsel %vm968, %v2053, -1e+30
  %v2055 = vld [vmem:[%s573] sm:$0xff]
  %2056 = vmatprep.subr.mxu0 0.0
  %2057 = vmatpush1.msra.mxu0 %v1812
  %2058 = vmatprep.subr.mxu0 0.0
  %2059 = vmatpush1.msra.mxu0 %v1811
  %2060 = vmatprep.subr.mxu0 0.0
  %2061 = vmatpush1.msra.mxu0 %v1810
  %2062 = vmatprep.subr.mxu0 0.0
  %2063 = vmatpush1.msra.mxu0 %v1809
  %2064 = vmatprep.subr.mxu0 0.0
  %2065 = vmatpush1.msra.mxu0 %v1808
  %2066 = vmatprep.subr.mxu0 0.0
  %2067 = vmatpush1.msra.mxu0 %v1807
  %2068 = vmatprep.subr.mxu0 0.0
  %2069 = vmatpush1.msra.mxu0 %v1806
  %2070 = vmatprep.subr.mxu0 0.0
  %2071 = vmatpush1.msra.mxu0 %v1805
  %2072 = vmatprep.subr.mxu0 0.0
  %2073 = vmatpush1.msra.mxu0 %v1804
  %2074 = vmatprep.subr.mxu0 0.0
  %2075 = vmatpush1.msra.mxu0 %v1803
  %2076 = vmatprep.subr.mxu0 0.0
  %2077 = vmatpush1.msra.mxu0 %v1802
  %2078 = vmatprep.subr.mxu0 0.0
  %2079 = vmatpush1.msra.mxu0 %v1801
  %2080 = vmatprep.subr.mxu0 0.0
  %2081 = vmatpush1.msra.mxu0 %v1800
  %2082 = vmatprep.subr.mxu0 0.0
  %2083 = vmatpush1.msra.mxu0 %v1799
  %2084 = vmatprep.subr.mxu0 0.0
  %2085 = vmatpush1.msra.mxu0 %v1798
  %2086 = vmatprep.subr.mxu0 0.0
  %2087 = vmatpush1.msra.mxu0 %v1797
  %2088 = vmatprep.subr.mxu0 0.0
  %2089 = vmatpush2.msra.mxu0 0.0
  %2090 = vmatprep.subr.mxu0 0.0
  %2091 = vmatpush2.msra.mxu0 0.0
  %2092 = vmatprep.subr.mxu0 0.0
  %2093 = vmatpush2.msra.mxu0 0.0
  %2094 = vmatprep.subr.mxu0 0.0
  %2095 = vmatpush2.msra.mxu0 0.0
  %2096 = vmatprep.subr.mxu0 0.0
  %2097 = vmatpush2.msra.mxu0 0.0
  %2098 = vmatprep.subr.mxu0 0.0
  %2099 = vmatpush2.msra.mxu0 0.0
  %2100 = vmatprep.subr.mxu0 0.0
  %2101 = vmatpush2.msra.mxu0 0.0
  %2102 = vmatprep.subr.mxu0 0.0
  %2103 = vmatpush2.msra.mxu0 0.0
  %2104 = vmatprep.subr.mxu0 0.0
  %2105 = vmatpush2.msra.mxu0 0.0
  %2106 = vmatprep.subr.mxu0 0.0
  %2107 = vmatpush2.msra.mxu0 0.0
  %2108 = vmatprep.subr.mxu0 0.0
  %2109 = vmatpush2.msra.mxu0 0.0
  %2110 = vmatprep.subr.mxu0 0.0
  %2111 = vmatpush2.msra.mxu0 0.0
  %2112 = vmatprep.subr.mxu0 0.0
  %2113 = vmatpush2.msra.mxu0 0.0
  %2114 = vmatprep.subr.mxu0 0.0
  %2115 = vmatpush2.msra.mxu0 0.0
  %2116 = vmatprep.subr.mxu0 0.0
  %2117 = vmatpush2.msra.mxu0 0.0
  %2118 = vmatprep.subr.mxu0 0.0
  %2119 = vmatpush2.msra.mxu0 0.0
  %2120 = vmatprep.mubr.f32.mxu0 0.0
  %2121 = vmatmul.mubr.f32.gmra.mxu0 %v2055
  %v2122 = vpop.f32.mrf.mxu0
  %v2123 = vadd.f32 %v1820, %v2122
  %v2124 = vpop.f32.mrf.mxu0
  %2125 = vdwg.mxu0
  %v2126 = vtanh.pop %v2123
  %v2127 = vmul.f32 %v2126, %v1897
  %2128 = vadd.xlane.f32.xlu0 %v2127
  %v2129 = vpop.xlane.xlu0 %2128
  %v2130 = vsel %vm555, %v2129, -1e+30
  %v2131 = vmax.f32 %v1902, %v1978
  %v2132 = vmax.f32 %v2131, %v2054
  %v2133 = vmax.f32 %v2132, %v2130
  %v2134 = vsub.f32 %v1902, %v2133
  %v2135 = vmul.f32 %v2134, 1.442695
  %v2136 = vpow.pop %v2135
  %v2137 = vsel %vm554, %v2136, 0.0
  %v2138 = vsub.f32 %v1978, %v2133
  %v2139 = vmul.f32 %v2138, 1.442695
  %v2140 = vpow.pop %v2139
  %v2141 = vsel %vm967, %v2140, 0.0
  %v2142 = vsub.f32 %v2054, %v2133
  %v2143 = vmul.f32 %v2142, 1.442695
  %v2144 = vpow.pop %v2143
  %v2145 = vsel %vm968, %v2144, 0.0
  %v2146 = vsub.f32 %v2130, %v2133
  %v2147 = vmul.f32 %v2146, 1.442695
  %v2148 = vpow.pop %v2147
  %v2149 = vsel %vm555, %v2148, 0.0
  %v2150 = vadd.f32 %v2137, %v2141
  %v2151 = vadd.f32 %v2150, %v2145
  %v2152 = vadd.f32 %v2151, %v2149
  %v2153 = vrcp.pop %v2152
  %v2154 = vmul.f32 1.0, %v2153
  %v2155 = vmul.f32 %v2137, %v2154
  %vm2156 = vcmask 7168
  %2157 = vst.msk [vmem:[%s14] sm:$0xff] %vm2156, %v2155
  %v2158 = vld [vmem:[#allocation2] sm:$0xff]
  %2160 = vset.pattern.permute.xlu0 0
  %2161 = vperm.xlu0 %2160, %v2155
  %v2162 = vpop.permute.xlu0 %2161
  %v2164 = vmul.f32 %v2162, %v2158
  %v2165 = vadd.f32 %v2164, 0.0
  %v2166 = vmul.f32 %v2141, %v2154
  %2168 = vrot.lane.b32.xlu0 %v2166, 1
  %v2169 = vpop.permute.xlu0 %2168
  %vm2171 = vcmask 15368
  %2172 = vst.msk [vmem:[%s14] sm:$0xff] %vm2171, %v2169
  %v2173 = vld [vmem:[%s986] sm:$0xff]
  %2174 = vset.pattern.permute.xlu0 0
  %2175 = vperm.xlu0 %2174, %v2166
  %v2176 = vpop.permute.xlu0 %2175
  %v2178 = vmul.f32 %v2176, %v2173
  %v2179 = vadd.f32 %v2165, %v2178
  %v2180 = vmul.f32 %v2145, %v2154
  %2182 = vrot.lane.b32.xlu0 %v2180, 2
  %v2183 = vpop.permute.xlu0 %2182
  %vm2185 = vcmask 23568
  %2186 = vst.msk [vmem:[%s14] sm:$0xff] %vm2185, %v2183
  %v2187 = vld [vmem:[%s989] sm:$0xff]
  %2188 = vset.pattern.permute.xlu0 0
  %2189 = vperm.xlu0 %2188, %v2180
  %v2190 = vpop.permute.xlu0 %2189
  %v2192 = vmul.f32 %v2190, %v2187
  %v2193 = vadd.f32 %v2179, %v2192
  %v2194 = vmul.f32 %v2149, %v2154
  %2196 = vrot.lane.b32.xlu0 %v2194, 3
  %v2197 = vpop.permute.xlu0 %2196
  %vm2199 = vcmask 31768
  %2200 = vst.msk [vmem:[%s14] sm:$0xff] %vm2199, %v2197
  %v2201 = vld [vmem:[%s573] sm:$0xff]
  %2202 = vset.pattern.permute.xlu0 0
  %2203 = vperm.xlu0 %2202, %v2194
  %v2204 = vpop.permute.xlu0 %2203
  %v2206 = vmul.f32 %v2204, %v2201
  %v2207 = vadd.f32 %v2193, %v2206
  %2208 = vst [vmem:[%s13] sm:$0xff] %v2207
  // Predicated region
  $region54: #{sentence_attention_forward.3} parent=0 // pred_check
    _
  $region55: #{sentence_attention_forward.3} parent=0 // pred_check_branch
    %2210 = sbr.rel (0) target = $region57
  $region56: #{sentence_attention_forward.3} parent=0 // pred_region
    _
  $region57: #{sentence_attention_forward.3} parent=0 // pred_fallthru
    _
  // Predicated region
  $region58: #{sentence_attention_forward.3} parent=0 // pred_check
    _
  $region59: #{sentence_attention_forward.3} parent=0 // pred_check_branch
    %2212 = sbr.rel (0) target = $region61
  $region60: #{sentence_attention_forward.3} parent=0 // pred_region
    _
  $region61: #{sentence_attention_forward.3} parent=0 // pred_fallthru
    _
  // Predicated region
  $region62: #{sentence_attention_forward.3} parent=0 // pred_check
    _
  $region63: #{sentence_attention_forward.3} parent=0 // pred_check_branch
    %2214 = sbr.rel (0) target = $region65
  $region64: #{sentence_attention_forward.3} parent=0 // pred_region
    _
  $region65: #{sentence_attention_forward.3} parent=0 // pred_fallthru
    _
  // Predicated region
  $region66: #{sentence_attention_forward.3} parent=0 // pred_check
    _
  $region67: #{sentence_attention_forward.3} parent=0 // pred_check_branch
    %2216 = sbr.rel (0) target = $region69
  $region68: #{sentence_attention_forward.3} parent=0 // pred_region
    _
  $region69: #{sentence_attention_forward.3} parent=0 // pred_fallthru
    _

// kernel: sentence_attention_forward.2
$region0: #{sentence_attention_forward.2}
  #allocation0 [shape = 'u32[]', space=smem, size = 0x4, offset = 0x4, fixed_abs, tag = 'smem constant byte address 0x4 - core index']
  #allocation1 [shape = 'u32[144,128]{1,0:T(1,128)}', space=vmem, size = 0x12000, scoped, tag = 'internal scratch']
  #allocation2 [shape = 'f32[8,8,128]{2,1,0:T(8,128)}', space=vmem, size = 0x8000, scoped, tag = 'scratch operand']
  %s0 = inlined_call_operand.vmem [shape: f32[8,8,32], index: 0, kind: input, shape index: {}]
  %s1 = inlined_call_operand.vmem [shape: s32[8,1], index: 1, kind: input, shape index: {}]
  %s2 = inlined_call_operand.vmem [shape: f32[32,192], index: 2, kind: input, shape index: {}]
  %s3 = inlined_call_operand.vmem [shape: f32[32,192], index: 3, kind: input, shape index: {}]
  %s4 = inlined_call_operand.vmem [shape: f32[64,192], index: 4, kind: input, shape index: {}]
  %s5 = inlined_call_operand.vmem [shape: f32[64,192], index: 5, kind: input, shape index: {}]
  %s6 = inlined_call_operand.vmem [shape: f32[1,192], index: 6, kind: input, shape index: {}]
  %s7 = inlined_call_operand.vmem [shape: f32[1,192], index: 7, kind: input, shape index: {}]
  %s8 = inlined_call_operand.vmem [shape: f32[1,192], index: 8, kind: input, shape index: {}]
  %s9 = inlined_call_operand.vmem [shape: f32[1,192], index: 9, kind: input, shape index: {}]
  %s10 = inlined_call_operand.vmem [shape: f32[128,128], index: 10, kind: input, shape index: {}]
  %s11 = inlined_call_operand.vmem [shape: f32[1,128], index: 11, kind: input, shape index: {}]
  %s12 = inlined_call_operand.vmem [shape: f32[1,128], index: 12, kind: input, shape index: {}]
  %s13 = inlined_call_operand.vmem [shape: f32[8,128], index: 13, kind: output, shape index: {0}]
  %s14 = inlined_call_operand.vmem [shape: f32[8,8], index: 14, kind: output, shape index: {1}]
  %15 = xla_tuple %s13, %s14
  %s16 = sld [smem:[#allocation0]]
  $region70: #{sentence_attention_forward.2} parent=0
    _
  %s18 = ssub.s32 1, %s16
  %s19 = scalar_select 0, %s18, %s16
  // Predicated region
  $region2: #{sentence_attention_forward.2} parent=0 // pred_check
    _
  $region3: #{sentence_attention_forward.2} parent=0 // pred_check_branch
    %21 = sbr.rel (0) target = $region5
  $region4: #{sentence_attention_forward.2} parent=0 // pred_region
    _
  $region5: #{sentence_attention_forward.2} parent=0 // pred_fallthru
    _
  // Predicated region
  $region6: #{sentence_attention_forward.2} parent=0 // pred_check
    _
  $region7: #{sentence_attention_forward.2} parent=0 // pred_check_branch
    %23 = sbr.rel (0) target = $region9
  $region8: #{sentence_attention_forward.2} parent=0 // pred_region
    _
  $region9: #{sentence_attention_forward.2} parent=0 // pred_fallthru
    _
  // Predicated region
  $region10: #{sentence_attention_forward.2} parent=0 // pred_check
    _
  $region11: #{sentence_attention_forward.2} parent=0 // pred_check_branch
    %25 = sbr.rel (0) target = $region13
  $region12: #{sentence_attention_forward.2} parent=0 // pred_region
    _
  $region13: #{sentence_attention_forward.2} parent=0 // pred_fallthru
    _
  // Predicated region
  $region14: #{sentence_attention_forward.2} parent=0 // pred_check
    _
  $region15: #{sentence_attention_forward.2} parent=0 // pred_check_branch
    %27 = sbr.rel (0) target = $region17
  $region16: #{sentence_attention_forward.2} parent=0 // pred_region
    _
  $region17: #{sentence_attention_forward.2} parent=0 // pred_fallthru
    _
  // Predicated region
  $region18: #{sentence_attention_forward.2} parent=0 // pred_check
    _
  $region19: #{sentence_attention_forward.2} parent=0 // pred_check_branch
    %29 = sbr.rel (0) target = $region21
  $region20: #{sentence_attention_forward.2} parent=0 // pred_region
    _
  $region21: #{sentence_attention_forward.2} parent=0 // pred_fallthru
    _
  // Predicated region
  $region22: #{sentence_attention_forward.2} parent=0 // pred_check
    _
  $region23: #{sentence_attention_forward.2} parent=0 // pred_check_branch
    %31 = sbr.rel (0) target = $region25
  $region24: #{sentence_attention_forward.2} parent=0 // pred_region
    _
  $region25: #{sentence_attention_forward.2} parent=0 // pred_fallthru
    _
  // Predicated region
  $region26: #{sentence_attention_forward.2} parent=0 // pred_check
    _
  $region27: #{sentence_attention_forward.2} parent=0 // pred_check_branch
    %33 = sbr.rel (0) target = $region29
  $region28: #{sentence_attention_forward.2} parent=0 // pred_region
    _
  $region29: #{sentence_attention_forward.2} parent=0 // pred_fallthru
    _
  // Predicated region
  $region30: #{sentence_attention_forward.2} parent=0 // pred_check
    _
  $region31: #{sentence_attention_forward.2} parent=0 // pred_check_branch
    %35 = sbr.rel (0) target = $region33
  $region32: #{sentence_attention_forward.2} parent=0 // pred_region
    _
  $region33: #{sentence_attention_forward.2} parent=0 // pred_fallthru
    _
  // Predicated region
  $region34: #{sentence_attention_forward.2} parent=0 // pred_check
    _
  $region35: #{sentence_attention_forward.2} parent=0 // pred_check_branch
    %37 = sbr.rel (0) target = $region37
  $region36: #{sentence_attention_forward.2} parent=0 // pred_region
    _
  $region37: #{sentence_attention_forward.2} parent=0 // pred_fallthru
    _
  // Predicated region
  $region38: #{sentence_attention_forward.2} parent=0 // pred_check
    _
  $region39: #{sentence_attention_forward.2} parent=0 // pred_check_branch
    %39 = sbr.rel (0) target = $region41
  $region40: #{sentence_attention_forward.2} parent=0 // pred_region
    _
  $region41: #{sentence_attention_forward.2} parent=0 // pred_fallthru
    _
  // Predicated region
  $region42: #{sentence_attention_forward.2} parent=0 // pred_check
    _
  $region43: #{sentence_attention_forward.2} parent=0 // pred_check_branch
    %41 = sbr.rel (0) target = $region45
  $region44: #{sentence_attention_forward.2} parent=0 // pred_region
    _
  $region45: #{sentence_attention_forward.2} parent=0 // pred_fallthru
    _
  // Predicated region
  $region46: #{sentence_attention_forward.2} parent=0 // pred_check
    _
  $region47: #{sentence_attention_forward.2} parent=0 // pred_check_branch
    %43 = sbr.rel (0) target = $region49
  $region48: #{sentence_attention_forward.2} parent=0 // pred_region
    _
  $region49: #{sentence_attention_forward.2} parent=0 // pred_fallthru
    _
  // Predicated region
  $region50: #{sentence_attention_forward.2} parent=0 // pred_check
    _
  $region51: #{sentence_attention_forward.2} parent=0 // pred_check_branch
    %45 = sbr.rel (0) target = $region53
  $region52: #{sentence_attention_forward.2} parent=0 // pred_region
    _
  $region53: #{sentence_attention_forward.2} parent=0 // pred_fallthru
    _
  %v46 = vld [vmem:[%s1] sm:$0xff]
  %v47 = vld [vmem:[%s2] sm:$0xff]
  %v48 = vld [vmem:[%s2 + $0x8] sm:$0xff]
  %v49 = vld [vmem:[%s2 + $0x10] sm:$0xff]
  %v50 = vld [vmem:[%s2 + $0x18] sm:$0xff]
  %v51 = vld [vmem:[%s2 + $0x20] sm:$0xff]
  %v52 = vld [vmem:[%s2 + $0x28] sm:$0xff]
  %v53 = vld [vmem:[%s2 + $0x30] sm:$0xff]
  %v54 = vld [vmem:[%s2 + $0x38] sm:$0xff]
  %v55 = vld [vmem:[%s3] sm:$0xff]
  %v56 = vld [vmem:[%s3 + $0x8] sm:$0xff]
  %v57 = vld [vmem:[%s3 + $0x10] sm:$0xff]
  %v58 = vld [vmem:[%s3 + $0x18] sm:$0xff]
  %v59 = vld [vmem:[%s3 + $0x20] sm:$0xff]
  %v60 = vld [vmem:[%s3 + $0x28] sm:$0xff]
  %v61 = vld [vmem:[%s3 + $0x30] sm:$0xff]
  %v62 = vld [vmem:[%s3 + $0x38] sm:$0xff]
  %v63 = vld [vmem:[%s4] sm:$0xff]
  %v64 = vld [vmem:[%s4 + $0x8] sm:$0xff]
  %v65 = vld [vmem:[%s4 + $0x10] sm:$0xff]
  %v66 = vld [vmem:[%s4 + $0x18] sm:$0xff]
  %v67 = vld [vmem:[%s4 + $0x20] sm:$0xff]
  %v68 = vld [vmem:[%s4 + $0x28] sm:$0xff]
  %v69 = vld [vmem:[%s4 + $0x30] sm:$0xff]
  %v70 = vld [vmem:[%s4 + $0x38] sm:$0xff]
  %v71 = vld [vmem:[%s4 + $0x40] sm:$0xff]
  %v72 = vld [vmem:[%s4 + $0x48] sm:$0xff]
  %v73 = vld [vmem:[%s4 + $0x50] sm:$0xff]
  %v74 = vld [vmem:[%s4 + $0x58] sm:$0xff]
  %v75 = vld [vmem:[%s4 + $0x60] sm:$0xff]
  %v76 = vld [vmem:[%s4 + $0x68] sm:$0xff]
  %v77 = vld [vmem:[%s4 + $0x70] sm:$0xff]
  %v78 = vld [vmem:[%s4 + $0x78] sm:$0xff]
  %v79 = vld [vmem:[%s5] sm:$0xff]
  %v80 = vld [vmem:[%s5 + $0x8] sm:$0xff]
  %v81 = vld [vmem:[%s5 + $0x10] sm:$0xff]
  %v82 = vld [vmem:[%s5 + $0x18] sm:$0xff]
  %v83 = vld [vmem:[%s5 + $0x20] sm:$0xff]
  %v84 = vld [vmem:[%s5 + $0x28] sm:$0xff]
  %v85 = vld [vmem:[%s5 + $0x30] sm:$0xff]
  %v86 = vld [vmem:[%s5 + $0x38] sm:$0xff]
  %v87 = vld [vmem:[%s5 + $0x40] sm:$0xff]
  %v88 = vld [vmem:[%s5 + $0x48] sm:$0xff]
  %v89 = vld [vmem:[%s5 + $0x50] sm:$0xff]
  %v90 = vld [vmem:[%s5 + $0x58] sm:$0xff]
  %v91 = vld [vmem:[%s5 + $0x60] sm:$0xff]
  %v92 = vld [vmem:[%s5 + $0x68] sm:$0xff]
  %v93 = vld [vmem:[%s5 + $0x70] sm:$0xff]
  %v94 = vld [vmem:[%s5 + $0x78] sm:$0xff]
  %v95 = vld [vmem:[%s6] sm:$0x3]
  %v96 = vld [vmem:[%s7] sm:$0x3]
  %v97 = vld [vmem:[%s8] sm:$0x3]
  %v98 = vld [vmem:[%s9] sm:$0x3]
  %v99 = vld [vmem:[%s0] sm:$0x1]
  %v100 = vld [vmem:[%s0 + $0x8] sm:$0x1]
  %v101 = vld [vmem:[%s0 + $0x10] sm:$0x1]
  %v102 = vld [vmem:[%s0 + $0x18] sm:$0x1]
  %v103 = vld [vmem:[%s0 + $0x20] sm:$0x1]
  %v104 = vld [vmem:[%s0 + $0x28] sm:$0x1]
  %v105 = vld [vmem:[%s0 + $0x30] sm:$0x1]
  %v106 = vld [vmem:[%s0 + $0x38] sm:$0x1]
  %v108 = vlaneseq
  %v109 = vshrl.u32 %v108, 7
  %v110 = vsub.s32 0, %v109
  %v111 = vrot.slane %v95, %v110
  %v112 = vlaneseq
  %v113 = vshrl.u32 %v112, 7
  %v114 = vsub.s32 1, %v113
  %v115 = vrot.slane %v95, %v114
  %v126 = vrot.slane %v100, 7
  %vm127 = vcmask 1041409
  %v128 = vsel %vm127, %v126, %v99
  %v129 = vrot.slane %v101, 6
  %vm130 = vcmask 1042434
  %v131 = vsel %vm130, %v129, %v128
  %v132 = vrot.slane %v102, 5
  %vm133 = vcmask 1043459
  %v134 = vsel %vm133, %v132, %v131
  %v135 = vrot.slane %v103, 4
  %vm136 = vcmask 1044484
  %v137 = vsel %vm136, %v135, %v134
  %v138 = vrot.slane %v104, 3
  %vm139 = vcmask 1045509
  %v140 = vsel %vm139, %v138, %v137
  %v141 = vrot.slane %v105, 2
  %vm142 = vcmask 1046534
  %v143 = vsel %vm142, %v141, %v140
  %v144 = vrot.slane %v106, 1
  %vm145 = vcmask 1047559
  %v146 = vsel %vm145, %v144, %v143
  %vm147 = vcmask 261120
  %v148 = vsel %vm147, %v146, 0
  %150 = vmatprep.subr.mxu0 0.0
  %151 = vmatpush1.msra.mxu0 0.0
  %152 = vmatprep.subr.mxu0 0.0
  %153 = vmatpush1.msra.mxu0 0.0
  %154 = vmatprep.subr.mxu0 0.0
  %155 = vmatpush1.msra.mxu0 0.0
  %156 = vmatprep.subr.mxu0 0.0
  %157 = vmatpush1.msra.mxu0 0.0
  %158 = vmatprep.subr.mxu0 0.0
  %159 = vmatpush1.msra.mxu0 0.0
  %160 = vmatprep.subr.mxu0 0.0
  %161 = vmatpush1.msra.mxu0 0.0
  %162 = vmatprep.subr.mxu0 0.0
  %163 = vmatpush1.msra.mxu0 0.0
  %164 = vmatprep.subr.mxu0 0.0
  %165 = vmatpush1.msra.mxu0 0.0
  %166 = vmatprep.subr.mxu0 0.0
  %167 = vmatpush1.msra.mxu0 0.0
  %168 = vmatprep.subr.mxu0 0.0
  %169 = vmatpush1.msra.mxu0 0.0
  %170 = vmatprep.subr.mxu0 0.0
  %171 = vmatpush1.msra.mxu0 0.0
  %172 = vmatprep.subr.mxu0 0.0
  %173 = vmatpush1.msra.mxu0 0.0
  %174 = vmatprep.subr.mxu0 %v54
  %175 = vmatpush1.msra.mxu0 %v53
  %176 = vmatprep.subr.mxu0 %v52
  %177 = vmatpush1.msra.mxu0 %v51
  %178 = vmatprep.subr.mxu0 %v50
  %179 = vmatpush1.msra.mxu0 %v49
  %180 = vmatprep.subr.mxu0 %v48
  %181 = vmatpush1.msra.mxu0 %v47
  %182 = vmatprep.subr.mxu0 0.0
  %183 = vmatpush2.msra.mxu0 0.0
  %184 = vmatprep.subr.mxu0 0.0
  %185 = vmatpush2.msra.mxu0 0.0
  %186 = vmatprep.subr.mxu0 0.0
  %187 = vmatpush2.msra.mxu0 0.0
  %188 = vmatprep.subr.mxu0 0.0
  %189 = vmatpush2.msra.mxu0 0.0
  %190 = vmatprep.subr.mxu0 0.0
  %191 = vmatpush2.msra.mxu0 0.0
  %192 = vmatprep.subr.mxu0 0.0
  %193 = vmatpush2.msra.mxu0 0.0
  %194 = vmatprep.subr.mxu0 0.0
  %195 = vmatpush2.msra.mxu0 0.0
  %196 = vmatprep.subr.mxu0 0.0
  %197 = vmatpush2.msra.mxu0 0.0
  %198 = vmatprep.subr.mxu0 0.0
  %199 = vmatpush2.msra.mxu0 0.0
  %200 = vmatprep.subr.mxu0 0.0
  %201 = vmatpush2.msra.mxu0 0.0
  %202 = vmatprep.subr.mxu0 0.0
  %203 = vmatpush2.msra.mxu0 0.0
  %204 = vmatprep.subr.mxu0 0.0
  %205 = vmatpush2.msra.mxu0 0.0
  %206 = vmatprep.subr.mxu0 0.0
  %207 = vmatpush2.msra.mxu0 0.0
  %208 = vmatprep.subr.mxu0 0.0
  %209 = vmatpush2.msra.mxu0 0.0
  %210 = vmatprep.subr.mxu0 0.0
  %211 = vmatpush2.msra.mxu0 0.0
  %212 = vmatprep.subr.mxu0 0.0
  %213 = vmatpush2.msra.mxu0 0.0
  %214 = vmatprep.mubr.f32.mxu0 0.0
  %215 = vmatmul.mubr.f32.gmra.mxu0 %v148
  %v216 = vpop.f32.mrf.mxu0
  %v217 = vadd.f32 %v111, %v216
  %v218 = vpop.f32.mrf.mxu0
  %v219 = vadd.f32 %v115, %v218
  %220 = vdwg.mxu0
  %v221 = vld [vmem:[%s0 + $0x7] sm:$0x1]
  %v222 = vld [vmem:[%s0 + $0xf] sm:$0x1]
  %v223 = vld [vmem:[%s0 + $0x17] sm:$0x1]
  %v224 = vld [vmem:[%s0 + $0x1f] sm:$0x1]
  %v225 = vld [vmem:[%s0 + $0x27] sm:$0x1]
  %v226 = vld [vmem:[%s0 + $0x2f] sm:$0x1]
  %v227 = vld [vmem:[%s0 + $0x37] sm:$0x1]
  %v228 = vld [vmem:[%s0 + $0x3f] sm:$0x1]
  %v230 = vlaneseq
  %v231 = vshrl.u32 %v230, 7
  %v232 = vsub.s32 0, %v231
  %v233 = vrot.slane %v96, %v232
  %v234 = vlaneseq
  %v235 = vshrl.u32 %v234, 7
  %v236 = vsub.s32 1, %v235
  %v237 = vrot.slane %v96, %v236
  %v248 = vrot.slane %v222, 7
  %v249 = vsel %vm127, %v248, %v221
  %v250 = vrot.slane %v223, 6
  %v251 = vsel %vm130, %v250, %v249
  %v252 = vrot.slane %v224, 5
  %v253 = vsel %vm133, %v252, %v251
  %v254 = vrot.slane %v225, 4
  %v255 = vsel %vm136, %v254, %v253
  %v256 = vrot.slane %v226, 3
  %v257 = vsel %vm139, %v256, %v255
  %v258 = vrot.slane %v227, 2
  %v259 = vsel %vm142, %v258, %v257
  %v260 = vrot.slane %v228, 1
  %v261 = vsel %vm145, %v260, %v259
  %v262 = vsel %vm147, %v261, 0
  %264 = vmatprep.subr.mxu0 0.0
  %265 = vmatpush1.msra.mxu0 0.0
  %266 = vmatprep.subr.mxu0 0.0
  %267 = vmatpush1.msra.mxu0 0.0
  %268 = vmatprep.subr.mxu0 0.0
  %269 = vmatpush1.msra.mxu0 0.0
  %270 = vmatprep.subr.mxu0 0.0
  %271 = vmatpush1.msra.mxu0 0.0
  %272 = vmatprep.subr.mxu0 0.0
  %273 = vmatpush1.msra.mxu0 0.0
  %274 = vmatprep.subr.mxu0 0.0
  %275 = vmatpush1.msra.mxu0 0.0
  %276 = vmatprep.subr.mxu0 0.0
  %277 = vmatpush1.msra.mxu0 0.0
  %278 = vmatprep.subr.mxu0 0.0
  %279 = vmatpush1.msra.mxu0 0.0
  %280 = vmatprep.subr.mxu0 0.0
  %281 = vmatpush1.msra.mxu0 0.0
  %282 = vmatprep.subr.mxu0 0.0
  %283 = vmatpush1.msra.mxu0 0.0
  %284 = vmatprep.subr.mxu0 0.0
  %285 = vmatpush1.msra.mxu0 0.0
  %286 = vmatprep.subr.mxu0 0.0
  %287 = vmatpush1.msra.mxu0 0.0
  %288 = vmatprep.subr.mxu0 %v62
  %289 = vmatpush1.msra.mxu0 %v61
  %290 = vmatprep.subr.mxu0 %v60
  %291 = vmatpush1.msra.mxu0 %v59
  %292 = vmatprep.subr.mxu0 %v58
  %293 = vmatpush1.msra.mxu0 %v57
  %294 = vmatprep.subr.mxu0 %v56
  %295 = vmatpush1.msra.mxu0 %v55
  %296 = vmatprep.subr.mxu0 0.0
  %297 = vmatpush2.msra.mxu0 0.0
  %298 = vmatprep.subr.mxu0 0.0
  %299 = vmatpush2.msra.mxu0 0.0
  %300 = vmatprep.subr.mxu0 0.0
  %301 = vmatpush2.msra.mxu0 0.0
  %302 = vmatprep.subr.mxu0 0.0
  %303 = vmatpush2.msra.mxu0 0.0
  %304 = vmatprep.subr.mxu0 0.0
  %305 = vmatpush2.msra.mxu0 0.0
  %306 = vmatprep.subr.mxu0 0.0
  %307 = vmatpush2.msra.mxu0 0.0
  %308 = vmatprep.subr.mxu0 0.0
  %309 = vmatpush2.msra.mxu0 0.0
  %310 = vmatprep.subr.mxu0 0.0
  %311 = vmatpush2.msra.mxu0 0.0
  %312 = vmatprep.subr.mxu0 0.0
  %313 = vmatpush2.msra.mxu0 0.0
  %314 = vmatprep.subr.mxu0 0.0
  %315 = vmatpush2.msra.mxu0 0.0
  %316 = vmatprep.subr.mxu0 0.0
  %317 = vmatpush2.msra.mxu0 0.0
  %318 = vmatprep.subr.mxu0 0.0
  %319 = vmatpush2.msra.mxu0 0.0
  %320 = vmatprep.subr.mxu0 0.0
  %321 = vmatpush2.msra.mxu0 0.0
  %322 = vmatprep.subr.mxu0 0.0
  %323 = vmatpush2.msra.mxu0 0.0
  %324 = vmatprep.subr.mxu0 0.0
  %325 = vmatpush2.msra.mxu0 0.0
  %326 = vmatprep.subr.mxu0 0.0
  %327 = vmatpush2.msra.mxu0 0.0
  %328 = vmatprep.mubr.f32.mxu0 0.0
  %329 = vmatmul.mubr.f32.gmra.mxu0 %v262
  %v330 = vpop.f32.mrf.mxu0
  %v331 = vadd.f32 %v233, %v330
  %v332 = vpop.f32.mrf.mxu0
  %v333 = vadd.f32 %v237, %v332
  %334 = vdwg.mxu0
  %v336 = vlaneseq
  %v337 = vshrl.u32 %v336, 7
  %v338 = vsub.s32 0, %v337
  %v339 = vrot.slane %v97, %v338
  %v340 = vlaneseq
  %v341 = vshrl.u32 %v340, 7
  %v342 = vsub.s32 1, %v341
  %v343 = vrot.slane %v97, %v342
  %vm346 = vcmask 523264
  %v348 = vsel %vm346, 0.0, 0
  %350 = vmatprep.subr.mxu0 0.0
  %351 = vmatpush1.msra.mxu0 0.0
  %352 = vmatprep.subr.mxu0 0.0
  %353 = vmatpush1.msra.mxu0 0.0
  %354 = vmatprep.subr.mxu0 0.0
  %355 = vmatpush1.msra.mxu0 0.0
  %356 = vmatprep.subr.mxu0 0.0
  %357 = vmatpush1.msra.mxu0 0.0
  %358 = vmatprep.subr.mxu0 0.0
  %359 = vmatpush1.msra.mxu0 0.0
  %360 = vmatprep.subr.mxu0 0.0
  %361 = vmatpush1.msra.mxu0 0.0
  %362 = vmatprep.subr.mxu0 0.0
  %363 = vmatpush1.msra.mxu0 0.0
  %364 = vmatprep.subr.mxu0 0.0
  %365 = vmatpush1.msra.mxu0 0.0
  %366 = vmatprep.subr.mxu0 %v78
  %367 = vmatpush1.msra.mxu0 %v77
  %368 = vmatprep.subr.mxu0 %v76
  %369 = vmatpush1.msra.mxu0 %v75
  %370 = vmatprep.subr.mxu0 %v74
  %371 = vmatpush1.msra.mxu0 %v73
  %372 = vmatprep.subr.mxu0 %v72
  %373 = vmatpush1.msra.mxu0 %v71
  %374 = vmatprep.subr.mxu0 %v70
  %375 = vmatpush1.msra.mxu0 %v69
  %376 = vmatprep.subr.mxu0 %v68
  %377 = vmatpush1.msra.mxu0 %v67
  %378 = vmatprep.subr.mxu0 %v66
  %379 = vmatpush1.msra.mxu0 %v65
  %380 = vmatprep.subr.mxu0 %v64
  %381 = vmatpush1.msra.mxu0 %v63
  %382 = vmatprep.subr.mxu0 0.0
  %383 = vmatpush2.msra.mxu0 0.0
  %384 = vmatprep.subr.mxu0 0.0
  %385 = vmatpush2.msra.mxu0 0.0
  %386 = vmatprep.subr.mxu0 0.0
  %387 = vmatpush2.msra.mxu0 0.0
  %388 = vmatprep.subr.mxu0 0.0
  %389 = vmatpush2.msra.mxu0 0.0
  %390 = vmatprep.subr.mxu0 0.0
  %391 = vmatpush2.msra.mxu0 0.0
  %392 = vmatprep.subr.mxu0 0.0
  %393 = vmatpush2.msra.mxu0 0.0
  %394 = vmatprep.subr.mxu0 0.0
  %395 = vmatpush2.msra.mxu0 0.0
  %396 = vmatprep.subr.mxu0 0.0
  %397 = vmatpush2.msra.mxu0 0.0
  %398 = vmatprep.subr.mxu0 0.0
  %399 = vmatpush2.msra.mxu0 0.0
  %400 = vmatprep.subr.mxu0 0.0
  %401 = vmatpush2.msra.mxu0 0.0
  %402 = vmatprep.subr.mxu0 0.0
  %403 = vmatpush2.msra.mxu0 0.0
  %404 = vmatprep.subr.mxu0 0.0
  %405 = vmatpush2.msra.mxu0 0.0
  %406 = vmatprep.subr.mxu0 0.0
  %407 = vmatpush2.msra.mxu0 0.0
  %408 = vmatprep.subr.mxu0 0.0
  %409 = vmatpush2.msra.mxu0 0.0
  %410 = vmatprep.subr.mxu0 0.0
  %411 = vmatpush2.msra.mxu0 0.0
  %412 = vmatprep.subr.mxu0 0.0
  %413 = vmatpush2.msra.mxu0 0.0
  %414 = vmatprep.mubr.f32.mxu0 0.0
  %415 = vmatmul.mubr.f32.gmra.mxu0 %v348
  %v416 = vpop.f32.mrf.mxu0
  %v417 = vadd.f32 %v339, %v416
  %v418 = vpop.f32.mrf.mxu0
  %v419 = vadd.f32 %v343, %v418
  %420 = vdwg.mxu0
  %v421 = vadd.f32 %v217, %v417
  %v422 = vxor.u32 %v421, 2147483648
  %v423 = vmul.f32 %v422, 1.442695
  %v424 = vpow.pop %v423
  %v425 = vadd.f32 %v424, 1.0
  %v426 = vrcp.pop %v425
  %v427 = vmul.f32 1.0, %v426
  %v428 = vmul.f32 %v427, %v419
  %v429 = vadd.f32 %v219, %v428
  %v430 = vtanh.pop %v429
  %v431 = vsub.f32 1.0, %v427
  %433 = vrot.lane.b32.xlu0 %v430, 64
  %v434 = vpop.permute.xlu0 %433
  %v436 = vmul.f32 %v431, %v434
  %v437 = vmul.f32 %v427, 0.0
  %v438 = vadd.f32 %v436, %v437
  %v440 = vlaneseq
  %v441 = vshrl.u32 %v440, 7
  %v442 = vsub.s32 0, %v441
  %v443 = vrot.slane %v98, %v442
  %v444 = vlaneseq
  %v445 = vshrl.u32 %v444, 7
  %v446 = vsub.s32 1, %v445
  %v447 = vrot.slane %v98, %v446
  %450 = vmatprep.subr.mxu0 0.0
  %451 = vmatpush1.msra.mxu0 0.0
  %452 = vmatprep.subr.mxu0 0.0
  %453 = vmatpush1.msra.mxu0 0.0
  %454 = vmatprep.subr.mxu0 0.0
  %455 = vmatpush1.msra.mxu0 0.0
  %456 = vmatprep.subr.mxu0 0.0
  %457 = vmatpush1.msra.mxu0 0.0
  %458 = vmatprep.subr.mxu0 0.0
  %459 = vmatpush1.msra.mxu0 0.0
  %460 = vmatprep.subr.mxu0 0.0
  %461 = vmatpush1.msra.mxu0 0.0
  %462 = vmatprep.subr.mxu0 0.0
  %463 = vmatpush1.msra.mxu0 0.0
  %464 = vmatprep.subr.mxu0 0.0
  %465 = vmatpush1.msra.mxu0 0.0
  %466 = vmatprep.subr.mxu0 %v94
  %467 = vmatpush1.msra.mxu0 %v93
  %468 = vmatprep.subr.mxu0 %v92
  %469 = vmatpush1.msra.mxu0 %v91
  %470 = vmatprep.subr.mxu0 %v90
  %471 = vmatpush1.msra.mxu0 %v89
  %472 = vmatprep.subr.mxu0 %v88
  %473 = vmatpush1.msra.mxu0 %v87
  %474 = vmatprep.subr.mxu0 %v86
  %475 = vmatpush1.msra.mxu0 %v85
  %476 = vmatprep.subr.mxu0 %v84
  %477 = vmatpush1.msra.mxu0 %v83
  %478 = vmatprep.subr.mxu0 %v82
  %479 = vmatpush1.msra.mxu0 %v81
  %480 = vmatprep.subr.mxu0 %v80
  %481 = vmatpush1.msra.mxu0 %v79
  %482 = vmatprep.subr.mxu0 0.0
  %483 = vmatpush2.msra.mxu0 0.0
  %484 = vmatprep.subr.mxu0 0.0
  %485 = vmatpush2.msra.mxu0 0.0
  %486 = vmatprep.subr.mxu0 0.0
  %487 = vmatpush2.msra.mxu0 0.0
  %488 = vmatprep.subr.mxu0 0.0
  %489 = vmatpush2.msra.mxu0 0.0
  %490 = vmatprep.subr.mxu0 0.0
  %491 = vmatpush2.msra.mxu0 0.0
  %492 = vmatprep.subr.mxu0 0.0
  %493 = vmatpush2.msra.mxu0 0.0
  %494 = vmatprep.subr.mxu0 0.0
  %495 = vmatpush2.msra.mxu0 0.0
  %496 = vmatprep.subr.mxu0 0.0
  %497 = vmatpush2.msra.mxu0 0.0
  %498 = vmatprep.subr.mxu0 0.0
  %499 = vmatpush2.msra.mxu0 0.0
  %500 = vmatprep.subr.mxu0 0.0
  %501 = vmatpush2.msra.mxu0 0.0
  %502 = vmatprep.subr.mxu0 0.0
  %503 = vmatpush2.msra.mxu0 0.0
  %504 = vmatprep.subr.mxu0 0.0
  %505 = vmatpush2.msra.mxu0 0.0
  %506 = vmatprep.subr.mxu0 0.0
  %507 = vmatpush2.msra.mxu0 0.0
  %508 = vmatprep.subr.mxu0 0.0
  %509 = vmatpush2.msra.mxu0 0.0
  %510 = vmatprep.subr.mxu0 0.0
  %511 = vmatpush2.msra.mxu0 0.0
  %512 = vmatprep.subr.mxu0 0.0
  %513 = vmatpush2.msra.mxu0 0.0
  %514 = vmatprep.mubr.f32.mxu0 0.0
  %515 = vmatmul.mubr.f32.gmra.mxu0 %v348
  %v516 = vpop.f32.mrf.mxu0
  %v517 = vadd.f32 %v443, %v516
  %v518 = vpop.f32.mrf.mxu0
  %v519 = vadd.f32 %v447, %v518
  %520 = vdwg.mxu0
  %v521 = vadd.f32 %v331, %v517
  %v522 = vxor.u32 %v521, 2147483648
  %v523 = vmul.f32 %v522, 1.442695
  %v524 = vpow.pop %v523
  %v525 = vadd.f32 %v524, 1.0
  %v526 = vrcp.pop %v525
  %v527 = vmul.f32 1.0, %v526
  %v528 = vmul.f32 %v527, %v519
  %v529 = vadd.f32 %v333, %v528
  %v530 = vtanh.pop %v529
  %v531 = vsub.f32 1.0, %v527
  %533 = vrot.lane.b32.xlu0 %v530, 64
  %v534 = vpop.permute.xlu0 %533
  %v536 = vmul.f32 %v531, %v534
  %v537 = vmul.f32 %v527, 0.0
  %v538 = vadd.f32 %v536, %v537
  %vm539 = vcmp.gt.s32.totalorder %v46, 0
  %vm540 = vcmp.gt.s32.totalorder %v46, 7
  %v541 = vsel %vm539, 1, 0
  %542 = vset.pattern.permute.xlu0 0
  %543 = vperm.xlu0 %542, %v541
  %v544 = vpop.permute.xlu0 %543
  %vm545 = vcmp.eq.s32.totalorder %v544, 1
  %v546 = vsel %vm545, %v438, 0.0
  %v547 = vsel %vm540, 1, 0
  %548 = vset.pattern.permute.xlu0 0
  %549 = vperm.xlu0 %548, %v547
  %v550 = vpop.permute.xlu0 %549
  %vm551 = vcmp.eq.s32.totalorder %v550, 1
  %v552 = vsel %vm551, %v538, 0.0
  %554 = vrot.lane.b32.xlu0 %v546, 64
  %v555 = vpop.permute.xlu0 %554
  %557 = vst.msk [vmem:[#allocation2] sm:$0xff] %vm346, %v555
  %s558 = scalar_lea.vmem [#allocation2], 56
  %vm559 = vcmask 1048064
  %560 = vst.msk [vmem:[%s558] sm:$0xff] %vm559, %v552
  %v561 = vld [vmem:[%s0 + $0x1] sm:$0x1]
  %v562 = vld [vmem:[%s0 + $0x9] sm:$0x1]
  %v563 = vld [vmem:[%s0 + $0x11] sm:$0x1]
  %v564 = vld [vmem:[%s0 + $0x19] sm:$0x1]
  %v565 = vld [vmem:[%s0 + $0x21] sm:$0x1]
  %v566 = vld [vmem:[%s0 + $0x29] sm:$0x1]
  %v567 = vld [vmem:[%s0 + $0x31] sm:$0x1]
  %v568 = vld [vmem:[%s0 + $0x39] sm:$0x1]
  %v577 = vrot.slane %v562, 7
  %v578 = vsel %vm127, %v577, %v561
  %v579 = vrot.slane %v563, 6
  %v580 = vsel %vm130, %v579, %v578
  %v581 = vrot.slane %v564, 5
  %v582 = vsel %vm133, %v581, %v580
  %v583 = vrot.slane %v565, 4
  %v584 = vsel %vm136, %v583, %v582
  %v585 = vrot.slane %v566, 3
  %v586 = vsel %vm139, %v585, %v584
  %v587 = vrot.slane %v567, 2
  %v588 = vsel %vm142, %v587, %v586
  %v589 = vrot.slane %v568, 1
  %v590 = vsel %vm145, %v589, %v588
  %v591 = vsel %vm147, %v590, 0
  %593 = vmatprep.subr.mxu0 0.0
  %594 = vmatpush1.msra.mxu0 0.0
  %595 = vmatprep.subr.mxu0 0.0
  %596 = vmatpush1.msra.mxu0 0.0
  %597 = vmatprep.subr.mxu0 0.0
  %598 = vmatpush1.msra.mxu0 0.0
  %599 = vmatprep.subr.mxu0 0.0
  %600 = vmatpush1.msra.mxu0 0.0
  %601 = vmatprep.subr.mxu0 0.0
  %602 = vmatpush1.msra.mxu0 0.0
  %603 = vmatprep.subr.mxu0 0.0
  %604 = vmatpush1.msra.mxu0 0.0
  %605 = vmatprep.subr.mxu0 0.0
  %606 = vmatpush1.msra.mxu0 0.0
  %607 = vmatprep.subr.mxu0 0.0
  %608 = vmatpush1.msra.mxu0 0.0
  %609 = vmatprep.subr.mxu0 0.0
  %610 = vmatpush1.msra.mxu0 0.0
  %611 = vmatprep.subr.mxu0 0.0
  %612 = vmatpush1.msra.mxu0 0.0
  %613 = vmatprep.subr.mxu0 0.0
  %614 = vmatpush1.msra.mxu0 0.0
  %615 = vmatprep.subr.mxu0 0.0
  %616 = vmatpush1.msra.mxu0 0.0
  %617 = vmatprep.subr.mxu0 %v54
  %618 = vmatpush1.msra.mxu0 %v53
  %619 = vmatprep.subr.mxu0 %v52
  %620 = vmatpush1.msra.mxu0 %v51
  %621 = vmatprep.subr.mxu0 %v50
  %622 = vmatpush1.msra.mxu0 %v49
  %623 = vmatprep.subr.mxu0 %v48
  %624 = vmatpush1.msra.mxu0 %v47
  %625 = vmatprep.subr.mxu0 0.0
  %626 = vmatpush2.msra.mxu0 0.0
  %627 = vmatprep.subr.mxu0 0.0
  %628 = vmatpush2.msra.mxu0 0.0
  %629 = vmatprep.subr.mxu0 0.0
  %630 = vmatpush2.msra.mxu0 0.0
  %631 = vmatprep.subr.mxu0 0.0
  %632 = vmatpush2.msra.mxu0 0.0
  %633 = vmatprep.subr.mxu0 0.0
  %634 = vmatpush2.msra.mxu0 0.0
  %635 = vmatprep.subr.mxu0 0.0
  %636 = vmatpush2.msra.mxu0 0.0
  %637 = vmatprep.subr.mxu0 0.0
  %638 = vmatpush2.msra.mxu0 0.0
  %639 = vmatprep.subr.mxu0 0.0
  %640 = vmatpush2.msra.mxu0 0.0
  %641 = vmatprep.subr.mxu0 0.0
  %642 = vmatpush2.msra.mxu0 0.0
  %643 = vmatprep.subr.mxu0 0.0
  %644 = vmatpush2.msra.mxu0 0.0
  %645 = vmatprep.subr.mxu0 0.0
  %646 = vmatpush2.msra.mxu0 0.0
  %647 = vmatprep.subr.mxu0 0.0
  %648 = vmatpush2.msra.mxu0 0.0
  %649 = vmatprep.subr.mxu0 0.0
  %650 = vmatpush2.msra.mxu0 0.0
  %651 = vmatprep.subr.mxu0 0.0
  %652 = vmatpush2.msra.mxu0 0.0
  %653 = vmatprep.subr.mxu0 0.0
  %654 = vmatpush2.msra.mxu0 0.0
  %655 = vmatprep.subr.mxu0 0.0
  %656 = vmatpush2.msra.mxu0 0.0
  %657 = vmatprep.mubr.f32.mxu0 0.0
  %658 = vmatmul.mubr.f32.gmra.mxu0 %v591
  %v659 = vpop.f32.mrf.mxu0
  %v660 = vadd.f32 %v111, %v659
  %v661 = vpop.f32.mrf.mxu0
  %v662 = vadd.f32 %v115, %v661
  %663 = vdwg.mxu0
  %v664 = vld [vmem:[%s0 + $0x6] sm:$0x1]
  %v665 = vld [vmem:[%s0 + $0xe] sm:$0x1]
  %v666 = vld [vmem:[%s0 + $0x16] sm:$0x1]
  %v667 = vld [vmem:[%s0 + $0x1e] sm:$0x1]
  %v668 = vld [vmem:[%s0 + $0x26] sm:$0x1]
  %v669 = vld [vmem:[%s0 + $0x2e] sm:$0x1]
  %v670 = vld [vmem:[%s0 + $0x36] sm:$0x1]
  %v671 = vld [vmem:[%s0 + $0x3e] sm:$0x1]
  %v680 = vrot.slane %v665, 7
  %v681 = vsel %vm127, %v680, %v664
  %v682 = vrot.slane %v666, 6
  %v683 = vsel %vm130, %v682, %v681
  %v684 = vrot.slane %v667, 5
  %v685 = vsel %vm133, %v684, %v683
  %v686 = vrot.slane %v668, 4
  %v687 = vsel %vm136, %v686, %v685
  %v688 = vrot.slane %v669, 3
  %v689 = vsel %vm139, %v688, %v687
  %v690 = vrot.slane %v670, 2
  %v691 = vsel %vm142, %v690, %v689
  %v692 = vrot.slane %v671, 1
  %v693 = vsel %vm145, %v692, %v691
  %v694 = vsel %vm147, %v693, 0
  %696 = vmatprep.subr.mxu0 0.0
  %697 = vmatpush1.msra.mxu0 0.0
  %698 = vmatprep.subr.mxu0 0.0
  %699 = vmatpush1.msra.mxu0 0.0
  %700 = vmatprep.subr.mxu0 0.0
  %701 = vmatpush1.msra.mxu0 0.0
  %702 = vmatprep.subr.mxu0 0.0
  %703 = vmatpush1.msra.mxu0 0.0
  %704 = vmatprep.subr.mxu0 0.0
  %705 = vmatpush1.msra.mxu0 0.0
  %706 = vmatprep.subr.mxu0 0.0
  %707 = vmatpush1.msra.mxu0 0.0
  %708 = vmatprep.subr.mxu0 0.0
  %709 = vmatpush1.msra.mxu0 0.0
  %710 = vmatprep.subr.mxu0 0.0
  %711 = vmatpush1.msra.mxu0 0.0
  %712 = vmatprep.subr.mxu0 0.0
  %713 = vmatpush1.msra.mxu0 0.0
  %714 = vmatprep.subr.mxu0 0.0
  %715 = vmatpush1.msra.mxu0 0.0
  %716 = vmatprep.subr.mxu0 0.0
  %717 = vmatpush1.msra.mxu0 0.0
  %718 = vmatprep.subr.mxu0 0.0
  %719 = vmatpush1.msra.mxu0 0.0
  %720 = vmatprep.subr.mxu0 %v62
  %721 = vmatpush1.msra.mxu0 %v61
  %722 = vmatprep.subr.mxu0 %v60
  %723 = vmatpush1.msra.mxu0 %v59
  %724 = vmatprep.subr.mxu0 %v58
  %725 = vmatpush1.msra.mxu0 %v57
  %726 = vmatprep.subr.mxu0 %v56
  %727 = vmatpush1.msra.mxu0 %v55
  %728 = vmatprep.subr.mxu0 0.0
  %729 = vmatpush2.msra.mxu0 0.0
  %730 = vmatprep.subr.mxu0 0.0
  %731 = vmatpush2.msra.mxu0 0.0
  %732 = vmatprep.subr.mxu0 0.0
  %733 = vmatpush2.msra.mxu0 0.0
  %734 = vmatprep.subr.mxu0 0.0
  %735 = vmatpush2.msra.mxu0 0.0
  %736 = vmatprep.subr.mxu0 0.0
  %737 = vmatpush2.msra.mxu0 0.0
  %738 = vmatprep.subr.mxu0 0.0
  %739 = vmatpush2.msra.mxu0 0.0
  %740 = vmatprep.subr.mxu0 0.0
  %741 = vmatpush2.msra.mxu0 0.0
  %742 = vmatprep.subr.mxu0 0.0
  %743 = vmatpush2.msra.mxu0 0.0
  %744 = vmatprep.subr.mxu0 0.0
  %745 = vmatpush2.msra.mxu0 0.0
  %746 = vmatprep.subr.mxu0 0.0
  %747 = vmatpush2.msra.mxu0 0.0
  %748 = vmatprep.subr.mxu0 0.0
  %749 = vmatpush2.msra.mxu0 0.0
  %750 = vmatprep.subr.mxu0 0.0
  %751 = vmatpush2.msra.mxu0 0.0
  %752 = vmatprep.subr.mxu0 0.0
  %753 = vmatpush2.msra.mxu0 0.0
  %754 = vmatprep.subr.mxu0 0.0
  %755 = vmatpush2.msra.mxu0 0.0
  %756 = vmatprep.subr.mxu0 0.0
  %757 = vmatpush2.msra.mxu0 0.0
  %758 = vmatprep.subr.mxu0 0.0
  %759 = vmatpush2.msra.mxu0 0.0
  %760 = vmatprep.mubr.f32.mxu0 0.0
  %761 = vmatmul.mubr.f32.gmra.mxu0 %v694
  %v762 = vpop.f32.mrf.mxu0
  %v763 = vadd.f32 %v233, %v762
  %v764 = vpop.f32.mrf.mxu0
  %v765 = vadd.f32 %v237, %v764
  %766 = vdwg.mxu0
  %v767 = vsel %vm346, %v555, 0
  %769 = vmatprep.subr.mxu0 0.0
  %770 = vmatpush1.msra.mxu0 0.0
  %771 = vmatprep.subr.mxu0 0.0
  %772 = vmatpush1.msra.mxu0 0.0
  %773 = vmatprep.subr.mxu0 0.0
  %774 = vmatpush1.msra.mxu0 0.0
  %775 = vmatprep.subr.mxu0 0.0
  %776 = vmatpush1.msra.mxu0 0.0
  %777 = vmatprep.subr.mxu0 0.0
  %778 = vmatpush1.msra.mxu0 0.0
  %779 = vmatprep.subr.mxu0 0.0
  %780 = vmatpush1.msra.mxu0 0.0
  %781 = vmatprep.subr.mxu0 0.0
  %782 = vmatpush1.msra.mxu0 0.0
  %783 = vmatprep.subr.mxu0 0.0
  %784 = vmatpush1.msra.mxu0 0.0
  %785 = vmatprep.subr.mxu0 %v78
  %786 = vmatpush1.msra.mxu0 %v77
  %787 = vmatprep.subr.mxu0 %v76
  %788 = vmatpush1.msra.mxu0 %v75
  %789 = vmatprep.subr.mxu0 %v74
  %790 = vmatpush1.msra.mxu0 %v73
  %791 = vmatprep.subr.mxu0 %v72
  %792 = vmatpush1.msra.mxu0 %v71
  %793 = vmatprep.subr.mxu0 %v70
  %794 = vmatpush1.msra.mxu0 %v69
  %795 = vmatprep.subr.mxu0 %v68
  %796 = vmatpush1.msra.mxu0 %v67
  %797 = vmatprep.subr.mxu0 %v66
  %798 = vmatpush1.msra.mxu0 %v65
  %799 = vmatprep.subr.mxu0 %v64
  %800 = vmatpush1.msra.mxu0 %v63
  %801 = vmatprep.subr.mxu0 0.0
  %802 = vmatpush2.msra.mxu0 0.0
  %803 = vmatprep.subr.mxu0 0.0
  %804 = vmatpush2.msra.mxu0 0.0
  %805 = vmatprep.subr.mxu0 0.0
  %806 = vmatpush2.msra.mxu0 0.0
  %807 = vmatprep.subr.mxu0 0.0
  %808 = vmatpush2.msra.mxu0 0.0
  %809 = vmatprep.subr.mxu0 0.0
  %810 = vmatpush2.msra.mxu0 0.0
  %811 = vmatprep.subr.mxu0 0.0
  %812 = vmatpush2.msra.mxu0 0.0
  %813 = vmatprep.subr.mxu0 0.0
  %814 = vmatpush2.msra.mxu0 0.0
  %815 = vmatprep.subr.mxu0 0.0
  %816 = vmatpush2.msra.mxu0 0.0
  %817 = vmatprep.subr.mxu0 0.0
  %818 = vmatpush2.msra.mxu0 0.0
  %819 = vmatprep.subr.mxu0 0.0
  %820 = vmatpush2.msra.mxu0 0.0
  %821 = vmatprep.subr.mxu0 0.0
  %822 = vmatpush2.msra.mxu0 0.0
  %823 = vmatprep.subr.mxu0 0.0
  %824 = vmatpush2.msra.mxu0 0.0
  %825 = vmatprep.subr.mxu0 0.0
  %826 = vmatpush2.msra.mxu0 0.0
  %827 = vmatprep.subr.mxu0 0.0
  %828 = vmatpush2.msra.mxu0 0.0
  %829 = vmatprep.subr.mxu0 0.0
  %830 = vmatpush2.msra.mxu0 0.0
  %831 = vmatprep.subr.mxu0 0.0
  %832 = vmatpush2.msra.mxu0 0.0
  %833 = vmatprep.mubr.f32.mxu0 0.0
  %834 = vmatmul.mubr.f32.gmra.mxu0 %v767
  %v835 = vpop.f32.mrf.mxu0
  %v836 = vadd.f32 %v339, %v835
  %v837 = vpop.f32.mrf.mxu0
  %v838 = vadd.f32 %v343, %v837
  %839 = vdwg.mxu0
  %v840 = vadd.f32 %v660, %v836
  %v841 = vxor.u32 %v840, 2147483648
  %v842 = vmul.f32 %v841, 1.442695
  %v843 = vpow.pop %v842
  %v844 = vadd.f32 %v843, 1.0
  %v845 = vrcp.pop %v844
  %v846 = vmul.f32 1.0, %v845
  %v847 = vmul.f32 %v846, %v838
  %v848 = vadd.f32 %v662, %v847
  %v849 = vtanh.pop %v848
  %v850 = vsub.f32 1.0, %v846
  %852 = vrot.lane.b32.xlu0 %v849, 64
  %v853 = vpop.permute.xlu0 %852
  %v855 = vmul.f32 %v850, %v853
  %v856 = vmul.f32 %v846, %v546
  %v857 = vadd.f32 %v855, %v856
  %859 = vrot.lane.b32.xlu0 %v552, 64
  %v860 = vpop.permute.xlu0 %859
  %v861 = vsel %vm346, %v860, 0
  %863 = vmatprep.subr.mxu0 0.0
  %864 = vmatpush1.msra.mxu0 0.0
  %865 = vmatprep.subr.mxu0 0.0
  %866 = vmatpush1.msra.mxu0 0.0
  %867 = vmatprep.subr.mxu0 0.0
  %868 = vmatpush1.msra.mxu0 0.0
  %869 = vmatprep.subr.mxu0 0.0
  %870 = vmatpush1.msra.mxu0 0.0
  %871 = vmatprep.subr.mxu0 0.0
  %872 = vmatpush1.msra.mxu0 0.0
  %873 = vmatprep.subr.mxu0 0.0
  %874 = vmatpush1.msra.mxu0 0.0
  %875 = vmatprep.subr.mxu0 0.0
  %876 = vmatpush1.msra.mxu0 0.0
  %877 = vmatprep.subr.mxu0 0.0
  %878 = vmatpush1.msra.mxu0 0.0
  %879 = vmatprep.subr.mxu0 %v94
  %880 = vmatpush1.msra.mxu0 %v93
  %881 = vmatprep.subr.mxu0 %v92
  %882 = vmatpush1.msra.mxu0 %v91
  %883 = vmatprep.subr.mxu0 %v90
  %884 = vmatpush1.msra.mxu0 %v89
  %885 = vmatprep.subr.mxu0 %v88
  %886 = vmatpush1.msra.mxu0 %v87
  %887 = vmatprep.subr.mxu0 %v86
  %888 = vmatpush1.msra.mxu0 %v85
  %889 = vmatprep.subr.mxu0 %v84
  %890 = vmatpush1.msra.mxu0 %v83
  %891 = vmatprep.subr.mxu0 %v82
  %892 = vmatpush1.msra.mxu0 %v81
  %893 = vmatprep.subr.mxu0 %v80
  %894 = vmatpush1.msra.mxu0 %v79
  %895 = vmatprep.subr.mxu0 0.0
  %896 = vmatpush2.msra.mxu0 0.0
  %897 = vmatprep.subr.mxu0 0.0
  %898 = vmatpush2.msra.mxu0 0.0
  %899 = vmatprep.subr.mxu0 0.0
  %900 = vmatpush2.msra.mxu0 0.0
  %901 = vmatprep.subr.mxu0 0.0
  %902 = vmatpush2.msra.mxu0 0.0
  %903 = vmatprep.subr.mxu0 0.0
  %904 = vmatpush2.msra.mxu0 0.0
  %905 = vmatprep.subr.mxu0 0.0
  %906 = vmatpush2.msra.mxu0 0.0
  %907 = vmatprep.subr.mxu0 0.0
  %908 = vmatpush2.msra.mxu0 0.0
  %909 = vmatprep.subr.mxu0 0.0
  %910 = vmatpush2.msra.mxu0 0.0
  %911 = vmatprep.subr.mxu0 0.0
  %912 = vmatpush2.msra.mxu0 0.0
  %913 = vmatprep.subr.mxu0 0.0
  %914 = vmatpush2.msra.mxu0 0.0
  %915 = vmatprep.subr.mxu0 0.0
  %916 = vmatpush2.msra.mxu0 0.0
  %917 = vmatprep.subr.mxu0 0.0
  %918 = vmatpush2.msra.mxu0 0.0
  %919 = vmatprep.subr.mxu0 0.0
  %920 = vmatpush2.msra.mxu0 0.0
  %921 = vmatprep.subr.mxu0 0.0
  %922 = vmatpush2.msra.mxu0 0.0
  %923 = vmatprep.subr.mxu0 0.0
  %924 = vmatpush2.msra.mxu0 0.0
  %925 = vmatprep.subr.mxu0 0.0
  %926 = vmatpush2.msra.mxu0 0.0
  %927 = vmatprep.mubr.f32.mxu0 0.0
  %928 = vmatmul.mubr.f32.gmra.mxu0 %v861
  %v929 = vpop.f32.mrf.mxu0
  %v930 = vadd.f32 %v443, %v929
  %v931 = vpop.f32.mrf.mxu0
  %v932 = vadd.f32 %v447, %v931
  %933 = vdwg.mxu0
  %v934 = vadd.f32 %v763, %v930
  %v935 = vxor.u32 %v934, 2147483648
  %v936 = vmul.f32 %v935, 1.442695
  %v937 = vpow.pop %v936
  %v938 = vadd.f32 %v937, 1.0
  %v939 = vrcp.pop %v938
  %v940 = vmul.f32 1.0, %v939
  %v941 = vmul.f32 %v940, %v932
  %v942 = vadd.f32 %v765, %v941
  %v943 = vtanh.pop %v942
  %v944 = vsub.f32 1.0, %v940
  %946 = vrot.lane.b32.xlu0 %v943, 64
  %v947 = vpop.permute.xlu0 %946
  %v949 = vmul.f32 %v944, %v947
  %v950 = vmul.f32 %v940, %v552
  %v951 = vadd.f32 %v949, %v950
  %vm952 = vcmp.gt.s32.totalorder %v46, 1
  %vm953 = vcmp.gt.s32.totalorder %v46, 6
  %v954 = vsel %vm952, 1, 0
  %955 = vset.pattern.permute.xlu0 0
  %956 = vperm.xlu0 %955, %v954
  %v957 = vpop.permute.xlu0 %956
  %vm958 = vcmp.eq.s32.totalorder %v957, 1
  %v959 = vsel %vm958, %v857, %v546
  %v960 = vsel %vm953, 1, 0
  %961 = vset.pattern.permute.xlu0 0
  %962 = vperm.xlu0 %961, %v960
  %v963 = vpop.permute.xlu0 %962
  %vm964 = vcmp.eq.s32.totalorder %v963, 1
  %v965 = vsel %vm964, %v951, %v552
  %v966 = vsel %vm958, %v857, 0.0
  %968 = vrot.lane.b32.xlu0 %v966, 64
  %v969 = vpop.permute.xlu0 %968
  %s971 = scalar_lea.vmem [#allocation2], 8
  %972 = vst.msk [vmem:[%s971] sm:$0xff] %vm346, %v969
  %v973 = vsel %vm964, %v951, 0.0
  %s974 = scalar_lea.vmem [#allocation2], 48
  %975 = vst.msk [vmem:[%s974] sm:$0xff] %vm559, %v973
  %v976 = vld [vmem:[%s0 + $0x2] sm:$0x1]
  %v977 = vld [vmem:[%s0 + $0xa] sm:$0x1]
  %v978 = vld [vmem:[%s0 + $0x12] sm:$0x1]
  %v979 = vld [vmem:[%s0 + $0x1a] sm:$0x1]
  %v980 = vld [vmem:[%s0 + $0x22] sm:$0x1]
  %v981 = vld [vmem:[%s0 + $0x2a] sm:$0x1]
  %v982 = vld [vmem:[%s0 + $0x32] sm:$0x1]
  %v983 = vld [vmem:[%s0 + $0x3a] sm:$0x1]
  %v992 = vrot.slane %v977, 7
  %v993 = vsel %vm127, %v992, %v976
  %v994 = vrot.slane %v978, 6
  %v995 = vsel %vm130, %v994, %v993
  %v996 = vrot.slane %v979, 5
  %v997 = vsel %vm133, %v996, %v995
  %v998 = vrot.slane %v980, 4
  %v999 = vsel %vm136, %v998, %v997
  %v1000 = vrot.slane %v981, 3
  %v1001 = vsel %vm139, %v1000, %v999
  %v1002 = vrot.slane %v982, 2
  %v1003 = vsel %vm142, %v1002, %v1001
  %v1004 = vrot.slane %v983, 1
  %v1005 = vsel %vm145, %v1004, %v1003
  %v1006 = vsel %vm147, %v1005, 0
  %1008 = vmatprep.subr.mxu0 0.0
  %1009 = vmatpush1.msra.mxu0 0.0
  %1010 = vmatprep.subr.mxu0 0.0
  %1011 = vmatpush1.msra.mxu0 0.0
  %1012 = vmatprep.subr.mxu0 0.0
  %1013 = vmatpush1.msra.mxu0 0.0
  %1014 = vmatprep.subr.mxu0 0.0
  %1015 = vmatpush1.msra.mxu0 0.0
  %1016 = vmatprep.subr.mxu0 0.0
  %1017 = vmatpush1.msra.mxu0 0.0
  %1018 = vmatprep.subr.mxu0 0.0
  %1019 = vmatpush1.msra.mxu0 0.0
  %1020 = vmatprep.subr.mxu0 0.0
  %1021 = vmatpush1.msra.mxu0 0.0
  %1022 = vmatprep.subr.mxu0 0.0
  %1023 = vmatpush1.msra.mxu0 0.0
  %1024 = vmatprep.subr.mxu0 0.0
  %1025 = vmatpush1.msra.mxu0 0.0
  %1026 = vmatprep.subr.mxu0 0.0
  %1027 = vmatpush1.msra.mxu0 0.0
  %1028 = vmatprep.subr.mxu0 0.0
  %1029 = vmatpush1.msra.mxu0 0.0
  %1030 = vmatprep.subr.mxu0 0.0
  %1031 = vmatpush1.msra.mxu0 0.0
  %1032 = vmatprep.subr.mxu0 %v54
  %1033 = vmatpush1.msra.mxu0 %v53
  %1034 = vmatprep.subr.mxu0 %v52
  %1035 = vmatpush1.msra.mxu0 %v51
  %1036 = vmatprep.subr.mxu0 %v50
  %1037 = vmatpush1.msra.mxu0 %v49
  %1038 = vmatprep.subr.mxu0 %v48
  %1039 = vmatpush1.msra.mxu0 %v47
  %1040 = vmatprep.subr.mxu0 0.0
  %1041 = vmatpush2.msra.mxu0 0.0
  %1042 = vmatprep.subr.mxu0 0.0
  %1043 = vmatpush2.msra.mxu0 0.0
  %1044 = vmatprep.subr.mxu0 0.0
  %1045 = vmatpush2.msra.mxu0 0.0
  %1046 = vmatprep.subr.mxu0 0.0
  %1047 = vmatpush2.msra.mxu0 0.0
  %1048 = vmatprep.subr.mxu0 0.0
  %1049 = vmatpush2.msra.mxu0 0.0
  %1050 = vmatprep.subr.mxu0 0.0
  %1051 = vmatpush2.msra.mxu0 0.0
  %1052 = vmatprep.subr.mxu0 0.0
  %1053 = vmatpush2.msra.mxu0 0.0
  %1054 = vmatprep.subr.mxu0 0.0
  %1055 = vmatpush2.msra.mxu0 0.0
  %1056 = vmatprep.subr.mxu0 0.0
  %1057 = vmatpush2.msra.mxu0 0.0
  %1058 = vmatprep.subr.mxu0 0.0
  %1059 = vmatpush2.msra.mxu0 0.0
  %1060 = vmatprep.subr.mxu0 0.0
  %1061 = vmatpush2.msra.mxu0 0.0
  %1062 = vmatprep.subr.mxu0 0.0
  %1063 = vmatpush2.msra.mxu0 0.0
  %1064 = vmatprep.subr.mxu0 0.0
  %1065 = vmatpush2.msra.mxu0 0.0
  %1066 = vmatprep.subr.mxu0 0.0
  %1067 = vmatpush2.msra.mxu0 0.0
  %1068 = vmatprep.subr.mxu0 0.0
  %1069 = vmatpush2.msra.mxu0 0.0
  %1070 = vmatprep.subr.mxu0 0.0
  %1071 = vmatpush2.msra.mxu0 0.0
  %1072 = vmatprep.mubr.f32.mxu0 0.0
  %1073 = vmatmul.mubr.f32.gmra.mxu0 %v1006
  %v1074 = vpop.f32.mrf.mxu0
  %v1075 = vadd.f32 %v111, %v1074
  %v1076 = vpop.f32.mrf.mxu0
  %v1077 = vadd.f32 %v115, %v1076
  %1078 = vdwg.mxu0
  %v1079 = vld [vmem:[%s0 + $0x5] sm:$0x1]
  %v1080 = vld [vmem:[%s0 + $0xd] sm:$0x1]
  %v1081 = vld [vmem:[%s0 + $0x15] sm:$0x1]
  %v1082 = vld [vmem:[%s0 + $0x1d] sm:$0x1]
  %v1083 = vld [vmem:[%s0 + $0x25] sm:$0x1]
  %v1084 = vld [vmem:[%s0 + $0x2d] sm:$0x1]
  %v1085 = vld [vmem:[%s0 + $0x35] sm:$0x1]
  %v1086 = vld [vmem:[%s0 + $0x3d] sm:$0x1]
  %v1095 = vrot.slane %v1080, 7
  %v1096 = vsel %vm127, %v1095, %v1079
  %v1097 = vrot.slane %v1081, 6
  %v1098 = vsel %vm130, %v1097, %v1096
  %v1099 = vrot.slane %v1082, 5
  %v1100 = vsel %vm133, %v1099, %v1098
  %v1101 = vrot.slane %v1083, 4
  %v1102 = vsel %vm136, %v1101, %v1100
  %v1103 = vrot.slane %v1084, 3
  %v1104 = vsel %vm139, %v1103, %v1102
  %v1105 = vrot.slane %v1085, 2
  %v1106 = vsel %vm142, %v1105, %v1104
  %v1107 = vrot.slane %v1086, 1
  %v1108 = vsel %vm145, %v1107, %v1106
  %v1109 = vsel %vm147, %v1108, 0
  %1111 = vmatprep.subr.mxu0 0.0
  %1112 = vmatpush1.msra.mxu0 0.0
  %1113 = vmatprep.subr.mxu0 0.0
  %1114 = vmatpush1.msra.mxu0 0.0
  %1115 = vmatprep.subr.mxu0 0.0
  %1116 = vmatpush1.msra.mxu0 0.0
  %1117 = vmatprep.subr.mxu0 0.0
  %1118 = vmatpush1.msra.mxu0 0.0
  %1119 = vmatprep.subr.mxu0 0.0
  %1120 = vmatpush1.msra.mxu0 0.0
  %1121 = vmatprep.subr.mxu0 0.0
  %1122 = vmatpush1.msra.mxu0 0.0
  %1123 = vmatprep.subr.mxu0 0.0
  %1124 = vmatpush1.msra.mxu0 0.0
  %1125 = vmatprep.subr.mxu0 0.0
  %1126 = vmatpush1.msra.mxu0 0.0
  %1127 = vmatprep.subr.mxu0 0.0
  %1128 = vmatpush1.msra.mxu0 0.0
  %1129 = vmatprep.subr.mxu0 0.0
  %1130 = vmatpush1.msra.mxu0 0.0
  %1131 = vmatprep.subr.mxu0 0.0
  %1132 = vmatpush1.msra.mxu0 0.0
  %1133 = vmatprep.subr.mxu0 0.0
  %1134 = vmatpush1.msra.mxu0 0.0
  %1135 = vmatprep.subr.mxu0 %v62
  %1136 = vmatpush1.msra.mxu0 %v61
  %1137 = vmatprep.subr.mxu0 %v60
  %1138 = vmatpush1.msra.mxu0 %v59
  %1139 = vmatprep.subr.mxu0 %v58
  %1140 = vmatpush1.msra.mxu0 %v57
  %1141 = vmatprep.subr.mxu0 %v56
  %1142 = vmatpush1.msra.mxu0 %v55
  %1143 = vmatprep.subr.mxu0 0.0
  %1144 = vmatpush2.msra.mxu0 0.0
  %1145 = vmatprep.subr.mxu0 0.0
  %1146 = vmatpush2.msra.mxu0 0.0
  %1147 = vmatprep.subr.mxu0 0.0
  %1148 = vmatpush2.msra.mxu0 0.0
  %1149 = vmatprep.subr.mxu0 0.0
  %1150 = vmatpush2.msra.mxu0 0.0
  %1151 = vmatprep.subr.mxu0 0.0
  %1152 = vmatpush2.msra.mxu0 0.0
  %1153 = vmatprep.subr.mxu0 0.0
  %1154 = vmatpush2.msra.mxu0 0.0
  %1155 = vmatprep.subr.mxu0 0.0
  %1156 = vmatpush2.msra.mxu0 0.0
  %1157 = vmatprep.subr.mxu0 0.0
  %1158 = vmatpush2.msra.mxu0 0.0
  %1159 = vmatprep.subr.mxu0 0.0
  %1160 = vmatpush2.msra.mxu0 0.0
  %1161 = vmatprep.subr.mxu0 0.0
  %1162 = vmatpush2.msra.mxu0 0.0
  %1163 = vmatprep.subr.mxu0 0.0
  %1164 = vmatpush2.msra.mxu0 0.0
  %1165 = vmatprep.subr.mxu0 0.0
  %1166 = vmatpush2.msra.mxu0 0.0
  %1167 = vmatprep.subr.mxu0 0.0
  %1168 = vmatpush2.msra.mxu0 0.0
  %1169 = vmatprep.subr.mxu0 0.0
  %1170 = vmatpush2.msra.mxu0 0.0
  %1171 = vmatprep.subr.mxu0 0.0
  %1172 = vmatpush2.msra.mxu0 0.0
  %1173 = vmatprep.subr.mxu0 0.0
  %1174 = vmatpush2.msra.mxu0 0.0
  %1175 = vmatprep.mubr.f32.mxu0 0.0
  %1176 = vmatmul.mubr.f32.gmra.mxu0 %v1109
  %v1177 = vpop.f32.mrf.mxu0
  %v1178 = vadd.f32 %v233, %v1177
  %v1179 = vpop.f32.mrf.mxu0
  %v1180 = vadd.f32 %v237, %v1179
  %1181 = vdwg.mxu0
  %1183 = vrot.lane.b32.xlu0 %v959, 64
  %v1184 = vpop.permute.xlu0 %1183
  %v1185 = vsel %vm346, %v1184, 0
  %1187 = vmatprep.subr.mxu0 0.0
  %1188 = vmatpush1.msra.mxu0 0.0
  %1189 = vmatprep.subr.mxu0 0.0
  %1190 = vmatpush1.msra.mxu0 0.0
  %1191 = vmatprep.subr.mxu0 0.0
  %1192 = vmatpush1.msra.mxu0 0.0
  %1193 = vmatprep.subr.mxu0 0.0
  %1194 = vmatpush1.msra.mxu0 0.0
  %1195 = vmatprep.subr.mxu0 0.0
  %1196 = vmatpush1.msra.mxu0 0.0
  %1197 = vmatprep.subr.mxu0 0.0
  %1198 = vmatpush1.msra.mxu0 0.0
  %1199 = vmatprep.subr.mxu0 0.0
  %1200 = vmatpush1.msra.mxu0 0.0
  %1201 = vmatprep.subr.mxu0 0.0
  %1202 = vmatpush1.msra.mxu0 0.0
  %1203 = vmatprep.subr.mxu0 %v78
  %1204 = vmatpush1.msra.mxu0 %v77
  %1205 = vmatprep.subr.mxu0 %v76
  %1206 = vmatpush1.msra.mxu0 %v75
  %1207 = vmatprep.subr.mxu0 %v74
  %1208 = vmatpush1.msra.mxu0 %v73
  %1209 = vmatprep.subr.mxu0 %v72
  %1210 = vmatpush1.msra.mxu0 %v71
  %1211 = vmatprep.subr.mxu0 %v70
  %1212 = vmatpush1.msra.mxu0 %v69
  %1213 = vmatprep.subr.mxu0 %v68
  %1214 = vmatpush1.msra.mxu0 %v67
  %1215 = vmatprep.subr.mxu0 %v66
  %1216 = vmatpush1.msra.mxu0 %v65
  %1217 = vmatprep.subr.mxu0 %v64
  %1218 = vmatpush1.msra.mxu0 %v63
  %1219 = vmatprep.subr.mxu0 0.0
  %1220 = vmatpush2.msra.mxu0 0.0
  %1221 = vmatprep.subr.mxu0 0.0
  %1222 = vmatpush2.msra.mxu0 0.0
  %1223 = vmatprep.subr.mxu0 0.0
  %1224 = vmatpush2.msra.mxu0 0.0
  %1225 = vmatprep.subr.mxu0 0.0
  %1226 = vmatpush2.msra.mxu0 0.0
  %1227 = vmatprep.subr.mxu0 0.0
  %1228 = vmatpush2.msra.mxu0 0.0
  %1229 = vmatprep.subr.mxu0 0.0
  %1230 = vmatpush2.msra.mxu0 0.0
  %1231 = vmatprep.subr.mxu0 0.0
  %1232 = vmatpush2.msra.mxu0 0.0
  %1233 = vmatprep.subr.mxu0 0.0
  %1234 = vmatpush2.msra.mxu0 0.0
  %1235 = vmatprep.subr.mxu0 0.0
  %1236 = vmatpush2.msra.mxu0 0.0
  %1237 = vmatprep.subr.mxu0 0.0
  %1238 = vmatpush2.msra.mxu0 0.0
  %1239 = vmatprep.subr.mxu0 0.0
  %1240 = vmatpush2.msra.mxu0 0.0
  %1241 = vmatprep.subr.mxu0 0.0
  %1242 = vmatpush2.msra.mxu0 0.0
  %1243 = vmatprep.subr.mxu0 0.0
  %1244 = vmatpush2.msra.mxu0 0.0
  %1245 = vmatprep.subr.mxu0 0.0
  %1246 = vmatpush2.msra.mxu0 0.0
  %1247 = vmatprep.subr.mxu0 0.0
  %1248 = vmatpush2.msra.mxu0 0.0
  %1249 = vmatprep.subr.mxu0 0.0
  %1250 = vmatpush2.msra.mxu0 0.0
  %1251 = vmatprep.mubr.f32.mxu0 0.0
  %1252 = vmatmul.mubr.f32.gmra.mxu0 %v1185
  %v1253 = vpop.f32.mrf.mxu0
  %v1254 = vadd.f32 %v339, %v1253
  %v1255 = vpop.f32.mrf.mxu0
  %v1256 = vadd.f32 %v343, %v1255
  %1257 = vdwg.mxu0
  %v1258 = vadd.f32 %v1075, %v1254
  %v1259 = vxor.u32 %v1258, 2147483648
  %v1260 = vmul.f32 %v1259, 1.442695
  %v1261 = vpow.pop %v1260
  %v1262 = vadd.f32 %v1261, 1.0
  %v1263 = vrcp.pop %v1262
  %v1264 = vmul.f32 1.0, %v1263
  %v1265 = vmul.f32 %v1264, %v1256
  %v1266 = vadd.f32 %v1077, %v1265
  %v1267 = vtanh.pop %v1266
  %v1268 = vsub.f32 1.0, %v1264
  %1270 = vrot.lane.b32.xlu0 %v1267, 64
  %v1271 = vpop.permute.xlu0 %1270
  %v1273 = vmul.f32 %v1268, %v1271
  %v1274 = vmul.f32 %v1264, %v959
  %v1275 = vadd.f32 %v1273, %v1274
  %1277 = vrot.lane.b32.xlu0 %v965, 64
  %v1278 = vpop.permute.xlu0 %1277
  %v1279 = vsel %vm346, %v1278, 0
  %1281 = vmatprep.subr.mxu0 0.0
  %1282 = vmatpush1.msra.mxu0 0.0
  %1283 = vmatprep.subr.mxu0 0.0
  %1284 = vmatpush1.msra.mxu0 0.0
  %1285 = vmatprep.subr.mxu0 0.0
  %1286 = vmatpush1.msra.mxu0 0.0
  %1287 = vmatprep.subr.mxu0 0.0
  %1288 = vmatpush1.msra.mxu0 0.0
  %1289 = vmatprep.subr.mxu0 0.0
  %1290 = vmatpush1.msra.mxu0 0.0
  %1291 = vmatprep.subr.mxu0 0.0
  %1292 = vmatpush1.msra.mxu0 0.0
  %1293 = vmatprep.subr.mxu0 0.0
  %1294 = vmatpush1.msra.mxu0 0.0
  %1295 = vmatprep.subr.mxu0 0.0
  %1296 = vmatpush1.msra.mxu0 0.0
  %1297 = vmatprep.subr.mxu0 %v94
  %1298 = vmatpush1.msra.mxu0 %v93
  %1299 = vmatprep.subr.mxu0 %v92
  %1300 = vmatpush1.msra.mxu0 %v91
  %1301 = vmatprep.subr.mxu0 %v90
  %1302 = vmatpush1.msra.mxu0 %v89
  %1303 = vmatprep.subr.mxu0 %v88
  %1304 = vmatpush1.msra.mxu0 %v87
  %1305 = vmatprep.subr.mxu0 %v86
  %1306 = vmatpush1.msra.mxu0 %v85
  %1307 = vmatprep.subr.mxu0 %v84
  %1308 = vmatpush1.msra.mxu0 %v83
  %1309 = vmatprep.subr.mxu0 %v82
  %1310 = vmatpush1.msra.mxu0 %v81
  %1311 = vmatprep.subr.mxu0 %v80
  %1312 = vmatpush1.msra.mxu0 %v79
  %1313 = vmatprep.subr.mxu0 0.0
  %1314 = vmatpush2.msra.mxu0 0.0
  %1315 = vmatprep.subr.mxu0 0.0
  %1316 = vmatpush2.msra.mxu0 0.0
  %1317 = vmatprep.subr.mxu0 0.0
  %1318 = vmatpush2.msra.mxu0 0.0
  %1319 = vmatprep.subr.mxu0 0.0
  %1320 = vmatpush2.msra.mxu0 0.0
  %1321 = vmatprep.subr.mxu0 0.0
  %1322 = vmatpush2.msra.mxu0 0.0
  %1323 = vmatprep.subr.mxu0 0.0
  %1324 = vmatpush2.msra.mxu0 0.0
  %1325 = vmatprep.subr.mxu0 0.0
  %1326 = vmatpush2.msra.mxu0 0.0
  %1327 = vmatprep.subr.mxu0 0.0
  %1328 = vmatpush2.msra.mxu0 0.0
  %1329 = vmatprep.subr.mxu0 0.0
  %1330 = vmatpush2.msra.mxu0 0.0
  %1331 = vmatprep.subr.mxu0 0.0
  %1332 = vmatpush2.msra.mxu0 0.0
  %1333 = vmatprep.subr.mxu0 0.0
  %1334 = vmatpush2.msra.mxu0 0.0
  %1335 = vmatprep.subr.mxu0 0.0
  %1336 = vmatpush2.msra.mxu0 0.0
  %1337 = vmatprep.subr.mxu0 0.0
  %1338 = vmatpush2.msra.mxu0 0.0
  %1339 = vmatprep.subr.mxu0 0.0
  %1340 = vmatpush2.msra.mxu0 0.0
  %1341 = vmatprep.subr.mxu0 0.0
  %1342 = vmatpush2.msra.mxu0 0.0
  %1343 = vmatprep.subr.mxu0 0.0
  %1344 = vmatpush2.msra.mxu0 0.0
  %1345 = vmatprep.mubr.f32.mxu0 0.0
  %1346 = vmatmul.mubr.f32.gmra.mxu0 %v1279
  %v1347 = vpop.f32.mrf.mxu0
  %v1348 = vadd.f32 %v443, %v1347
  %v1349 = vpop.f32.mrf.mxu0
  %v1350 = vadd.f32 %v447, %v1349
  %1351 = vdwg.mxu0
  %v1352 = vadd.f32 %v1178, %v1348
  %v1353 = vxor.u32 %v1352, 2147483648
  %v1354 = vmul.f32 %v1353, 1.442695
  %v1355 = vpow.pop %v1354
  %v1356 = vadd.f32 %v1355, 1.0
  %v1357 = vrcp.pop %v1356
  %v1358 = vmul.f32 1.0, %v1357
  %v1359 = vmul.f32 %v1358, %v1350
  %v1360 = vadd.f32 %v1180, %v1359
  %v1361 = vtanh.pop %v1360
  %v1362 = vsub.f32 1.0, %v1358
  %1364 = vrot.lane.b32.xlu0 %v1361, 64
  %v1365 = vpop.permute.xlu0 %1364
  %v1367 = vmul.f32 %v1362, %v1365
  %v1368 = vmul.f32 %v1358, %v965
  %v1369 = vadd.f32 %v1367, %v1368
  %vm1370 = vcmp.gt.s32.totalorder %v46, 2
  %vm1371 = vcmp.gt.s32.totalorder %v46, 5
  %v1372 = vsel %vm1370, 1, 0
  %1373 = vset.pattern.permute.xlu0 0
  %1374 = vperm.xlu0 %1373, %v1372
  %v1375 = vpop.permute.xlu0 %1374
  %vm1376 = vcmp.eq.s32.totalorder %v1375, 1
  %v1377 = vsel %vm1376, %v1275, %v959
  %v1378 = vsel %vm1371, 1, 0
  %1379 = vset.pattern.permute.xlu0 0
  %1380 = vperm.xlu0 %1379, %v1378
  %v1381 = vpop.permute.xlu0 %1380
  %vm1382 = vcmp.eq.s32.totalorder %v1381, 1
  %v1383 = vsel %vm1382, %v1369, %v965
  %v1384 = vsel %vm1376, %v1275, 0.0
  %1386 = vrot.lane.b32.xlu0 %v1384, 64
  %v1387 = vpop.permute.xlu0 %1386
  %s1389 = scalar_lea.vmem [#allocation2], 16
  %1390 = vst.msk [vmem:[%s1389] sm:$0xff] %vm346, %v1387
  %v1391 = vsel %vm1382, %v1369, 0.0
  %s1392 = scalar_lea.vmem [#allocation2], 40
  %1393 = vst.msk [vmem:[%s1392] sm:$0xff] %vm559, %v1391
  %v1394 = vld [vmem:[%s0 + $0x3] sm:$0x1]
  %v1395 = vld [vmem:[%s0 + $0xb] sm:$0x1]
  %v1396 = vld [vmem:[%s0 + $0x13] sm:$0x1]
  %v1397 = vld [vmem:[%s0 + $0x1b] sm:$0x1]
  %v1398 = vld [vmem:[%s0 + $0x23] sm:$0x1]
  %v1399 = vld [vmem:[%s0 + $0x2b] sm:$0x1]
  %v1400 = vld [vmem:[%s0 + $0x33] sm:$0x1]
  %v1401 = vld [vmem:[%s0 + $0x3b] sm:$0x1]
  %v1410 = vrot.slane %v1395, 7
  %v1411 = vsel %vm127, %v1410, %v1394
  %v1412 = vrot.slane %v1396, 6
  %v1413 = vsel %vm130, %v1412, %v1411
  %v1414 = vrot.slane %v1397, 5
  %v1415 = vsel %vm133, %v1414, %v1413
  %v1416 = vrot.slane %v1398, 4
  %v1417 = vsel %vm136, %v1416, %v1415
  %v1418 = vrot.slane %v1399, 3
  %v1419 = vsel %vm139, %v1418, %v1417
  %v1420 = vrot.slane %v1400, 2
  %v1421 = vsel %vm142, %v1420, %v1419
  %v1422 = vrot.slane %v1401, 1
  %v1423 = vsel %vm145, %v1422, %v1421
  %v1424 = vsel %vm147, %v1423, 0
  %1426 = vmatprep.subr.mxu0 0.0
  %1427 = vmatpush1.msra.mxu0 0.0
  %1428 = vmatprep.subr.mxu0 0.0
  %1429 = vmatpush1.msra.mxu0 0.0
  %1430 = vmatprep.subr.mxu0 0.0
  %1431 = vmatpush1.msra.mxu0 0.0
  %1432 = vmatprep.subr.mxu0 0.0
  %1433 = vmatpush1.msra.mxu0 0.0
  %1434 = vmatprep.subr.mxu0 0.0
  %1435 = vmatpush1.msra.mxu0 0.0
  %1436 = vmatprep.subr.mxu0 0.0
  %1437 = vmatpush1.msra.mxu0 0.0
  %1438 = vmatprep.subr.mxu0 0.0
  %1439 = vmatpush1.msra.mxu0 0.0
  %1440 = vmatprep.subr.mxu0 0.0
  %1441 = vmatpush1.msra.mxu0 0.0
  %1442 = vmatprep.subr.mxu0 0.0
  %1443 = vmatpush1.msra.mxu0 0.0
  %1444 = vmatprep.subr.mxu0 0.0
  %1445 = vmatpush1.msra.mxu0 0.0
  %1446 = vmatprep.subr.mxu0 0.0
  %1447 = vmatpush1.msra.mxu0 0.0
  %1448 = vmatprep.subr.mxu0 0.0
  %1449 = vmatpush1.msra.mxu0 0.0
  %1450 = vmatprep.subr.mxu0 %v54
  %1451 = vmatpush1.msra.mxu0 %v53
  %1452 = vmatprep.subr.mxu0 %v52
  %1453 = vmatpush1.msra.mxu0 %v51
  %1454 = vmatprep.subr.mxu0 %v50
  %1455 = vmatpush1.msra.mxu0 %v49
  %1456 = vmatprep.subr.mxu0 %v48
  %1457 = vmatpush1.msra.mxu0 %v47
  %1458 = vmatprep.subr.mxu0 0.0
  %1459 = vmatpush2.msra.mxu0 0.0
  %1460 = vmatprep.subr.mxu0 0.0
  %1461 = vmatpush2.msra.mxu0 0.0
  %1462 = vmatprep.subr.mxu0 0.0
  %1463 = vmatpush2.msra.mxu0 0.0
  %1464 = vmatprep.subr.mxu0 0.0
  %1465 = vmatpush2.msra.mxu0 0.0
  %1466 = vmatprep.subr.mxu0 0.0
  %1467 = vmatpush2.msra.mxu0 0.0
  %1468 = vmatprep.subr.mxu0 0.0
  %1469 = vmatpush2.msra.mxu0 0.0
  %1470 = vmatprep.subr.mxu0 0.0
  %1471 = vmatpush2.msra.mxu0 0.0
  %1472 = vmatprep.subr.mxu0 0.0
  %1473 = vmatpush2.msra.mxu0 0.0
  %1474 = vmatprep.subr.mxu0 0.0
  %1475 = vmatpush2.msra.mxu0 0.0
  %1476 = vmatprep.subr.mxu0 0.0
  %1477 = vmatpush2.msra.mxu0 0.0
  %1478 = vmatprep.subr.mxu0 0.0
  %1479 = vmatpush2.msra.mxu0 0.0
  %1480 = vmatprep.subr.mxu0 0.0
  %1481 = vmatpush2.msra.mxu0 0.0
  %1482 = vmatprep.subr.mxu0 0.0
  %1483 = vmatpush2.msra.mxu0 0.0
  %1484 = vmatprep.subr.mxu0 0.0
  %1485 = vmatpush2.msra.mxu0 0.0
  %1486 = vmatprep.subr.mxu0 0.0
  %1487 = vmatpush2.msra.mxu0 0.0
  %1488 = vmatprep.subr.mxu0 0.0
  %1489 = vmatpush2.msra.mxu0 0.0
  %1490 = vmatprep.mubr.f32.mxu0 0.0
  %1491 = vmatmul.mubr.f32.gmra.mxu0 %v1424
  %v1492 = vpop.f32.mrf.mxu0
  %v1493 = vadd.f32 %v111, %v1492
  %v1494 = vpop.f32.mrf.mxu0
  %v1495 = vadd.f32 %v115, %v1494
  %1496 = vdwg.mxu0
  %v1497 = vld [vmem:[%s0 + $0x4] sm:$0x1]
  %v1498 = vld [vmem:[%s0 + $0xc] sm:$0x1]
  %v1499 = vld [vmem:[%s0 + $0x14] sm:$0x1]
  %v1500 = vld [vmem:[%s0 + $0x1c] sm:$0x1]
  %v1501 = vld [vmem:[%s0 + $0x24] sm:$0x1]
  %v1502 = vld [vmem:[%s0 + $0x2c] sm:$0x1]
  %v1503 = vld [vmem:[%s0 + $0x34] sm:$0x1]
  %v1504 = vld [vmem:[%s0 + $0x3c] sm:$0x1]
  %v1513 = vrot.slane %v1498, 7
  %v1514 = vsel %vm127, %v1513, %v1497
  %v1515 = vrot.slane %v1499, 6
  %v1516 = vsel %vm130, %v1515, %v1514
  %v1517 = vrot.slane %v1500, 5
  %v1518 = vsel %vm133, %v1517, %v1516
  %v1519 = vrot.slane %v1501, 4
  %v1520 = vsel %vm136, %v1519, %v1518
  %v1521 = vrot.slane %v1502, 3
  %v1522 = vsel %vm139, %v1521, %v1520
  %v1523 = vrot.slane %v1503, 2
  %v1524 = vsel %vm142, %v1523, %v1522
  %v1525 = vrot.slane %v1504, 1
  %v1526 = vsel %vm145, %v1525, %v1524
  %v1527 = vsel %vm147, %v1526, 0
  %1529 = vmatprep.subr.mxu0 0.0
  %1530 = vmatpush1.msra.mxu0 0.0
  %1531 = vmatprep.subr.mxu0 0.0
  %1532 = vmatpush1.msra.mxu0 0.0
  %1533 = vmatprep.subr.mxu0 0.0
  %1534 = vmatpush1.msra.mxu0 0.0
  %1535 = vmatprep.subr.mxu0 0.0
  %1536 = vmatpush1.msra.mxu0 0.0
  %1537 = vmatprep.subr.mxu0 0.0
  %1538 = vmatpush1.msra.mxu0 0.0
  %1539 = vmatprep.subr.mxu0 0.0
  %1540 = vmatpush1.msra.mxu0 0.0
  %1541 = vmatprep.subr.mxu0 0.0
  %1542 = vmatpush1.msra.mxu0 0.0
  %1543 = vmatprep.subr.mxu0 0.0
  %1544 = vmatpush1.msra.mxu0 0.0
  %1545 = vmatprep.subr.mxu0 0.0
  %1546 = vmatpush1.msra.mxu0 0.0
  %1547 = vmatprep.subr.mxu0 0.0
  %1548 = vmatpush1.msra.mxu0 0.0
  %1549 = vmatprep.subr.mxu0 0.0
  %1550 = vmatpush1.msra.mxu0 0.0
  %1551 = vmatprep.subr.mxu0 0.0
  %1552 = vmatpush1.msra.mxu0 0.0
  %1553 = vmatprep.subr.mxu0 %v62
  %1554 = vmatpush1.msra.mxu0 %v61
  %1555 = vmatprep.subr.mxu0 %v60
  %1556 = vmatpush1.msra.mxu0 %v59
  %1557 = vmatprep.subr.mxu0 %v58
  %1558 = vmatpush1.msra.mxu0 %v57
  %1559 = vmatprep.subr.mxu0 %v56
  %1560 = vmatpush1.msra.mxu0 %v55
  %1561 = vmatprep.subr.mxu0 0.0
  %1562 = vmatpush2.msra.mxu0 0.0
  %1563 = vmatprep.subr.mxu0 0.0
  %1564 = vmatpush2.msra.mxu0 0.0
  %1565 = vmatprep.subr.mxu0 0.0
  %1566 = vmatpush2.msra.mxu0 0.0
  %1567 = vmatprep.subr.mxu0 0.0
  %1568 = vmatpush2.msra.mxu0 0.0
  %1569 = vmatprep.subr.mxu0 0.0
  %1570 = vmatpush2.msra.mxu0 0.0
  %1571 = vmatprep.subr.mxu0 0.0
  %1572 = vmatpush2.msra.mxu0 0.0
  %1573 = vmatprep.subr.mxu0 0.0
  %1574 = vmatpush2.msra.mxu0 0.0
  %1575 = vmatprep.subr.mxu0 0.0
  %1576 = vmatpush2.msra.mxu0 0.0
  %1577 = vmatprep.subr.mxu0 0.0
  %1578 = vmatpush2.msra.mxu0 0.0
  %1579 = vmatprep.subr.mxu0 0.0
  %1580 = vmatpush2.msra.mxu0 0.0
  %1581 = vmatprep.subr.mxu0 0.0
  %1582 = vmatpush2.msra.mxu0 0.0
  %1583 = vmatprep.subr.mxu0 0.0
  %1584 = vmatpush2.msra.mxu0 0.0
  %1585 = vmatprep.subr.mxu0 0.0
  %1586 = vmatpush2.msra.mxu0 0.0
  %1587 = vmatprep.subr.mxu0 0.0
  %1588 = vmatpush2.msra.mxu0 0.0
  %1589 = vmatprep.subr.mxu0 0.0
  %1590 = vmatpush2.msra.mxu0 0.0
  %1591 = vmatprep.subr.mxu0 0.0
  %1592 = vmatpush2.msra.mxu0 0.0
  %1593 = vmatprep.mubr.f32.mxu0 0.0
  %1594 = vmatmul.mubr.f32.gmra.mxu0 %v1527
  %v1595 = vpop.f32.mrf.mxu0
  %v1596 = vadd.f32 %v233, %v1595
  %v1597 = vpop.f32.mrf.mxu0
  %v1598 = vadd.f32 %v237, %v1597
  %1599 = vdwg.mxu0
  %1601 = vrot.lane.b32.xlu0 %v1377, 64
  %v1602 = vpop.permute.xlu0 %1601
  %v1603 = vsel %vm346, %v1602, 0
  %1605 = vmatprep.subr.mxu0 0.0
  %1606 = vmatpush1.msra.mxu0 0.0
  %1607 = vmatprep.subr.mxu0 0.0
  %1608 = vmatpush1.msra.mxu0 0.0
  %1609 = vmatprep.subr.mxu0 0.0
  %1610 = vmatpush1.msra.mxu0 0.0
  %1611 = vmatprep.subr.mxu0 0.0
  %1612 = vmatpush1.msra.mxu0 0.0
  %1613 = vmatprep.subr.mxu0 0.0
  %1614 = vmatpush1.msra.mxu0 0.0
  %1615 = vmatprep.subr.mxu0 0.0
  %1616 = vmatpush1.msra.mxu0 0.0
  %1617 = vmatprep.subr.mxu0 0.0
  %1618 = vmatpush1.msra.mxu0 0.0
  %1619 = vmatprep.subr.mxu0 0.0
  %1620 = vmatpush1.msra.mxu0 0.0
  %1621 = vmatprep.subr.mxu0 %v78
  %1622 = vmatpush1.msra.mxu0 %v77
  %1623 = vmatprep.subr.mxu0 %v76
  %1624 = vmatpush1.msra.mxu0 %v75
  %1625 = vmatprep.subr.mxu0 %v74
  %1626 = vmatpush1.msra.mxu0 %v73
  %1627 = vmatprep.subr.mxu0 %v72
  %1628 = vmatpush1.msra.mxu0 %v71
  %1629 = vmatprep.subr.mxu0 %v70
  %1630 = vmatpush1.msra.mxu0 %v69
  %1631 = vmatprep.subr.mxu0 %v68
  %1632 = vmatpush1.msra.mxu0 %v67
  %1633 = vmatprep.subr.mxu0 %v66
  %1634 = vmatpush1.msra.mxu0 %v65
  %1635 = vmatprep.subr.mxu0 %v64
  %1636 = vmatpush1.msra.mxu0 %v63
  %1637 = vmatprep.subr.mxu0 0.0
  %1638 = vmatpush2.msra.mxu0 0.0
  %1639 = vmatprep.subr.mxu0 0.0
  %1640 = vmatpush2.msra.mxu0 0.0
  %1641 = vmatprep.subr.mxu0 0.0
  %1642 = vmatpush2.msra.mxu0 0.0
  %1643 = vmatprep.subr.mxu0 0.0
  %1644 = vmatpush2.msra.mxu0 0.0
  %1645 = vmatprep.subr.mxu0 0.0
  %1646 = vmatpush2.msra.mxu0 0.0
  %1647 = vmatprep.subr.mxu0 0.0
  %1648 = vmatpush2.msra.mxu0 0.0
  %1649 = vmatprep.subr.mxu0 0.0
  %1650 = vmatpush2.msra.mxu0 0.0
  %1651 = vmatprep.subr.mxu0 0.0
  %1652 = vmatpush2.msra.mxu0 0.0
  %1653 = vmatprep.subr.mxu0 0.0
  %1654 = vmatpush2.msra.mxu0 0.0
  %1655 = vmatprep.subr.mxu0 0.0
  %1656 = vmatpush2.msra.mxu0 0.0
  %1657 = vmatprep.subr.mxu0 0.0
  %1658 = vmatpush2.msra.mxu0 0.0
  %1659 = vmatprep.subr.mxu0 0.0
  %1660 = vmatpush2.msra.mxu0 0.0
  %1661 = vmatprep.subr.mxu0 0.0
  %1662 = vmatpush2.msra.mxu0 0.0
  %1663 = vmatprep.subr.mxu0 0.0
  %1664 = vmatpush2.msra.mxu0 0.0
  %1665 = vmatprep.subr.mxu0 0.0
  %1666 = vmatpush2.msra.mxu0 0.0
  %1667 = vmatprep.subr.mxu0 0.0
  %1668 = vmatpush2.msra.mxu0 0.0
  %1669 = vmatprep.mubr.f32.mxu0 0.0
  %1670 = vmatmul.mubr.f32.gmra.mxu0 %v1603
  %v1671 = vpop.f32.mrf.mxu0
  %v1672 = vadd.f32 %v339, %v1671
  %v1673 = vpop.f32.mrf.mxu0
  %v1674 = vadd.f32 %v343, %v1673
  %1675 = vdwg.mxu0
  %v1676 = vadd.f32 %v1493, %v1672
  %v1677 = vxor.u32 %v1676, 2147483648
  %v1678 = vmul.f32 %v1677, 1.442695
  %v1679 = vpow.pop %v1678
  %v1680 = vadd.f32 %v1679, 1.0
  %v1681 = vrcp.pop %v1680
  %v1682 = vmul.f32 1.0, %v1681
  %v1683 = vmul.f32 %v1682, %v1674
  %v1684 = vadd.f32 %v1495, %v1683
  %v1685 = vtanh.pop %v1684
  %v1686 = vsub.f32 1.0, %v1682
  %1688 = vrot.lane.b32.xlu0 %v1685, 64
  %v1689 = vpop.permute.xlu0 %1688
  %v1691 = vmul.f32 %v1686, %v1689
  %v1692 = vmul.f32 %v1682, %v1377
  %v1693 = vadd.f32 %v1691, %v1692
  %1695 = vrot.lane.b32.xlu0 %v1383, 64
  %v1696 = vpop.permute.xlu0 %1695
  %v1697 = vsel %vm346, %v1696, 0
  %1699 = vmatprep.subr.mxu0 0.0
  %1700 = vmatpush1.msra.mxu0 0.0
  %1701 = vmatprep.subr.mxu0 0.0
  %1702 = vmatpush1.msra.mxu0 0.0
  %1703 = vmatprep.subr.mxu0 0.0
  %1704 = vmatpush1.msra.mxu0 0.0
  %1705 = vmatprep.subr.mxu0 0.0
  %1706 = vmatpush1.msra.mxu0 0.0
  %1707 = vmatprep.subr.mxu0 0.0
  %1708 = vmatpush1.msra.mxu0 0.0
  %1709 = vmatprep.subr.mxu0 0.0
  %1710 = vmatpush1.msra.mxu0 0.0
  %1711 = vmatprep.subr.mxu0 0.0
  %1712 = vmatpush1.msra.mxu0 0.0
  %1713 = vmatprep.subr.mxu0 0.0
  %1714 = vmatpush1.msra.mxu0 0.0
  %1715 = vmatprep.subr.mxu0 %v94
  %1716 = vmatpush1.msra.mxu0 %v93
  %1717 = vmatprep.subr.mxu0 %v92
  %1718 = vmatpush1.msra.mxu0 %v91
  %1719 = vmatprep.subr.mxu0 %v90
  %1720 = vmatpush1.msra.mxu0 %v89
  %1721 = vmatprep.subr.mxu0 %v88
  %1722 = vmatpush1.msra.mxu0 %v87
  %1723 = vmatprep.subr.mxu0 %v86
  %1724 = vmatpush1.msra.mxu0 %v85
  %1725 = vmatprep.subr.mxu0 %v84
  %1726 = vmatpush1.msra.mxu0 %v83
  %1727 = vmatprep.subr.mxu0 %v82
  %1728 = vmatpush1.msra.mxu0 %v81
  %1729 = vmatprep.subr.mxu0 %v80
  %1730 = vmatpush1.msra.mxu0 %v79
  %1731 = vmatprep.subr.mxu0 0.0
  %1732 = vmatpush2.msra.mxu0 0.0
  %1733 = vmatprep.subr.mxu0 0.0
  %1734 = vmatpush2.msra.mxu0 0.0
  %1735 = vmatprep.subr.mxu0 0.0
  %1736 = vmatpush2.msra.mxu0 0.0
  %1737 = vmatprep.subr.mxu0 0.0
  %1738 = vmatpush2.msra.mxu0 0.0
  %1739 = vmatprep.subr.mxu0 0.0
  %1740 = vmatpush2.msra.mxu0 0.0
  %1741 = vmatprep.subr.mxu0 0.0
  %1742 = vmatpush2.msra.mxu0 0.0
  %1743 = vmatprep.subr.mxu0 0.0
  %1744 = vmatpush2.msra.mxu0 0.0
  %1745 = vmatprep.subr.mxu0 0.0
  %1746 = vmatpush2.msra.mxu0 0.0
  %1747 = vmatprep.subr.mxu0 0.0
  %1748 = vmatpush2.msra.mxu0 0.0
  %1749 = vmatprep.subr.mxu0 0.0
  %1750 = vmatpush2.msra.mxu0 0.0
  %1751 = vmatprep.subr.mxu0 0.0
  %1752 = vmatpush2.msra.mxu0 0.0
  %1753 = vmatprep.subr.mxu0 0.0
  %1754 = vmatpush2.msra.mxu0 0.0
  %1755 = vmatprep.subr.mxu0 0.0
  %1756 = vmatpush2.msra.mxu0 0.0
  %1757 = vmatprep.subr.mxu0 0.0
  %1758 = vmatpush2.msra.mxu0 0.0
  %1759 = vmatprep.subr.mxu0 0.0
  %1760 = vmatpush2.msra.mxu0 0.0
  %1761 = vmatprep.subr.mxu0 0.0
  %1762 = vmatpush2.msra.mxu0 0.0
  %1763 = vmatprep.mubr.f32.mxu0 0.0
  %1764 = vmatmul.mubr.f32.gmra.mxu0 %v1697
  %v1765 = vpop.f32.mrf.mxu0
  %v1766 = vadd.f32 %v443, %v1765
  %v1767 = vpop.f32.mrf.mxu0
  %v1768 = vadd.f32 %v447, %v1767
  %1769 = vdwg.mxu0
  %v1770 = vadd.f32 %v1596, %v1766
  %v1771 = vxor.u32 %v1770, 2147483648
  %v1772 = vmul.f32 %v1771, 1.442695
  %v1773 = vpow.pop %v1772
  %v1774 = vadd.f32 %v1773, 1.0
  %v1775 = vrcp.pop %v1774
  %v1776 = vmul.f32 1.0, %v1775
  %v1777 = vmul.f32 %v1776, %v1768
  %v1778 = vadd.f32 %v1598, %v1777
  %v1779 = vtanh.pop %v1778
  %v1780 = vsub.f32 1.0, %v1776
  %1782 = vrot.lane.b32.xlu0 %v1779, 64
  %v1783 = vpop.permute.xlu0 %1782
  %v1785 = vmul.f32 %v1780, %v1783
  %v1786 = vmul.f32 %v1776, %v1383
  %v1787 = vadd.f32 %v1785, %v1786
  %vm1788 = vcmp.gt.s32.totalorder %v46, 3
  %vm1789 = vcmp.gt.s32.totalorder %v46, 4
  %v1790 = vsel %vm1788, 1, 0
  %1791 = vset.pattern.permute.xlu0 0
  %1792 = vperm.xlu0 %1791, %v1790
  %v1793 = vpop.permute.xlu0 %1792
  %vm1794 = vcmp.eq.s32.totalorder %v1793, 1
  %v1795 = vsel %vm1794, %v1693, %v1377
  %v1796 = vsel %vm1789, 1, 0
  %1797 = vset.pattern.permute.xlu0 0
  %1798 = vperm.xlu0 %1797, %v1796
  %v1799 = vpop.permute.xlu0 %1798
  %vm1800 = vcmp.eq.s32.totalorder %v1799, 1
  %v1801 = vsel %vm1800, %v1787, %v1383
  %v1802 = vsel %vm1794, %v1693, 0.0
  %1804 = vrot.lane.b32.xlu0 %v1802, 64
  %v1805 = vpop.permute.xlu0 %1804
  %s1807 = scalar_lea.vmem [#allocation2], 24
  %1808 = vst.msk [vmem:[%s1807] sm:$0xff] %vm346, %v1805
  %v1809 = vsel %vm1800, %v1787, 0.0
  %s1810 = scalar_lea.vmem [#allocation2], 32
  %1811 = vst.msk [vmem:[%s1810] sm:$0xff] %vm559, %v1809
  %v1812 = vld [vmem:[%s0 + $0x4] sm:$0x1]
  %v1813 = vld [vmem:[%s0 + $0xc] sm:$0x1]
  %v1814 = vld [vmem:[%s0 + $0x14] sm:$0x1]
  %v1815 = vld [vmem:[%s0 + $0x1c] sm:$0x1]
  %v1816 = vld [vmem:[%s0 + $0x24] sm:$0x1]
  %v1817 = vld [vmem:[%s0 + $0x2c] sm:$0x1]
  %v1818 = vld [vmem:[%s0 + $0x34] sm:$0x1]
  %v1819 = vld [vmem:[%s0 + $0x3c] sm:$0x1]
  %v1828 = vrot.slane %v1813, 7
  %v1829 = vsel %vm127, %v1828, %v1812
  %v1830 = vrot.slane %v1814, 6
  %v1831 = vsel %vm130, %v1830, %v1829
  %v1832 = vrot.slane %v1815, 5
  %v1833 = vsel %vm133, %v1832, %v1831
  %v1834 = vrot.slane %v1816, 4
  %v1835 = vsel %vm136, %v1834, %v1833
  %v1836 = vrot.slane %v1817, 3
  %v1837 = vsel %vm139, %v1836, %v1835
  %v1838 = vrot.slane %v1818, 2
  %v1839 = vsel %vm142, %v1838, %v1837
  %v1840 = vrot.slane %v1819, 1
  %v1841 = vsel %vm145, %v1840, %v1839
  %v1842 = vsel %vm147, %v1841, 0
  %1844 = vmatprep.subr.mxu0 0.0
  %1845 = vmatpush1.msra.mxu0 0.0
  %1846 = vmatprep.subr.mxu0 0.0
  %1847 = vmatpush1.msra.mxu0 0.0
  %1848 = vmatprep.subr.mxu0 0.0
  %1849 = vmatpush1.msra.mxu0 0.0
  %1850 = vmatprep.subr.mxu0 0.0
  %1851 = vmatpush1.msra.mxu0 0.0
  %1852 = vmatprep.subr.mxu0 0.0
  %1853 = vmatpush1.msra.mxu0 0.0
  %1854 = vmatprep.subr.mxu0 0.0
  %1855 = vmatpush1.msra.mxu0 0.0
  %1856 = vmatprep.subr.mxu0 0.0
  %1857 = vmatpush1.msra.mxu0 0.0
  %1858 = vmatprep.subr.mxu0 0.0
  %1859 = vmatpush1.msra.mxu0 0.0
  %1860 = vmatprep.subr.mxu0 0.0
  %1861 = vmatpush1.msra.mxu0 0.0
  %1862 = vmatprep.subr.mxu0 0.0
  %1863 = vmatpush1.msra.mxu0 0.0
  %1864 = vmatprep.subr.mxu0 0.0
  %1865 = vmatpush1.msra.mxu0 0.0
  %1866 = vmatprep.subr.mxu0 0.0
  %1867 = vmatpush1.msra.mxu0 0.0
  %1868 = vmatprep.subr.mxu0 %v54
  %1869 = vmatpush1.msra.mxu0 %v53
  %1870 = vmatprep.subr.mxu0 %v52
  %1871 = vmatpush1.msra.mxu0 %v51
  %1872 = vmatprep.subr.mxu0 %v50
  %1873 = vmatpush1.msra.mxu0 %v49
  %1874 = vmatprep.subr.mxu0 %v48
  %1875 = vmatpush1.msra.mxu0 %v47
  %1876 = vmatprep.subr.mxu0 0.0
  %1877 = vmatpush2.msra.mxu0 0.0
  %1878 = vmatprep.subr.mxu0 0.0
  %1879 = vmatpush2.msra.mxu0 0.0
  %1880 = vmatprep.subr.mxu0 0.0
  %1881 = vmatpush2.msra.mxu0 0.0
  %1882 = vmatprep.subr.mxu0 0.0
  %1883 = vmatpush2.msra.mxu0 0.0
  %1884 = vmatprep.subr.mxu0 0.0
  %1885 = vmatpush2.msra.mxu0 0.0
  %1886 = vmatprep.subr.mxu0 0.0
  %1887 = vmatpush2.msra.mxu0 0.0
  %1888 = vmatprep.subr.mxu0 0.0
  %1889 = vmatpush2.msra.mxu0 0.0
  %1890 = vmatprep.subr.mxu0 0.0
  %1891 = vmatpush2.msra.mxu0 0.0
  %1892 = vmatprep.subr.mxu0 0.0
  %1893 = vmatpush2.msra.mxu0 0.0
  %1894 = vmatprep.subr.mxu0 0.0
  %1895 = vmatpush2.msra.mxu0 0.0
  %1896 = vmatprep.subr.mxu0 0.0
  %1897 = vmatpush2.msra.mxu0 0.0
  %1898 = vmatprep.subr.mxu0 0.0
  %1899 = vmatpush2.msra.mxu0 0.0
  %1900 = vmatprep.subr.mxu0 0.0
  %1901 = vmatpush2.msra.mxu0 0.0
  %1902 = vmatprep.subr.mxu0 0.0
  %1903 = vmatpush2.msra.mxu0 0.0
  %1904 = vmatprep.subr.mxu0 0.0
  %1905 = vmatpush2.msra.mxu0 0.0
  %1906 = vmatprep.subr.mxu0 0.0
  %1907 = vmatpush2.msra.mxu0 0.0
  %1908 = vmatprep.mubr.f32.mxu0 0.0
  %1909 = vmatmul.mubr.f32.gmra.mxu0 %v1842
  %v1910 = vpop.f32.mrf.mxu0
  %v1911 = vadd.f32 %v111, %v1910
  %v1912 = vpop.f32.mrf.mxu0
  %v1913 = vadd.f32 %v115, %v1912
  %1914 = vdwg.mxu0
  %v1915 = vld [vmem:[%s0 + $0x3] sm:$0x1]
  %v1916 = vld [vmem:[%s0 + $0xb] sm:$0x1]
  %v1917 = vld [vmem:[%s0 + $0x13] sm:$0x1]
  %v1918 = vld [vmem:[%s0 + $0x1b] sm:$0x1]
  %v1919 = vld [vmem:[%s0 + $0x23] sm:$0x1]
  %v1920 = vld [vmem:[%s0 + $0x2b] sm:$0x1]
  %v1921 = vld [vmem:[%s0 + $0x33] sm:$0x1]
  %v1922 = vld [vmem:[%s0 + $0x3b] sm:$0x1]
  %v1931 = vrot.slane %v1916, 7
  %v1932 = vsel %vm127, %v1931, %v1915
  %v1933 = vrot.slane %v1917, 6
  %v1934 = vsel %vm130, %v1933, %v1932
  %v1935 = vrot.slane %v1918, 5
  %v1936 = vsel %vm133, %v1935, %v1934
  %v1937 = vrot.slane %v1919, 4
  %v1938 = vsel %vm136, %v1937, %v1936
  %v1939 = vrot.slane %v1920, 3
  %v1940 = vsel %vm139, %v1939, %v1938
  %v1941 = vrot.slane %v1921, 2
  %v1942 = vsel %vm142, %v1941, %v1940
  %v1943 = vrot.slane %v1922, 1
  %v1944 = vsel %vm145, %v1943, %v1942
  %v1945 = vsel %vm147, %v1944, 0
  %1947 = vmatprep.subr.mxu0 0.0
  %1948 = vmatpush1.msra.mxu0 0.0
  %1949 = vmatprep.subr.mxu0 0.0
  %1950 = vmatpush1.msra.mxu0 0.0
  %1951 = vmatprep.subr.mxu0 0.0
  %1952 = vmatpush1.msra.mxu0 0.0
  %1953 = vmatprep.subr.mxu0 0.0
  %1954 = vmatpush1.msra.mxu0 0.0
  %1955 = vmatprep.subr.mxu0 0.0
  %1956 = vmatpush1.msra.mxu0 0.0
  %1957 = vmatprep.subr.mxu0 0.0
  %1958 = vmatpush1.msra.mxu0 0.0
  %1959 = vmatprep.subr.mxu0 0.0
  %1960 = vmatpush1.msra.mxu0 0.0
  %1961 = vmatprep.subr.mxu0 0.0
  %1962 = vmatpush1.msra.mxu0 0.0
  %1963 = vmatprep.subr.mxu0 0.0
  %1964 = vmatpush1.msra.mxu0 0.0
  %1965 = vmatprep.subr.mxu0 0.0
  %1966 = vmatpush1.msra.mxu0 0.0
  %1967 = vmatprep.subr.mxu0 0.0
  %1968 = vmatpush1.msra.mxu0 0.0
  %1969 = vmatprep.subr.mxu0 0.0
  %1970 = vmatpush1.msra.mxu0 0.0
  %1971 = vmatprep.subr.mxu0 %v62
  %1972 = vmatpush1.msra.mxu0 %v61
  %1973 = vmatprep.subr.mxu0 %v60
  %1974 = vmatpush1.msra.mxu0 %v59
  %1975 = vmatprep.subr.mxu0 %v58
  %1976 = vmatpush1.msra.mxu0 %v57
  %1977 = vmatprep.subr.mxu0 %v56
  %1978 = vmatpush1.msra.mxu0 %v55
  %1979 = vmatprep.subr.mxu0 0.0
  %1980 = vmatpush2.msra.mxu0 0.0
  %1981 = vmatprep.subr.mxu0 0.0
  %1982 = vmatpush2.msra.mxu0 0.0
  %1983 = vmatprep.subr.mxu0 0.0
  %1984 = vmatpush2.msra.mxu0 0.0
  %1985 = vmatprep.subr.mxu0 0.0
  %1986 = vmatpush2.msra.mxu0 0.0
  %1987 = vmatprep.subr.mxu0 0.0
  %1988 = vmatpush2.msra.mxu0 0.0
  %1989 = vmatprep.subr.mxu0 0.0
  %1990 = vmatpush2.msra.mxu0 0.0
  %1991 = vmatprep.subr.mxu0 0.0
  %1992 = vmatpush2.msra.mxu0 0.0
  %1993 = vmatprep.subr.mxu0 0.0
  %1994 = vmatpush2.msra.mxu0 0.0
  %1995 = vmatprep.subr.mxu0 0.0
  %1996 = vmatpush2.msra.mxu0 0.0
  %1997 = vmatprep.subr.mxu0 0.0
  %1998 = vmatpush2.msra.mxu0 0.0
  %1999 = vmatprep.subr.mxu0 0.0
  %2000 = vmatpush2.msra.mxu0 0.0
  %2001 = vmatprep.subr.mxu0 0.0
  %2002 = vmatpush2.msra.mxu0 0.0
  %2003 = vmatprep.subr.mxu0 0.0
  %2004 = vmatpush2.msra.mxu0 0.0
  %2005 = vmatprep.subr.mxu0 0.0
  %2006 = vmatpush2.msra.mxu0 0.0
  %2007 = vmatprep.subr.mxu0 0.0
  %2008 = vmatpush2.msra.mxu0 0.0
  %2009 = vmatprep.subr.mxu0 0.0
  %2010 = vmatpush2.msra.mxu0 0.0
  %2011 = vmatprep.mubr.f32.mxu0 0.0
  %2012 = vmatmul.mubr.f32.gmra.mxu0 %v1945
  %v2013 = vpop.f32.mrf.mxu0
  %v2014 = vadd.f32 %v233, %v2013
  %v2015 = vpop.f32.mrf.mxu0
  %v2016 = vadd.f32 %v237, %v2015
  %2017 = vdwg.mxu0
  %2019 = vrot.lane.b32.xlu0 %v1795, 64
  %v2020 = vpop.permute.xlu0 %2019
  %v2021 = vsel %vm346, %v2020, 0
  %2023 = vmatprep.subr.mxu0 0.0
  %2024 = vmatpush1.msra.mxu0 0.0
  %2025 = vmatprep.subr.mxu0 0.0
  %2026 = vmatpush1.msra.mxu0 0.0
  %2027 = vmatprep.subr.mxu0 0.0
  %2028 = vmatpush1.msra.mxu0 0.0
  %2029 = vmatprep.subr.mxu0 0.0
  %2030 = vmatpush1.msra.mxu0 0.0
  %2031 = vmatprep.subr.mxu0 0.0
  %2032 = vmatpush1.msra.mxu0 0.0
  %2033 = vmatprep.subr.mxu0 0.0
  %2034 = vmatpush1.msra.mxu0 0.0
  %2035 = vmatprep.subr.mxu0 0.0
  %2036 = vmatpush1.msra.mxu0 0.0
  %2037 = vmatprep.subr.mxu0 0.0
  %2038 = vmatpush1.msra.mxu0 0.0
  %2039 = vmatprep.subr.mxu0 %v78
  %2040 = vmatpush1.msra.mxu0 %v77
  %2041 = vmatprep.subr.mxu0 %v76
  %2042 = vmatpush1.msra.mxu0 %v75
  %2043 = vmatprep.subr.mxu0 %v74
  %2044 = vmatpush1.msra.mxu0 %v73
  %2045 = vmatprep.subr.mxu0 %v72
  %2046 = vmatpush1.msra.mxu0 %v71
  %2047 = vmatprep.subr.mxu0 %v70
  %2048 = vmatpush1.msra.mxu0 %v69
  %2049 = vmatprep.subr.mxu0 %v68
  %2050 = vmatpush1.msra.mxu0 %v67
  %2051 = vmatprep.subr.mxu0 %v66
  %2052 = vmatpush1.msra.mxu0 %v65
  %2053 = vmatprep.subr.mxu0 %v64
  %2054 = vmatpush1.msra.mxu0 %v63
  %2055 = vmatprep.subr.mxu0 0.0
  %2056 = vmatpush2.msra.mxu0 0.0
  %2057 = vmatprep.subr.mxu0 0.0
  %2058 = vmatpush2.msra.mxu0 0.0
  %2059 = vmatprep.subr.mxu0 0.0
  %2060 = vmatpush2.msra.mxu0 0.0
  %2061 = vmatprep.subr.mxu0 0.0
  %2062 = vmatpush2.msra.mxu0 0.0
  %2063 = vmatprep.subr.mxu0 0.0
  %2064 = vmatpush2.msra.mxu0 0.0
  %2065 = vmatprep.subr.mxu0 0.0
  %2066 = vmatpush2.msra.mxu0 0.0
  %2067 = vmatprep.subr.mxu0 0.0
  %2068 = vmatpush2.msra.mxu0 0.0
  %2069 = vmatprep.subr.mxu0 0.0
  %2070 = vmatpush2.msra.mxu0 0.0
  %2071 = vmatprep.subr.mxu0 0.0
  %2072 = vmatpush2.msra.mxu0 0.0
  %2073 = vmatprep.subr.mxu0 0.0
  %2074 = vmatpush2.msra.mxu0 0.0
  %2075 = vmatprep.subr.mxu0 0.0
  %2076 = vmatpush2.msra.mxu0 0.0
  %2077 = vmatprep.subr.mxu0 0.0
  %2078 = vmatpush2.msra.mxu0 0.0
  %2079 = vmatprep.subr.mxu0 0.0
  %2080 = vmatpush2.msra.mxu0 0.0
  %2081 = vmatprep.subr.mxu0 0.0
  %2082 = vmatpush2.msra.mxu0 0.0
  %2083 = vmatprep.subr.mxu0 0.0
  %2084 = vmatpush2.msra.mxu0 0.0
  %2085 = vmatprep.subr.mxu0 0.0
  %2086 = vmatpush2.msra.mxu0 0.0
  %2087 = vmatprep.mubr.f32.mxu0 0.0
  %2088 = vmatmul.mubr.f32.gmra.mxu0 %v2021
  %v2089 = vpop.f32.mrf.mxu0
  %v2090 = vadd.f32 %v339, %v2089
  %v2091 = vpop.f32.mrf.mxu0
  %v2092 = vadd.f32 %v343, %v2091
  %2093 = vdwg.mxu0
  %v2094 = vadd.f32 %v1911, %v2090
  %v2095 = vxor.u32 %v2094, 2147483648
  %v2096 = vmul.f32 %v2095, 1.442695
  %v2097 = vpow.pop %v2096
  %v2098 = vadd.f32 %v2097, 1.0
  %v2099 = vrcp.pop %v2098
  %v2100 = vmul.f32 1.0, %v2099
  %v2101 = vmul.f32 %v2100, %v2092
  %v2102 = vadd.f32 %v1913, %v2101
  %v2103 = vtanh.pop %v2102
  %v2104 = vsub.f32 1.0, %v2100
  %2106 = vrot.lane.b32.xlu0 %v2103, 64
  %v2107 = vpop.permute.xlu0 %2106
  %v2109 = vmul.f32 %v2104, %v2107
  %v2110 = vmul.f32 %v2100, %v1795
  %v2111 = vadd.f32 %v2109, %v2110
  %2113 = vrot.lane.b32.xlu0 %v1801, 64
  %v2114 = vpop.permute.xlu0 %2113
  %v2115 = vsel %vm346, %v2114, 0
  %2117 = vmatprep.subr.mxu0 0.0
  %2118 = vmatpush1.msra.mxu0 0.0
  %2119 = vmatprep.subr.mxu0 0.0
  %2120 = vmatpush1.msra.mxu0 0.0
  %2121 = vmatprep.subr.mxu0 0.0
  %2122 = vmatpush1.msra.mxu0 0.0
  %2123 = vmatprep.subr.mxu0 0.0
  %2124 = vmatpush1.msra.mxu0 0.0
  %2125 = vmatprep.subr.mxu0 0.0
  %2126 = vmatpush1.msra.mxu0 0.0
  %2127 = vmatprep.subr.mxu0 0.0
  %2128 = vmatpush1.msra.mxu0 0.0
  %2129 = vmatprep.subr.mxu0 0.0
  %2130 = vmatpush1.msra.mxu0 0.0
  %2131 = vmatprep.subr.mxu0 0.0
  %2132 = vmatpush1.msra.mxu0 0.0
  %2133 = vmatprep.subr.mxu0 %v94
  %2134 = vmatpush1.msra.mxu0 %v93
  %2135 = vmatprep.subr.mxu0 %v92
  %2136 = vmatpush1.msra.mxu0 %v91
  %2137 = vmatprep.subr.mxu0 %v90
  %2138 = vmatpush1.msra.mxu0 %v89
  %2139 = vmatprep.subr.mxu0 %v88
  %2140 = vmatpush1.msra.mxu0 %v87
  %2141 = vmatprep.subr.mxu0 %v86
  %2142 = vmatpush1.msra.mxu0 %v85
  %2143 = vmatprep.subr.mxu0 %v84
  %2144 = vmatpush1.msra.mxu0 %v83
  %2145 = vmatprep.subr.mxu0 %v82
  %2146 = vmatpush1.msra.mxu0 %v81
  %2147 = vmatprep.subr.mxu0 %v80
  %2148 = vmatpush1.msra.mxu0 %v79
  %2149 = vmatprep.subr.mxu0 0.0
  %2150 = vmatpush2.msra.mxu0 0.0
  %2151 = vmatprep.subr.mxu0 0.0
  %2152 = vmatpush2.msra.mxu0 0.0
  %2153 = vmatprep.subr.mxu0 0.0
  %2154 = vmatpush2.msra.mxu0 0.0
  %2155 = vmatprep.subr.mxu0 0.0
  %2156 = vmatpush2.msra.mxu0 0.0
  %2157 = vmatprep.subr.mxu0 0.0
  %2158 = vmatpush2.msra.mxu0 0.0
  %2159 = vmatprep.subr.mxu0 0.0
  %2160 = vmatpush2.msra.mxu0 0.0
  %2161 = vmatprep.subr.mxu0 0.0
  %2162 = vmatpush2.msra.mxu0 0.0
  %2163 = vmatprep.subr.mxu0 0.0
  %2164 = vmatpush2.msra.mxu0 0.0
  %2165 = vmatprep.subr.mxu0 0.0
  %2166 = vmatpush2.msra.mxu0 0.0
  %2167 = vmatprep.subr.mxu0 0.0
  %2168 = vmatpush2.msra.mxu0 0.0
  %2169 = vmatprep.subr.mxu0 0.0
  %2170 = vmatpush2.msra.mxu0 0.0
  %2171 = vmatprep.subr.mxu0 0.0
  %2172 = vmatpush2.msra.mxu0 0.0
  %2173 = vmatprep.subr.mxu0 0.0
  %2174 = vmatpush2.msra.mxu0 0.0
  %2175 = vmatprep.subr.mxu0 0.0
  %2176 = vmatpush2.msra.mxu0 0.0
  %2177 = vmatprep.subr.mxu0 0.0
  %2178 = vmatpush2.msra.mxu0 0.0
  %2179 = vmatprep.subr.mxu0 0.0
  %2180 = vmatpush2.msra.mxu0 0.0
  %2181 = vmatprep.mubr.f32.mxu0 0.0
  %2182 = vmatmul.mubr.f32.gmra.mxu0 %v2115
  %v2183 = vpop.f32.mrf.mxu0
  %v2184 = vadd.f32 %v443, %v2183
  %v2185 = vpop.f32.mrf.mxu0
  %v2186 = vadd.f32 %v447, %v2185
  %2187 = vdwg.mxu0
  %v2188 = vadd.f32 %v2014, %v2184
  %v2189 = vxor.u32 %v2188, 2147483648
  %v2190 = vmul.f32 %v2189, 1.442695
  %v2191 = vpow.pop %v2190
  %v2192 = vadd.f32 %v2191, 1.0
  %v2193 = vrcp.pop %v2192
  %v2194 = vmul.f32 1.0, %v2193
  %v2195 = vmul.f32 %v2194, %v2186
  %v2196 = vadd.f32 %v2016, %v2195
  %v2197 = vtanh.pop %v2196
  %v2198 = vsub.f32 1.0, %v2194
  %2200 = vrot.lane.b32.xlu0 %v2197, 64
  %v2201 = vpop.permute.xlu0 %2200
  %v2203 = vmul.f32 %v2198, %v2201
  %v2204 = vmul.f32 %v2194, %v1801
  %v2205 = vadd.f32 %v2203, %v2204
  %v2206 = vsel %vm1800, %v2111, %v1795
  %v2207 = vsel %vm1794, %v2205, %v1801
  %v2208 = vsel %vm1800, %v2111, 0.0
  %2210 = vrot.lane.b32.xlu0 %v2208, 64
  %v2211 = vpop.permute.xlu0 %2210
  %2213 = vst.msk [vmem:[%s1810] sm:$0xff] %vm346, %v2211
  %v2214 = vsel %vm1794, %v2205, 0.0
  %2215 = vst.msk [vmem:[%s1807] sm:$0xff] %vm559, %v2214
  %v2216 = vld [vmem:[%s0 + $0x5] sm:$0x1]
  %v2217 = vld [vmem:[%s0 + $0xd] sm:$0x1]
  %v2218 = vld [vmem:[%s0 + $0x15] sm:$0x1]
  %v2219 = vld [vmem:[%s0 + $0x1d] sm:$0x1]
  %v2220 = vld [vmem:[%s0 + $0x25] sm:$0x1]
  %v2221 = vld [vmem:[%s0 + $0x2d] sm:$0x1]
  %v2222 = vld [vmem:[%s0 + $0x35] sm:$0x1]
  %v2223 = vld [vmem:[%s0 + $0x3d] sm:$0x1]
  %v2232 = vrot.slane %v2217, 7
  %v2233 = vsel %vm127, %v2232, %v2216
  %v2234 = vrot.slane %v2218, 6
  %v2235 = vsel %vm130, %v2234, %v2233
  %v2236 = vrot.slane %v2219, 5
  %v2237 = vsel %vm133, %v2236, %v2235
  %v2238 = vrot.slane %v2220, 4
  %v2239 = vsel %vm136, %v2238, %v2237
  %v2240 = vrot.slane %v2221, 3
  %v2241 = vsel %vm139, %v2240, %v2239
  %v2242 = vrot.slane %v2222, 2
  %v2243 = vsel %vm142, %v2242, %v2241
  %v2244 = vrot.slane %v2223, 1
  %v2245 = vsel %vm145, %v2244, %v2243
  %v2246 = vsel %vm147, %v2245, 0
  %2248 = vmatprep.subr.mxu0 0.0
  %2249 = vmatpush1.msra.mxu0 0.0
  %2250 = vmatprep.subr.mxu0 0.0
  %2251 = vmatpush1.msra.mxu0 0.0
  %2252 = vmatprep.subr.mxu0 0.0
  %2253 = vmatpush1.msra.mxu0 0.0
  %2254 = vmatprep.subr.mxu0 0.0
  %2255 = vmatpush1.msra.mxu0 0.0
  %2256 = vmatprep.subr.mxu0 0.0
  %2257 = vmatpush1.msra.mxu0 0.0
  %2258 = vmatprep.subr.mxu0 0.0
  %2259 = vmatpush1.msra.mxu0 0.0
  %2260 = vmatprep.subr.mxu0 0.0
  %2261 = vmatpush1.msra.mxu0 0.0
  %2262 = vmatprep.subr.mxu0 0.0
  %2263 = vmatpush1.msra.mxu0 0.0
  %2264 = vmatprep.subr.mxu0 0.0
  %2265 = vmatpush1.msra.mxu0 0.0
  %2266 = vmatprep.subr.mxu0 0.0
  %2267 = vmatpush1.msra.mxu0 0.0
  %2268 = vmatprep.subr.mxu0 0.0
  %2269 = vmatpush1.msra.mxu0 0.0
  %2270 = vmatprep.subr.mxu0 0.0
  %2271 = vmatpush1.msra.mxu0 0.0
  %2272 = vmatprep.subr.mxu0 %v54
  %2273 = vmatpush1.msra.mxu0 %v53
  %2274 = vmatprep.subr.mxu0 %v52
  %2275 = vmatpush1.msra.mxu0 %v51
  %2276 = vmatprep.subr.mxu0 %v50
  %2277 = vmatpush1.msra.mxu0 %v49
  %2278 = vmatprep.subr.mxu0 %v48
  %2279 = vmatpush1.msra.mxu0 %v47
  %2280 = vmatprep.subr.mxu0 0.0
  %2281 = vmatpush2.msra.mxu0 0.0
  %2282 = vmatprep.subr.mxu0 0.0
  %2283 = vmatpush2.msra.mxu0 0.0
  %2284 = vmatprep.subr.mxu0 0.0
  %2285 = vmatpush2.msra.mxu0 0.0
  %2286 = vmatprep.subr.mxu0 0.0
  %2287 = vmatpush2.msra.mxu0 0.0
  %2288 = vmatprep.subr.mxu0 0.0
  %2289 = vmatpush2.msra.mxu0 0.0
  %2290 = vmatprep.subr.mxu0 0.0
  %2291 = vmatpush2.msra.mxu0 0.0
  %2292 = vmatprep.subr.mxu0 0.0
  %2293 = vmatpush2.msra.mxu0 0.0
  %2294 = vmatprep.subr.mxu0 0.0
  %2295 = vmatpush2.msra.mxu0 0.0
  %2296 = vmatprep.subr.mxu0 0.0
  %2297 = vmatpush2.msra.mxu0 0.0
  %2298 = vmatprep.subr.mxu0 0.0
  %2299 = vmatpush2.msra.mxu0 0.0
  %2300 = vmatprep.subr.mxu0 0.0
  %2301 = vmatpush2.msra.mxu0 0.0
  %2302 = vmatprep.subr.mxu0 0.0
  %2303 = vmatpush2.msra.mxu0 0.0
  %2304 = vmatprep.subr.mxu0 0.0
  %2305 = vmatpush2.msra.mxu0 0.0
  %2306 = vmatprep.subr.mxu0 0.0
  %2307 = vmatpush2.msra.mxu0 0.0
  %2308 = vmatprep.subr.mxu0 0.0
  %2309 = vmatpush2.msra.mxu0 0.0
  %2310 = vmatprep.subr.mxu0 0.0
  %2311 = vmatpush2.msra.mxu0 0.0
  %2312 = vmatprep.mubr.f32.mxu0 0.0
  %2313 = vmatmul.mubr.f32.gmra.mxu0 %v2246
  %v2314 = vpop.f32.mrf.mxu0
  %v2315 = vadd.f32 %v111, %v2314
  %v2316 = vpop.f32.mrf.mxu0
  %v2317 = vadd.f32 %v115, %v2316
  %2318 = vdwg.mxu0
  %v2319 = vld [vmem:[%s0 + $0x2] sm:$0x1]
  %v2320 = vld [vmem:[%s0 + $0xa] sm:$0x1]
  %v2321 = vld [vmem:[%s0 + $0x12] sm:$0x1]
  %v2322 = vld [vmem:[%s0 + $0x1a] sm:$0x1]
  %v2323 = vld [vmem:[%s0 + $0x22] sm:$0x1]
  %v2324 = vld [vmem:[%s0 + $0x2a] sm:$0x1]
  %v2325 = vld [vmem:[%s0 + $0x32] sm:$0x1]
  %v2326 = vld [vmem:[%s0 + $0x3a] sm:$0x1]
  %v2335 = vrot.slane %v2320, 7
  %v2336 = vsel %vm127, %v2335, %v2319
  %v2337 = vrot.slane %v2321, 6
  %v2338 = vsel %vm130, %v2337, %v2336
  %v2339 = vrot.slane %v2322, 5
  %v2340 = vsel %vm133, %v2339, %v2338
  %v2341 = vrot.slane %v2323, 4
  %v2342 = vsel %vm136, %v2341, %v2340
  %v2343 = vrot.slane %v2324, 3
  %v2344 = vsel %vm139, %v2343, %v2342
  %v2345 = vrot.slane %v2325, 2
  %v2346 = vsel %vm142, %v2345, %v2344
  %v2347 = vrot.slane %v2326, 1
  %v2348 = vsel %vm145, %v2347, %v2346
  %v2349 = vsel %vm147, %v2348, 0
  %2351 = vmatprep.subr.mxu0 0.0
  %2352 = vmatpush1.msra.mxu0 0.0
  %2353 = vmatprep.subr.mxu0 0.0
  %2354 = vmatpush1.msra.mxu0 0.0
  %2355 = vmatprep.subr.mxu0 0.0
  %2356 = vmatpush1.msra.mxu0 0.0
  %2357 = vmatprep.subr.mxu0 0.0
  %2358 = vmatpush1.msra.mxu0 0.0
  %2359 = vmatprep.subr.mxu0 0.0
  %2360 = vmatpush1.msra.mxu0 0.0
  %2361 = vmatprep.subr.mxu0 0.0
  %2362 = vmatpush1.msra.mxu0 0.0
  %2363 = vmatprep.subr.mxu0 0.0
  %2364 = vmatpush1.msra.mxu0 0.0
  %2365 = vmatprep.subr.mxu0 0.0
  %2366 = vmatpush1.msra.mxu0 0.0
  %2367 = vmatprep.subr.mxu0 0.0
  %2368 = vmatpush1.msra.mxu0 0.0
  %2369 = vmatprep.subr.mxu0 0.0
  %2370 = vmatpush1.msra.mxu0 0.0
  %2371 = vmatprep.subr.mxu0 0.0
  %2372 = vmatpush1.msra.mxu0 0.0
  %2373 = vmatprep.subr.mxu0 0.0
  %2374 = vmatpush1.msra.mxu0 0.0
  %2375 = vmatprep.subr.mxu0 %v62
  %2376 = vmatpush1.msra.mxu0 %v61
  %2377 = vmatprep.subr.mxu0 %v60
  %2378 = vmatpush1.msra.mxu0 %v59
  %2379 = vmatprep.subr.mxu0 %v58
  %2380 = vmatpush1.msra.mxu0 %v57
  %2381 = vmatprep.subr.mxu0 %v56
  %2382 = vmatpush1.msra.mxu0 %v55
  %2383 = vmatprep.subr.mxu0 0.0
  %2384 = vmatpush2.msra.mxu0 0.0
  %2385 = vmatprep.subr.mxu0 0.0
  %2386 = vmatpush2.msra.mxu0 0.0
  %2387 = vmatprep.subr.mxu0 0.0
  %2388 = vmatpush2.msra.mxu0 0.0
  %2389 = vmatprep.subr.mxu0 0.0
  %2390 = vmatpush2.msra.mxu0 0.0
  %2391 = vmatprep.subr.mxu0 0.0
  %2392 = vmatpush2.msra.mxu0 0.0
  %2393 = vmatprep.subr.mxu0 0.0
  %2394 = vmatpush2.msra.mxu0 0.0
  %2395 = vmatprep.subr.mxu0 0.0
  %2396 = vmatpush2.msra.mxu0 0.0
  %2397 = vmatprep.subr.mxu0 0.0
  %2398 = vmatpush2.msra.mxu0 0.0
  %2399 = vmatprep.subr.mxu0 0.0
  %2400 = vmatpush2.msra.mxu0 0.0
  %2401 = vmatprep.subr.mxu0 0.0
  %2402 = vmatpush2.msra.mxu0 0.0
  %2403 = vmatprep.subr.mxu0 0.0
  %2404 = vmatpush2.msra.mxu0 0.0
  %2405 = vmatprep.subr.mxu0 0.0
  %2406 = vmatpush2.msra.mxu0 0.0
  %2407 = vmatprep.subr.mxu0 0.0
  %2408 = vmatpush2.msra.mxu0 0.0
  %2409 = vmatprep.subr.mxu0 0.0
  %2410 = vmatpush2.msra.mxu0 0.0
  %2411 = vmatprep.subr.mxu0 0.0
  %2412 = vmatpush2.msra.mxu0 0.0
  %2413 = vmatprep.subr.mxu0 0.0
  %2414 = vmatpush2.msra.mxu0 0.0
  %2415 = vmatprep.mubr.f32.mxu0 0.0
  %2416 = vmatmul.mubr.f32.gmra.mxu0 %v2349
  %v2417 = vpop.f32.mrf.mxu0
  %v2418 = vadd.f32 %v233, %v2417
  %v2419 = vpop.f32.mrf.mxu0
  %v2420 = vadd.f32 %v237, %v2419
  %2421 = vdwg.mxu0
  %2423 = vrot.lane.b32.xlu0 %v2206, 64
  %v2424 = vpop.permute.xlu0 %2423
  %v2425 = vsel %vm346, %v2424, 0
  %2427 = vmatprep.subr.mxu0 0.0
  %2428 = vmatpush1.msra.mxu0 0.0
  %2429 = vmatprep.subr.mxu0 0.0
  %2430 = vmatpush1.msra.mxu0 0.0
  %2431 = vmatprep.subr.mxu0 0.0
  %2432 = vmatpush1.msra.mxu0 0.0
  %2433 = vmatprep.subr.mxu0 0.0
  %2434 = vmatpush1.msra.mxu0 0.0
  %2435 = vmatprep.subr.mxu0 0.0
  %2436 = vmatpush1.msra.mxu0 0.0
  %2437 = vmatprep.subr.mxu0 0.0
  %2438 = vmatpush1.msra.mxu0 0.0
  %2439 = vmatprep.subr.mxu0 0.0
  %2440 = vmatpush1.msra.mxu0 0.0
  %2441 = vmatprep.subr.mxu0 0.0
  %2442 = vmatpush1.msra.mxu0 0.0
  %2443 = vmatprep.subr.mxu0 %v78
  %2444 = vmatpush1.msra.mxu0 %v77
  %2445 = vmatprep.subr.mxu0 %v76
  %2446 = vmatpush1.msra.mxu0 %v75
  %2447 = vmatprep.subr.mxu0 %v74
  %2448 = vmatpush1.msra.mxu0 %v73
  %2449 = vmatprep.subr.mxu0 %v72
  %2450 = vmatpush1.msra.mxu0 %v71
  %2451 = vmatprep.subr.mxu0 %v70
  %2452 = vmatpush1.msra.mxu0 %v69
  %2453 = vmatprep.subr.mxu0 %v68
  %2454 = vmatpush1.msra.mxu0 %v67
  %2455 = vmatprep.subr.mxu0 %v66
  %2456 = vmatpush1.msra.mxu0 %v65
  %2457 = vmatprep.subr.mxu0 %v64
  %2458 = vmatpush1.msra.mxu0 %v63
  %2459 = vmatprep.subr.mxu0 0.0
  %2460 = vmatpush2.msra.mxu0 0.0
  %2461 = vmatprep.subr.mxu0 0.0
  %2462 = vmatpush2.msra.mxu0 0.0
  %2463 = vmatprep.subr.mxu0 0.0
  %2464 = vmatpush2.msra.mxu0 0.0
  %2465 = vmatprep.subr.mxu0 0.0
  %2466 = vmatpush2.msra.mxu0 0.0
  %2467 = vmatprep.subr.mxu0 0.0
  %2468 = vmatpush2.msra.mxu0 0.0
  %2469 = vmatprep.subr.mxu0 0.0
  %2470 = vmatpush2.msra.mxu0 0.0
  %2471 = vmatprep.subr.mxu0 0.0
  %2472 = vmatpush2.msra.mxu0 0.0
  %2473 = vmatprep.subr.mxu0 0.0
  %2474 = vmatpush2.msra.mxu0 0.0
  %2475 = vmatprep.subr.mxu0 0.0
  %2476 = vmatpush2.msra.mxu0 0.0
  %2477 = vmatprep.subr.mxu0 0.0
  %2478 = vmatpush2.msra.mxu0 0.0
  %2479 = vmatprep.subr.mxu0 0.0
  %2480 = vmatpush2.msra.mxu0 0.0
  %2481 = vmatprep.subr.mxu0 0.0
  %2482 = vmatpush2.msra.mxu0 0.0
  %2483 = vmatprep.subr.mxu0 0.0
  %2484 = vmatpush2.msra.mxu0 0.0
  %2485 = vmatprep.subr.mxu0 0.0
  %2486 = vmatpush2.msra.mxu0 0.0
  %2487 = vmatprep.subr.mxu0 0.0
  %2488 = vmatpush2.msra.mxu0 0.0
  %2489 = vmatprep.subr.mxu0 0.0
  %2490 = vmatpush2.msra.mxu0 0.0
  %2491 = vmatprep.mubr.f32.mxu0 0.0
  %2492 = vmatmul.mubr.f32.gmra.mxu0 %v2425
  %v2493 = vpop.f32.mrf.mxu0
  %v2494 = vadd.f32 %v339, %v2493
  %v2495 = vpop.f32.mrf.mxu0
  %v2496 = vadd.f32 %v343, %v2495
  %2497 = vdwg.mxu0
  %v2498 = vadd.f32 %v2315, %v2494
  %v2499 = vxor.u32 %v2498, 2147483648
  %v2500 = vmul.f32 %v2499, 1.442695
  %v2501 = vpow.pop %v2500
  %v2502 = vadd.f32 %v2501, 1.0
  %v2503 = vrcp.pop %v2502
  %v2504 = vmul.f32 1.0, %v2503
  %v2505 = vmul.f32 %v2504, %v2496
  %v2506 = vadd.f32 %v2317, %v2505
  %v2507 = vtanh.pop %v2506
  %v2508 = vsub.f32 1.0, %v2504
  %2510 = vrot.lane.b32.xlu0 %v2507, 64
  %v2511 = vpop.permute.xlu0 %2510
  %v2513 = vmul.f32 %v2508, %v2511
  %v2514 = vmul.f32 %v2504, %v2206
  %v2515 = vadd.f32 %v2513, %v2514
  %2517 = vrot.lane.b32.xlu0 %v2207, 64
  %v2518 = vpop.permute.xlu0 %2517
  %v2519 = vsel %vm346, %v2518, 0
  %2521 = vmatprep.subr.mxu0 0.0
  %2522 = vmatpush1.msra.mxu0 0.0
  %2523 = vmatprep.subr.mxu0 0.0
  %2524 = vmatpush1.msra.mxu0 0.0
  %2525 = vmatprep.subr.mxu0 0.0
  %2526 = vmatpush1.msra.mxu0 0.0
  %2527 = vmatprep.subr.mxu0 0.0
  %2528 = vmatpush1.msra.mxu0 0.0
  %2529 = vmatprep.subr.mxu0 0.0
  %2530 = vmatpush1.msra.mxu0 0.0
  %2531 = vmatprep.subr.mxu0 0.0
  %2532 = vmatpush1.msra.mxu0 0.0
  %2533 = vmatprep.subr.mxu0 0.0
  %2534 = vmatpush1.msra.mxu0 0.0
  %2535 = vmatprep.subr.mxu0 0.0
  %2536 = vmatpush1.msra.mxu0 0.0
  %2537 = vmatprep.subr.mxu0 %v94
  %2538 = vmatpush1.msra.mxu0 %v93
  %2539 = vmatprep.subr.mxu0 %v92
  %2540 = vmatpush1.msra.mxu0 %v91
  %2541 = vmatprep.subr.mxu0 %v90
  %2542 = vmatpush1.msra.mxu0 %v89
  %2543 = vmatprep.subr.mxu0 %v88
  %2544 = vmatpush1.msra.mxu0 %v87
  %2545 = vmatprep.subr.mxu0 %v86
  %2546 = vmatpush1.msra.mxu0 %v85
  %2547 = vmatprep.subr.mxu0 %v84
  %2548 = vmatpush1.msra.mxu0 %v83
  %2549 = vmatprep.subr.mxu0 %v82
  %2550 = vmatpush1.msra.mxu0 %v81
  %2551 = vmatprep.subr.mxu0 %v80
  %2552 = vmatpush1.msra.mxu0 %v79
  %2553 = vmatprep.subr.mxu0 0.0
  %2554 = vmatpush2.msra.mxu0 0.0
  %2555 = vmatprep.subr.mxu0 0.0
  %2556 = vmatpush2.msra.mxu0 0.0
  %2557 = vmatprep.subr.mxu0 0.0
  %2558 = vmatpush2.msra.mxu0 0.0
  %2559 = vmatprep.subr.mxu0 0.0
  %2560 = vmatpush2.msra.mxu0 0.0
  %2561 = vmatprep.subr.mxu0 0.0
  %2562 = vmatpush2.msra.mxu0 0.0
  %2563 = vmatprep.subr.mxu0 0.0
  %2564 = vmatpush2.msra.mxu0 0.0
  %2565 = vmatprep.subr.mxu0 0.0
  %2566 = vmatpush2.msra.mxu0 0.0
  %2567 = vmatprep.subr.mxu0 0.0
  %2568 = vmatpush2.msra.mxu0 0.0
  %2569 = vmatprep.subr.mxu0 0.0
  %2570 = vmatpush2.msra.mxu0 0.0
  %2571 = vmatprep.subr.mxu0 0.0
  %2572 = vmatpush2.msra.mxu0 0.0
  %2573 = vmatprep.subr.mxu0 0.0
  %2574 = vmatpush2.msra.mxu0 0.0
  %2575 = vmatprep.subr.mxu0 0.0
  %2576 = vmatpush2.msra.mxu0 0.0
  %2577 = vmatprep.subr.mxu0 0.0
  %2578 = vmatpush2.msra.mxu0 0.0
  %2579 = vmatprep.subr.mxu0 0.0
  %2580 = vmatpush2.msra.mxu0 0.0
  %2581 = vmatprep.subr.mxu0 0.0
  %2582 = vmatpush2.msra.mxu0 0.0
  %2583 = vmatprep.subr.mxu0 0.0
  %2584 = vmatpush2.msra.mxu0 0.0
  %2585 = vmatprep.mubr.f32.mxu0 0.0
  %2586 = vmatmul.mubr.f32.gmra.mxu0 %v2519
  %v2587 = vpop.f32.mrf.mxu0
  %v2588 = vadd.f32 %v443, %v2587
  %v2589 = vpop.f32.mrf.mxu0
  %v2590 = vadd.f32 %v447, %v2589
  %2591 = vdwg.mxu0
  %v2592 = vadd.f32 %v2418, %v2588
  %v2593 = vxor.u32 %v2592, 2147483648
  %v2594 = vmul.f32 %v2593, 1.442695
  %v2595 = vpow.pop %v2594
  %v2596 = vadd.f32 %v2595, 1.0
  %v2597 = vrcp.pop %v2596
  %v2598 = vmul.f32 1.0, %v2597
  %v2599 = vmul.f32 %v2598, %v2590
  %v2600 = vadd.f32 %v2420, %v2599
  %v2601 = vtanh.pop %v2600
  %v2602 = vsub.f32 1.0, %v2598
  %2604 = vrot.lane.b32.xlu0 %v2601, 64
  %v2605 = vpop.permute.xlu0 %2604
  %v2607 = vmul.f32 %v2602, %v2605
  %v2608 = vmul.f32 %v2598, %v2207
  %v2609 = vadd.f32 %v2607, %v2608
  %v2610 = vsel %vm1382, %v2515, %v2206
  %v2611 = vsel %vm1376, %v2609, %v2207
  %v2612 = vsel %vm1382, %v2515, 0.0
  %2614 = vrot.lane.b32.xlu0 %v2612, 64
  %v2615 = vpop.permute.xlu0 %2614
  %2617 = vst.msk [vmem:[%s1392] sm:$0xff] %vm346, %v2615
  %v2618 = vsel %vm1376, %v2609, 0.0
  %2619 = vst.msk [vmem:[%s1389] sm:$0xff] %vm559, %v2618
  %v2620 = vld [vmem:[%s0 + $0x6] sm:$0x1]
  %v2621 = vld [vmem:[%s0 + $0xe] sm:$0x1]
  %v2622 = vld [vmem:[%s0 + $0x16] sm:$0x1]
  %v2623 = vld [vmem:[%s0 + $0x1e] sm:$0x1]
  %v2624 = vld [vmem:[%s0 + $0x26] sm:$0x1]
  %v2625 = vld [vmem:[%s0 + $0x2e] sm:$0x1]
  %v2626 = vld [vmem:[%s0 + $0x36] sm:$0x1]
  %v2627 = vld [vmem:[%s0 + $0x3e] sm:$0x1]
  %v2636 = vrot.slane %v2621, 7
  %v2637 = vsel %vm127, %v2636, %v2620
  %v2638 = vrot.slane %v2622, 6
  %v2639 = vsel %vm130, %v2638, %v2637
  %v2640 = vrot.slane %v2623, 5
  %v2641 = vsel %vm133, %v2640, %v2639
  %v2642 = vrot.slane %v2624, 4
  %v2643 = vsel %vm136, %v2642, %v2641
  %v2644 = vrot.slane %v2625, 3
  %v2645 = vsel %vm139, %v2644, %v2643
  %v2646 = vrot.slane %v2626, 2
  %v2647 = vsel %vm142, %v2646, %v2645
  %v2648 = vrot.slane %v2627, 1
  %v2649 = vsel %vm145, %v2648, %v2647
  %v2650 = vsel %vm147, %v2649, 0
  %2652 = vmatprep.subr.mxu0 0.0
  %2653 = vmatpush1.msra.mxu0 0.0
  %2654 = vmatprep.subr.mxu0 0.0
  %2655 = vmatpush1.msra.mxu0 0.0
  %2656 = vmatprep.subr.mxu0 0.0
  %2657 = vmatpush1.msra.mxu0 0.0
  %2658 = vmatprep.subr.mxu0 0.0
  %2659 = vmatpush1.msra.mxu0 0.0
  %2660 = vmatprep.subr.mxu0 0.0
  %2661 = vmatpush1.msra.mxu0 0.0
  %2662 = vmatprep.subr.mxu0 0.0
  %2663 = vmatpush1.msra.mxu0 0.0
  %2664 = vmatprep.subr.mxu0 0.0
  %2665 = vmatpush1.msra.mxu0 0.0
  %2666 = vmatprep.subr.mxu0 0.0
  %2667 = vmatpush1.msra.mxu0 0.0
  %2668 = vmatprep.subr.mxu0 0.0
  %2669 = vmatpush1.msra.mxu0 0.0
  %2670 = vmatprep.subr.mxu0 0.0
  %2671 = vmatpush1.msra.mxu0 0.0
  %2672 = vmatprep.subr.mxu0 0.0
  %2673 = vmatpush1.msra.mxu0 0.0
  %2674 = vmatprep.subr.mxu0 0.0
  %2675 = vmatpush1.msra.mxu0 0.0
  %2676 = vmatprep.subr.mxu0 %v54
  %2677 = vmatpush1.msra.mxu0 %v53
  %2678 = vmatprep.subr.mxu0 %v52
  %2679 = vmatpush1.msra.mxu0 %v51
  %2680 = vmatprep.subr.mxu0 %v50
  %2681 = vmatpush1.msra.mxu0 %v49
  %2682 = vmatprep.subr.mxu0 %v48
  %2683 = vmatpush1.msra.mxu0 %v47
  %2684 = vmatprep.subr.mxu0 0.0
  %2685 = vmatpush2.msra.mxu0 0.0
  %2686 = vmatprep.subr.mxu0 0.0
  %2687 = vmatpush2.msra.mxu0 0.0
  %2688 = vmatprep.subr.mxu0 0.0
  %2689 = vmatpush2.msra.mxu0 0.0
  %2690 = vmatprep.subr.mxu0 0.0
  %2691 = vmatpush2.msra.mxu0 0.0
  %2692 = vmatprep.subr.mxu0 0.0
  %2693 = vmatpush2.msra.mxu0 0.0
  %2694 = vmatprep.subr.mxu0 0.0
  %2695 = vmatpush2.msra.mxu0 0.0
  %2696 = vmatprep.subr.mxu0 0.0
  %2697 = vmatpush2.msra.mxu0 0.0
  %2698 = vmatprep.subr.mxu0 0.0
  %2699 = vmatpush2.msra.mxu0 0.0
  %2700 = vmatprep.subr.mxu0 0.0
  %2701 = vmatpush2.msra.mxu0 0.0
  %2702 = vmatprep.subr.mxu0 0.0
  %2703 = vmatpush2.msra.mxu0 0.0
  %2704 = vmatprep.subr.mxu0 0.0
  %2705 = vmatpush2.msra.mxu0 0.0
  %2706 = vmatprep.subr.mxu0 0.0
  %2707 = vmatpush2.msra.mxu0 0.0
  %2708 = vmatprep.subr.mxu0 0.0
  %2709 = vmatpush2.msra.mxu0 0.0
  %2710 = vmatprep.subr.mxu0 0.0
  %2711 = vmatpush2.msra.mxu0 0.0
  %2712 = vmatprep.subr.mxu0 0.0
  %2713 = vmatpush2.msra.mxu0 0.0
  %2714 = vmatprep.subr.mxu0 0.0
  %2715 = vmatpush2.msra.mxu0 0.0
  %2716 = vmatprep.mubr.f32.mxu0 0.0
  %2717 = vmatmul.mubr.f32.gmra.mxu0 %v2650
  %v2718 = vpop.f32.mrf.mxu0
  %v2719 = vadd.f32 %v111, %v2718
  %v2720 = vpop.f32.mrf.mxu0
  %v2721 = vadd.f32 %v115, %v2720
  %2722 = vdwg.mxu0
  %v2723 = vld [vmem:[%s0 + $0x1] sm:$0x1]
  %v2724 = vld [vmem:[%s0 + $0x9] sm:$0x1]
  %v2725 = vld [vmem:[%s0 + $0x11] sm:$0x1]
  %v2726 = vld [vmem:[%s0 + $0x19] sm:$0x1]
  %v2727 = vld [vmem:[%s0 + $0x21] sm:$0x1]
  %v2728 = vld [vmem:[%s0 + $0x29] sm:$0x1]
  %v2729 = vld [vmem:[%s0 + $0x31] sm:$0x1]
  %v2730 = vld [vmem:[%s0 + $0x39] sm:$0x1]
  %v2739 = vrot.slane %v2724, 7
  %v2740 = vsel %vm127, %v2739, %v2723
  %v2741 = vrot.slane %v2725, 6
  %v2742 = vsel %vm130, %v2741, %v2740
  %v2743 = vrot.slane %v2726, 5
  %v2744 = vsel %vm133, %v2743, %v2742
  %v2745 = vrot.slane %v2727, 4
  %v2746 = vsel %vm136, %v2745, %v2744
  %v2747 = vrot.slane %v2728, 3
  %v2748 = vsel %vm139, %v2747, %v2746
  %v2749 = vrot.slane %v2729, 2
  %v2750 = vsel %vm142, %v2749, %v2748
  %v2751 = vrot.slane %v2730, 1
  %v2752 = vsel %vm145, %v2751, %v2750
  %v2753 = vsel %vm147, %v2752, 0
  %2755 = vmatprep.subr.mxu0 0.0
  %2756 = vmatpush1.msra.mxu0 0.0
  %2757 = vmatprep.subr.mxu0 0.0
  %2758 = vmatpush1.msra.mxu0 0.0
  %2759 = vmatprep.subr.mxu0 0.0
  %2760 = vmatpush1.msra.mxu0 0.0
  %2761 = vmatprep.subr.mxu0 0.0
  %2762 = vmatpush1.msra.mxu0 0.0
  %2763 = vmatprep.subr.mxu0 0.0
  %2764 = vmatpush1.msra.mxu0 0.0
  %2765 = vmatprep.subr.mxu0 0.0
  %2766 = vmatpush1.msra.mxu0 0.0
  %2767 = vmatprep.subr.mxu0 0.0
  %2768 = vmatpush1.msra.mxu0 0.0
  %2769 = vmatprep.subr.mxu0 0.0
  %2770 = vmatpush1.msra.mxu0 0.0
  %2771 = vmatprep.subr.mxu0 0.0
  %2772 = vmatpush1.msra.mxu0 0.0
  %2773 = vmatprep.subr.mxu0 0.0
  %2774 = vmatpush1.msra.mxu0 0.0
  %2775 = vmatprep.subr.mxu0 0.0
  %2776 = vmatpush1.msra.mxu0 0.0
  %2777 = vmatprep.subr.mxu0 0.0
  %2778 = vmatpush1.msra.mxu0 0.0
  %2779 = vmatprep.subr.mxu0 %v62
  %2780 = vmatpush1.msra.mxu0 %v61
  %2781 = vmatprep.subr.mxu0 %v60
  %2782 = vmatpush1.msra.mxu0 %v59
  %2783 = vmatprep.subr.mxu0 %v58
  %2784 = vmatpush1.msra.mxu0 %v57
  %2785 = vmatprep.subr.mxu0 %v56
  %2786 = vmatpush1.msra.mxu0 %v55
  %2787 = vmatprep.subr.mxu0 0.0
  %2788 = vmatpush2.msra.mxu0 0.0
  %2789 = vmatprep.subr.mxu0 0.0
  %2790 = vmatpush2.msra.mxu0 0.0
  %2791 = vmatprep.subr.mxu0 0.0
  %2792 = vmatpush2.msra.mxu0 0.0
  %2793 = vmatprep.subr.mxu0 0.0
  %2794 = vmatpush2.msra.mxu0 0.0
  %2795 = vmatprep.subr.mxu0 0.0
  %2796 = vmatpush2.msra.mxu0 0.0
  %2797 = vmatprep.subr.mxu0 0.0
  %2798 = vmatpush2.msra.mxu0 0.0
  %2799 = vmatprep.subr.mxu0 0.0
  %2800 = vmatpush2.msra.mxu0 0.0
  %2801 = vmatprep.subr.mxu0 0.0
  %2802 = vmatpush2.msra.mxu0 0.0
  %2803 = vmatprep.subr.mxu0 0.0
  %2804 = vmatpush2.msra.mxu0 0.0
  %2805 = vmatprep.subr.mxu0 0.0
  %2806 = vmatpush2.msra.mxu0 0.0
  %2807 = vmatprep.subr.mxu0 0.0
  %2808 = vmatpush2.msra.mxu0 0.0
  %2809 = vmatprep.subr.mxu0 0.0
  %2810 = vmatpush2.msra.mxu0 0.0
  %2811 = vmatprep.subr.mxu0 0.0
  %2812 = vmatpush2.msra.mxu0 0.0
  %2813 = vmatprep.subr.mxu0 0.0
  %2814 = vmatpush2.msra.mxu0 0.0
  %2815 = vmatprep.subr.mxu0 0.0
  %2816 = vmatpush2.msra.mxu0 0.0
  %2817 = vmatprep.subr.mxu0 0.0
  %2818 = vmatpush2.msra.mxu0 0.0
  %2819 = vmatprep.mubr.f32.mxu0 0.0
  %2820 = vmatmul.mubr.f32.gmra.mxu0 %v2753
  %v2821 = vpop.f32.mrf.mxu0
  %v2822 = vadd.f32 %v233, %v2821
  %v2823 = vpop.f32.mrf.mxu0
  %v2824 = vadd.f32 %v237, %v2823
  %2825 = vdwg.mxu0
  %2827 = vrot.lane.b32.xlu0 %v2610, 64
  %v2828 = vpop.permute.xlu0 %2827
  %v2829 = vsel %vm346, %v2828, 0
  %2831 = vmatprep.subr.mxu0 0.0
  %2832 = vmatpush1.msra.mxu0 0.0
  %2833 = vmatprep.subr.mxu0 0.0
  %2834 = vmatpush1.msra.mxu0 0.0
  %2835 = vmatprep.subr.mxu0 0.0
  %2836 = vmatpush1.msra.mxu0 0.0
  %2837 = vmatprep.subr.mxu0 0.0
  %2838 = vmatpush1.msra.mxu0 0.0
  %2839 = vmatprep.subr.mxu0 0.0
  %2840 = vmatpush1.msra.mxu0 0.0
  %2841 = vmatprep.subr.mxu0 0.0
  %2842 = vmatpush1.msra.mxu0 0.0
  %2843 = vmatprep.subr.mxu0 0.0
  %2844 = vmatpush1.msra.mxu0 0.0
  %2845 = vmatprep.subr.mxu0 0.0
  %2846 = vmatpush1.msra.mxu0 0.0
  %2847 = vmatprep.subr.mxu0 %v78
  %2848 = vmatpush1.msra.mxu0 %v77
  %2849 = vmatprep.subr.mxu0 %v76
  %2850 = vmatpush1.msra.mxu0 %v75
  %2851 = vmatprep.subr.mxu0 %v74
  %2852 = vmatpush1.msra.mxu0 %v73
  %2853 = vmatprep.subr.mxu0 %v72
  %2854 = vmatpush1.msra.mxu0 %v71
  %2855 = vmatprep.subr.mxu0 %v70
  %2856 = vmatpush1.msra.mxu0 %v69
  %2857 = vmatprep.subr.mxu0 %v68
  %2858 = vmatpush1.msra.mxu0 %v67
  %2859 = vmatprep.subr.mxu0 %v66
  %2860 = vmatpush1.msra.mxu0 %v65
  %2861 = vmatprep.subr.mxu0 %v64
  %2862 = vmatpush1.msra.mxu0 %v63
  %2863 = vmatprep.subr.mxu0 0.0
  %2864 = vmatpush2.msra.mxu0 0.0
  %2865 = vmatprep.subr.mxu0 0.0
  %2866 = vmatpush2.msra.mxu0 0.0
  %2867 = vmatprep.subr.mxu0 0.0
  %2868 = vmatpush2.msra.mxu0 0.0
  %2869 = vmatprep.subr.mxu0 0.0
  %2870 = vmatpush2.msra.mxu0 0.0
  %2871 = vmatprep.subr.mxu0 0.0
  %2872 = vmatpush2.msra.mxu0 0.0
  %2873 = vmatprep.subr.mxu0 0.0
  %2874 = vmatpush2.msra.mxu0 0.0
  %2875 = vmatprep.subr.mxu0 0.0
  %2876 = vmatpush2.msra.mxu0 0.0
  %2877 = vmatprep.subr.mxu0 0.0
  %2878 = vmatpush2.msra.mxu0 0.0
  %2879 = vmatprep.subr.mxu0 0.0
  %2880 = vmatpush2.msra.mxu0 0.0
  %2881 = vmatprep.subr.mxu0 0.0
  %2882 = vmatpush2.msra.mxu0 0.0
  %2883 = vmatprep.subr.mxu0 0.0
  %2884 = vmatpush2.msra.mxu0 0.0
  %2885 = vmatprep.subr.mxu0 0.0
  %2886 = vmatpush2.msra.mxu0 0.0
  %2887 = vmatprep.subr.mxu0 0.0
  %2888 = vmatpush2.msra.mxu0 0.0
  %2889 = vmatprep.subr.mxu0 0.0
  %2890 = vmatpush2.msra.mxu0 0.0
  %2891 = vmatprep.subr.mxu0 0.0
  %2892 = vmatpush2.msra.mxu0 0.0
  %2893 = vmatprep.subr.mxu0 0.0
  %2894 = vmatpush2.msra.mxu0 0.0
  %2895 = vmatprep.mubr.f32.mxu0 0.0
  %2896 = vmatmul.mubr.f32.gmra.mxu0 %v2829
  %v2897 = vpop.f32.mrf.mxu0
  %v2898 = vadd.f32 %v339, %v2897
  %v2899 = vpop.f32.mrf.mxu0
  %v2900 = vadd.f32 %v343, %v2899
  %2901 = vdwg.mxu0
  %v2902 = vadd.f32 %v2719, %v2898
  %v2903 = vxor.u32 %v2902, 2147483648
  %v2904 = vmul.f32 %v2903, 1.442695
  %v2905 = vpow.pop %v2904
  %v2906 = vadd.f32 %v2905, 1.0
  %v2907 = vrcp.pop %v2906
  %v2908 = vmul.f32 1.0, %v2907
  %v2909 = vmul.f32 %v2908, %v2900
  %v2910 = vadd.f32 %v2721, %v2909
  %v2911 = vtanh.pop %v2910
  %v2912 = vsub.f32 1.0, %v2908
  %2914 = vrot.lane.b32.xlu0 %v2911, 64
  %v2915 = vpop.permute.xlu0 %2914
  %v2917 = vmul.f32 %v2912, %v2915
  %v2918 = vmul.f32 %v2908, %v2610
  %v2919 = vadd.f32 %v2917, %v2918
  %2921 = vrot.lane.b32.xlu0 %v2611, 64
  %v2922 = vpop.permute.xlu0 %2921
  %v2923 = vsel %vm346, %v2922, 0
  %2925 = vmatprep.subr.mxu0 0.0
  %2926 = vmatpush1.msra.mxu0 0.0
  %2927 = vmatprep.subr.mxu0 0.0
  %2928 = vmatpush1.msra.mxu0 0.0
  %2929 = vmatprep.subr.mxu0 0.0
  %2930 = vmatpush1.msra.mxu0 0.0
  %2931 = vmatprep.subr.mxu0 0.0
  %2932 = vmatpush1.msra.mxu0 0.0
  %2933 = vmatprep.subr.mxu0 0.0
  %2934 = vmatpush1.msra.mxu0 0.0
  %2935 = vmatprep.subr.mxu0 0.0
  %2936 = vmatpush1.msra.mxu0 0.0
  %2937 = vmatprep.subr.mxu0 0.0
  %2938 = vmatpush1.msra.mxu0 0.0
  %2939 = vmatprep.subr.mxu0 0.0
  %2940 = vmatpush1.msra.mxu0 0.0
  %2941 = vmatprep.subr.mxu0 %v94
  %2942 = vmatpush1.msra.mxu0 %v93
  %2943 = vmatprep.subr.mxu0 %v92
  %2944 = vmatpush1.msra.mxu0 %v91
  %2945 = vmatprep.subr.mxu0 %v90
  %2946 = vmatpush1.msra.mxu0 %v89
  %2947 = vmatprep.subr.mxu0 %v88
  %2948 = vmatpush1.msra.mxu0 %v87
  %2949 = vmatprep.subr.mxu0 %v86
  %2950 = vmatpush1.msra.mxu0 %v85
  %2951 = vmatprep.subr.mxu0 %v84
  %2952 = vmatpush1.msra.mxu0 %v83
  %2953 = vmatprep.subr.mxu0 %v82
  %2954 = vmatpush1.msra.mxu0 %v81
  %2955 = vmatprep.subr.mxu0 %v80
  %2956 = vmatpush1.msra.mxu0 %v79
  %2957 = vmatprep.subr.mxu0 0.0
  %2958 = vmatpush2.msra.mxu0 0.0
  %2959 = vmatprep.subr.mxu0 0.0
  %2960 = vmatpush2.msra.mxu0 0.0
  %2961 = vmatprep.subr.mxu0 0.0
  %2962 = vmatpush2.msra.mxu0 0.0
  %2963 = vmatprep.subr.mxu0 0.0
  %2964 = vmatpush2.msra.mxu0 0.0
  %2965 = vmatprep.subr.mxu0 0.0
  %2966 = vmatpush2.msra.mxu0 0.0
  %2967 = vmatprep.subr.mxu0 0.0
  %2968 = vmatpush2.msra.mxu0 0.0
  %2969 = vmatprep.subr.mxu0 0.0
  %2970 = vmatpush2.msra.mxu0 0.0
  %2971 = vmatprep.subr.mxu0 0.0
  %2972 = vmatpush2.msra.mxu0 0.0
  %2973 = vmatprep.subr.mxu0 0.0
  %2974 = vmatpush2.msra.mxu0 0.0
  %2975 = vmatprep.subr.mxu0 0.0
  %2976 = vmatpush2.msra.mxu0 0.0
  %2977 = vmatprep.subr.mxu0 0.0
  %2978 = vmatpush2.msra.mxu0 0.0
  %2979 = vmatprep.subr.mxu0 0.0
  %2980 = vmatpush2.msra.mxu0 0.0
  %2981 = vmatprep.subr.mxu0 0.0
  %2982 = vmatpush2.msra.mxu0 0.0
  %2983 = vmatprep.subr.mxu0 0.0
  %2984 = vmatpush2.msra.mxu0 0.0
  %2985 = vmatprep.subr.mxu0 0.0
  %2986 = vmatpush2.msra.mxu0 0.0
  %2987 = vmatprep.subr.mxu0 0.0
  %2988 = vmatpush2.msra.mxu0 0.0
  %2989 = vmatprep.mubr.f32.mxu0 0.0
  %2990 = vmatmul.mubr.f32.gmra.mxu0 %v2923
  %v2991 = vpop.f32.mrf.mxu0
  %v2992 = vadd.f32 %v443, %v2991
  %v2993 = vpop.f32.mrf.mxu0
  %v2994 = vadd.f32 %v447, %v2993
  %2995 = vdwg.mxu0
  %v2996 = vadd.f32 %v2822, %v2992
  %v2997 = vxor.u32 %v2996, 2147483648
  %v2998 = vmul.f32 %v2997, 1.442695
  %v2999 = vpow.pop %v2998
  %v3000 = vadd.f32 %v2999, 1.0
  %v3001 = vrcp.pop %v3000
  %v3002 = vmul.f32 1.0, %v3001
  %v3003 = vmul.f32 %v3002, %v2994
  %v3004 = vadd.f32 %v2824, %v3003
  %v3005 = vtanh.pop %v3004
  %v3006 = vsub.f32 1.0, %v3002
  %3008 = vrot.lane.b32.xlu0 %v3005, 64
  %v3009 = vpop.permute.xlu0 %3008
  %v3011 = vmul.f32 %v3006, %v3009
  %v3012 = vmul.f32 %v3002, %v2611
  %v3013 = vadd.f32 %v3011, %v3012
  %v3014 = vsel %vm964, %v2919, %v2610
  %v3015 = vsel %vm958, %v3013, %v2611
  %v3016 = vsel %vm964, %v2919, 0.0
  %3018 = vrot.lane.b32.xlu0 %v3016, 64
  %v3019 = vpop.permute.xlu0 %3018
  %3021 = vst.msk [vmem:[%s974] sm:$0xff] %vm346, %v3019
  %v3022 = vsel %vm958, %v3013, 0.0
  %3023 = vst.msk [vmem:[%s971] sm:$0xff] %vm559, %v3022
  %v3024 = vld [vmem:[%s0 + $0x7] sm:$0x1]
  %v3025 = vld [vmem:[%s0 + $0xf] sm:$0x1]
  %v3026 = vld [vmem:[%s0 + $0x17] sm:$0x1]
  %v3027 = vld [vmem:[%s0 + $0x1f] sm:$0x1]
  %v3028 = vld [vmem:[%s0 + $0x27] sm:$0x1]
  %v3029 = vld [vmem:[%s0 + $0x2f] sm:$0x1]
  %v3030 = vld [vmem:[%s0 + $0x37] sm:$0x1]
  %v3031 = vld [vmem:[%s0 + $0x3f] sm:$0x1]
  %v3040 = vrot.slane %v3025, 7
  %v3041 = vsel %vm127, %v3040, %v3024
  %v3042 = vrot.slane %v3026, 6
  %v3043 = vsel %vm130, %v3042, %v3041
  %v3044 = vrot.slane %v3027, 5
  %v3045 = vsel %vm133, %v3044, %v3043
  %v3046 = vrot.slane %v3028, 4
  %v3047 = vsel %vm136, %v3046, %v3045
  %v3048 = vrot.slane %v3029, 3
  %v3049 = vsel %vm139, %v3048, %v3047
  %v3050 = vrot.slane %v3030, 2
  %v3051 = vsel %vm142, %v3050, %v3049
  %v3052 = vrot.slane %v3031, 1
  %v3053 = vsel %vm145, %v3052, %v3051
  %v3054 = vsel %vm147, %v3053, 0
  %3056 = vmatprep.subr.mxu0 0.0
  %3057 = vmatpush1.msra.mxu0 0.0
  %3058 = vmatprep.subr.mxu0 0.0
  %3059 = vmatpush1.msra.mxu0 0.0
  %3060 = vmatprep.subr.mxu0 0.0
  %3061 = vmatpush1.msra.mxu0 0.0
  %3062 = vmatprep.subr.mxu0 0.0
  %3063 = vmatpush1.msra.mxu0 0.0
  %3064 = vmatprep.subr.mxu0 0.0
  %3065 = vmatpush1.msra.mxu0 0.0
  %3066 = vmatprep.subr.mxu0 0.0
  %3067 = vmatpush1.msra.mxu0 0.0
  %3068 = vmatprep.subr.mxu0 0.0
  %3069 = vmatpush1.msra.mxu0 0.0
  %3070 = vmatprep.subr.mxu0 0.0
  %3071 = vmatpush1.msra.mxu0 0.0
  %3072 = vmatprep.subr.mxu0 0.0
  %3073 = vmatpush1.msra.mxu0 0.0
  %3074 = vmatprep.subr.mxu0 0.0
  %3075 = vmatpush1.msra.mxu0 0.0
  %3076 = vmatprep.subr.mxu0 0.0
  %3077 = vmatpush1.msra.mxu0 0.0
  %3078 = vmatprep.subr.mxu0 0.0
  %3079 = vmatpush1.msra.mxu0 0.0
  %3080 = vmatprep.subr.mxu0 %v54
  %3081 = vmatpush1.msra.mxu0 %v53
  %3082 = vmatprep.subr.mxu0 %v52
  %3083 = vmatpush1.msra.mxu0 %v51
  %3084 = vmatprep.subr.mxu0 %v50
  %3085 = vmatpush1.msra.mxu0 %v49
  %3086 = vmatprep.subr.mxu0 %v48
  %3087 = vmatpush1.msra.mxu0 %v47
  %3088 = vmatprep.subr.mxu0 0.0
  %3089 = vmatpush2.msra.mxu0 0.0
  %3090 = vmatprep.subr.mxu0 0.0
  %3091 = vmatpush2.msra.mxu0 0.0
  %3092 = vmatprep.subr.mxu0 0.0
  %3093 = vmatpush2.msra.mxu0 0.0
  %3094 = vmatprep.subr.mxu0 0.0
  %3095 = vmatpush2.msra.mxu0 0.0
  %3096 = vmatprep.subr.mxu0 0.0
  %3097 = vmatpush2.msra.mxu0 0.0
  %3098 = vmatprep.subr.mxu0 0.0
  %3099 = vmatpush2.msra.mxu0 0.0
  %3100 = vmatprep.subr.mxu0 0.0
  %3101 = vmatpush2.msra.mxu0 0.0
  %3102 = vmatprep.subr.mxu0 0.0
  %3103 = vmatpush2.msra.mxu0 0.0
  %3104 = vmatprep.subr.mxu0 0.0
  %3105 = vmatpush2.msra.mxu0 0.0
  %3106 = vmatprep.subr.mxu0 0.0
  %3107 = vmatpush2.msra.mxu0 0.0
  %3108 = vmatprep.subr.mxu0 0.0
  %3109 = vmatpush2.msra.mxu0 0.0
  %3110 = vmatprep.subr.mxu0 0.0
  %3111 = vmatpush2.msra.mxu0 0.0
  %3112 = vmatprep.subr.mxu0 0.0
  %3113 = vmatpush2.msra.mxu0 0.0
  %3114 = vmatprep.subr.mxu0 0.0
  %3115 = vmatpush2.msra.mxu0 0.0
  %3116 = vmatprep.subr.mxu0 0.0
  %3117 = vmatpush2.msra.mxu0 0.0
  %3118 = vmatprep.subr.mxu0 0.0
  %3119 = vmatpush2.msra.mxu0 0.0
  %3120 = vmatprep.mubr.f32.mxu0 0.0
  %3121 = vmatmul.mubr.f32.gmra.mxu0 %v3054
  %v3122 = vpop.f32.mrf.mxu0
  %v3123 = vadd.f32 %v111, %v3122
  %v3124 = vpop.f32.mrf.mxu0
  %v3125 = vadd.f32 %v115, %v3124
  %3126 = vdwg.mxu0
  %v3127 = vld [vmem:[%s0] sm:$0x1]
  %v3128 = vld [vmem:[%s0 + $0x8] sm:$0x1]
  %v3129 = vld [vmem:[%s0 + $0x10] sm:$0x1]
  %v3130 = vld [vmem:[%s0 + $0x18] sm:$0x1]
  %v3131 = vld [vmem:[%s0 + $0x20] sm:$0x1]
  %v3132 = vld [vmem:[%s0 + $0x28] sm:$0x1]
  %v3133 = vld [vmem:[%s0 + $0x30] sm:$0x1]
  %v3134 = vld [vmem:[%s0 + $0x38] sm:$0x1]
  %v3143 = vrot.slane %v3128, 7
  %v3144 = vsel %vm127, %v3143, %v3127
  %v3145 = vrot.slane %v3129, 6
  %v3146 = vsel %vm130, %v3145, %v3144
  %v3147 = vrot.slane %v3130, 5
  %v3148 = vsel %vm133, %v3147, %v3146
  %v3149 = vrot.slane %v3131, 4
  %v3150 = vsel %vm136, %v3149, %v3148
  %v3151 = vrot.slane %v3132, 3
  %v3152 = vsel %vm139, %v3151, %v3150
  %v3153 = vrot.slane %v3133, 2
  %v3154 = vsel %vm142, %v3153, %v3152
  %v3155 = vrot.slane %v3134, 1
  %v3156 = vsel %vm145, %v3155, %v3154
  %v3157 = vsel %vm147, %v3156, 0
  %3159 = vmatprep.subr.mxu0 0.0
  %3160 = vmatpush1.msra.mxu0 0.0
  %3161 = vmatprep.subr.mxu0 0.0
  %3162 = vmatpush1.msra.mxu0 0.0
  %3163 = vmatprep.subr.mxu0 0.0
  %3164 = vmatpush1.msra.mxu0 0.0
  %3165 = vmatprep.subr.mxu0 0.0
  %3166 = vmatpush1.msra.mxu0 0.0
  %3167 = vmatprep.subr.mxu0 0.0
  %3168 = vmatpush1.msra.mxu0 0.0
  %3169 = vmatprep.subr.mxu0 0.0
  %3170 = vmatpush1.msra.mxu0 0.0
  %3171 = vmatprep.subr.mxu0 0.0
  %3172 = vmatpush1.msra.mxu0 0.0
  %3173 = vmatprep.subr.mxu0 0.0
  %3174 = vmatpush1.msra.mxu0 0.0
  %3175 = vmatprep.subr.mxu0 0.0
  %3176 = vmatpush1.msra.mxu0 0.0
  %3177 = vmatprep.subr.mxu0 0.0
  %3178 = vmatpush1.msra.mxu0 0.0
  %3179 = vmatprep.subr.mxu0 0.0
  %3180 = vmatpush1.msra.mxu0 0.0
  %3181 = vmatprep.subr.mxu0 0.0
  %3182 = vmatpush1.msra.mxu0 0.0
  %3183 = vmatprep.subr.mxu0 %v62
  %3184 = vmatpush1.msra.mxu0 %v61
  %3185 = vmatprep.subr.mxu0 %v60
  %3186 = vmatpush1.msra.mxu0 %v59
  %3187 = vmatprep.subr.mxu0 %v58
  %3188 = vmatpush1.msra.mxu0 %v57
  %3189 = vmatprep.subr.mxu0 %v56
  %3190 = vmatpush1.msra.mxu0 %v55
  %3191 = vmatprep.subr.mxu0 0.0
  %3192 = vmatpush2.msra.mxu0 0.0
  %3193 = vmatprep.subr.mxu0 0.0
  %3194 = vmatpush2.msra.mxu0 0.0
  %3195 = vmatprep.subr.mxu0 0.0
  %3196 = vmatpush2.msra.mxu0 0.0
  %3197 = vmatprep.subr.mxu0 0.0
  %3198 = vmatpush2.msra.mxu0 0.0
  %3199 = vmatprep.subr.mxu0 0.0
  %3200 = vmatpush2.msra.mxu0 0.0
  %3201 = vmatprep.subr.mxu0 0.0
  %3202 = vmatpush2.msra.mxu0 0.0
  %3203 = vmatprep.subr.mxu0 0.0
  %3204 = vmatpush2.msra.mxu0 0.0
  %3205 = vmatprep.subr.mxu0 0.0
  %3206 = vmatpush2.msra.mxu0 0.0
  %3207 = vmatprep.subr.mxu0 0.0
  %3208 = vmatpush2.msra.mxu0 0.0
  %3209 = vmatprep.subr.mxu0 0.0
  %3210 = vmatpush2.msra.mxu0 0.0
  %3211 = vmatprep.subr.mxu0 0.0
  %3212 = vmatpush2.msra.mxu0 0.0
  %3213 = vmatprep.subr.mxu0 0.0
  %3214 = vmatpush2.msra.mxu0 0.0
  %3215 = vmatprep.subr.mxu0 0.0
  %3216 = vmatpush2.msra.mxu0 0.0
  %3217 = vmatprep.subr.mxu0 0.0
  %3218 = vmatpush2.msra.mxu0 0.0
  %3219 = vmatprep.subr.mxu0 0.0
  %3220 = vmatpush2.msra.mxu0 0.0
  %3221 = vmatprep.subr.mxu0 0.0
  %3222 = vmatpush2.msra.mxu0 0.0
  %3223 = vmatprep.mubr.f32.mxu0 0.0
  %3224 = vmatmul.mubr.f32.gmra.mxu0 %v3157
  %v3225 = vpop.f32.mrf.mxu0
  %v3226 = vadd.f32 %v233, %v3225
  %v3227 = vpop.f32.mrf.mxu0
  %v3228 = vadd.f32 %v237, %v3227
  %3229 = vdwg.mxu0
  %3231 = vrot.lane.b32.xlu0 %v3014, 64
  %v3232 = vpop.permute.xlu0 %3231
  %v3233 = vsel %vm346, %v3232, 0
  %3235 = vmatprep.subr.mxu0 0.0
  %3236 = vmatpush1.msra.mxu0 0.0
  %3237 = vmatprep.subr.mxu0 0.0
  %3238 = vmatpush1.msra.mxu0 0.0
  %3239 = vmatprep.subr.mxu0 0.0
  %3240 = vmatpush1.msra.mxu0 0.0
  %3241 = vmatprep.subr.mxu0 0.0
  %3242 = vmatpush1.msra.mxu0 0.0
  %3243 = vmatprep.subr.mxu0 0.0
  %3244 = vmatpush1.msra.mxu0 0.0
  %3245 = vmatprep.subr.mxu0 0.0
  %3246 = vmatpush1.msra.mxu0 0.0
  %3247 = vmatprep.subr.mxu0 0.0
  %3248 = vmatpush1.msra.mxu0 0.0
  %3249 = vmatprep.subr.mxu0 0.0
  %3250 = vmatpush1.msra.mxu0 0.0
  %3251 = vmatprep.subr.mxu0 %v78
  %3252 = vmatpush1.msra.mxu0 %v77
  %3253 = vmatprep.subr.mxu0 %v76
  %3254 = vmatpush1.msra.mxu0 %v75
  %3255 = vmatprep.subr.mxu0 %v74
  %3256 = vmatpush1.msra.mxu0 %v73
  %3257 = vmatprep.subr.mxu0 %v72
  %3258 = vmatpush1.msra.mxu0 %v71
  %3259 = vmatprep.subr.mxu0 %v70
  %3260 = vmatpush1.msra.mxu0 %v69
  %3261 = vmatprep.subr.mxu0 %v68
  %3262 = vmatpush1.msra.mxu0 %v67
  %3263 = vmatprep.subr.mxu0 %v66
  %3264 = vmatpush1.msra.mxu0 %v65
  %3265 = vmatprep.subr.mxu0 %v64
  %3266 = vmatpush1.msra.mxu0 %v63
  %3267 = vmatprep.subr.mxu0 0.0
  %3268 = vmatpush2.msra.mxu0 0.0
  %3269 = vmatprep.subr.mxu0 0.0
  %3270 = vmatpush2.msra.mxu0 0.0
  %3271 = vmatprep.subr.mxu0 0.0
  %3272 = vmatpush2.msra.mxu0 0.0
  %3273 = vmatprep.subr.mxu0 0.0
  %3274 = vmatpush2.msra.mxu0 0.0
  %3275 = vmatprep.subr.mxu0 0.0
  %3276 = vmatpush2.msra.mxu0 0.0
  %3277 = vmatprep.subr.mxu0 0.0
  %3278 = vmatpush2.msra.mxu0 0.0
  %3279 = vmatprep.subr.mxu0 0.0
  %3280 = vmatpush2.msra.mxu0 0.0
  %3281 = vmatprep.subr.mxu0 0.0
  %3282 = vmatpush2.msra.mxu0 0.0
  %3283 = vmatprep.subr.mxu0 0.0
  %3284 = vmatpush2.msra.mxu0 0.0
  %3285 = vmatprep.subr.mxu0 0.0
  %3286 = vmatpush2.msra.mxu0 0.0
  %3287 = vmatprep.subr.mxu0 0.0
  %3288 = vmatpush2.msra.mxu0 0.0
  %3289 = vmatprep.subr.mxu0 0.0
  %3290 = vmatpush2.msra.mxu0 0.0
  %3291 = vmatprep.subr.mxu0 0.0
  %3292 = vmatpush2.msra.mxu0 0.0
  %3293 = vmatprep.subr.mxu0 0.0
  %3294 = vmatpush2.msra.mxu0 0.0
  %3295 = vmatprep.subr.mxu0 0.0
  %3296 = vmatpush2.msra.mxu0 0.0
  %3297 = vmatprep.subr.mxu0 0.0
  %3298 = vmatpush2.msra.mxu0 0.0
  %3299 = vmatprep.mubr.f32.mxu0 0.0
  %3300 = vmatmul.mubr.f32.gmra.mxu0 %v3233
  %v3301 = vpop.f32.mrf.mxu0
  %v3302 = vadd.f32 %v339, %v3301
  %v3303 = vpop.f32.mrf.mxu0
  %v3304 = vadd.f32 %v343, %v3303
  %3305 = vdwg.mxu0
  %v3306 = vadd.f32 %v3123, %v3302
  %v3307 = vxor.u32 %v3306, 2147483648
  %v3308 = vmul.f32 %v3307, 1.442695
  %v3309 = vpow.pop %v3308
  %v3310 = vadd.f32 %v3309, 1.0
  %v3311 = vrcp.pop %v3310
  %v3312 = vmul.f32 1.0, %v3311
  %v3313 = vmul.f32 %v3312, %v3304
  %v3314 = vadd.f32 %v3125, %v3313
  %v3315 = vtanh.pop %v3314
  %v3316 = vsub.f32 1.0, %v3312
  %3318 = vrot.lane.b32.xlu0 %v3315, 64
  %v3319 = vpop.permute.xlu0 %3318
  %v3321 = vmul.f32 %v3316, %v3319
  %v3322 = vmul.f32 %v3312, %v3014
  %v3323 = vadd.f32 %v3321, %v3322
  %3325 = vrot.lane.b32.xlu0 %v3015, 64
  %v3326 = vpop.permute.xlu0 %3325
  %v3327 = vsel %vm346, %v3326, 0
  %3329 = vmatprep.subr.mxu0 0.0
  %3330 = vmatpush1.msra.mxu0 0.0
  %3331 = vmatprep.subr.mxu0 0.0
  %3332 = vmatpush1.msra.mxu0 0.0
  %3333 = vmatprep.subr.mxu0 0.0
  %3334 = vmatpush1.msra.mxu0 0.0
  %3335 = vmatprep.subr.mxu0 0.0
  %3336 = vmatpush1.msra.mxu0 0.0
  %3337 = vmatprep.subr.mxu0 0.0
  %3338 = vmatpush1.msra.mxu0 0.0
  %3339 = vmatprep.subr.mxu0 0.0
  %3340 = vmatpush1.msra.mxu0 0.0
  %3341 = vmatprep.subr.mxu0 0.0
  %3342 = vmatpush1.msra.mxu0 0.0
  %3343 = vmatprep.subr.mxu0 0.0
  %3344 = vmatpush1.msra.mxu0 0.0
  %3345 = vmatprep.subr.mxu0 %v94
  %3346 = vmatpush1.msra.mxu0 %v93
  %3347 = vmatprep.subr.mxu0 %v92
  %3348 = vmatpush1.msra.mxu0 %v91
  %3349 = vmatprep.subr.mxu0 %v90
  %3350 = vmatpush1.msra.mxu0 %v89
  %3351 = vmatprep.subr.mxu0 %v88
  %3352 = vmatpush1.msra.mxu0 %v87
  %3353 = vmatprep.subr.mxu0 %v86
  %3354 = vmatpush1.msra.mxu0 %v85
  %3355 = vmatprep.subr.mxu0 %v84
  %3356 = vmatpush1.msra.mxu0 %v83
  %3357 = vmatprep.subr.mxu0 %v82
  %3358 = vmatpush1.msra.mxu0 %v81
  %3359 = vmatprep.subr.mxu0 %v80
  %3360 = vmatpush1.msra.mxu0 %v79
  %3361 = vmatprep.subr.mxu0 0.0
  %3362 = vmatpush2.msra.mxu0 0.0
  %3363 = vmatprep.subr.mxu0 0.0
  %3364 = vmatpush2.msra.mxu0 0.0
  %3365 = vmatprep.subr.mxu0 0.0
  %3366 = vmatpush2.msra.mxu0 0.0
  %3367 = vmatprep.subr.mxu0 0.0
  %3368 = vmatpush2.msra.mxu0 0.0
  %3369 = vmatprep.subr.mxu0 0.0
  %3370 = vmatpush2.msra.mxu0 0.0
  %3371 = vmatprep.subr.mxu0 0.0
  %3372 = vmatpush2.msra.mxu0 0.0
  %3373 = vmatprep.subr.mxu0 0.0
  %3374 = vmatpush2.msra.mxu0 0.0
  %3375 = vmatprep.subr.mxu0 0.0
  %3376 = vmatpush2.msra.mxu0 0.0
  %3377 = vmatprep.subr.mxu0 0.0
  %3378 = vmatpush2.msra.mxu0 0.0
  %3379 = vmatprep.subr.mxu0 0.0
  %3380 = vmatpush2.msra.mxu0 0.0
  %3381 = vmatprep.subr.mxu0 0.0
  %3382 = vmatpush2.msra.mxu0 0.0
  %3383 = vmatprep.subr.mxu0 0.0
  %3384 = vmatpush2.msra.mxu0 0.0
  %3385 = vmatprep.subr.mxu0 0.0
  %3386 = vmatpush2.msra.mxu0 0.0
  %3387 = vmatprep.subr.mxu0 0.0
  %3388 = vmatpush2.msra.mxu0 0.0
  %3389 = vmatprep.subr.mxu0 0.0
  %3390 = vmatpush2.msra.mxu0 0.0
  %3391 = vmatprep.subr.mxu0 0.0
  %3392 = vmatpush2.msra.mxu0 0.0
  %3393 = vmatprep.mubr.f32.mxu0 0.0
  %3394 = vmatmul.mubr.f32.gmra.mxu0 %v3327
  %v3395 = vpop.f32.mrf.mxu0
  %v3396 = vadd.f32 %v443, %v3395
  %v3397 = vpop.f32.mrf.mxu0
  %v3398 = vadd.f32 %v447, %v3397
  %3399 = vdwg.mxu0
  %v3400 = vadd.f32 %v3226, %v3396
  %v3401 = vxor.u32 %v3400, 2147483648
  %v3402 = vmul.f32 %v3401, 1.442695
  %v3403 = vpow.pop %v3402
  %v3404 = vadd.f32 %v3403, 1.0
  %v3405 = vrcp.pop %v3404
  %v3406 = vmul.f32 1.0, %v3405
  %v3407 = vmul.f32 %v3406, %v3398
  %v3408 = vadd.f32 %v3228, %v3407
  %v3409 = vtanh.pop %v3408
  %v3410 = vsub.f32 1.0, %v3406
  %3412 = vrot.lane.b32.xlu0 %v3409, 64
  %v3413 = vpop.permute.xlu0 %3412
  %v3415 = vmul.f32 %v3410, %v3413
  %v3416 = vmul.f32 %v3406, %v3015
  %v3417 = vadd.f32 %v3415, %v3416
  %v3418 = vsel %vm551, %v3323, 0.0
  %3420 = vrot.lane.b32.xlu0 %v3418, 64
  %v3421 = vpop.permute.xlu0 %3420
  %3423 = vst.msk [vmem:[%s558] sm:$0xff] %vm346, %v3421
  %v3424 = vsel %vm545, %v3417, 0.0
  %3425 = vst.msk [vmem:[#allocation2] sm:$0xff] %vm559, %v3424
  %v3426 = vld [vmem:[%s10] sm:$0xff]
  %v3427 = vld [vmem:[%s10 + $0x8] sm:$0xff]
  %v3428 = vld [vmem:[%s10 + $0x10] sm:$0xff]
  %v3429 = vld [vmem:[%s10 + $0x18] sm:$0xff]
  %v3430 = vld [vmem:[%s10 + $0x20] sm:$0xff]
  %v3431 = vld [vmem:[%s10 + $0x28] sm:$0xff]
  %v3432 = vld [vmem:[%s10 + $0x30] sm:$0xff]
  %v3433 = vld [vmem:[%s10 + $0x38] sm:$0xff]
  %v3434 = vld [vmem:[%s10 + $0x40] sm:$0xff]
  %v3435 = vld [vmem:[%s10 + $0x48] sm:$0xff]
  %v3436 = vld [vmem:[%s10 + $0x50] sm:$0xff]
  %v3437 = vld [vmem:[%s10 + $0x58] sm:$0xff]
  %v3438 = vld [vmem:[%s10 + $0x60] sm:$0xff]
  %v3439 = vld [vmem:[%s10 + $0x68] sm:$0xff]
  %v3440 = vld [vmem:[%s10 + $0x70] sm:$0xff]
  %v3441 = vld [vmem:[%s10 + $0x78] sm:$0xff]
  %v3442 = vld [vmem:[%s11] sm:$0x1]
  %v3443 = vld [vmem:[%s12] sm:$0x1]
  %v3444 = vld [vmem:[#allocation2] sm:$0xff]
  %v3446 = vlaneseq
  %v3447 = vshrl.u32 %v3446, 7
  %v3448 = vsub.s32 0, %v3447
  %v3449 = vrot.slane %v3442, %v3448
  %3451 = vmatprep.subr.mxu0 0.0
  %3452 = vmatpush1.msra.mxu0 %v3441
  %3453 = vmatprep.subr.mxu0 0.0
  %3454 = vmatpush1.msra.mxu0 %v3440
  %3455 = vmatprep.subr.mxu0 0.0
  %3456 = vmatpush1.msra.mxu0 %v3439
  %3457 = vmatprep.subr.mxu0 0.0
  %3458 = vmatpush1.msra.mxu0 %v3438
  %3459 = vmatprep.subr.mxu0 0.0
  %3460 = vmatpush1.msra.mxu0 %v3437
  %3461 = vmatprep.subr.mxu0 0.0
  %3462 = vmatpush1.msra.mxu0 %v3436
  %3463 = vmatprep.subr.mxu0 0.0
  %3464 = vmatpush1.msra.mxu0 %v3435
  %3465 = vmatprep.subr.mxu0 0.0
  %3466 = vmatpush1.msra.mxu0 %v3434
  %3467 = vmatprep.subr.mxu0 0.0
  %3468 = vmatpush1.msra.mxu0 %v3433
  %3469 = vmatprep.subr.mxu0 0.0
  %3470 = vmatpush1.msra.mxu0 %v3432
  %3471 = vmatprep.subr.mxu0 0.0
  %3472 = vmatpush1.msra.mxu0 %v3431
  %3473 = vmatprep.subr.mxu0 0.0
  %3474 = vmatpush1.msra.mxu0 %v3430
  %3475 = vmatprep.subr.mxu0 0.0
  %3476 = vmatpush1.msra.mxu0 %v3429
  %3477 = vmatprep.subr.mxu0 0.0
  %3478 = vmatpush1.msra.mxu0 %v3428
  %3479 = vmatprep.subr.mxu0 0.0
  %3480 = vmatpush1.msra.mxu0 %v3427
  %3481 = vmatprep.subr.mxu0 0.0
  %3482 = vmatpush1.msra.mxu0 %v3426
  %3483 = vmatprep.subr.mxu0 0.0
  %3484 = vmatpush2.msra.mxu0 0.0
  %3485 = vmatprep.subr.mxu0 0.0
  %3486 = vmatpush2.msra.mxu0 0.0
  %3487 = vmatprep.subr.mxu0 0.0
  %3488 = vmatpush2.msra.mxu0 0.0
  %3489 = vmatprep.subr.mxu0 0.0
  %3490 = vmatpush2.msra.mxu0 0.0
  %3491 = vmatprep.subr.mxu0 0.0
  %3492 = vmatpush2.msra.mxu0 0.0
  %3493 = vmatprep.subr.mxu0 0.0
  %3494 = vmatpush2.msra.mxu0 0.0
  %3495 = vmatprep.subr.mxu0 0.0
  %3496 = vmatpush2.msra.mxu0 0.0
  %3497 = vmatprep.subr.mxu0 0.0
  %3498 = vmatpush2.msra.mxu0 0.0
  %3499 = vmatprep.subr.mxu0 0.0
  %3500 = vmatpush2.msra.mxu0 0.0
  %3501 = vmatprep.subr.mxu0 0.0
  %3502 = vmatpush2.msra.mxu0 0.0
  %3503 = vmatprep.subr.mxu0 0.0
  %3504 = vmatpush2.msra.mxu0 0.0
  %3505 = vmatprep.subr.mxu0 0.0
  %3506 = vmatpush2.msra.mxu0 0.0
  %3507 = vmatprep.subr.mxu0 0.0
  %3508 = vmatpush2.msra.mxu0 0.0
  %3509 = vmatprep.subr.mxu0 0.0
  %3510 = vmatpush2.msra.mxu0 0.0
  %3511 = vmatprep.subr.mxu0 0.0
  %3512 = vmatpush2.msra.mxu0 0.0
  %3513 = vmatprep.subr.mxu0 0.0
  %3514 = vmatpush2.msra.mxu0 0.0
  %3515 = vmatprep.mubr.f32.mxu0 0.0
  %3516 = vmatmul.mubr.f32.gmra.mxu0 %v3444
  %v3517 = vpop.f32.mrf.mxu0
  %v3518 = vadd.f32 %v3449, %v3517
  %v3519 = vpop.f32.mrf.mxu0
  %3520 = vdwg.mxu0
  %v3521 = vtanh.pop %v3518
  %v3523 = vlaneseq
  %v3524 = vshrl.u32 %v3523, 7
  %v3525 = vsub.s32 0, %v3524
  %v3526 = vrot.slane %v3443, %v3525
  %v3528 = vmul.f32 %v3521, %v3526
  %3529 = vadd.xlane.f32.xlu0 %v3528
  %v3530 = vpop.xlane.xlu0 %3529
  %v3531 = vsel %vm539, %v3530, -1e+30
  %v3532 = vld [vmem:[%s971] sm:$0xff]
  %3533 = vmatprep.subr.mxu0 0.0
  %3534 = vmatpush1.msra.mxu0 %v3441
  %3535 = vmatprep.subr.mxu0 0.0
  %3536 = vmatpush1.msra.mxu0 %v3440
  %3537 = vmatprep.subr.mxu0 0.0
  %3538 = vmatpush1.msra.mxu0 %v3439
  %3539 = vmatprep.subr.mxu0 0.0
  %3540 = vmatpush1.msra.mxu0 %v3438
  %3541 = vmatprep.subr.mxu0 0.0
  %3542 = vmatpush1.msra.mxu0 %v3437
  %3543 = vmatprep.subr.mxu0 0.0
  %3544 = vmatpush1.msra.mxu0 %v3436
  %3545 = vmatprep.subr.mxu0 0.0
  %3546 = vmatpush1.msra.mxu0 %v3435
  %3547 = vmatprep.subr.mxu0 0.0
  %3548 = vmatpush1.msra.mxu0 %v3434
  %3549 = vmatprep.subr.mxu0 0.0
  %3550 = vmatpush1.msra.mxu0 %v3433
  %3551 = vmatprep.subr.mxu0 0.0
  %3552 = vmatpush1.msra.mxu0 %v3432
  %3553 = vmatprep.subr.mxu0 0.0
  %3554 = vmatpush1.msra.mxu0 %v3431
  %3555 = vmatprep.subr.mxu0 0.0
  %3556 = vmatpush1.msra.mxu0 %v3430
  %3557 = vmatprep.subr.mxu0 0.0
  %3558 = vmatpush1.msra.mxu0 %v3429
  %3559 = vmatprep.subr.mxu0 0.0
  %3560 = vmatpush1.msra.mxu0 %v3428
  %3561 = vmatprep.subr.mxu0 0.0
  %3562 = vmatpush1.msra.mxu0 %v3427
  %3563 = vmatprep.subr.mxu0 0.0
  %3564 = vmatpush1.msra.mxu0 %v3426
  %3565 = vmatprep.subr.mxu0 0.0
  %3566 = vmatpush2.msra.mxu0 0.0
  %3567 = vmatprep.subr.mxu0 0.0
  %3568 = vmatpush2.msra.mxu0 0.0
  %3569 = vmatprep.subr.mxu0 0.0
  %3570 = vmatpush2.msra.mxu0 0.0
  %3571 = vmatprep.subr.mxu0 0.0
  %3572 = vmatpush2.msra.mxu0 0.0
  %3573 = vmatprep.subr.mxu0 0.0
  %3574 = vmatpush2.msra.mxu0 0.0
  %3575 = vmatprep.subr.mxu0 0.0
  %3576 = vmatpush2.msra.mxu0 0.0
  %3577 = vmatprep.subr.mxu0 0.0
  %3578 = vmatpush2.msra.mxu0 0.0
  %3579 = vmatprep.subr.mxu0 0.0
  %3580 = vmatpush2.msra.mxu0 0.0
  %3581 = vmatprep.subr.mxu0 0.0
  %3582 = vmatpush2.msra.mxu0 0.0
  %3583 = vmatprep.subr.mxu0 0.0
  %3584 = vmatpush2.msra.mxu0 0.0
  %3585 = vmatprep.subr.mxu0 0.0
  %3586 = vmatpush2.msra.mxu0 0.0
  %3587 = vmatprep.subr.mxu0 0.0
  %3588 = vmatpush2.msra.mxu0 0.0
  %3589 = vmatprep.subr.mxu0 0.0
  %3590 = vmatpush2.msra.mxu0 0.0
  %3591 = vmatprep.subr.mxu0 0.0
  %3592 = vmatpush2.msra.mxu0 0.0
  %3593 = vmatprep.subr.mxu0 0.0
  %3594 = vmatpush2.msra.mxu0 0.0
  %3595 = vmatprep.subr.mxu0 0.0
  %3596 = vmatpush2.msra.mxu0 0.0
  %3597 = vmatprep.mubr.f32.mxu0 0.0
  %3598 = vmatmul.mubr.f32.gmra.mxu0 %v3532
  %v3599 = vpop.f32.mrf.mxu0
  %v3600 = vadd.f32 %v3449, %v3599
  %v3601 = vpop.f32.mrf.mxu0
  %3602 = vdwg.mxu0
  %v3603 = vtanh.pop %v3600
  %v3604 = vmul.f32 %v3603, %v3526
  %3605 = vadd.xlane.f32.xlu0 %v3604
  %v3606 = vpop.xlane.xlu0 %3605
  %v3607 = vsel %vm952, %v3606, -1e+30
  %v3608 = vld [vmem:[%s1389] sm:$0xff]
  %3609 = vmatprep.subr.mxu0 0.0
  %3610 = vmatpush1.msra.mxu0 %v3441
  %3611 = vmatprep.subr.mxu0 0.0
  %3612 = vmatpush1.msra.mxu0 %v3440
  %3613 = vmatprep.subr.mxu0 0.0
  %3614 = vmatpush1.msra.mxu0 %v3439
  %3615 = vmatprep.subr.mxu0 0.0
  %3616 = vmatpush1.msra.mxu0 %v3438
  %3617 = vmatprep.subr.mxu0 0.0
  %3618 = vmatpush1.msra.mxu0 %v3437
  %3619 = vmatprep.subr.mxu0 0.0
  %3620 = vmatpush1.msra.mxu0 %v3436
  %3621 = vmatprep.subr.mxu0 0.0
  %3622 = vmatpush1.msra.mxu0 %v3435
  %3623 = vmatprep.subr.mxu0 0.0
  %3624 = vmatpush1.msra.mxu0 %v3434
  %3625 = vmatprep.subr.mxu0 0.0
  %3626 = vmatpush1.msra.mxu0 %v3433
  %3627 = vmatprep.subr.mxu0 0.0
  %3628 = vmatpush1.msra.mxu0 %v3432
  %3629 = vmatprep.subr.mxu0 0.0
  %3630 = vmatpush1.msra.mxu0 %v3431
  %3631 = vmatprep.subr.mxu0 0.0
  %3632 = vmatpush1.msra.mxu0 %v3430
  %3633 = vmatprep.subr.mxu0 0.0
  %3634 = vmatpush1.msra.mxu0 %v3429
  %3635 = vmatprep.subr.mxu0 0.0
  %3636 = vmatpush1.msra.mxu0 %v3428
  %3637 = vmatprep.subr.mxu0 0.0
  %3638 = vmatpush1.msra.mxu0 %v3427
  %3639 = vmatprep.subr.mxu0 0.0
  %3640 = vmatpush1.msra.mxu0 %v3426
  %3641 = vmatprep.subr.mxu0 0.0
  %3642 = vmatpush2.msra.mxu0 0.0
  %3643 = vmatprep.subr.mxu0 0.0
  %3644 = vmatpush2.msra.mxu0 0.0
  %3645 = vmatprep.subr.mxu0 0.0
  %3646 = vmatpush2.msra.mxu0 0.0
  %3647 = vmatprep.subr.mxu0 0.0
  %3648 = vmatpush2.msra.mxu0 0.0
  %3649 = vmatprep.subr.mxu0 0.0
  %3650 = vmatpush2.msra.mxu0 0.0
  %3651 = vmatprep.subr.mxu0 0.0
  %3652 = vmatpush2.msra.mxu0 0.0
  %3653 = vmatprep.subr.mxu0 0.0
  %3654 = vmatpush2.msra.mxu0 0.0
  %3655 = vmatprep.subr.mxu0 0.0
  %3656 = vmatpush2.msra.mxu0 0.0
  %3657 = vmatprep.subr.mxu0 0.0
  %3658 = vmatpush2.msra.mxu0 0.0
  %3659 = vmatprep.subr.mxu0 0.0
  %3660 = vmatpush2.msra.mxu0 0.0
  %3661 = vmatprep.subr.mxu0 0.0
  %3662 = vmatpush2.msra.mxu0 0.0
  %3663 = vmatprep.subr.mxu0 0.0
  %3664 = vmatpush2.msra.mxu0 0.0
  %3665 = vmatprep.subr.mxu0 0.0
  %3666 = vmatpush2.msra.mxu0 0.0
  %3667 = vmatprep.subr.mxu0 0.0
  %3668 = vmatpush2.msra.mxu0 0.0
  %3669 = vmatprep.subr.mxu0 0.0
  %3670 = vmatpush2.msra.mxu0 0.0
  %3671 = vmatprep.subr.mxu0 0.0
  %3672 = vmatpush2.msra.mxu0 0.0
  %3673 = vmatprep.mubr.f32.mxu0 0.0
  %3674 = vmatmul.mubr.f32.gmra.mxu0 %v3608
  %v3675 = vpop.f32.mrf.mxu0
  %v3676 = vadd.f32 %v3449, %v3675
  %v3677 = vpop.f32.mrf.mxu0
  %3678 = vdwg.mxu0
  %v3679 = vtanh.pop %v3676
  %v3680 = vmul.f32 %v3679, %v3526
  %3681 = vadd.xlane.f32.xlu0 %v3680
  %v3682 = vpop.xlane.xlu0 %3681
  %v3683 = vsel %vm1370, %v3682, -1e+30
  %v3684 = vld [vmem:[%s1807] sm:$0xff]
  %3685 = vmatprep.subr.mxu0 0.0
  %3686 = vmatpush1.msra.mxu0 %v3441
  %3687 = vmatprep.subr.mxu0 0.0
  %3688 = vmatpush1.msra.mxu0 %v3440
  %3689 = vmatprep.subr.mxu0 0.0
  %3690 = vmatpush1.msra.mxu0 %v3439
  %3691 = vmatprep.subr.mxu0 0.0
  %3692 = vmatpush1.msra.mxu0 %v3438
  %3693 = vmatprep.subr.mxu0 0.0
  %3694 = vmatpush1.msra.mxu0 %v3437
  %3695 = vmatprep.subr.mxu0 0.0
  %3696 = vmatpush1.msra.mxu0 %v3436
  %3697 = vmatprep.subr.mxu0 0.0
  %3698 = vmatpush1.msra.mxu0 %v3435
  %3699 = vmatprep.subr.mxu0 0.0
  %3700 = vmatpush1.msra.mxu0 %v3434
  %3701 = vmatprep.subr.mxu0 0.0
  %3702 = vmatpush1.msra.mxu0 %v3433
  %3703 = vmatprep.subr.mxu0 0.0
  %3704 = vmatpush1.msra.mxu0 %v3432
  %3705 = vmatprep.subr.mxu0 0.0
  %3706 = vmatpush1.msra.mxu0 %v3431
  %3707 = vmatprep.subr.mxu0 0.0
  %3708 = vmatpush1.msra.mxu0 %v3430
  %3709 = vmatprep.subr.mxu0 0.0
  %3710 = vmatpush1.msra.mxu0 %v3429
  %3711 = vmatprep.subr.mxu0 0.0
  %3712 = vmatpush1.msra.mxu0 %v3428
  %3713 = vmatprep.subr.mxu0 0.0
  %3714 = vmatpush1.msra.mxu0 %v3427
  %3715 = vmatprep.subr.mxu0 0.0
  %3716 = vmatpush1.msra.mxu0 %v3426
  %3717 = vmatprep.subr.mxu0 0.0
  %3718 = vmatpush2.msra.mxu0 0.0
  %3719 = vmatprep.subr.mxu0 0.0
  %3720 = vmatpush2.msra.mxu0 0.0
  %3721 = vmatprep.subr.mxu0 0.0
  %3722 = vmatpush2.msra.mxu0 0.0
  %3723 = vmatprep.subr.mxu0 0.0
  %3724 = vmatpush2.msra.mxu0 0.0
  %3725 = vmatprep.subr.mxu0 0.0
  %3726 = vmatpush2.msra.mxu0 0.0
  %3727 = vmatprep.subr.mxu0 0.0
  %3728 = vmatpush2.msra.mxu0 0.0
  %3729 = vmatprep.subr.mxu0 0.0
  %3730 = vmatpush2.msra.mxu0 0.0
  %3731 = vmatprep.subr.mxu0 0.0
  %3732 = vmatpush2.msra.mxu0 0.0
  %3733 = vmatprep.subr.mxu0 0.0
  %3734 = vmatpush2.msra.mxu0 0.0
  %3735 = vmatprep.subr.mxu0 0.0
  %3736 = vmatpush2.msra.mxu0 0.0
  %3737 = vmatprep.subr.mxu0 0.0
  %3738 = vmatpush2.msra.mxu0 0.0
  %3739 = vmatprep.subr.mxu0 0.0
  %3740 = vmatpush2.msra.mxu0 0.0
  %3741 = vmatprep.subr.mxu0 0.0
  %3742 = vmatpush2.msra.mxu0 0.0
  %3743 = vmatprep.subr.mxu0 0.0
  %3744 = vmatpush2.msra.mxu0 0.0
  %3745 = vmatprep.subr.mxu0 0.0
  %3746 = vmatpush2.msra.mxu0 0.0
  %3747 = vmatprep.subr.mxu0 0.0
  %3748 = vmatpush2.msra.mxu0 0.0
  %3749 = vmatprep.mubr.f32.mxu0 0.0
  %3750 = vmatmul.mubr.f32.gmra.mxu0 %v3684
  %v3751 = vpop.f32.mrf.mxu0
  %v3752 = vadd.f32 %v3449, %v3751
  %v3753 = vpop.f32.mrf.mxu0
  %3754 = vdwg.mxu0
  %v3755 = vtanh.pop %v3752
  %v3756 = vmul.f32 %v3755, %v3526
  %3757 = vadd.xlane.f32.xlu0 %v3756
  %v3758 = vpop.xlane.xlu0 %3757
  %v3759 = vsel %vm1788, %v3758, -1e+30
  %v3760 = vld [vmem:[%s1810] sm:$0xff]
  %3761 = vmatprep.subr.mxu0 0.0
  %3762 = vmatpush1.msra.mxu0 %v3441
  %3763 = vmatprep.subr.mxu0 0.0
  %3764 = vmatpush1.msra.mxu0 %v3440
  %3765 = vmatprep.subr.mxu0 0.0
  %3766 = vmatpush1.msra.mxu0 %v3439
  %3767 = vmatprep.subr.mxu0 0.0
  %3768 = vmatpush1.msra.mxu0 %v3438
  %3769 = vmatprep.subr.mxu0 0.0
  %3770 = vmatpush1.msra.mxu0 %v3437
  %3771 = vmatprep.subr.mxu0 0.0
  %3772 = vmatpush1.msra.mxu0 %v3436
  %3773 = vmatprep.subr.mxu0 0.0
  %3774 = vmatpush1.msra.mxu0 %v3435
  %3775 = vmatprep.subr.mxu0 0.0
  %3776 = vmatpush1.msra.mxu0 %v3434
  %3777 = vmatprep.subr.mxu0 0.0
  %3778 = vmatpush1.msra.mxu0 %v3433
  %3779 = vmatprep.subr.mxu0 0.0
  %3780 = vmatpush1.msra.mxu0 %v3432
  %3781 = vmatprep.subr.mxu0 0.0
  %3782 = vmatpush1.msra.mxu0 %v3431
  %3783 = vmatprep.subr.mxu0 0.0
  %3784 = vmatpush1.msra.mxu0 %v3430
  %3785 = vmatprep.subr.mxu0 0.0
  %3786 = vmatpush1.msra.mxu0 %v3429
  %3787 = vmatprep.subr.mxu0 0.0
  %3788 = vmatpush1.msra.mxu0 %v3428
  %3789 = vmatprep.subr.mxu0 0.0
  %3790 = vmatpush1.msra.mxu0 %v3427
  %3791 = vmatprep.subr.mxu0 0.0
  %3792 = vmatpush1.msra.mxu0 %v3426
  %3793 = vmatprep.subr.mxu0 0.0
  %3794 = vmatpush2.msra.mxu0 0.0
  %3795 = vmatprep.subr.mxu0 0.0
  %3796 = vmatpush2.msra.mxu0 0.0
  %3797 = vmatprep.subr.mxu0 0.0
  %3798 = vmatpush2.msra.mxu0 0.0
  %3799 = vmatprep.subr.mxu0 0.0
  %3800 = vmatpush2.msra.mxu0 0.0
  %3801 = vmatprep.subr.mxu0 0.0
  %3802 = vmatpush2.msra.mxu0 0.0
  %3803 = vmatprep.subr.mxu0 0.0
  %3804 = vmatpush2.msra.mxu0 0.0
  %3805 = vmatprep.subr.mxu0 0.0
  %3806 = vmatpush2.msra.mxu0 0.0
  %3807 = vmatprep.subr.mxu0 0.0
  %3808 = vmatpush2.msra.mxu0 0.0
  %3809 = vmatprep.subr.mxu0 0.0
  %3810 = vmatpush2.msra.mxu0 0.0
  %3811 = vmatprep.subr.mxu0 0.0
  %3812 = vmatpush2.msra.mxu0 0.0
  %3813 = vmatprep.subr.mxu0 0.0
  %3814 = vmatpush2.msra.mxu0 0.0
  %3815 = vmatprep.subr.mxu0 0.0
  %3816 = vmatpush2.msra.mxu0 0.0
  %3817 = vmatprep.subr.mxu0 0.0
  %3818 = vmatpush2.msra.mxu0 0.0
  %3819 = vmatprep.subr.mxu0 0.0
  %3820 = vmatpush2.msra.mxu0 0.0
  %3821 = vmatprep.subr.mxu0 0.0
  %3822 = vmatpush2.msra.mxu0 0.0
  %3823 = vmatprep.subr.mxu0 0.0
  %3824 = vmatpush2.msra.mxu0 0.0
  %3825 = vmatprep.mubr.f32.mxu0 0.0
  %3826 = vmatmul.mubr.f32.gmra.mxu0 %v3760
  %v3827 = vpop.f32.mrf.mxu0
  %v3828 = vadd.f32 %v3449, %v3827
  %v3829 = vpop.f32.mrf.mxu0
  %3830 = vdwg.mxu0
  %v3831 = vtanh.pop %v3828
  %v3832 = vmul.f32 %v3831, %v3526
  %3833 = vadd.xlane.f32.xlu0 %v3832
  %v3834 = vpop.xlane.xlu0 %3833
  %v3835 = vsel %vm1789, %v3834, -1e+30
  %v3836 = vld [vmem:[%s1392] sm:$0xff]
  %3837 = vmatprep.subr.mxu0 0.0
  %3838 = vmatpush1.msra.mxu0 %v3441
  %3839 = vmatprep.subr.mxu0 0.0
  %3840 = vmatpush1.msra.mxu0 %v3440
  %3841 = vmatprep.subr.mxu0 0.0
  %3842 = vmatpush1.msra.mxu0 %v3439
  %3843 = vmatprep.subr.mxu0 0.0
  %3844 = vmatpush1.msra.mxu0 %v3438
  %3845 = vmatprep.subr.mxu0 0.0
  %3846 = vmatpush1.msra.mxu0 %v3437
  %3847 = vmatprep.subr.mxu0 0.0
  %3848 = vmatpush1.msra.mxu0 %v3436
  %3849 = vmatprep.subr.mxu0 0.0
  %3850 = vmatpush1.msra.mxu0 %v3435
  %3851 = vmatprep.subr.mxu0 0.0
  %3852 = vmatpush1.msra.mxu0 %v3434
  %3853 = vmatprep.subr.mxu0 0.0
  %3854 = vmatpush1.msra.mxu0 %v3433
  %3855 = vmatprep.subr.mxu0 0.0
  %3856 = vmatpush1.msra.mxu0 %v3432
  %3857 = vmatprep.subr.mxu0 0.0
  %3858 = vmatpush1.msra.mxu0 %v3431
  %3859 = vmatprep.subr.mxu0 0.0
  %3860 = vmatpush1.msra.mxu0 %v3430
  %3861 = vmatprep.subr.mxu0 0.0
  %3862 = vmatpush1.msra.mxu0 %v3429
  %3863 = vmatprep.subr.mxu0 0.0
  %3864 = vmatpush1.msra.mxu0 %v3428
  %3865 = vmatprep.subr.mxu0 0.0
  %3866 = vmatpush1.msra.mxu0 %v3427
  %3867 = vmatprep.subr.mxu0 0.0
  %3868 = vmatpush1.msra.mxu0 %v3426
  %3869 = vmatprep.subr.mxu0 0.0
  %3870 = vmatpush2.msra.mxu0 0.0
  %3871 = vmatprep.subr.mxu0 0.0
  %3872 = vmatpush2.msra.mxu0 0.0
  %3873 = vmatprep.subr.mxu0 0.0
  %3874 = vmatpush2.msra.mxu0 0.0
  %3875 = vmatprep.subr.mxu0 0.0
  %3876 = vmatpush2.msra.mxu0 0.0
  %3877 = vmatprep.subr.mxu0 0.0
  %3878 = vmatpush2.msra.mxu0 0.0
  %3879 = vmatprep.subr.mxu0 0.0
  %3880 = vmatpush2.msra.mxu0 0.0
  %3881 = vmatprep.subr.mxu0 0.0
  %3882 = vmatpush2.msra.mxu0 0.0
  %3883 = vmatprep.subr.mxu0 0.0
  %3884 = vmatpush2.msra.mxu0 0.0
  %3885 = vmatprep.subr.mxu0 0.0
  %3886 = vmatpush2.msra.mxu0 0.0
  %3887 = vmatprep.subr.mxu0 0.0
  %3888 = vmatpush2.msra.mxu0 0.0
  %3889 = vmatprep.subr.mxu0 0.0
  %3890 = vmatpush2.msra.mxu0 0.0
  %3891 = vmatprep.subr.mxu0 0.0
  %3892 = vmatpush2.msra.mxu0 0.0
  %3893 = vmatprep.subr.mxu0 0.0
  %3894 = vmatpush2.msra.mxu0 0.0
  %3895 = vmatprep.subr.mxu0 0.0
  %3896 = vmatpush2.msra.mxu0 0.0
  %3897 = vmatprep.subr.mxu0 0.0
  %3898 = vmatpush2.msra.mxu0 0.0
  %3899 = vmatprep.subr.mxu0 0.0
  %3900 = vmatpush2.msra.mxu0 0.0
  %3901 = vmatprep.mubr.f32.mxu0 0.0
  %3902 = vmatmul.mubr.f32.gmra.mxu0 %v3836
  %v3903 = vpop.f32.mrf.mxu0
  %v3904 = vadd.f32 %v3449, %v3903
  %v3905 = vpop.f32.mrf.mxu0
  %3906 = vdwg.mxu0
  %v3907 = vtanh.pop %v3904
  %v3908 = vmul.f32 %v3907, %v3526
  %3909 = vadd.xlane.f32.xlu0 %v3908
  %v3910 = vpop.xlane.xlu0 %3909
  %v3911 = vsel %vm1371, %v3910, -1e+30
  %v3912 = vld [vmem:[%s974] sm:$0xff]
  %3913 = vmatprep.subr.mxu0 0.0
  %3914 = vmatpush1.msra.mxu0 %v3441
  %3915 = vmatprep.subr.mxu0 0.0
  %3916 = vmatpush1.msra.mxu0 %v3440
  %3917 = vmatprep.subr.mxu0 0.0
  %3918 = vmatpush1.msra.mxu0 %v3439
  %3919 = vmatprep.subr.mxu0 0.0
  %3920 = vmatpush1.msra.mxu0 %v3438
  %3921 = vmatprep.subr.mxu0 0.0
  %3922 = vmatpush1.msra.mxu0 %v3437
  %3923 = vmatprep.subr.mxu0 0.0
  %3924 = vmatpush1.msra.mxu0 %v3436
  %3925 = vmatprep.subr.mxu0 0.0
  %3926 = vmatpush1.msra.mxu0 %v3435
  %3927 = vmatprep.subr.mxu0 0.0
  %3928 = vmatpush1.msra.mxu0 %v3434
  %3929 = vmatprep.subr.mxu0 0.0
  %3930 = vmatpush1.msra.mxu0 %v3433
  %3931 = vmatprep.subr.mxu0 0.0
  %3932 = vmatpush1.msra.mxu0 %v3432
  %3933 = vmatprep.subr.mxu0 0.0
  %3934 = vmatpush1.msra.mxu0 %v3431
  %3935 = vmatprep.subr.mxu0 0.0
  %3936 = vmatpush1.msra.mxu0 %v3430
  %3937 = vmatprep.subr.mxu0 0.0
  %3938 = vmatpush1.msra.mxu0 %v3429
  %3939 = vmatprep.subr.mxu0 0.0
  %3940 = vmatpush1.msra.mxu0 %v3428
  %3941 = vmatprep.subr.mxu0 0.0
  %3942 = vmatpush1.msra.mxu0 %v3427
  %3943 = vmatprep.subr.mxu0 0.0
  %3944 = vmatpush1.msra.mxu0 %v3426
  %3945 = vmatprep.subr.mxu0 0.0
  %3946 = vmatpush2.msra.mxu0 0.0
  %3947 = vmatprep.subr.mxu0 0.0
  %3948 = vmatpush2.msra.mxu0 0.0
  %3949 = vmatprep.subr.mxu0 0.0
  %3950 = vmatpush2.msra.mxu0 0.0
  %3951 = vmatprep.subr.mxu0 0.0
  %3952 = vmatpush2.msra.mxu0 0.0
  %3953 = vmatprep.subr.mxu0 0.0
  %3954 = vmatpush2.msra.mxu0 0.0
  %3955 = vmatprep.subr.mxu0 0.0
  %3956 = vmatpush2.msra.mxu0 0.0
  %3957 = vmatprep.subr.mxu0 0.0
  %3958 = vmatpush2.msra.mxu0 0.0
  %3959 = vmatprep.subr.mxu0 0.0
  %3960 = vmatpush2.msra.mxu0 0.0
  %3961 = vmatprep.subr.mxu0 0.0
  %3962 = vmatpush2.msra.mxu0 0.0
  %3963 = vmatprep.subr.mxu0 0.0
  %3964 = vmatpush2.msra.mxu0 0.0
  %3965 = vmatprep.subr.mxu0 0.0
  %3966 = vmatpush2.msra.mxu0 0.0
  %3967 = vmatprep.subr.mxu0 0.0
  %3968 = vmatpush2.msra.mxu0 0.0
  %3969 = vmatprep.subr.mxu0 0.0
  %3970 = vmatpush2.msra.mxu0 0.0
  %3971 = vmatprep.subr.mxu0 0.0
  %3972 = vmatpush2.msra.mxu0 0.0
  %3973 = vmatprep.subr.mxu0 0.0
  %3974 = vmatpush2.msra.mxu0 0.0
  %3975 = vmatprep.subr.mxu0 0.0
  %3976 = vmatpush2.msra.mxu0 0.0
  %3977 = vmatprep.mubr.f32.mxu0 0.0
  %3978 = vmatmul.mubr.f32.gmra.mxu0 %v3912
  %v3979 = vpop.f32.mrf.mxu0
  %v3980 = vadd.f32 %v3449, %v3979
  %v3981 = vpop.f32.mrf.mxu0
  %3982 = vdwg.mxu0
  %v3983 = vtanh.pop %v3980
  %v3984 = vmul.f32 %v3983, %v3526
  %3985 = vadd.xlane.f32.xlu0 %v3984
  %v3986 = vpop.xlane.xlu0 %3985
  %v3987 = vsel %vm953, %v3986, -1e+30
  %v3988 = vld [vmem:[%s558] sm:$0xff]
  %3989 = vmatprep.subr.mxu0 0.0
  %3990 = vmatpush1.msra.mxu0 %v3441
  %3991 = vmatprep.subr.mxu0 0.0
  %3992 = vmatpush1.msra.mxu0 %v3440
  %3993 = vmatprep.subr.mxu0 0.0
  %3994 = vmatpush1.msra.mxu0 %v3439
  %3995 = vmatprep.subr.mxu0 0.0
  %3996 = vmatpush1.msra.mxu0 %v3438
  %3997 = vmatprep.subr.mxu0 0.0
  %3998 = vmatpush1.msra.mxu0 %v3437
  %3999 = vmatprep.subr.mxu0 0.0
  %4000 = vmatpush1.msra.mxu0 %v3436
  %4001 = vmatprep.subr.mxu0 0.0
  %4002 = vmatpush1.msra.mxu0 %v3435
  %4003 = vmatprep.subr.mxu0 0.0
  %4004 = vmatpush1.msra.mxu0 %v3434
  %4005 = vmatprep.subr.mxu0 0.0
  %4006 = vmatpush1.msra.mxu0 %v3433
  %4007 = vmatprep.subr.mxu0 0.0
  %4008 = vmatpush1.msra.mxu0 %v3432
  %4009 = vmatprep.subr.mxu0 0.0
  %4010 = vmatpush1.msra.mxu0 %v3431
  %4011 = vmatprep.subr.mxu0 0.0
  %4012 = vmatpush1.msra.mxu0 %v3430
  %4013 = vmatprep.subr.mxu0 0.0
  %4014 = vmatpush1.msra.mxu0 %v3429
  %4015 = vmatprep.subr.mxu0 0.0
  %4016 = vmatpush1.msra.mxu0 %v3428
  %4017 = vmatprep.subr.mxu0 0.0
  %4018 = vmatpush1.msra.mxu0 %v3427
  %4019 = vmatprep.subr.mxu0 0.0
  %4020 = vmatpush1.msra.mxu0 %v3426
  %4021 = vmatprep.subr.mxu0 0.0
  %4022 = vmatpush2.msra.mxu0 0.0
  %4023 = vmatprep.subr.mxu0 0.0
  %4024 = vmatpush2.msra.mxu0 0.0
  %4025 = vmatprep.subr.mxu0 0.0
  %4026 = vmatpush2.msra.mxu0 0.0
  %4027 = vmatprep.subr.mxu0 0.0
  %4028 = vmatpush2.msra.mxu0 0.0
  %4029 = vmatprep.subr.mxu0 0.0
  %4030 = vmatpush2.msra.mxu0 0.0
  %4031 = vmatprep.subr.mxu0 0.0
  %4032 = vmatpush2.msra.mxu0 0.0
  %4033 = vmatprep.subr.mxu0 0.0
  %4034 = vmatpush2.msra.mxu0 0.0
  %4035 = vmatprep.subr.mxu0 0.0
  %4036 = vmatpush2.msra.mxu0 0.0
  %4037 = vmatprep.subr.mxu0 0.0
  %4038 = vmatpush2.msra.mxu0 0.0
  %4039 = vmatprep.subr.mxu0 0.0
  %4040 = vmatpush2.msra.mxu0 0.0
  %4041 = vmatprep.subr.mxu0 0.0
  %4042 = vmatpush2.msra.mxu0 0.0
  %4043 = vmatprep.subr.mxu0 0.0
  %4044 = vmatpush2.msra.mxu0 0.0
  %4045 = vmatprep.subr.mxu0 0.0
  %4046 = vmatpush2.msra.mxu0 0.0
  %4047 = vmatprep.subr.mxu0 0.0
  %4048 = vmatpush2.msra.mxu0 0.0
  %4049 = vmatprep.subr.mxu0 0.0
  %4050 = vmatpush2.msra.mxu0 0.0
  %4051 = vmatprep.subr.mxu0 0.0
  %4052 = vmatpush2.msra.mxu0 0.0
  %4053 = vmatprep.mubr.f32.mxu0 0.0
  %4054 = vmatmul.mubr.f32.gmra.mxu0 %v3988
  %v4055 = vpop.f32.mrf.mxu0
  %v4056 = vadd.f32 %v3449, %v4055
  %v4057 = vpop.f32.mrf.mxu0
  %4058 = vdwg.mxu0
  %v4059 = vtanh.pop %v4056
  %v4060 = vmul.f32 %v4059, %v3526
  %4061 = vadd.xlane.f32.xlu0 %v4060
  %v4062 = vpop.xlane.xlu0 %4061
  %v4063 = vsel %vm540, %v4062, -1e+30
  %v4064 = vmax.f32 %v3531, %v3607
  %v4065 = vmax.f32 %v4064, %v3683
  %v4066 = vmax.f32 %v4065, %v3759
  %v4067 = vmax.f32 %v4066, %v3835
  %v4068 = vmax.f32 %v4067, %v3911
  %v4069 = vmax.f32 %v4068, %v3987
  %v4070 = vmax.f32 %v4069, %v4063
  %v4071 = vsub.f32 %v3531, %v4070
  %v4072 = vmul.f32 %v4071, 1.442695
  %v4073 = vpow.pop %v4072
  %v4074 = vsel %vm539, %v4073, 0.0
  %v4075 = vsub.f32 %v3607, %v4070
  %v4076 = vmul.f32 %v4075, 1.442695
  %v4077 = vpow.pop %v4076
  %v4078 = vsel %vm952, %v4077, 0.0
  %v4079 = vsub.f32 %v3683, %v4070
  %v4080 = vmul.f32 %v4079, 1.442695
  %v4081 = vpow.pop %v4080
  %v4082 = vsel %vm1370, %v4081, 0.0
  %v4083 = vsub.f32 %v3759, %v4070
  %v4084 = vmul.f32 %v4083, 1.442695
  %v4085 = vpow.pop %v4084
  %v4086 = vsel %vm1788, %v4085, 0.0
  %v4087 = vsub.f32 %v3835, %v4070
  %v4088 = vmul.f32 %v4087, 1.442695
  %v4089 = vpow.pop %v4088
  %v4090 = vsel %vm1789, %v4089, 0.0
  %v4091 = vsub.f32 %v3911, %v4070
  %v4092 = vmul.f32 %v4091, 1.442695
  %v4093 = vpow.pop %v4092
  %v4094 = vsel %vm1371, %v4093, 0.0
  %v4095 = vsub.f32 %v3987, %v4070
  %v4096 = vmul.f32 %v4095, 1.442695
  %v4097 = vpow.pop %v4096
  %v4098 = vsel %vm953, %v4097, 0.0
  %v4099 = vsub.f32 %v4063, %v4070
  %v4100 = vmul.f32 %v4099, 1.442695
  %v4101 = vpow.pop %v4100
  %v4102 = vsel %vm540, %v4101, 0.0
  %v4103 = vadd.f32 %v4074, %v4078
  %v4104 = vadd.f32 %v4103, %v4082
  %v4105 = vadd.f32 %v4104, %v4086
  %v4106 = vadd.f32 %v4105, %v4090
  %v4107 = vadd.f32 %v4106, %v4094
  %v4108 = vadd.f32 %v4107, %v4098
  %v4109 = vadd.f32 %v4108, %v4102
  %v4110 = vrcp.pop %v4109
  %v4111 = vmul.f32 1.0, %v4110
  %v4112 = vmul.f32 %v4074, %v4111
  %vm4113 = vcmask 7168
  %4114 = vst.msk [vmem:[%s14] sm:$0xff] %vm4113, %v4112
  %v4115 = vld [vmem:[#allocation2] sm:$0xff]
  %4117 = vset.pattern.permute.xlu0 0
  %4118 = vperm.xlu0 %4117, %v4112
  %v4119 = vpop.permute.xlu0 %4118
  %v4121 = vmul.f32 %v4119, %v4115
  %v4122 = vadd.f32 %v4121, 0.0
  %v4123 = vmul.f32 %v4078, %v4111
  %4125 = vrot.lane.b32.xlu0 %v4123, 1
  %v4126 = vpop.permute.xlu0 %4125
  %vm4128 = vcmask 15368
  %4129 = vst.msk [vmem:[%s14] sm:$0xff] %vm4128, %v4126
  %v4130 = vld [vmem:[%s971] sm:$0xff]
  %4131 = vset.pattern.permute.xlu0 0
  %4132 = vperm.xlu0 %4131, %v4123
  %v4133 = vpop.permute.xlu0 %4132
  %v4135 = vmul.f32 %v4133, %v4130
  %v4136 = vadd.f32 %v4122, %v4135
  %v4137 = vmul.f32 %v4082, %v4111
  %4139 = vrot.lane.b32.xlu0 %v4137, 2
  %v4140 = vpop.permute.xlu0 %4139
  %vm4142 = vcmask 23568
  %4143 = vst.msk [vmem:[%s14] sm:$0xff] %vm4142, %v4140
  %v4144 = vld [vmem:[%s1389] sm:$0xff]
  %4145 = vset.pattern.permute.xlu0 0
  %4146 = vperm.xlu0 %4145, %v4137
  %v4147 = vpop.permute.xlu0 %4146
  %v4149 = vmul.f32 %v4147, %v4144
  %v4150 = vadd.f32 %v4136, %v4149
  %v4151 = vmul.f32 %v4086, %v4111
  %4153 = vrot.lane.b32.xlu0 %v4151, 3
  %v4154 = vpop.permute.xlu0 %4153
  %vm4156 = vcmask 31768
  %4157 = vst.msk [vmem:[%s14] sm:$0xff] %vm4156, %v4154
  %v4158 = vld [vmem:[%s1807] sm:$0xff]
  %4159 = vset.pattern.permute.xlu0 0
  %4160 = vperm.xlu0 %4159, %v4151
  %v4161 = vpop.permute.xlu0 %4160
  %v4163 = vmul.f32 %v4161, %v4158
  %v4164 = vadd.f32 %v4150, %v4163
  %v4165 = vmul.f32 %v4090, %v4111
  %4167 = vrot.lane.b32.xlu0 %v4165, 4
  %v4168 = vpop.permute.xlu0 %4167
  %vm4170 = vcmask 39968
  %4171 = vst.msk [vmem:[%s14] sm:$0xff] %vm4170, %v4168
  %v4172 = vld [vmem:[%s1810] sm:$0xff]
  %4173 = vset.pattern.permute.xlu0 0
  %4174 = vperm.xlu0 %4173, %v4165
  %v4175 = vpop.permute.xlu0 %4174
  %v4177 = vmul.f32 %v4175, %v4172
  %v4178 = vadd.f32 %v4164, %v4177
  %v4179 = vmul.f32 %v4094, %v4111
  %4181 = vrot.lane.b32.xlu0 %v4179, 5
  %v4182 = vpop.permute.xlu0 %4181
  %vm4184 = vcmask 48168
  %4185 = vst.msk [vmem:[%s14] sm:$0xff] %vm4184, %v4182
  %v4186 = vld [vmem:[%s1392] sm:$0xff]
  %4187 = vset.pattern.permute.xlu0 0
  %4188 = vperm.xlu0 %4187, %v4179
  %v4189 = vpop.permute.xlu0 %4188
  %v4191 = vmul.f32 %v4189, %v4186
  %v4192 = vadd.f32 %v4178, %v4191
  %v4193 = vmul.f32 %v4098, %v4111
  %4195 = vrot.lane.b32.xlu0 %v4193, 6
  %v4196 = vpop.permute.xlu0 %4195
  %vm4198 = vcmask 56368
  %4199 = vst.msk [vmem:[%s14] sm:$0xff] %vm4198, %v4196
  %v4200 = vld [vmem:[%s974] sm:$0xff]
  %4201 = vset.pattern.permute.xlu0 0
  %4202 = vperm.xlu0 %4201, %v4193
  %v4203 = vpop.permute.xlu0 %4202
  %v4205 = vmul.f32 %v4203, %v4200
  %v4206 = vadd.f32 %v4192, %v4205
  %v4207 = vmul.f32 %v4102, %v4111
  %4209 = vrot.lane.b32.xlu0 %v4207, 7
  %v4210 = vpop.permute.xlu0 %4209
  %vm4212 = vcmask 64568
  %4213 = vst.msk [vmem:[%s14] sm:$0xff] %vm4212, %v4210
  %v4214 = vld [vmem:[%s558] sm:$0xff]
  %4215 = vset.pattern.permute.xlu0 0
  %4216 = vperm.xlu0 %4215, %v4207
  %v4217 = vpop.permute.xlu0 %4216
  %v4219 = vmul.f32 %v4217, %v4214
  %v4220 = vadd.f32 %v4206, %v4219
  %4221 = vst [vmem:[%s13] sm:$0xff] %v4220
  // Predicated region
  $region54: #{sentence_attention_forward.2} parent=0 // pred_check
    _
  $region55: #{sentence_attention_forward.2} parent=0 // pred_check_branch
    %4223 = sbr.rel (0) target = $region57
  $region56: #{sentence_attention_forward.2} parent=0 // pred_region
    _
  $region57: #{sentence_attention_forward.2} parent=0 // pred_fallthru
    _
  // Predicated region
  $region58: #{sentence_attention_forward.2} parent=0 // pred_check
    _
  $region59: #{sentence_attention_forward.2} parent=0 // pred_check_branch
    %4225 = sbr.rel (0) target = $region61
  $region60: #{sentence_attention_forward.2} parent=0 // pred_region
    _
  $region61: #{sentence_attention_forward.2} parent=0 // pred_fallthru
    _
  // Predicated region
  $region62: #{sentence_attention_forward.2} parent=0 // pred_check
    _
  $region63: #{sentence_attention_forward.2} parent=0 // pred_check_branch
    %4227 = sbr.rel (0) target = $region65
  $region64: #{sentence_attention_forward.2} parent=0 // pred_region
    _
  $region65: #{sentence_attention_forward.2} parent=0 // pred_fallthru
    _
  // Predicated region
  $region66: #{sentence_attention_forward.2} parent=0 // pred_check
    _
  $region67: #{sentence_attention_forward.2} parent=0 // pred_check_branch
    %4229 = sbr.rel (0) target = $region69
  $region68: #{sentence_attention_forward.2} parent=0 // pred_region
    _
  $region69: #{sentence_attention_forward.2} parent=0 // pred_fallthru
    _

</llo_original>
